<compile_context>
chip_gen: v7x
topology: tpu7x:2x2x1
jax: 0.10.0
libtpu: 0.0.40
codegen_flags: <defaults>
</compile_context>

<pallas_src>
import functools

import jax
import jax.numpy as jnp
from jax.experimental import pallas as pl
from jax.experimental.pallas import tpu as pltpu


_SQRT_HALF = 0.7071067811865476
_SQRT_2_OVER_PI = 0.7978845608028654


def _gelu_exact(x):
    # torch.nn.functional.gelu default = exact (erf) variant. VPU-heavy.
    return 0.5 * x * (1.0 + jax.lax.erf(x * jnp.float32(_SQRT_HALF)))


def _gelu_tanh(x):
    # EUP-friendly tanh approximation (performance default; tiny numeric
    # difference vs torch's exact erf, validated below against the f32 ref).
    c = jnp.float32(_SQRT_2_OVER_PI)
    return 0.5 * x * (1.0 + jnp.tanh(c * (x + jnp.float32(0.044715) * x * x * x)))


def mlp_ln_kernel(x_ref, w1_ref, b1_ref, w2_ref, b2_ref, g_ref, beta_ref,
                  o_ref, acc_ref, *, eps, approx_gelu, ffn_chunk, n_chunks):
    # x_ref: (TM, H) f32; w1_ref: (H, FFN) bf16; w2_ref: (FFN, H) bf16.
    # acc_ref: (TM, H) f32 VMEM scratch accumulator.
    x_f32 = x_ref[...]                       # keep f32 copy for residual + LN
    x_mxu = x_f32.astype(jnp.bfloat16)       # MXU operand (bf16 in, f32 acc)
    gelu = _gelu_tanh if approx_gelu else _gelu_exact

    acc_ref[...] = jnp.zeros_like(acc_ref)

    def chunk_body(c, carry):
        # Interleave dot1 / GELU / dot2 over ffn chunks so the activation's
        # VPU/EUP work overlaps with MXU pushes of the next chunk.
        off = pl.multiple_of(c * ffn_chunk, ffn_chunk)
        h = jnp.dot(x_mxu, w1_ref[:, pl.ds(off, ffn_chunk)],
                    preferred_element_type=jnp.float32)
        h = gelu(h + b1_ref[:, pl.ds(off, ffn_chunk)])
        acc_ref[...] += jnp.dot(h.astype(jnp.bfloat16),
                                w2_ref[pl.ds(off, ffn_chunk), :],
                                preferred_element_type=jnp.float32)
        return carry

    jax.lax.fori_loop(0, n_chunks, chunk_body, 0, unroll=True)

    # dense2 bias + residual
    y = acc_ref[...] + b2_ref[...] + x_f32

    # LayerNorm over last dim (biased variance, like torch.nn.LayerNorm),
    # with fused statistics: one pass gives E[y] and E[y^2].
    inv_h = jnp.float32(1.0 / y.shape[-1])
    mu = jnp.sum(y, axis=-1, keepdims=True) * inv_h
    msq = jnp.sum(y * y, axis=-1, keepdims=True) * inv_h
    var = msq - mu * mu
    inv = jax.lax.rsqrt(var + jnp.float32(eps))
    o_ref[...] = ((y - mu) * inv * g_ref[...] + beta_ref[...]).astype(o_ref.dtype)


def _round_up(n, m):
    return ((n + m - 1) // m) * m


def _choose_tile_m(rows, max_tile=256, min_steps=4):
    """Pick a row tile: enough grid steps for megacore/pipelining, bounded
    zero-pad waste, and as large a tile as those constraints allow."""
    cands = [t for t in (256, 128, 64, 32, 16, 8) if t <= max_tile]
    min_steps = min(min_steps, max(1, -(-rows // 8)))  # best achievable w/ tm=8

    def stats(tm):
        rows_p = _round_up(rows, tm)
        return rows_p // tm, rows_p - rows

    ok = [t for t in cands if stats(t)[0] >= min_steps]
    pool = ok if ok else cands
    good = [t for t in pool if stats(t)[1] * 4 <= rows]   # pad waste <= 25%
    if good:
        return max(good)
    return min(pool, key=lambda t: (_round_up(rows, t), -t))


def _choose_ffn_chunk(ffn, target=512):
    """Largest 128-multiple divisor of ffn that is <= target (or ffn itself)."""
    if ffn <= target or ffn % 128 != 0:
        return ffn
    for c in range(target, 127, -128):
        if ffn % c == 0:
            return c
    return ffn


def _const_spec_kwargs():
    """Narrow feature probe for BlockSpec(pipeline_mode=pl.Buffered(1))."""
    try:
        pl.BlockSpec((8, 128), lambda i: (0, 0),
                     pipeline_mode=pl.Buffered(buffer_count=1))
        return dict(pipeline_mode=pl.Buffered(buffer_count=1))
    except (AttributeError, TypeError):
        return {}


def _derive_vmem_limit(tile_m, hidden, ffn, ffn_chunk, const_bufs):
    """VMEM limit from actual shapes + headroom (clamped to v7x-safe 64 MiB)."""
    bf16, f32 = 2, 4
    weights = (hidden * ffn + ffn * hidden) * bf16 * const_bufs
    biases = (ffn + 3 * hidden) * f32 * const_bufs
    io = (2 * tile_m * hidden * f32) * 2            # x in + y out, double-buffered
    acc = tile_m * hidden * f32                     # f32 accumulator scratch
    tmp = tile_m * ffn_chunk * (f32 + bf16) * 2     # live h-chunk temporaries
    need = weights + biases + io + acc + tmp
    limit = int(need * 1.5) + (4 << 20)             # 50% headroom + 4 MiB slack
    return min(max(limit, 16 << 20), 64 << 20)


def pt_simple_model_forward(x, w1, b1, w2, b2, gamma, beta, *, eps=1e-5,
                            tile_m=None, ffn_chunk=None, approx_gelu=True):
    """x: (rows, hidden) f32.  w1: (hidden, 4*hidden), w2: (4*hidden, hidden)
    stored [in, out] (transposed from torch's [out, in]), ideally bf16.
    Contract: weights run through the MXU as bf16 (f32 accumulation), so the
    result differs from a pure-f32 torch module at the ~1e-3 level."""
    rows, hidden = x.shape
    ffn = w1.shape[1]

    if tile_m is None:
        tile_m = _choose_tile_m(rows)
    tile_m = max(8, min(tile_m, _round_up(rows, 8)))
    rows_p = _round_up(rows, tile_m)
    if rows_p != rows:
        x = jnp.pad(x, ((0, rows_p - rows), (0, 0)))

    if ffn_chunk is None:
        ffn_chunk = _choose_ffn_chunk(ffn)
    if ffn % ffn_chunk != 0:
        ffn_chunk = ffn
    n_chunks = ffn // ffn_chunk

    grid = (rows_p // tile_m,)
    kernel = functools.partial(mlp_ln_kernel, eps=eps, approx_gelu=approx_gelu,
                               ffn_chunk=ffn_chunk, n_chunks=n_chunks)

    const_kw = _const_spec_kwargs()
    const_bufs = 1 if const_kw else 2

    def const(shape):
        # Constant-index operand: resident across the whole grid; single-buffer
        # when the BlockSpec pipeline_mode kwarg is available.
        return pl.BlockSpec(shape, lambda i: (0, 0), **const_kw)

    vmem_limit = _derive_vmem_limit(tile_m, hidden, ffn, ffn_chunk, const_bufs)

    out = pl.pallas_call(
        kernel,
        out_shape=jax.ShapeDtypeStruct((rows_p, hidden), x.dtype),
        grid_spec=pltpu.PrefetchScalarGridSpec(
            num_scalar_prefetch=0,
            grid=grid,
            in_specs=[
                pl.BlockSpec((tile_m, hidden), lambda i: (i, 0)),  # x row tile
                const((hidden, ffn)),     # W1 (resident, bf16)
                const((1, ffn)),          # b1
                const((ffn, hidden)),     # W2 (resident, bf16)
                const((1, hidden)),       # b2
                const((1, hidden)),       # gamma
                const((1, hidden)),       # beta
            ],
            out_specs=pl.BlockSpec((tile_m, hidden), lambda i: (i, 0)),
            scratch_shapes=[pltpu.VMEM((tile_m, hidden), jnp.float32)],
        ),
        compiler_params=pltpu.CompilerParams(
            dimension_semantics=("parallel",),
            vmem_limit_bytes=vmem_limit,
        ),
    )(x, w1, b1, w2, b2, gamma, beta)

    return out[:rows] if rows_p != rows else out


if __name__ == "__main__":
    hidden = 512
    batch, seq = 2, 8                      # rows = 16 -> tile_m=8, grid=(2,)
    rows = batch * seq

    key = jax.random.PRNGKey(0)
    k_x, k_w1, k_b1, k_w2, k_b2 = jax.random.split(key, 5)

    # Deterministic synthetic parameters (shapes per torch module __init__).
    x = jax.random.normal(k_x, (batch, seq, hidden), dtype=jnp.float32)
    # torch stores Linear weight as [out, in]; we keep the transposed [in, out]
    # layout and convert weights to bf16 once at parameter setup (MXU dtype).
    w1_f32 = 0.02 * jax.random.normal(k_w1, (hidden, 4 * hidden), jnp.float32)
    b1 = 0.02 * jax.random.normal(k_b1, (1, 4 * hidden), jnp.float32)
    w2_f32 = 0.02 * jax.random.normal(k_w2, (4 * hidden, hidden), jnp.float32)
    b2 = 0.02 * jax.random.normal(k_b2, (1, hidden), jnp.float32)
    gamma = jnp.ones((1, hidden), jnp.float32)    # torch LayerNorm default init
    beta = jnp.zeros((1, hidden), jnp.float32)
    w1 = w1_f32.astype(jnp.bfloat16)
    w2 = w2_f32.astype(jnp.bfloat16)

    x2d = x.reshape(rows, hidden)

    # Performance default: tanh GELU (EUP).
    out_tanh = pt_simple_model_forward(x2d, w1, b1, w2, b2, gamma, beta,
                                       eps=1e-5, approx_gelu=True)
    # Exact-erf path (torch's default GELU numerics) stays selectable.
    out_erf = pt_simple_model_forward(x2d, w1, b1, w2, b2, gamma, beta,
                                      eps=1e-5, approx_gelu=False)
    jax.block_until_ready((out_tanh, out_erf))

    # Reference: same math as the kernel (bf16 weights, f32 accumulation).
    def ref_bf16(x2d, gelu):
        xb = x2d.astype(jnp.bfloat16)
        h = jnp.dot(xb, w1, preferred_element_type=jnp.float32) + b1
        h = gelu(h)
        y = jnp.dot(h.astype(jnp.bfloat16), w2,
                    preferred_element_type=jnp.float32) + b2 + x2d
        mu = jnp.mean(y, -1, keepdims=True)
        var = jnp.mean((y - mu) ** 2, -1, keepdims=True)
        return (y - mu) * jax.lax.rsqrt(var + 1e-5) * gamma + beta

    # Reference: full-f32 torch-module semantics (exact erf GELU).
    def ref_f32(x2d):
        h = _gelu_exact(x2d @ w1_f32 + b1)
        y = h @ w2_f32 + b2 + x2d
        mu = jnp.mean(y, -1, keepdims=True)
        var = jnp.mean((y - mu) ** 2, -1, keepdims=True)
        return (y - mu) * jax.lax.rsqrt(var + 1e-5) * gamma + beta

    r_bf16_tanh = ref_bf16(x2d, _gelu_tanh)
    r_bf16_erf = ref_bf16(x2d, _gelu_exact)
    r_f32 = ref_f32(x2d)

    assert jnp.allclose(out_tanh, r_bf16_tanh, atol=2e-3, rtol=2e-3), \
        "tanh kernel mismatch vs bf16 reference"
    assert jnp.allclose(out_erf, r_bf16_erf, atol=2e-3, rtol=2e-3), \
        "erf kernel mismatch vs bf16 reference"
    assert jnp.allclose(out_tanh, r_f32, atol=5e-2, rtol=5e-2), \
        "tanh kernel mismatch vs f32 torch-semantics reference"
    assert jnp.allclose(out_erf, r_f32, atol=5e-2, rtol=5e-2), \
        "erf kernel mismatch vs f32 torch-semantics reference"

    print("KERNEL_OK")
</pallas_src>

<mosaic_0001>
module attributes {stable_mosaic.version = 11 : i64} {
  func.func @mlp_ln_kernel(%arg0: i32, %arg1: memref<8x512xf32, #tpu.memory_space<vmem>>, %arg2: memref<512x2048xbf16, #tpu.memory_space<vmem>>, %arg3: memref<1x2048xf32, #tpu.memory_space<vmem>>, %arg4: memref<2048x512xbf16, #tpu.memory_space<vmem>>, %arg5: memref<1x512xf32, #tpu.memory_space<vmem>>, %arg6: memref<1x512xf32, #tpu.memory_space<vmem>>, %arg7: memref<1x512xf32, #tpu.memory_space<vmem>>, %arg8: memref<8x512xf32, #tpu.memory_space<vmem>>, %arg9: memref<8x512xf32, #tpu.memory_space<vmem>>) attributes {dimension_semantics = [#tpu.dimension_semantics<parallel>], iteration_bounds = array<i64: 2>, scalar_prefetch = 0 : i64, scratch_operands = 1 : i64, tpu.core_type = #tpu.core_type<tc>, window_params = [{transform_indices = @transform_0, window_bounds = array<i64: 8, 512>}, {pipeline_mode = #tpu.pipeline_mode<synchronous>, transform_indices = @transform_1, window_bounds = array<i64: 512, 2048>}, {pipeline_mode = #tpu.pipeline_mode<synchronous>, transform_indices = @transform_2, window_bounds = array<i64: 1, 2048>}, {pipeline_mode = #tpu.pipeline_mode<synchronous>, transform_indices = @transform_3, window_bounds = array<i64: 2048, 512>}, {pipeline_mode = #tpu.pipeline_mode<synchronous>, transform_indices = @transform_4, window_bounds = array<i64: 1, 512>}, {pipeline_mode = #tpu.pipeline_mode<synchronous>, transform_indices = @transform_5, window_bounds = array<i64: 1, 512>}, {pipeline_mode = #tpu.pipeline_mode<synchronous>, transform_indices = @transform_6, window_bounds = array<i64: 1, 512>}, {transform_indices = @transform_7, window_bounds = array<i64: 8, 512>}]} {
    %c0 = arith.constant 0 : index
    %c0_0 = arith.constant 0 : index
    %0 = vector.load %arg1[%c0, %c0_0] : memref<8x512xf32, #tpu.memory_space<vmem>>, vector<8x512xf32>
    %1 = arith.truncf %0 : vector<8x512xf32> to vector<8x512xbf16>
    %cst = arith.constant 0.000000e+00 : f32
    %2 = vector.broadcast %cst : f32 to vector<8x512xf32>
    %c0_1 = arith.constant 0 : index
    %c0_2 = arith.constant 0 : index
    %3 = vector.load %arg9[%c0_1, %c0_2] : memref<8x512xf32, #tpu.memory_space<vmem>>, vector<8x512xf32>
    tpu.vector_store %arg9[%c0_1, %c0_2], %2 {strides = array<i32>} : memref<8x512xf32, #tpu.memory_space<vmem>>, vector<8x512xf32>,
    %c0_i32 = arith.constant 0 : i32
    %c512_i32 = arith.constant 512 : i32
    %4 = arith.muli %c0_i32, %c512_i32 : i32
    %5 = tpu.assume_multiple %4, 512 : i32
    %c0_3 = arith.constant 0 : index
    %6 = arith.index_cast %5 : i32 to index
    %7 = vector.load %arg2[%c0_3, %6] : memref<512x2048xbf16, #tpu.memory_space<vmem>>, vector<512x512xbf16>
    %cst_4 = arith.constant dense<0.000000e+00> : vector<8x512xf32>
    %8 = tpu.matmul %1, %7, %cst_4 {dimension_numbers = #tpu.dot_dimension_numbers<[1], [0], [0], [1], [0, 0, 1, 1], [], []>} : vector<8x512xbf16>, vector<512x512xbf16>, vector<8x512xf32> -> vector<8x512xf32>
    %c0_5 = arith.constant 0 : index
    %9 = arith.index_cast %5 : i32 to index
    %10 = vector.load %arg3[%c0_5, %9] : memref<1x2048xf32, #tpu.memory_space<vmem>>, vector<1x512xf32>
    %11 = vector.broadcast %10 : vector<1x512xf32> to vector<8x512xf32>
    %12 = arith.addf %8, %11 : vector<8x512xf32>
    %cst_6 = arith.constant 5.000000e-01 : f32
    %13 = vector.broadcast %cst_6 : f32 to vector<8x512xf32>
    %14 = arith.mulf %13, %12 : vector<8x512xf32>
    %cst_7 = arith.constant 4.471500e-02 : f32
    %15 = vector.broadcast %cst_7 : f32 to vector<8x512xf32>
    %16 = arith.mulf %15, %12 : vector<8x512xf32>
    %17 = arith.mulf %16, %12 : vector<8x512xf32>
    %18 = arith.mulf %17, %12 : vector<8x512xf32>
    %19 = arith.addf %12, %18 : vector<8x512xf32>
    %cst_8 = arith.constant 0.797884583 : f32
    %20 = vector.broadcast %cst_8 : f32 to vector<8x512xf32>
    %21 = arith.mulf %20, %19 : vector<8x512xf32>
    %22 = math.tanh %21 : vector<8x512xf32>
    %cst_9 = arith.constant 1.000000e+00 : f32
    %23 = vector.broadcast %cst_9 : f32 to vector<8x512xf32>
    %24 = arith.addf %23, %22 : vector<8x512xf32>
    %25 = arith.mulf %14, %24 : vector<8x512xf32>
    %c0_10 = arith.constant 0 : index
    %c0_11 = arith.constant 0 : index
    %26 = vector.load %arg9[%c0_10, %c0_11] : memref<8x512xf32, #tpu.memory_space<vmem>>, vector<8x512xf32>
    %27 = arith.truncf %25 : vector<8x512xf32> to vector<8x512xbf16>
    %28 = arith.index_cast %5 : i32 to index
    %c0_12 = arith.constant 0 : index
    %29 = vector.load %arg4[%28, %c0_12] : memref<2048x512xbf16, #tpu.memory_space<vmem>>, vector<512x512xbf16>
    %cst_13 = arith.constant dense<0.000000e+00> : vector<8x512xf32>
    %30 = tpu.matmul %27, %29, %cst_13 {dimension_numbers = #tpu.dot_dimension_numbers<[1], [0], [0], [1], [0, 0, 1, 1], [], []>} : vector<8x512xbf16>, vector<512x512xbf16>, vector<8x512xf32> -> vector<8x512xf32>
    %31 = arith.addf %26, %30 : vector<8x512xf32>
    %c0_14 = arith.constant 0 : index
    %c0_15 = arith.constant 0 : index
    %32 = vector.load %arg9[%c0_14, %c0_15] : memref<8x512xf32, #tpu.memory_space<vmem>>, vector<8x512xf32>
    tpu.vector_store %arg9[%c0_14, %c0_15], %31 {strides = array<i32>} : memref<8x512xf32, #tpu.memory_space<vmem>>, vector<8x512xf32>,
    %c1_i32 = arith.constant 1 : i32
    %c512_i32_16 = arith.constant 512 : i32
    %33 = arith.muli %c1_i32, %c512_i32_16 : i32
    %34 = tpu.assume_multiple %33, 512 : i32
    %c0_17 = arith.constant 0 : index
    %35 = arith.index_cast %34 : i32 to index
    %36 = vector.load %arg2[%c0_17, %35] : memref<512x2048xbf16, #tpu.memory_space<vmem>>, vector<512x512xbf16>
    %cst_18 = arith.constant dense<0.000000e+00> : vector<8x512xf32>
    %37 = tpu.matmul %1, %36, %cst_18 {dimension_numbers = #tpu.dot_dimension_numbers<[1], [0], [0], [1], [0, 0, 1, 1], [], []>} : vector<8x512xbf16>, vector<512x512xbf16>, vector<8x512xf32> -> vector<8x512xf32>
    %c0_19 = arith.constant 0 : index
    %38 = arith.index_cast %34 : i32 to index
    %39 = vector.load %arg3[%c0_19, %38] : memref<1x2048xf32, #tpu.memory_space<vmem>>, vector<1x512xf32>
    %40 = vector.broadcast %39 : vector<1x512xf32> to vector<8x512xf32>
    %41 = arith.addf %37, %40 : vector<8x512xf32>
    %cst_20 = arith.constant 5.000000e-01 : f32
    %42 = vector.broadcast %cst_20 : f32 to vector<8x512xf32>
    %43 = arith.mulf %42, %41 : vector<8x512xf32>
    %cst_21 = arith.constant 4.471500e-02 : f32
    %44 = vector.broadcast %cst_21 : f32 to vector<8x512xf32>
    %45 = arith.mulf %44, %41 : vector<8x512xf32>
    %46 = arith.mulf %45, %41 : vector<8x512xf32>
    %47 = arith.mulf %46, %41 : vector<8x512xf32>
    %48 = arith.addf %41, %47 : vector<8x512xf32>
    %cst_22 = arith.constant 0.797884583 : f32
    %49 = vector.broadcast %cst_22 : f32 to vector<8x512xf32>
    %50 = arith.mulf %49, %48 : vector<8x512xf32>
    %51 = math.tanh %50 : vector<8x512xf32>
    %cst_23 = arith.constant 1.000000e+00 : f32
    %52 = vector.broadcast %cst_23 : f32 to vector<8x512xf32>
    %53 = arith.addf %52, %51 : vector<8x512xf32>
    %54 = arith.mulf %43, %53 : vector<8x512xf32>
    %c0_24 = arith.constant 0 : index
    %c0_25 = arith.constant 0 : index
    %55 = vector.load %arg9[%c0_24, %c0_25] : memref<8x512xf32, #tpu.memory_space<vmem>>, vector<8x512xf32>
    %56 = arith.truncf %54 : vector<8x512xf32> to vector<8x512xbf16>
    %57 = arith.index_cast %34 : i32 to index
    %c0_26 = arith.constant 0 : index
    %58 = vector.load %arg4[%57, %c0_26] : memref<2048x512xbf16, #tpu.memory_space<vmem>>, vector<512x512xbf16>
    %cst_27 = arith.constant dense<0.000000e+00> : vector<8x512xf32>
    %59 = tpu.matmul %56, %58, %cst_27 {dimension_numbers = #tpu.dot_dimension_numbers<[1], [0], [0], [1], [0, 0, 1, 1], [], []>} : vector<8x512xbf16>, vector<512x512xbf16>, vector<8x512xf32> -> vector<8x512xf32>
    %60 = arith.addf %55, %59 : vector<8x512xf32>
    %c0_28 = arith.constant 0 : index
    %c0_29 = arith.constant 0 : index
    %61 = vector.load %arg9[%c0_28, %c0_29] : memref<8x512xf32, #tpu.memory_space<vmem>>, vector<8x512xf32>
    tpu.vector_store %arg9[%c0_28, %c0_29], %60 {strides = array<i32>} : memref<8x512xf32, #tpu.memory_space<vmem>>, vector<8x512xf32>,
    %c2_i32 = arith.constant 2 : i32
    %c512_i32_30 = arith.constant 512 : i32
    %62 = arith.muli %c2_i32, %c512_i32_30 : i32
    %63 = tpu.assume_multiple %62, 512 : i32
    %c0_31 = arith.constant 0 : index
    %64 = arith.index_cast %63 : i32 to index
    %65 = vector.load %arg2[%c0_31, %64] : memref<512x2048xbf16, #tpu.memory_space<vmem>>, vector<512x512xbf16>
    %cst_32 = arith.constant dense<0.000000e+00> : vector<8x512xf32>
    %66 = tpu.matmul %1, %65, %cst_32 {dimension_numbers = #tpu.dot_dimension_numbers<[1], [0], [0], [1], [0, 0, 1, 1], [], []>} : vector<8x512xbf16>, vector<512x512xbf16>, vector<8x512xf32> -> vector<8x512xf32>
    %c0_33 = arith.constant 0 : index
    %67 = arith.index_cast %63 : i32 to index
    %68 = vector.load %arg3[%c0_33, %67] : memref<1x2048xf32, #tpu.memory_space<vmem>>, vector<1x512xf32>
    %69 = vector.broadcast %68 : vector<1x512xf32> to vector<8x512xf32>
    %70 = arith.addf %66, %69 : vector<8x512xf32>
    %cst_34 = arith.constant 5.000000e-01 : f32
    %71 = vector.broadcast %cst_34 : f32 to vector<8x512xf32>
    %72 = arith.mulf %71, %70 : vector<8x512xf32>
    %cst_35 = arith.constant 4.471500e-02 : f32
    %73 = vector.broadcast %cst_35 : f32 to vector<8x512xf32>
    %74 = arith.mulf %73, %70 : vector<8x512xf32>
    %75 = arith.mulf %74, %70 : vector<8x512xf32>
    %76 = arith.mulf %75, %70 : vector<8x512xf32>
    %77 = arith.addf %70, %76 : vector<8x512xf32>
    %cst_36 = arith.constant 0.797884583 : f32
    %78 = vector.broadcast %cst_36 : f32 to vector<8x512xf32>
    %79 = arith.mulf %78, %77 : vector<8x512xf32>
    %80 = math.tanh %79 : vector<8x512xf32>
    %cst_37 = arith.constant 1.000000e+00 : f32
    %81 = vector.broadcast %cst_37 : f32 to vector<8x512xf32>
    %82 = arith.addf %81, %80 : vector<8x512xf32>
    %83 = arith.mulf %72, %82 : vector<8x512xf32>
    %c0_38 = arith.constant 0 : index
    %c0_39 = arith.constant 0 : index
    %84 = vector.load %arg9[%c0_38, %c0_39] : memref<8x512xf32, #tpu.memory_space<vmem>>, vector<8x512xf32>
    %85 = arith.truncf %83 : vector<8x512xf32> to vector<8x512xbf16>
    %86 = arith.index_cast %63 : i32 to index
    %c0_40 = arith.constant 0 : index
    %87 = vector.load %arg4[%86, %c0_40] : memref<2048x512xbf16, #tpu.memory_space<vmem>>, vector<512x512xbf16>
    %cst_41 = arith.constant dense<0.000000e+00> : vector<8x512xf32>
    %88 = tpu.matmul %85, %87, %cst_41 {dimension_numbers = #tpu.dot_dimension_numbers<[1], [0], [0], [1], [0, 0, 1, 1], [], []>} : vector<8x512xbf16>, vector<512x512xbf16>, vector<8x512xf32> -> vector<8x512xf32>
    %89 = arith.addf %84, %88 : vector<8x512xf32>
    %c0_42 = arith.constant 0 : index
    %c0_43 = arith.constant 0 : index
    %90 = vector.load %arg9[%c0_42, %c0_43] : memref<8x512xf32, #tpu.memory_space<vmem>>, vector<8x512xf32>
    tpu.vector_store %arg9[%c0_42, %c0_43], %89 {strides = array<i32>} : memref<8x512xf32, #tpu.memory_space<vmem>>, vector<8x512xf32>,
    %c3_i32 = arith.constant 3 : i32
    %c512_i32_44 = arith.constant 512 : i32
    %91 = arith.muli %c3_i32, %c512_i32_44 : i32
    %92 = tpu.assume_multiple %91, 512 : i32
    %c0_45 = arith.constant 0 : index
    %93 = arith.index_cast %92 : i32 to index
    %94 = vector.load %arg2[%c0_45, %93] : memref<512x2048xbf16, #tpu.memory_space<vmem>>, vector<512x512xbf16>
    %cst_46 = arith.constant dense<0.000000e+00> : vector<8x512xf32>
    %95 = tpu.matmul %1, %94, %cst_46 {dimension_numbers = #tpu.dot_dimension_numbers<[1], [0], [0], [1], [0, 0, 1, 1], [], []>} : vector<8x512xbf16>, vector<512x512xbf16>, vector<8x512xf32> -> vector<8x512xf32>
    %c0_47 = arith.constant 0 : index
    %96 = arith.index_cast %92 : i32 to index
    %97 = vector.load %arg3[%c0_47, %96] : memref<1x2048xf32, #tpu.memory_space<vmem>>, vector<1x512xf32>
    %98 = vector.broadcast %97 : vector<1x512xf32> to vector<8x512xf32>
    %99 = arith.addf %95, %98 : vector<8x512xf32>
    %cst_48 = arith.constant 5.000000e-01 : f32
    %100 = vector.broadcast %cst_48 : f32 to vector<8x512xf32>
    %101 = arith.mulf %100, %99 : vector<8x512xf32>
    %cst_49 = arith.constant 4.471500e-02 : f32
    %102 = vector.broadcast %cst_49 : f32 to vector<8x512xf32>
    %103 = arith.mulf %102, %99 : vector<8x512xf32>
    %104 = arith.mulf %103, %99 : vector<8x512xf32>
    %105 = arith.mulf %104, %99 : vector<8x512xf32>
    %106 = arith.addf %99, %105 : vector<8x512xf32>
    %cst_50 = arith.constant 0.797884583 : f32
    %107 = vector.broadcast %cst_50 : f32 to vector<8x512xf32>
    %108 = arith.mulf %107, %106 : vector<8x512xf32>
    %109 = math.tanh %108 : vector<8x512xf32>
    %cst_51 = arith.constant 1.000000e+00 : f32
    %110 = vector.broadcast %cst_51 : f32 to vector<8x512xf32>
    %111 = arith.addf %110, %109 : vector<8x512xf32>
    %112 = arith.mulf %101, %111 : vector<8x512xf32>
    %c0_52 = arith.constant 0 : index
    %c0_53 = arith.constant 0 : index
    %113 = vector.load %arg9[%c0_52, %c0_53] : memref<8x512xf32, #tpu.memory_space<vmem>>, vector<8x512xf32>
    %114 = arith.truncf %112 : vector<8x512xf32> to vector<8x512xbf16>
    %115 = arith.index_cast %92 : i32 to index
    %c0_54 = arith.constant 0 : index
    %116 = vector.load %arg4[%115, %c0_54] : memref<2048x512xbf16, #tpu.memory_space<vmem>>, vector<512x512xbf16>
    %cst_55 = arith.constant dense<0.000000e+00> : vector<8x512xf32>
    %117 = tpu.matmul %114, %116, %cst_55 {dimension_numbers = #tpu.dot_dimension_numbers<[1], [0], [0], [1], [0, 0, 1, 1], [], []>} : vector<8x512xbf16>, vector<512x512xbf16>, vector<8x512xf32> -> vector<8x512xf32>
    %118 = arith.addf %113, %117 : vector<8x512xf32>
    %c0_56 = arith.constant 0 : index
    %c0_57 = arith.constant 0 : index
    %119 = vector.load %arg9[%c0_56, %c0_57] : memref<8x512xf32, #tpu.memory_space<vmem>>, vector<8x512xf32>
    tpu.vector_store %arg9[%c0_56, %c0_57], %118 {strides = array<i32>} : memref<8x512xf32, #tpu.memory_space<vmem>>, vector<8x512xf32>,
    %c4_i32 = arith.constant 4 : i32
    %c0_58 = arith.constant 0 : index
    %c0_59 = arith.constant 0 : index
    %120 = vector.load %arg9[%c0_58, %c0_59] : memref<8x512xf32, #tpu.memory_space<vmem>>, vector<8x512xf32>
    %c0_60 = arith.constant 0 : index
    %c0_61 = arith.constant 0 : index
    %121 = vector.load %arg5[%c0_60, %c0_61] : memref<1x512xf32, #tpu.memory_space<vmem>>, vector<1x512xf32>
    %122 = vector.broadcast %121 : vector<1x512xf32> to vector<8x512xf32>
    %123 = arith.addf %120, %122 : vector<8x512xf32>
    %124 = arith.addf %123, %0 : vector<8x512xf32>
    %cst_62 = arith.constant dense<0.000000e+00> : vector<8xf32>
    %125 = vector.multi_reduction <add>, %124, %cst_62 [1] : vector<8x512xf32> to vector<8xf32>
    %126 = vector.shape_cast %125 : vector<8xf32> to vector<8x1xf32>
    %cst_63 = arith.constant 0.001953125 : f32
    %127 = vector.broadcast %cst_63 : f32 to vector<8x1xf32>
    %128 = arith.mulf %126, %127 : vector<8x1xf32>
    %129 = arith.mulf %124, %124 : vector<8x512xf32>
    %cst_64 = arith.constant dense<0.000000e+00> : vector<8xf32>
    %130 = vector.multi_reduction <add>, %129, %cst_64 [1] : vector<8x512xf32> to vector<8xf32>
    %131 = vector.shape_cast %130 : vector<8xf32> to vector<8x1xf32>
    %cst_65 = arith.constant 0.001953125 : f32
    %132 = vector.broadcast %cst_65 : f32 to vector<8x1xf32>
    %133 = arith.mulf %131, %132 : vector<8x1xf32>
    %134 = arith.mulf %128, %128 : vector<8x1xf32>
    %135 = arith.subf %133, %134 : vector<8x1xf32>
    %cst_66 = arith.constant 9.99999974E-6 : f32
    %136 = vector.broadcast %cst_66 : f32 to vector<8x1xf32>
    %137 = arith.addf %135, %136 : vector<8x1xf32>
    %138 = math.rsqrt %137 : vector<8x1xf32>
    %139 = vector.broadcast %128 : vector<8x1xf32> to vector<8x512xf32>
    %140 = arith.subf %124, %139 : vector<8x512xf32>
    %141 = vector.broadcast %138 : vector<8x1xf32> to vector<8x512xf32>
    %142 = arith.mulf %140, %141 : vector<8x512xf32>
    %c0_67 = arith.constant 0 : index
    %c0_68 = arith.constant 0 : index
    %143 = vector.load %arg6[%c0_67, %c0_68] : memref<1x512xf32, #tpu.memory_space<vmem>>, vector<1x512xf32>
    %144 = vector.broadcast %143 : vector<1x512xf32> to vector<8x512xf32>
    %145 = arith.mulf %142, %144 : vector<8x512xf32>
    %c0_69 = arith.constant 0 : index
    %c0_70 = arith.constant 0 : index
    %146 = vector.load %arg7[%c0_69, %c0_70] : memref<1x512xf32, #tpu.memory_space<vmem>>, vector<1x512xf32>
    %147 = vector.broadcast %146 : vector<1x512xf32> to vector<8x512xf32>
    %148 = arith.addf %145, %147 : vector<8x512xf32>
    %c0_71 = arith.constant 0 : index
    %c0_72 = arith.constant 0 : index
    %149 = vector.load %arg8[%c0_71, %c0_72] : memref<8x512xf32, #tpu.memory_space<vmem>>, vector<8x512xf32>
    tpu.vector_store %arg8[%c0_71, %c0_72], %148 {strides = array<i32>} : memref<8x512xf32, #tpu.memory_space<vmem>>, vector<8x512xf32>,
    return
  }
  func.func @transform_0(%arg0: i32) -> (i32, i32) {
    %c0_i32 = arith.constant 0 : i32
    %c0_i32_0 = arith.constant 0 : i32
    return %arg0, %c0_i32 : i32, i32
  }
  func.func @transform_1(%arg0: i32) -> (i32, i32) {
    %c0_i32 = arith.constant 0 : i32
    %c0_i32_0 = arith.constant 0 : i32
    %c0_i32_1 = arith.constant 0 : i32
    return %c0_i32, %c0_i32_0 : i32, i32
  }
  func.func @transform_2(%arg0: i32) -> (i32, i32) {
    %c0_i32 = arith.constant 0 : i32
    %c0_i32_0 = arith.constant 0 : i32
    %c0_i32_1 = arith.constant 0 : i32
    return %c0_i32, %c0_i32_0 : i32, i32
  }
  func.func @transform_3(%arg0: i32) -> (i32, i32) {
    %c0_i32 = arith.constant 0 : i32
    %c0_i32_0 = arith.constant 0 : i32
    %c0_i32_1 = arith.constant 0 : i32
    return %c0_i32, %c0_i32_0 : i32, i32
  }
  func.func @transform_4(%arg0: i32) -> (i32, i32) {
    %c0_i32 = arith.constant 0 : i32
    %c0_i32_0 = arith.constant 0 : i32
    %c0_i32_1 = arith.constant 0 : i32
    return %c0_i32, %c0_i32_0 : i32, i32
  }
  func.func @transform_5(%arg0: i32) -> (i32, i32) {
    %c0_i32 = arith.constant 0 : i32
    %c0_i32_0 = arith.constant 0 : i32
    %c0_i32_1 = arith.constant 0 : i32
    return %c0_i32, %c0_i32_0 : i32, i32
  }
  func.func @transform_6(%arg0: i32) -> (i32, i32) {
    %c0_i32 = arith.constant 0 : i32
    %c0_i32_0 = arith.constant 0 : i32
    %c0_i32_1 = arith.constant 0 : i32
    return %c0_i32, %c0_i32_0 : i32, i32
  }
  func.func @transform_7(%arg0: i32) -> (i32, i32) {
    %c0_i32 = arith.constant 0 : i32
    %c0_i32_0 = arith.constant 0 : i32
    return %arg0, %c0_i32 : i32, i32
  }
}

</mosaic_0001>

<llo_original>
// kernel: tpu_custom_call.1
$region0: #{tpu_custom_call.1}
  #allocation0 [shape = 'u32[]', space=smem, size = 0x4, offset = 0x4, fixed_abs, tag = 'smem constant byte address 0x4 - core index']
  #allocation1 [shape = 'u32[144,128]{1,0:T(1,128)}', space=vmem, size = 0x12000, scoped, tag = 'internal scratch']
  #allocation2 [shape = 'f32[8,512]{1,0:T(8,128)}', space=vmem, size = 0x4000, scoped, tag = 'scratch operand']
  %s0 = inlined_call_operand.hbm [shape: f32[16,512], index: 0, kind: input, shape index: {}]
  %s1 = inlined_call_operand.hbm [shape: bf16[512,2048], index: 1, kind: input, shape index: {}]
  %s2 = inlined_call_operand.hbm [shape: f32[1,2048], index: 2, kind: input, shape index: {}]
  %s3 = inlined_call_operand.hbm [shape: bf16[2048,512], index: 3, kind: input, shape index: {}]
  %s4 = inlined_call_operand.hbm [shape: f32[1,512], index: 4, kind: input, shape index: {}]
  %s5 = inlined_call_operand.hbm [shape: f32[1,512], index: 5, kind: input, shape index: {}]
  %s6 = inlined_call_operand.hbm [shape: f32[1,512], index: 6, kind: input, shape index: {}]
  %s7 = inlined_call_operand.hbm [shape: f32[16,512], index: 7, kind: output, shape index: {}]
  %s8 = sld [smem:[#allocation0]]
  $region89: #{tpu_custom_call.1} parent=0
    _
  %s10 = ssub.s32 1, %s8
  %s11 = scalar_select 0, %s10, %s8
  $region1: #{tpu_custom_call.1} parent=0
    #allocation3 [shape = 'u8[32768]{0}', space=vmem, size = 0x8000, scoped, tag = 'input window, operand 0']
    #allocation4 [shape = 's32[2]{0}', space=sflag, size = 0x8, scoped, tag = 'scoped memory for tpu_custom_call.1']
    #allocation5 [shape = 's32[2]{0}', space=sflag, size = 0x8, scoped, tag = 'scoped memory for tpu_custom_call.1']
    #allocation6 [shape = 'u8[2097152]{0}', space=vmem, size = 0x200000, scoped, tag = 'input window, operand 1, single buffered']
    #allocation7 [shape = 's32[1]{0}', space=sflag, size = 0x4, scoped, tag = 'scoped memory for tpu_custom_call.1']
    #allocation8 [shape = 'u8[8192]{0}', space=vmem, size = 0x2000, scoped, tag = 'input window, operand 2, single buffered']
    #allocation9 [shape = 'u8[2097152]{0}', space=vmem, size = 0x200000, scoped, tag = 'input window, operand 3, single buffered']
    #allocation10 [shape = 's32[1]{0}', space=sflag, size = 0x4, scoped, tag = 'scoped memory for tpu_custom_call.1']
    #allocation11 [shape = 'u8[2048]{0}', space=vmem, size = 0x800, scoped, tag = 'input window, operand 4, single buffered']
    #allocation12 [shape = 'u8[2048]{0}', space=vmem, size = 0x800, scoped, tag = 'input window, operand 5, single buffered']
    #allocation13 [shape = 's32[1]{0}', space=sflag, size = 0x4, scoped, tag = 'scoped memory for tpu_custom_call.1']
    #allocation14 [shape = 'u8[2048]{0}', space=vmem, size = 0x800, scoped, tag = 'input window, operand 6, single buffered']
    #allocation15 [shape = 'u8[32768]{0}', space=vmem, size = 0x8000, scoped, tag = 'output window, operand 0']
    %12 = vsyncpa [#allocation4], 0
    %s13 = scalar_lea.sflag [#allocation4], 1
    %14 = vsyncpa %s13, 0
    %15 = vsyncpa [#allocation7], 0
    %16 = vsyncpa [#allocation10], 0
    %17 = vsyncpa [#allocation13], 0
    %18 = vsyncpa [#allocation5], 0
    %s19 = scalar_lea.sflag [#allocation5], 1
    %20 = vsyncpa %s19, 0
    loop: start=0, step=1, limit=4
    $region2: #{tpu_custom_call.1} parent=1 // loop_pre_header
      _
    $region3: #{tpu_custom_call.1} parent=1 // loop_header
      %s22 = sphi 0, %s26
      %p23 = scmp.ge.s32.totalorder %s22, 4
      %s32 = sphi 0, %s34
      %s35 = sphi 0, %s32
      %s36 = sphi 0, %s35
      %s52 = sphi 0, %s36
      %s56 = sphi 0, %s56
      %s58 = sphi 0, %s56
      %s59 = sphi 0, %s58
      %s73 = sphi 0, %s59
      %s77 = sphi 0, %s77
      %s79 = sphi 0, %s77
      %s80 = sphi 0, %s79
      %s94 = sphi 0, %s80
      %s98 = sphi 0, %s98
      %s100 = sphi 0, %s98
      %s101 = sphi 0, %s100
      %s115 = sphi 0, %s101
      %s119 = sphi 0, %s119
      %s121 = sphi 0, %s119
      %s122 = sphi 0, %s121
      %s136 = sphi 0, %s122
      %s140 = sphi 0, %s140
      %s142 = sphi 0, %s140
      %s143 = sphi 0, %s142
      %s157 = sphi 0, %s143
      %s161 = sphi 0, %s161
      %s163 = sphi 0, %s161
      %s164 = sphi 0, %s163
      %s178 = sphi 0, %s164
      %s184 = sphi 0, %s186
      %s187 = sphi 0, %s184
      %s188 = sphi 0, %s187
      %s204 = sphi 0, %s188
    $region4: #{tpu_custom_call.1} parent=1 // loop_header_branch
      %25 = sbr.rel (%p23) target = $region8
    $region5: #{tpu_custom_call.1} parent=1 // loop_body
      %s27 = ssub.s32 %s22, 1
      %s28 = ssub.s32 %s22, 2
      %s29 = sadd.s32 %s22, 1
      %s30 = ssub.s32 %s22, %s29
      %p31 = scmp.eq.s32.totalorder %s30, 0
      %s33 = sadd.s32 %s32, 1
      %s34 = scalar_select %p31, %s32, %s33
      %p37 = pneg %p31
      %p38 = scmp.eq.s32.totalorder %s22, 1
      %p39 = por %p37, %p38
      %p40 = scmp.ne.s32.totalorder %s32, %s35
      %p41 = scmp.eq.s32.totalorder %s22, 0
      %p42 = por %p40, %p41
      %p43 = scmp.ne.s32.totalorder %s32, %s35
      %p44 = scmp.eq.s32.totalorder %s27, 1
      %p45 = por %p43, %p44
      %p46 = scmp.ne.s32.totalorder %s35, %s36
      %p47 = scmp.eq.s32.totalorder %s27, 0
      %p48 = por %p46, %p47
      %p49 = scmp.ne.s32.totalorder %s35, %s36
      %p50 = scmp.eq.s32.totalorder %s28, 1
      %p51 = por %p49, %p50
      %p53 = scmp.ne.s32.totalorder %s36, %s52
      %p54 = scmp.eq.s32.totalorder %s28, 0
      %p55 = por %p53, %p54
      %s57 = sadd.s32 %s56, 1
      %p60 = scmp.eq.s32.totalorder %s22, 1
      %p61 = scmp.ne.s32.totalorder %s56, %s58
      %p62 = scmp.eq.s32.totalorder %s22, 0
      %p63 = por %p61, %p62
      %p64 = scmp.ne.s32.totalorder %s56, %s58
      %p65 = scmp.eq.s32.totalorder %s27, 1
      %p66 = por %p64, %p65
      %p67 = scmp.ne.s32.totalorder %s58, %s59
      %p68 = scmp.eq.s32.totalorder %s27, 0
      %p69 = por %p67, %p68
      %p70 = scmp.ne.s32.totalorder %s58, %s59
      %p71 = scmp.eq.s32.totalorder %s28, 1
      %p72 = por %p70, %p71
      %p74 = scmp.ne.s32.totalorder %s59, %s73
      %p75 = scmp.eq.s32.totalorder %s28, 0
      %p76 = por %p74, %p75
      %s78 = sadd.s32 %s77, 1
      %p81 = scmp.eq.s32.totalorder %s22, 1
      %p82 = scmp.ne.s32.totalorder %s77, %s79
      %p83 = scmp.eq.s32.totalorder %s22, 0
      %p84 = por %p82, %p83
      %p85 = scmp.ne.s32.totalorder %s77, %s79
      %p86 = scmp.eq.s32.totalorder %s27, 1
      %p87 = por %p85, %p86
      %p88 = scmp.ne.s32.totalorder %s79, %s80
      %p89 = scmp.eq.s32.totalorder %s27, 0
      %p90 = por %p88, %p89
      %p91 = scmp.ne.s32.totalorder %s79, %s80
      %p92 = scmp.eq.s32.totalorder %s28, 1
      %p93 = por %p91, %p92
      %p95 = scmp.ne.s32.totalorder %s80, %s94
      %p96 = scmp.eq.s32.totalorder %s28, 0
      %p97 = por %p95, %p96
      %s99 = sadd.s32 %s98, 1
      %p102 = scmp.eq.s32.totalorder %s22, 1
      %p103 = scmp.ne.s32.totalorder %s98, %s100
      %p104 = scmp.eq.s32.totalorder %s22, 0
      %p105 = por %p103, %p104
      %p106 = scmp.ne.s32.totalorder %s98, %s100
      %p107 = scmp.eq.s32.totalorder %s27, 1
      %p108 = por %p106, %p107
      %p109 = scmp.ne.s32.totalorder %s100, %s101
      %p110 = scmp.eq.s32.totalorder %s27, 0
      %p111 = por %p109, %p110
      %p112 = scmp.ne.s32.totalorder %s100, %s101
      %p113 = scmp.eq.s32.totalorder %s28, 1
      %p114 = por %p112, %p113
      %p116 = scmp.ne.s32.totalorder %s101, %s115
      %p117 = scmp.eq.s32.totalorder %s28, 0
      %p118 = por %p116, %p117
      %s120 = sadd.s32 %s119, 1
      %p123 = scmp.eq.s32.totalorder %s22, 1
      %p124 = scmp.ne.s32.totalorder %s119, %s121
      %p125 = scmp.eq.s32.totalorder %s22, 0
      %p126 = por %p124, %p125
      %p127 = scmp.ne.s32.totalorder %s119, %s121
      %p128 = scmp.eq.s32.totalorder %s27, 1
      %p129 = por %p127, %p128
      %p130 = scmp.ne.s32.totalorder %s121, %s122
      %p131 = scmp.eq.s32.totalorder %s27, 0
      %p132 = por %p130, %p131
      %p133 = scmp.ne.s32.totalorder %s121, %s122
      %p134 = scmp.eq.s32.totalorder %s28, 1
      %p135 = por %p133, %p134
      %p137 = scmp.ne.s32.totalorder %s122, %s136
      %p138 = scmp.eq.s32.totalorder %s28, 0
      %p139 = por %p137, %p138
      %s141 = sadd.s32 %s140, 1
      %p144 = scmp.eq.s32.totalorder %s22, 1
      %p145 = scmp.ne.s32.totalorder %s140, %s142
      %p146 = scmp.eq.s32.totalorder %s22, 0
      %p147 = por %p145, %p146
      %p148 = scmp.ne.s32.totalorder %s140, %s142
      %p149 = scmp.eq.s32.totalorder %s27, 1
      %p150 = por %p148, %p149
      %p151 = scmp.ne.s32.totalorder %s142, %s143
      %p152 = scmp.eq.s32.totalorder %s27, 0
      %p153 = por %p151, %p152
      %p154 = scmp.ne.s32.totalorder %s142, %s143
      %p155 = scmp.eq.s32.totalorder %s28, 1
      %p156 = por %p154, %p155
      %p158 = scmp.ne.s32.totalorder %s143, %s157
      %p159 = scmp.eq.s32.totalorder %s28, 0
      %p160 = por %p158, %p159
      %s162 = sadd.s32 %s161, 1
      %p165 = scmp.eq.s32.totalorder %s22, 1
      %p166 = scmp.ne.s32.totalorder %s161, %s163
      %p167 = scmp.eq.s32.totalorder %s22, 0
      %p168 = por %p166, %p167
      %p169 = scmp.ne.s32.totalorder %s161, %s163
      %p170 = scmp.eq.s32.totalorder %s27, 1
      %p171 = por %p169, %p170
      %p172 = scmp.ne.s32.totalorder %s163, %s164
      %p173 = scmp.eq.s32.totalorder %s27, 0
      %p174 = por %p172, %p173
      %p175 = scmp.ne.s32.totalorder %s163, %s164
      %p176 = scmp.eq.s32.totalorder %s28, 1
      %p177 = por %p175, %p176
      %p179 = scmp.ne.s32.totalorder %s164, %s178
      %p180 = scmp.eq.s32.totalorder %s28, 0
      %p181 = por %p179, %p180
      %s182 = ssub.s32 %s22, %s29
      %p183 = scmp.eq.s32.totalorder %s182, 0
      %s185 = sadd.s32 %s184, 1
      %s186 = scalar_select %p183, %s184, %s185
      %p189 = pneg %p183
      %p190 = scmp.eq.s32.totalorder %s22, 1
      %p191 = por %p189, %p190
      %p192 = scmp.ne.s32.totalorder %s184, %s187
      %p193 = scmp.eq.s32.totalorder %s22, 0
      %p194 = por %p192, %p193
      %p195 = scmp.ne.s32.totalorder %s184, %s187
      %p196 = scmp.eq.s32.totalorder %s27, 1
      %p197 = por %p195, %p196
      %p198 = scmp.ne.s32.totalorder %s187, %s188
      %p199 = scmp.eq.s32.totalorder %s27, 0
      %p200 = por %p198, %p199
      %p201 = scmp.ne.s32.totalorder %s187, %s188
      %p202 = scmp.eq.s32.totalorder %s28, 1
      %p203 = por %p201, %p202
      %p205 = scmp.ne.s32.totalorder %s188, %s204
      %p206 = scmp.eq.s32.totalorder %s28, 0
      %p207 = por %p205, %p206
      %p208 = scmp.le.s32.totalorder 1, %s22
      %p209 = scmp.lt.s32.totalorder %s22, 3
      %p210 = pnand %p208, %p209
      %p211 = pneg %p210
      // Predicated region
      $region9: #{tpu_custom_call.1} parent=5 // pred_check
        _
      $region10: #{tpu_custom_call.1} parent=5 // pred_check_branch
        %213 = sbr.rel (%p210) target = $region12
      $region11: #{tpu_custom_call.1} parent=5 // pred_region
        %s214 = ssub.s32 %s22, 1
        // Predicated region
        $region13: #{tpu_custom_call.1} parent=11 // pred_check
          %p215 = pneg %p69
        $region14: #{tpu_custom_call.1} parent=11 // pred_check_branch
          %217 = sbr.rel (%p215) target = $region16
        $region15: #{tpu_custom_call.1} parent=11 // pred_region
          %s219 = ssub.s32 65536, 65536
          %220 = vsyncadd [#allocation7], %s219
          %s221 = sshll.u32 [#allocation6], 4
          %s222 = int_to_ptr.vmem [resolvable:$true] %s221
          %227 = dma.hbm_to_vmem [thread:$0]  %s1, 65536, %s222, [#allocation7], 1024, 1024, 64
        $region16: #{tpu_custom_call.1} parent=11 // pred_fallthru
          _
        // Predicated region
        $region17: #{tpu_custom_call.1} parent=11 // pred_check
          %p228 = pneg %p90
        $region18: #{tpu_custom_call.1} parent=11 // pred_check_branch
          %230 = sbr.rel (%p228) target = $region20
        $region19: #{tpu_custom_call.1} parent=11 // pred_region
          %s232 = ssub.s32 256, 256
          %233 = vsyncadd [#allocation7], %s232
          %s235 = sshll.u32 [#allocation8], 4
          %s236 = int_to_ptr.vmem [resolvable:$true] %s235
          %238 = dma.hbm_to_vmem [thread:$0]  %s2, 256, %s236, [#allocation7]
        $region20: #{tpu_custom_call.1} parent=11 // pred_fallthru
          _
        // Predicated region
        $region21: #{tpu_custom_call.1} parent=11 // pred_check
          %p239 = pneg %p111
        $region22: #{tpu_custom_call.1} parent=11 // pred_check_branch
          %241 = sbr.rel (%p239) target = $region24
        $region23: #{tpu_custom_call.1} parent=11 // pred_region
          %s243 = ssub.s32 65536, 65536
          %244 = vsyncadd [#allocation10], %s243
          %s245 = sshll.u32 [#allocation9], 4
          %s246 = int_to_ptr.vmem [resolvable:$true] %s245
          %251 = dma.hbm_to_vmem [thread:$0]  %s3, 65536, %s246, [#allocation10], 256, 256, 16
        $region24: #{tpu_custom_call.1} parent=11 // pred_fallthru
          _
        // Predicated region
        $region25: #{tpu_custom_call.1} parent=11 // pred_check
          %p252 = pneg %p132
        $region26: #{tpu_custom_call.1} parent=11 // pred_check_branch
          %254 = sbr.rel (%p252) target = $region28
        $region27: #{tpu_custom_call.1} parent=11 // pred_region
          %s256 = ssub.s32 64, 64
          %257 = vsyncadd [#allocation10], %s256
          %s259 = sshll.u32 [#allocation11], 4
          %s260 = int_to_ptr.vmem [resolvable:$true] %s259
          %262 = dma.hbm_to_vmem [thread:$0]  %s4, 64, %s260, [#allocation10]
        $region28: #{tpu_custom_call.1} parent=11 // pred_fallthru
          _
        // Predicated region
        $region29: #{tpu_custom_call.1} parent=11 // pred_check
          %p263 = pneg %p153
        $region30: #{tpu_custom_call.1} parent=11 // pred_check_branch
          %265 = sbr.rel (%p263) target = $region32
        $region31: #{tpu_custom_call.1} parent=11 // pred_region
          %s267 = ssub.s32 64, 64
          %268 = vsyncadd [#allocation13], %s267
          %s270 = sshll.u32 [#allocation12], 4
          %s271 = int_to_ptr.vmem [resolvable:$true] %s270
          %273 = dma.hbm_to_vmem [thread:$0]  %s5, 64, %s271, [#allocation13]
        $region32: #{tpu_custom_call.1} parent=11 // pred_fallthru
          _
        // Predicated region
        $region33: #{tpu_custom_call.1} parent=11 // pred_check
          %p274 = pneg %p174
        $region34: #{tpu_custom_call.1} parent=11 // pred_check_branch
          %276 = sbr.rel (%p274) target = $region36
        $region35: #{tpu_custom_call.1} parent=11 // pred_region
          %s278 = ssub.s32 64, 64
          %279 = vsyncadd [#allocation13], %s278
          %s281 = sshll.u32 [#allocation14], 4
          %s282 = int_to_ptr.vmem [resolvable:$true] %s281
          %284 = dma.hbm_to_vmem [thread:$0]  %s6, 64, %s282, [#allocation13]
        $region36: #{tpu_custom_call.1} parent=11 // pred_fallthru
          _
      $region12: #{tpu_custom_call.1} parent=5 // pred_fallthru
        _
      %p285 = scmp.lt.s32.totalorder %s22, 2
      // Predicated region
      $region37: #{tpu_custom_call.1} parent=5 // pred_check
        %p286 = pneg %p285
      $region38: #{tpu_custom_call.1} parent=5 // pred_check_branch
        %288 = sbr.rel (%p286) target = $region40
      $region39: #{tpu_custom_call.1} parent=5 // pred_region
        // Predicated region
        $region41: #{tpu_custom_call.1} parent=39 // pred_check
          %p289 = pneg %p42
        $region42: #{tpu_custom_call.1} parent=39 // pred_check_branch
          %291 = sbr.rel (%p289) target = $region44
        $region43: #{tpu_custom_call.1} parent=39 // pred_region
          %s292 = sand.u32 %s32, 1
          %s293 = scalar_lea.sflag [#allocation4], %s292
          %s294 = sand.u32 %s32, 1
          %s295 = smul.addr %s294, 32
          %s296 = scalar_lea.vmem [#allocation3], %s295
          %s298 = ssub.s32 512, 512
          %299 = vsyncadd %s293, %s298
          %s300 = smul.addr %s22, 4
          %s301 = smul.addr %s300, 128
          %s302 = scalar_lea.hbm %s0, %s301
          %s304 = sshll.u32 %s296, 4
          %s305 = int_to_ptr.vmem [resolvable:$true] %s304
          %307 = dma.hbm_to_vmem [thread:$0]  %s302, 512, %s305, %s293
        $region44: #{tpu_custom_call.1} parent=39 // pred_fallthru
          _
      $region40: #{tpu_custom_call.1} parent=5 // pred_fallthru
        _
      %p308 = scmp.le.s32.totalorder 1, %s22
      %p309 = scmp.lt.s32.totalorder %s22, 3
      %p310 = pnand %p308, %p309
      %p311 = pneg %p310
      // Predicated region
      $region45: #{tpu_custom_call.1} parent=5 // pred_check
        _
      $region46: #{tpu_custom_call.1} parent=5 // pred_check_branch
        %313 = sbr.rel (%p310) target = $region48
      $region47: #{tpu_custom_call.1} parent=5 // pred_region
        %s314 = ssub.s32 %s22, 1
        %s315 = sand.u32 %s35, 1
        %s316 = scalar_lea.sflag [#allocation4], %s315
        %s317 = sand.u32 %s35, 1
        %s318 = smul.addr %s317, 32
        %s319 = scalar_lea.vmem [#allocation3], %s318
        // Predicated region
        $region49: #{tpu_custom_call.1} parent=47 // pred_check
          %p320 = pneg %p48
        $region50: #{tpu_custom_call.1} parent=47 // pred_check_branch
          %322 = sbr.rel (%p320) target = $region52
        $region51: #{tpu_custom_call.1} parent=47 // pred_region
          %323 = dma.done %s316, 512
        $region52: #{tpu_custom_call.1} parent=47 // pred_fallthru
          _
        // Predicated region
        $region53: #{tpu_custom_call.1} parent=47 // pred_check
          %p324 = pneg %p69
        $region54: #{tpu_custom_call.1} parent=47 // pred_check_branch
          %326 = sbr.rel (%p324) target = $region56
        $region55: #{tpu_custom_call.1} parent=47 // pred_region
          %327 = dma.done [#allocation7], 65536
        $region56: #{tpu_custom_call.1} parent=47 // pred_fallthru
          _
        // Predicated region
        $region57: #{tpu_custom_call.1} parent=47 // pred_check
          %p328 = pneg %p90
        $region58: #{tpu_custom_call.1} parent=47 // pred_check_branch
          %330 = sbr.rel (%p328) target = $region60
        $region59: #{tpu_custom_call.1} parent=47 // pred_region
          %331 = dma.done [#allocation7], 256
        $region60: #{tpu_custom_call.1} parent=47 // pred_fallthru
          _
        // Predicated region
        $region61: #{tpu_custom_call.1} parent=47 // pred_check
          %p332 = pneg %p111
        $region62: #{tpu_custom_call.1} parent=47 // pred_check_branch
          %334 = sbr.rel (%p332) target = $region64
        $region63: #{tpu_custom_call.1} parent=47 // pred_region
          %335 = dma.done [#allocation10], 65536
        $region64: #{tpu_custom_call.1} parent=47 // pred_fallthru
          _
        // Predicated region
        $region65: #{tpu_custom_call.1} parent=47 // pred_check
          %p336 = pneg %p132
        $region66: #{tpu_custom_call.1} parent=47 // pred_check_branch
          %338 = sbr.rel (%p336) target = $region68
        $region67: #{tpu_custom_call.1} parent=47 // pred_region
          %339 = dma.done [#allocation10], 64
        $region68: #{tpu_custom_call.1} parent=47 // pred_fallthru
          _
        // Predicated region
        $region69: #{tpu_custom_call.1} parent=47 // pred_check
          %p340 = pneg %p153
        $region70: #{tpu_custom_call.1} parent=47 // pred_check_branch
          %342 = sbr.rel (%p340) target = $region72
        $region71: #{tpu_custom_call.1} parent=47 // pred_region
          %343 = dma.done [#allocation13], 64
        $region72: #{tpu_custom_call.1} parent=47 // pred_fallthru
          _
        // Predicated region
        $region73: #{tpu_custom_call.1} parent=47 // pred_check
          %p344 = pneg %p174
        $region74: #{tpu_custom_call.1} parent=47 // pred_check_branch
          %346 = sbr.rel (%p344) target = $region76
        $region75: #{tpu_custom_call.1} parent=47 // pred_region
          %347 = dma.done [#allocation13], 64
        $region76: #{tpu_custom_call.1} parent=47 // pred_fallthru
          _
        %s348 = sand.u32 %s35, 1
        %s349 = scalar_lea.sflag [#allocation4], %s348
        %s350 = sand.u32 %s35, 1
        %s351 = smul.addr %s350, 32
        %s352 = scalar_lea.vmem [#allocation3], %s351
        %p353 = pneg %p48
        %p354 = pneg %p45
        %p355 = pneg %p69
        %p356 = pneg %p66
        %p357 = pneg %p90
        %p358 = pneg %p87
        %p359 = pneg %p111
        %p360 = pneg %p108
        %p361 = pneg %p132
        %p362 = pneg %p129
        %p363 = pneg %p153
        %p364 = pneg %p150
        %p365 = pneg %p174
        %p366 = pneg %p171
        %p367 = pneg %p200
        %p368 = pneg %p197
        %s369 = sand.u32 %s187, 1
        %s370 = scalar_lea.sflag [#allocation5], %s369
        %s371 = sand.u32 %s187, 1
        %s372 = smul.addr %s371, 32
        %s373 = scalar_lea.vmem [#allocation15], %s372
        %v374 = vld [vmem:[%s319] sm:$0xff]
        %v375 = vld [vmem:[%s319 + $0x8] sm:$0xff]
        %v376 = vld [vmem:[%s319 + $0x10] sm:$0xff]
        %v377 = vld [vmem:[%s319 + $0x18] sm:$0xff]
        %v378 = vpack.c.bf16 %v374, %v374
        %v379 = vpack.c.bf16 %v375, %v375
        %v380 = vpack.c.bf16 %v376, %v376
        %v381 = vpack.c.bf16 %v377, %v377
        %382 = vst [vmem:[#allocation2] sm:$0xff] 0.0
        %383 = vst [vmem:[#allocation2 + $0x8] sm:$0xff] 0.0
        %384 = vst [vmem:[#allocation2 + $0x10] sm:$0xff] 0.0
        %385 = vst [vmem:[#allocation2 + $0x18] sm:$0xff] 0.0
        %v386 = vld [vmem:[#allocation6] sm:$0xff]
        %v387 = vld [vmem:[#allocation6 + $0x8] sm:$0xff]
        %v388 = vld [vmem:[#allocation6 + $0x40] sm:$0xff]
        %v389 = vld [vmem:[#allocation6 + $0x48] sm:$0xff]
        %v390 = vld [vmem:[#allocation6 + $0x80] sm:$0xff]
        %v391 = vld [vmem:[#allocation6 + $0x88] sm:$0xff]
        %v392 = vld [vmem:[#allocation6 + $0xc0] sm:$0xff]
        %v393 = vld [vmem:[#allocation6 + $0xc8] sm:$0xff]
        %v394 = vld [vmem:[#allocation6 + $0x100] sm:$0xff]
        %v395 = vld [vmem:[#allocation6 + $0x108] sm:$0xff]
        %v396 = vld [vmem:[#allocation6 + $0x140] sm:$0xff]
        %v397 = vld [vmem:[#allocation6 + $0x148] sm:$0xff]
        %v398 = vld [vmem:[#allocation6 + $0x180] sm:$0xff]
        %v399 = vld [vmem:[#allocation6 + $0x188] sm:$0xff]
        %v400 = vld [vmem:[#allocation6 + $0x1c0] sm:$0xff]
        %v401 = vld [vmem:[#allocation6 + $0x1c8] sm:$0xff]
        %v402 = vld [vmem:[#allocation6 + $0x200] sm:$0xff]
        %v403 = vld [vmem:[#allocation6 + $0x208] sm:$0xff]
        %v404 = vld [vmem:[#allocation6 + $0x240] sm:$0xff]
        %v405 = vld [vmem:[#allocation6 + $0x248] sm:$0xff]
        %v406 = vld [vmem:[#allocation6 + $0x280] sm:$0xff]
        %v407 = vld [vmem:[#allocation6 + $0x288] sm:$0xff]
        %v408 = vld [vmem:[#allocation6 + $0x2c0] sm:$0xff]
        %v409 = vld [vmem:[#allocation6 + $0x2c8] sm:$0xff]
        %v410 = vld [vmem:[#allocation6 + $0x300] sm:$0xff]
        %v411 = vld [vmem:[#allocation6 + $0x308] sm:$0xff]
        %v412 = vld [vmem:[#allocation6 + $0x340] sm:$0xff]
        %v413 = vld [vmem:[#allocation6 + $0x348] sm:$0xff]
        %v414 = vld [vmem:[#allocation6 + $0x380] sm:$0xff]
        %v415 = vld [vmem:[#allocation6 + $0x388] sm:$0xff]
        %v416 = vld [vmem:[#allocation6 + $0x3c0] sm:$0xff]
        %v417 = vld [vmem:[#allocation6 + $0x3c8] sm:$0xff]
        %v418 = vld [vmem:[#allocation6 + $0x400] sm:$0xff]
        %v419 = vld [vmem:[#allocation6 + $0x408] sm:$0xff]
        %v420 = vld [vmem:[#allocation6 + $0x440] sm:$0xff]
        %v421 = vld [vmem:[#allocation6 + $0x448] sm:$0xff]
        %v422 = vld [vmem:[#allocation6 + $0x480] sm:$0xff]
        %v423 = vld [vmem:[#allocation6 + $0x488] sm:$0xff]
        %v424 = vld [vmem:[#allocation6 + $0x4c0] sm:$0xff]
        %v425 = vld [vmem:[#allocation6 + $0x4c8] sm:$0xff]
        %v426 = vld [vmem:[#allocation6 + $0x500] sm:$0xff]
        %v427 = vld [vmem:[#allocation6 + $0x508] sm:$0xff]
        %v428 = vld [vmem:[#allocation6 + $0x540] sm:$0xff]
        %v429 = vld [vmem:[#allocation6 + $0x548] sm:$0xff]
        %v430 = vld [vmem:[#allocation6 + $0x580] sm:$0xff]
        %v431 = vld [vmem:[#allocation6 + $0x588] sm:$0xff]
        %v432 = vld [vmem:[#allocation6 + $0x5c0] sm:$0xff]
        %v433 = vld [vmem:[#allocation6 + $0x5c8] sm:$0xff]
        %v434 = vld [vmem:[#allocation6 + $0x600] sm:$0xff]
        %v435 = vld [vmem:[#allocation6 + $0x608] sm:$0xff]
        %v436 = vld [vmem:[#allocation6 + $0x640] sm:$0xff]
        %v437 = vld [vmem:[#allocation6 + $0x648] sm:$0xff]
        %v438 = vld [vmem:[#allocation6 + $0x680] sm:$0xff]
        %v439 = vld [vmem:[#allocation6 + $0x688] sm:$0xff]
        %v440 = vld [vmem:[#allocation6 + $0x6c0] sm:$0xff]
        %v441 = vld [vmem:[#allocation6 + $0x6c8] sm:$0xff]
        %v442 = vld [vmem:[#allocation6 + $0x700] sm:$0xff]
        %v443 = vld [vmem:[#allocation6 + $0x708] sm:$0xff]
        %v444 = vld [vmem:[#allocation6 + $0x740] sm:$0xff]
        %v445 = vld [vmem:[#allocation6 + $0x748] sm:$0xff]
        %v446 = vld [vmem:[#allocation6 + $0x780] sm:$0xff]
        %v447 = vld [vmem:[#allocation6 + $0x788] sm:$0xff]
        %v448 = vld [vmem:[#allocation6 + $0x7c0] sm:$0xff]
        %v449 = vld [vmem:[#allocation6 + $0x7c8] sm:$0xff]
        %v450 = vld [vmem:[#allocation6 + $0x800] sm:$0xff]
        %v451 = vld [vmem:[#allocation6 + $0x808] sm:$0xff]
        %v452 = vld [vmem:[#allocation6 + $0x840] sm:$0xff]
        %v453 = vld [vmem:[#allocation6 + $0x848] sm:$0xff]
        %v454 = vld [vmem:[#allocation6 + $0x880] sm:$0xff]
        %v455 = vld [vmem:[#allocation6 + $0x888] sm:$0xff]
        %v456 = vld [vmem:[#allocation6 + $0x8c0] sm:$0xff]
        %v457 = vld [vmem:[#allocation6 + $0x8c8] sm:$0xff]
        %v458 = vld [vmem:[#allocation6 + $0x900] sm:$0xff]
        %v459 = vld [vmem:[#allocation6 + $0x908] sm:$0xff]
        %v460 = vld [vmem:[#allocation6 + $0x940] sm:$0xff]
        %v461 = vld [vmem:[#allocation6 + $0x948] sm:$0xff]
        %v462 = vld [vmem:[#allocation6 + $0x980] sm:$0xff]
        %v463 = vld [vmem:[#allocation6 + $0x988] sm:$0xff]
        %v464 = vld [vmem:[#allocation6 + $0x9c0] sm:$0xff]
        %v465 = vld [vmem:[#allocation6 + $0x9c8] sm:$0xff]
        %v466 = vld [vmem:[#allocation6 + $0xa00] sm:$0xff]
        %v467 = vld [vmem:[#allocation6 + $0xa08] sm:$0xff]
        %v468 = vld [vmem:[#allocation6 + $0xa40] sm:$0xff]
        %v469 = vld [vmem:[#allocation6 + $0xa48] sm:$0xff]
        %v470 = vld [vmem:[#allocation6 + $0xa80] sm:$0xff]
        %v471 = vld [vmem:[#allocation6 + $0xa88] sm:$0xff]
        %v472 = vld [vmem:[#allocation6 + $0xac0] sm:$0xff]
        %v473 = vld [vmem:[#allocation6 + $0xac8] sm:$0xff]
        %v474 = vld [vmem:[#allocation6 + $0xb00] sm:$0xff]
        %v475 = vld [vmem:[#allocation6 + $0xb08] sm:$0xff]
        %v476 = vld [vmem:[#allocation6 + $0xb40] sm:$0xff]
        %v477 = vld [vmem:[#allocation6 + $0xb48] sm:$0xff]
        %v478 = vld [vmem:[#allocation6 + $0xb80] sm:$0xff]
        %v479 = vld [vmem:[#allocation6 + $0xb88] sm:$0xff]
        %v480 = vld [vmem:[#allocation6 + $0xbc0] sm:$0xff]
        %v481 = vld [vmem:[#allocation6 + $0xbc8] sm:$0xff]
        %v482 = vld [vmem:[#allocation6 + $0xc00] sm:$0xff]
        %v483 = vld [vmem:[#allocation6 + $0xc08] sm:$0xff]
        %v484 = vld [vmem:[#allocation6 + $0xc40] sm:$0xff]
        %v485 = vld [vmem:[#allocation6 + $0xc48] sm:$0xff]
        %v486 = vld [vmem:[#allocation6 + $0xc80] sm:$0xff]
        %v487 = vld [vmem:[#allocation6 + $0xc88] sm:$0xff]
        %v488 = vld [vmem:[#allocation6 + $0xcc0] sm:$0xff]
        %v489 = vld [vmem:[#allocation6 + $0xcc8] sm:$0xff]
        %v490 = vld [vmem:[#allocation6 + $0xd00] sm:$0xff]
        %v491 = vld [vmem:[#allocation6 + $0xd08] sm:$0xff]
        %v492 = vld [vmem:[#allocation6 + $0xd40] sm:$0xff]
        %v493 = vld [vmem:[#allocation6 + $0xd48] sm:$0xff]
        %v494 = vld [vmem:[#allocation6 + $0xd80] sm:$0xff]
        %v495 = vld [vmem:[#allocation6 + $0xd88] sm:$0xff]
        %v496 = vld [vmem:[#allocation6 + $0xdc0] sm:$0xff]
        %v497 = vld [vmem:[#allocation6 + $0xdc8] sm:$0xff]
        %v498 = vld [vmem:[#allocation6 + $0xe00] sm:$0xff]
        %v499 = vld [vmem:[#allocation6 + $0xe08] sm:$0xff]
        %v500 = vld [vmem:[#allocation6 + $0xe40] sm:$0xff]
        %v501 = vld [vmem:[#allocation6 + $0xe48] sm:$0xff]
        %v502 = vld [vmem:[#allocation6 + $0xe80] sm:$0xff]
        %v503 = vld [vmem:[#allocation6 + $0xe88] sm:$0xff]
        %v504 = vld [vmem:[#allocation6 + $0xec0] sm:$0xff]
        %v505 = vld [vmem:[#allocation6 + $0xec8] sm:$0xff]
        %v506 = vld [vmem:[#allocation6 + $0xf00] sm:$0xff]
        %v507 = vld [vmem:[#allocation6 + $0xf08] sm:$0xff]
        %v508 = vld [vmem:[#allocation6 + $0xf40] sm:$0xff]
        %v509 = vld [vmem:[#allocation6 + $0xf48] sm:$0xff]
        %v510 = vld [vmem:[#allocation6 + $0xf80] sm:$0xff]
        %v511 = vld [vmem:[#allocation6 + $0xf88] sm:$0xff]
        %v512 = vld [vmem:[#allocation6 + $0xfc0] sm:$0xff]
        %v513 = vld [vmem:[#allocation6 + $0xfc8] sm:$0xff]
        %v514 = vld [vmem:[#allocation8] sm:$0xf]
        %v516 = vlaneseq
        %v517 = vshrl.u32 %v516, 7
        %v518 = vsub.s32 0, %v517
        %v519 = vrot.slane %v514, %v518
        %v520 = vlaneseq
        %v521 = vshrl.u32 %v520, 7
        %v522 = vsub.s32 1, %v521
        %v523 = vrot.slane %v514, %v522
        %v524 = vlaneseq
        %v525 = vshrl.u32 %v524, 7
        %v526 = vsub.s32 2, %v525
        %v527 = vrot.slane %v514, %v526
        %v528 = vlaneseq
        %v529 = vshrl.u32 %v528, 7
        %v530 = vsub.s32 3, %v529
        %v531 = vrot.slane %v514, %v530
        %v664 = vunpack.c.l.b16 %v386
        %v665 = vunpack.c.h.b16 %v386
        %v666 = vunpack.c.l.b16 %v387
        %v667 = vunpack.c.h.b16 %v387
        %v668 = vunpack.c.l.b16 %v388
        %v669 = vunpack.c.h.b16 %v388
        %v670 = vunpack.c.l.b16 %v389
        %v671 = vunpack.c.h.b16 %v389
        %v672 = vunpack.c.l.b16 %v390
        %v673 = vunpack.c.h.b16 %v390
        %v674 = vunpack.c.l.b16 %v391
        %v675 = vunpack.c.h.b16 %v391
        %v676 = vunpack.c.l.b16 %v392
        %v677 = vunpack.c.h.b16 %v392
        %v678 = vunpack.c.l.b16 %v393
        %v679 = vunpack.c.h.b16 %v393
        %v680 = vunpack.c.l.b16 %v394
        %v681 = vunpack.c.h.b16 %v394
        %v682 = vunpack.c.l.b16 %v395
        %v683 = vunpack.c.h.b16 %v395
        %v684 = vunpack.c.l.b16 %v396
        %v685 = vunpack.c.h.b16 %v396
        %v686 = vunpack.c.l.b16 %v397
        %v687 = vunpack.c.h.b16 %v397
        %v688 = vunpack.c.l.b16 %v398
        %v689 = vunpack.c.h.b16 %v398
        %v690 = vunpack.c.l.b16 %v399
        %v691 = vunpack.c.h.b16 %v399
        %v692 = vunpack.c.l.b16 %v400
        %v693 = vunpack.c.h.b16 %v400
        %v694 = vunpack.c.l.b16 %v401
        %v695 = vunpack.c.h.b16 %v401
        %v696 = vunpack.c.l.b16 %v402
        %v697 = vunpack.c.h.b16 %v402
        %v698 = vunpack.c.l.b16 %v403
        %v699 = vunpack.c.h.b16 %v403
        %v700 = vunpack.c.l.b16 %v404
        %v701 = vunpack.c.h.b16 %v404
        %v702 = vunpack.c.l.b16 %v405
        %v703 = vunpack.c.h.b16 %v405
        %v704 = vunpack.c.l.b16 %v406
        %v705 = vunpack.c.h.b16 %v406
        %v706 = vunpack.c.l.b16 %v407
        %v707 = vunpack.c.h.b16 %v407
        %v708 = vunpack.c.l.b16 %v408
        %v709 = vunpack.c.h.b16 %v408
        %v710 = vunpack.c.l.b16 %v409
        %v711 = vunpack.c.h.b16 %v409
        %v712 = vunpack.c.l.b16 %v410
        %v713 = vunpack.c.h.b16 %v410
        %v714 = vunpack.c.l.b16 %v411
        %v715 = vunpack.c.h.b16 %v411
        %v716 = vunpack.c.l.b16 %v412
        %v717 = vunpack.c.h.b16 %v412
        %v718 = vunpack.c.l.b16 %v413
        %v719 = vunpack.c.h.b16 %v413
        %v720 = vunpack.c.l.b16 %v414
        %v721 = vunpack.c.h.b16 %v414
        %v722 = vunpack.c.l.b16 %v415
        %v723 = vunpack.c.h.b16 %v415
        %v724 = vunpack.c.l.b16 %v416
        %v725 = vunpack.c.h.b16 %v416
        %v726 = vunpack.c.l.b16 %v417
        %v727 = vunpack.c.h.b16 %v417
        %v728 = vunpack.c.l.b16 %v418
        %v729 = vunpack.c.h.b16 %v418
        %v730 = vunpack.c.l.b16 %v419
        %v731 = vunpack.c.h.b16 %v419
        %v732 = vunpack.c.l.b16 %v420
        %v733 = vunpack.c.h.b16 %v420
        %v734 = vunpack.c.l.b16 %v421
        %v735 = vunpack.c.h.b16 %v421
        %v736 = vunpack.c.l.b16 %v422
        %v737 = vunpack.c.h.b16 %v422
        %v738 = vunpack.c.l.b16 %v423
        %v739 = vunpack.c.h.b16 %v423
        %v740 = vunpack.c.l.b16 %v424
        %v741 = vunpack.c.h.b16 %v424
        %v742 = vunpack.c.l.b16 %v425
        %v743 = vunpack.c.h.b16 %v425
        %v744 = vunpack.c.l.b16 %v426
        %v745 = vunpack.c.h.b16 %v426
        %v746 = vunpack.c.l.b16 %v427
        %v747 = vunpack.c.h.b16 %v427
        %v748 = vunpack.c.l.b16 %v428
        %v749 = vunpack.c.h.b16 %v428
        %v750 = vunpack.c.l.b16 %v429
        %v751 = vunpack.c.h.b16 %v429
        %v752 = vunpack.c.l.b16 %v430
        %v753 = vunpack.c.h.b16 %v430
        %v754 = vunpack.c.l.b16 %v431
        %v755 = vunpack.c.h.b16 %v431
        %v756 = vunpack.c.l.b16 %v432
        %v757 = vunpack.c.h.b16 %v432
        %v758 = vunpack.c.l.b16 %v433
        %v759 = vunpack.c.h.b16 %v433
        %v760 = vunpack.c.l.b16 %v434
        %v761 = vunpack.c.h.b16 %v434
        %v762 = vunpack.c.l.b16 %v435
        %v763 = vunpack.c.h.b16 %v435
        %v764 = vunpack.c.l.b16 %v436
        %v765 = vunpack.c.h.b16 %v436
        %v766 = vunpack.c.l.b16 %v437
        %v767 = vunpack.c.h.b16 %v437
        %v768 = vunpack.c.l.b16 %v438
        %v769 = vunpack.c.h.b16 %v438
        %v770 = vunpack.c.l.b16 %v439
        %v771 = vunpack.c.h.b16 %v439
        %v772 = vunpack.c.l.b16 %v440
        %v773 = vunpack.c.h.b16 %v440
        %v774 = vunpack.c.l.b16 %v441
        %v775 = vunpack.c.h.b16 %v441
        %v776 = vunpack.c.l.b16 %v442
        %v777 = vunpack.c.h.b16 %v442
        %v778 = vunpack.c.l.b16 %v443
        %v779 = vunpack.c.h.b16 %v443
        %v780 = vunpack.c.l.b16 %v444
        %v781 = vunpack.c.h.b16 %v444
        %v782 = vunpack.c.l.b16 %v445
        %v783 = vunpack.c.h.b16 %v445
        %v784 = vunpack.c.l.b16 %v446
        %v785 = vunpack.c.h.b16 %v446
        %v786 = vunpack.c.l.b16 %v447
        %v787 = vunpack.c.h.b16 %v447
        %v788 = vunpack.c.l.b16 %v448
        %v789 = vunpack.c.h.b16 %v448
        %v790 = vunpack.c.l.b16 %v449
        %v791 = vunpack.c.h.b16 %v449
        %v792 = vunpack.c.l.b16 %v450
        %v793 = vunpack.c.h.b16 %v450
        %v794 = vunpack.c.l.b16 %v451
        %v795 = vunpack.c.h.b16 %v451
        %v796 = vunpack.c.l.b16 %v452
        %v797 = vunpack.c.h.b16 %v452
        %v798 = vunpack.c.l.b16 %v453
        %v799 = vunpack.c.h.b16 %v453
        %v800 = vunpack.c.l.b16 %v454
        %v801 = vunpack.c.h.b16 %v454
        %v802 = vunpack.c.l.b16 %v455
        %v803 = vunpack.c.h.b16 %v455
        %v804 = vunpack.c.l.b16 %v456
        %v805 = vunpack.c.h.b16 %v456
        %v806 = vunpack.c.l.b16 %v457
        %v807 = vunpack.c.h.b16 %v457
        %v808 = vunpack.c.l.b16 %v458
        %v809 = vunpack.c.h.b16 %v458
        %v810 = vunpack.c.l.b16 %v459
        %v811 = vunpack.c.h.b16 %v459
        %v812 = vunpack.c.l.b16 %v460
        %v813 = vunpack.c.h.b16 %v460
        %v814 = vunpack.c.l.b16 %v461
        %v815 = vunpack.c.h.b16 %v461
        %v816 = vunpack.c.l.b16 %v462
        %v817 = vunpack.c.h.b16 %v462
        %v818 = vunpack.c.l.b16 %v463
        %v819 = vunpack.c.h.b16 %v463
        %v820 = vunpack.c.l.b16 %v464
        %v821 = vunpack.c.h.b16 %v464
        %v822 = vunpack.c.l.b16 %v465
        %v823 = vunpack.c.h.b16 %v465
        %v824 = vunpack.c.l.b16 %v466
        %v825 = vunpack.c.h.b16 %v466
        %v826 = vunpack.c.l.b16 %v467
        %v827 = vunpack.c.h.b16 %v467
        %v828 = vunpack.c.l.b16 %v468
        %v829 = vunpack.c.h.b16 %v468
        %v830 = vunpack.c.l.b16 %v469
        %v831 = vunpack.c.h.b16 %v469
        %v832 = vunpack.c.l.b16 %v470
        %v833 = vunpack.c.h.b16 %v470
        %v834 = vunpack.c.l.b16 %v471
        %v835 = vunpack.c.h.b16 %v471
        %v836 = vunpack.c.l.b16 %v472
        %v837 = vunpack.c.h.b16 %v472
        %v838 = vunpack.c.l.b16 %v473
        %v839 = vunpack.c.h.b16 %v473
        %v840 = vunpack.c.l.b16 %v474
        %v841 = vunpack.c.h.b16 %v474
        %v842 = vunpack.c.l.b16 %v475
        %v843 = vunpack.c.h.b16 %v475
        %v844 = vunpack.c.l.b16 %v476
        %v845 = vunpack.c.h.b16 %v476
        %v846 = vunpack.c.l.b16 %v477
        %v847 = vunpack.c.h.b16 %v477
        %v848 = vunpack.c.l.b16 %v478
        %v849 = vunpack.c.h.b16 %v478
        %v850 = vunpack.c.l.b16 %v479
        %v851 = vunpack.c.h.b16 %v479
        %v852 = vunpack.c.l.b16 %v480
        %v853 = vunpack.c.h.b16 %v480
        %v854 = vunpack.c.l.b16 %v481
        %v855 = vunpack.c.h.b16 %v481
        %v856 = vunpack.c.l.b16 %v482
        %v857 = vunpack.c.h.b16 %v482
        %v858 = vunpack.c.l.b16 %v483
        %v859 = vunpack.c.h.b16 %v483
        %v860 = vunpack.c.l.b16 %v484
        %v861 = vunpack.c.h.b16 %v484
        %v862 = vunpack.c.l.b16 %v485
        %v863 = vunpack.c.h.b16 %v485
        %v864 = vunpack.c.l.b16 %v486
        %v865 = vunpack.c.h.b16 %v486
        %v866 = vunpack.c.l.b16 %v487
        %v867 = vunpack.c.h.b16 %v487
        %v868 = vunpack.c.l.b16 %v488
        %v869 = vunpack.c.h.b16 %v488
        %v870 = vunpack.c.l.b16 %v489
        %v871 = vunpack.c.h.b16 %v489
        %v872 = vunpack.c.l.b16 %v490
        %v873 = vunpack.c.h.b16 %v490
        %v874 = vunpack.c.l.b16 %v491
        %v875 = vunpack.c.h.b16 %v491
        %v876 = vunpack.c.l.b16 %v492
        %v877 = vunpack.c.h.b16 %v492
        %v878 = vunpack.c.l.b16 %v493
        %v879 = vunpack.c.h.b16 %v493
        %v880 = vunpack.c.l.b16 %v494
        %v881 = vunpack.c.h.b16 %v494
        %v882 = vunpack.c.l.b16 %v495
        %v883 = vunpack.c.h.b16 %v495
        %v884 = vunpack.c.l.b16 %v496
        %v885 = vunpack.c.h.b16 %v496
        %v886 = vunpack.c.l.b16 %v497
        %v887 = vunpack.c.h.b16 %v497
        %v888 = vunpack.c.l.b16 %v498
        %v889 = vunpack.c.h.b16 %v498
        %v890 = vunpack.c.l.b16 %v499
        %v891 = vunpack.c.h.b16 %v499
        %v892 = vunpack.c.l.b16 %v500
        %v893 = vunpack.c.h.b16 %v500
        %v894 = vunpack.c.l.b16 %v501
        %v895 = vunpack.c.h.b16 %v501
        %v896 = vunpack.c.l.b16 %v502
        %v897 = vunpack.c.h.b16 %v502
        %v898 = vunpack.c.l.b16 %v503
        %v899 = vunpack.c.h.b16 %v503
        %v900 = vunpack.c.l.b16 %v504
        %v901 = vunpack.c.h.b16 %v504
        %v902 = vunpack.c.l.b16 %v505
        %v903 = vunpack.c.h.b16 %v505
        %v904 = vunpack.c.l.b16 %v506
        %v905 = vunpack.c.h.b16 %v506
        %v906 = vunpack.c.l.b16 %v507
        %v907 = vunpack.c.h.b16 %v507
        %v908 = vunpack.c.l.b16 %v508
        %v909 = vunpack.c.h.b16 %v508
        %v910 = vunpack.c.l.b16 %v509
        %v911 = vunpack.c.h.b16 %v509
        %v912 = vunpack.c.l.b16 %v510
        %v913 = vunpack.c.h.b16 %v510
        %v914 = vunpack.c.l.b16 %v511
        %v915 = vunpack.c.h.b16 %v511
        %v916 = vunpack.c.l.b16 %v512
        %v917 = vunpack.c.h.b16 %v512
        %v918 = vunpack.c.l.b16 %v513
        %v919 = vunpack.c.h.b16 %v513
        %v920 = vpack.c.b16 %v668, %v664
        %v921 = vpack.c.b16 %v669, %v665
        %v922 = vpack.c.b16 %v670, %v666
        %v923 = vpack.c.b16 %v671, %v667
        %v924 = vpack.c.b16 %v676, %v672
        %v925 = vpack.c.b16 %v677, %v673
        %v926 = vpack.c.b16 %v678, %v674
        %v927 = vpack.c.b16 %v679, %v675
        %v928 = vpack.c.b16 %v684, %v680
        %v929 = vpack.c.b16 %v685, %v681
        %v930 = vpack.c.b16 %v686, %v682
        %v931 = vpack.c.b16 %v687, %v683
        %v932 = vpack.c.b16 %v692, %v688
        %v933 = vpack.c.b16 %v693, %v689
        %v934 = vpack.c.b16 %v694, %v690
        %v935 = vpack.c.b16 %v695, %v691
        %v936 = vpack.c.b16 %v700, %v696
        %v937 = vpack.c.b16 %v701, %v697
        %v938 = vpack.c.b16 %v702, %v698
        %v939 = vpack.c.b16 %v703, %v699
        %v940 = vpack.c.b16 %v708, %v704
        %v941 = vpack.c.b16 %v709, %v705
        %v942 = vpack.c.b16 %v710, %v706
        %v943 = vpack.c.b16 %v711, %v707
        %v944 = vpack.c.b16 %v716, %v712
        %v945 = vpack.c.b16 %v717, %v713
        %v946 = vpack.c.b16 %v718, %v714
        %v947 = vpack.c.b16 %v719, %v715
        %v948 = vpack.c.b16 %v724, %v720
        %v949 = vpack.c.b16 %v725, %v721
        %v950 = vpack.c.b16 %v726, %v722
        %v951 = vpack.c.b16 %v727, %v723
        %v952 = vpack.c.b16 %v732, %v728
        %v953 = vpack.c.b16 %v733, %v729
        %v954 = vpack.c.b16 %v734, %v730
        %v955 = vpack.c.b16 %v735, %v731
        %v956 = vpack.c.b16 %v740, %v736
        %v957 = vpack.c.b16 %v741, %v737
        %v958 = vpack.c.b16 %v742, %v738
        %v959 = vpack.c.b16 %v743, %v739
        %v960 = vpack.c.b16 %v748, %v744
        %v961 = vpack.c.b16 %v749, %v745
        %v962 = vpack.c.b16 %v750, %v746
        %v963 = vpack.c.b16 %v751, %v747
        %v964 = vpack.c.b16 %v756, %v752
        %v965 = vpack.c.b16 %v757, %v753
        %v966 = vpack.c.b16 %v758, %v754
        %v967 = vpack.c.b16 %v759, %v755
        %v968 = vpack.c.b16 %v764, %v760
        %v969 = vpack.c.b16 %v765, %v761
        %v970 = vpack.c.b16 %v766, %v762
        %v971 = vpack.c.b16 %v767, %v763
        %v972 = vpack.c.b16 %v772, %v768
        %v973 = vpack.c.b16 %v773, %v769
        %v974 = vpack.c.b16 %v774, %v770
        %v975 = vpack.c.b16 %v775, %v771
        %v976 = vpack.c.b16 %v780, %v776
        %v977 = vpack.c.b16 %v781, %v777
        %v978 = vpack.c.b16 %v782, %v778
        %v979 = vpack.c.b16 %v783, %v779
        %v980 = vpack.c.b16 %v788, %v784
        %v981 = vpack.c.b16 %v789, %v785
        %v982 = vpack.c.b16 %v790, %v786
        %v983 = vpack.c.b16 %v791, %v787
        %v984 = vpack.c.b16 %v796, %v792
        %v985 = vpack.c.b16 %v797, %v793
        %v986 = vpack.c.b16 %v798, %v794
        %v987 = vpack.c.b16 %v799, %v795
        %v988 = vpack.c.b16 %v804, %v800
        %v989 = vpack.c.b16 %v805, %v801
        %v990 = vpack.c.b16 %v806, %v802
        %v991 = vpack.c.b16 %v807, %v803
        %v992 = vpack.c.b16 %v812, %v808
        %v993 = vpack.c.b16 %v813, %v809
        %v994 = vpack.c.b16 %v814, %v810
        %v995 = vpack.c.b16 %v815, %v811
        %v996 = vpack.c.b16 %v820, %v816
        %v997 = vpack.c.b16 %v821, %v817
        %v998 = vpack.c.b16 %v822, %v818
        %v999 = vpack.c.b16 %v823, %v819
        %v1000 = vpack.c.b16 %v828, %v824
        %v1001 = vpack.c.b16 %v829, %v825
        %v1002 = vpack.c.b16 %v830, %v826
        %v1003 = vpack.c.b16 %v831, %v827
        %v1004 = vpack.c.b16 %v836, %v832
        %v1005 = vpack.c.b16 %v837, %v833
        %v1006 = vpack.c.b16 %v838, %v834
        %v1007 = vpack.c.b16 %v839, %v835
        %v1008 = vpack.c.b16 %v844, %v840
        %v1009 = vpack.c.b16 %v845, %v841
        %v1010 = vpack.c.b16 %v846, %v842
        %v1011 = vpack.c.b16 %v847, %v843
        %v1012 = vpack.c.b16 %v852, %v848
        %v1013 = vpack.c.b16 %v853, %v849
        %v1014 = vpack.c.b16 %v854, %v850
        %v1015 = vpack.c.b16 %v855, %v851
        %v1016 = vpack.c.b16 %v860, %v856
        %v1017 = vpack.c.b16 %v861, %v857
        %v1018 = vpack.c.b16 %v862, %v858
        %v1019 = vpack.c.b16 %v863, %v859
        %v1020 = vpack.c.b16 %v868, %v864
        %v1021 = vpack.c.b16 %v869, %v865
        %v1022 = vpack.c.b16 %v870, %v866
        %v1023 = vpack.c.b16 %v871, %v867
        %v1024 = vpack.c.b16 %v876, %v872
        %v1025 = vpack.c.b16 %v877, %v873
        %v1026 = vpack.c.b16 %v878, %v874
        %v1027 = vpack.c.b16 %v879, %v875
        %v1028 = vpack.c.b16 %v884, %v880
        %v1029 = vpack.c.b16 %v885, %v881
        %v1030 = vpack.c.b16 %v886, %v882
        %v1031 = vpack.c.b16 %v887, %v883
        %v1032 = vpack.c.b16 %v892, %v888
        %v1033 = vpack.c.b16 %v893, %v889
        %v1034 = vpack.c.b16 %v894, %v890
        %v1035 = vpack.c.b16 %v895, %v891
        %v1036 = vpack.c.b16 %v900, %v896
        %v1037 = vpack.c.b16 %v901, %v897
        %v1038 = vpack.c.b16 %v902, %v898
        %v1039 = vpack.c.b16 %v903, %v899
        %v1040 = vpack.c.b16 %v908, %v904
        %v1041 = vpack.c.b16 %v909, %v905
        %v1042 = vpack.c.b16 %v910, %v906
        %v1043 = vpack.c.b16 %v911, %v907
        %v1044 = vpack.c.b16 %v916, %v912
        %v1045 = vpack.c.b16 %v917, %v913
        %v1046 = vpack.c.b16 %v918, %v914
        %v1047 = vpack.c.b16 %v919, %v915
        %1176 = vmatprep.subr.bf16.mxu0 %v921
        %1177 = vmatpush1.bf16.msra.mxu0 %v920
        %1178 = vmatprep.subr.bf16.mxu0 %v925
        %1179 = vmatpush1.bf16.msra.mxu0 %v924
        %1180 = vmatprep.subr.bf16.mxu0 %v929
        %1181 = vmatpush1.bf16.msra.mxu0 %v928
        %1182 = vmatprep.subr.bf16.mxu0 %v933
        %1183 = vmatpush1.bf16.msra.mxu0 %v932
        %1184 = vmatprep.subr.bf16.mxu0 %v937
        %1185 = vmatpush1.bf16.msra.mxu0 %v936
        %1186 = vmatprep.subr.bf16.mxu0 %v941
        %1187 = vmatpush1.bf16.msra.mxu0 %v940
        %1188 = vmatprep.subr.bf16.mxu0 %v945
        %1189 = vmatpush1.bf16.msra.mxu0 %v944
        %1190 = vmatprep.subr.bf16.mxu0 %v949
        %1191 = vmatpush1.bf16.msra.mxu0 %v948
        %1192 = vmatprep.subr.bf16.mxu0 %v953
        %1193 = vmatpush1.bf16.msra.mxu0 %v952
        %1194 = vmatprep.subr.bf16.mxu0 %v957
        %1195 = vmatpush1.bf16.msra.mxu0 %v956
        %1196 = vmatprep.subr.bf16.mxu0 %v961
        %1197 = vmatpush1.bf16.msra.mxu0 %v960
        %1198 = vmatprep.subr.bf16.mxu0 %v965
        %1199 = vmatpush1.bf16.msra.mxu0 %v964
        %1200 = vmatprep.subr.bf16.mxu0 %v969
        %1201 = vmatpush1.bf16.msra.mxu0 %v968
        %1202 = vmatprep.subr.bf16.mxu0 %v973
        %1203 = vmatpush1.bf16.msra.mxu0 %v972
        %1204 = vmatprep.subr.bf16.mxu0 %v977
        %1205 = vmatpush1.bf16.msra.mxu0 %v976
        %1206 = vmatprep.subr.bf16.mxu0 %v981
        %1207 = vmatpush1.bf16.msra.mxu0 %v980
        %1208 = vmatprep.mubr.bf16.mxu0 %v379
        %1209 = vmatmul.mubr.bf16.gmra.mrb[0].mxu0 %v378
        %v1210 = vpop.f32.mrb[0].mxu0
        %v1211 = vadd.f32 %v519, %v1210
        %v1212 = vpop.f32.mrb[0].mxu0
        %v1213 = vadd.f32 %v523, %v1212
        %v1214 = vpop.f32.mrb[0].mxu0
        %v1215 = vpop.f32.mrb[0].mxu0
        %1216 = vdwg.mxu0
        %1217 = vmatprep.subr.bf16.mxu0 %v985
        %1218 = vmatpush1.bf16.msra.mxu0 %v984
        %1219 = vmatprep.subr.bf16.mxu0 %v989
        %1220 = vmatpush1.bf16.msra.mxu0 %v988
        %1221 = vmatprep.subr.bf16.mxu0 %v993
        %1222 = vmatpush1.bf16.msra.mxu0 %v992
        %1223 = vmatprep.subr.bf16.mxu0 %v997
        %1224 = vmatpush1.bf16.msra.mxu0 %v996
        %1225 = vmatprep.subr.bf16.mxu0 %v1001
        %1226 = vmatpush1.bf16.msra.mxu0 %v1000
        %1227 = vmatprep.subr.bf16.mxu0 %v1005
        %1228 = vmatpush1.bf16.msra.mxu0 %v1004
        %1229 = vmatprep.subr.bf16.mxu0 %v1009
        %1230 = vmatpush1.bf16.msra.mxu0 %v1008
        %1231 = vmatprep.subr.bf16.mxu0 %v1013
        %1232 = vmatpush1.bf16.msra.mxu0 %v1012
        %1233 = vmatprep.subr.bf16.mxu0 %v1017
        %1234 = vmatpush1.bf16.msra.mxu0 %v1016
        %1235 = vmatprep.subr.bf16.mxu0 %v1021
        %1236 = vmatpush1.bf16.msra.mxu0 %v1020
        %1237 = vmatprep.subr.bf16.mxu0 %v1025
        %1238 = vmatpush1.bf16.msra.mxu0 %v1024
        %1239 = vmatprep.subr.bf16.mxu0 %v1029
        %1240 = vmatpush1.bf16.msra.mxu0 %v1028
        %1241 = vmatprep.subr.bf16.mxu0 %v1033
        %1242 = vmatpush1.bf16.msra.mxu0 %v1032
        %1243 = vmatprep.subr.bf16.mxu0 %v1037
        %1244 = vmatpush1.bf16.msra.mxu0 %v1036
        %1245 = vmatprep.subr.bf16.mxu0 %v1041
        %1246 = vmatpush1.bf16.msra.mxu0 %v1040
        %1247 = vmatprep.subr.bf16.mxu0 %v1045
        %1248 = vmatpush1.bf16.msra.mxu0 %v1044
        %1249 = vmatprep.mubr.bf16.mxu0 %v381
        %1250 = vmatmul.mubr.bf16.gmra.mrb[0].mxu0 %v380
        %v1251 = vpop.f32.mrb[0].mxu0
        %v1252 = vadd.f32 %v1211, %v1251
        %v1253 = vpop.f32.mrb[0].mxu0
        %v1254 = vadd.f32 %v1213, %v1253
        %v1255 = vpop.f32.mrb[0].mxu0
        %v1256 = vpop.f32.mrb[0].mxu0
        %1257 = vdwg.mxu0
        %1258 = vmatprep.subr.bf16.mxu0 %v923
        %1259 = vmatpush1.bf16.msra.mxu0 %v922
        %1260 = vmatprep.subr.bf16.mxu0 %v927
        %1261 = vmatpush1.bf16.msra.mxu0 %v926
        %1262 = vmatprep.subr.bf16.mxu0 %v931
        %1263 = vmatpush1.bf16.msra.mxu0 %v930
        %1264 = vmatprep.subr.bf16.mxu0 %v935
        %1265 = vmatpush1.bf16.msra.mxu0 %v934
        %1266 = vmatprep.subr.bf16.mxu0 %v939
        %1267 = vmatpush1.bf16.msra.mxu0 %v938
        %1268 = vmatprep.subr.bf16.mxu0 %v943
        %1269 = vmatpush1.bf16.msra.mxu0 %v942
        %1270 = vmatprep.subr.bf16.mxu0 %v947
        %1271 = vmatpush1.bf16.msra.mxu0 %v946
        %1272 = vmatprep.subr.bf16.mxu0 %v951
        %1273 = vmatpush1.bf16.msra.mxu0 %v950
        %1274 = vmatprep.subr.bf16.mxu0 %v955
        %1275 = vmatpush1.bf16.msra.mxu0 %v954
        %1276 = vmatprep.subr.bf16.mxu0 %v959
        %1277 = vmatpush1.bf16.msra.mxu0 %v958
        %1278 = vmatprep.subr.bf16.mxu0 %v963
        %1279 = vmatpush1.bf16.msra.mxu0 %v962
        %1280 = vmatprep.subr.bf16.mxu0 %v967
        %1281 = vmatpush1.bf16.msra.mxu0 %v966
        %1282 = vmatprep.subr.bf16.mxu0 %v971
        %1283 = vmatpush1.bf16.msra.mxu0 %v970
        %1284 = vmatprep.subr.bf16.mxu0 %v975
        %1285 = vmatpush1.bf16.msra.mxu0 %v974
        %1286 = vmatprep.subr.bf16.mxu0 %v979
        %1287 = vmatpush1.bf16.msra.mxu0 %v978
        %1288 = vmatprep.subr.bf16.mxu0 %v983
        %1289 = vmatpush1.bf16.msra.mxu0 %v982
        %1290 = vmatprep.mubr.bf16.mxu0 %v379
        %1291 = vmatmul.mubr.bf16.gmra.mrb[0].mxu0 %v378
        %v1292 = vpop.f32.mrb[0].mxu0
        %v1293 = vadd.f32 %v527, %v1292
        %v1294 = vpop.f32.mrb[0].mxu0
        %v1295 = vadd.f32 %v531, %v1294
        %v1296 = vpop.f32.mrb[0].mxu0
        %v1297 = vpop.f32.mrb[0].mxu0
        %1298 = vdwg.mxu0
        %1299 = vmatprep.subr.bf16.mxu0 %v987
        %1300 = vmatpush1.bf16.msra.mxu0 %v986
        %1301 = vmatprep.subr.bf16.mxu0 %v991
        %1302 = vmatpush1.bf16.msra.mxu0 %v990
        %1303 = vmatprep.subr.bf16.mxu0 %v995
        %1304 = vmatpush1.bf16.msra.mxu0 %v994
        %1305 = vmatprep.subr.bf16.mxu0 %v999
        %1306 = vmatpush1.bf16.msra.mxu0 %v998
        %1307 = vmatprep.subr.bf16.mxu0 %v1003
        %1308 = vmatpush1.bf16.msra.mxu0 %v1002
        %1309 = vmatprep.subr.bf16.mxu0 %v1007
        %1310 = vmatpush1.bf16.msra.mxu0 %v1006
        %1311 = vmatprep.subr.bf16.mxu0 %v1011
        %1312 = vmatpush1.bf16.msra.mxu0 %v1010
        %1313 = vmatprep.subr.bf16.mxu0 %v1015
        %1314 = vmatpush1.bf16.msra.mxu0 %v1014
        %1315 = vmatprep.subr.bf16.mxu0 %v1019
        %1316 = vmatpush1.bf16.msra.mxu0 %v1018
        %1317 = vmatprep.subr.bf16.mxu0 %v1023
        %1318 = vmatpush1.bf16.msra.mxu0 %v1022
        %1319 = vmatprep.subr.bf16.mxu0 %v1027
        %1320 = vmatpush1.bf16.msra.mxu0 %v1026
        %1321 = vmatprep.subr.bf16.mxu0 %v1031
        %1322 = vmatpush1.bf16.msra.mxu0 %v1030
        %1323 = vmatprep.subr.bf16.mxu0 %v1035
        %1324 = vmatpush1.bf16.msra.mxu0 %v1034
        %1325 = vmatprep.subr.bf16.mxu0 %v1039
        %1326 = vmatpush1.bf16.msra.mxu0 %v1038
        %1327 = vmatprep.subr.bf16.mxu0 %v1043
        %1328 = vmatpush1.bf16.msra.mxu0 %v1042
        %1329 = vmatprep.subr.bf16.mxu0 %v1047
        %1330 = vmatpush1.bf16.msra.mxu0 %v1046
        %1331 = vmatprep.mubr.bf16.mxu0 %v381
        %1332 = vmatmul.mubr.bf16.gmra.mrb[0].mxu0 %v380
        %v1333 = vpop.f32.mrb[0].mxu0
        %v1334 = vadd.f32 %v1293, %v1333
        %v1335 = vpop.f32.mrb[0].mxu0
        %v1336 = vadd.f32 %v1295, %v1335
        %v1337 = vpop.f32.mrb[0].mxu0
        %v1338 = vpop.f32.mrb[0].mxu0
        %1339 = vdwg.mxu0
        %v1340 = vmul.f32 %v1252, 0.5
        %v1341 = vmul.f32 %v1254, 0.5
        %v1342 = vmul.f32 %v1334, 0.5
        %v1343 = vmul.f32 %v1336, 0.5
        %v1344 = vmul.f32 %v1252, 0.044715
        %v1345 = vmul.f32 %v1254, 0.044715
        %v1346 = vmul.f32 %v1334, 0.044715
        %v1347 = vmul.f32 %v1336, 0.044715
        %v1348 = vmul.f32 %v1344, %v1252
        %v1349 = vmul.f32 %v1345, %v1254
        %v1350 = vmul.f32 %v1346, %v1334
        %v1351 = vmul.f32 %v1347, %v1336
        %v1352 = vmul.f32 %v1348, %v1252
        %v1353 = vmul.f32 %v1349, %v1254
        %v1354 = vmul.f32 %v1350, %v1334
        %v1355 = vmul.f32 %v1351, %v1336
        %v1356 = vadd.f32 %v1252, %v1352
        %v1357 = vadd.f32 %v1254, %v1353
        %v1358 = vadd.f32 %v1334, %v1354
        %v1359 = vadd.f32 %v1336, %v1355
        %v1360 = vmul.f32 %v1356, 0.7978846
        %v1361 = vmul.f32 %v1357, 0.7978846
        %v1362 = vmul.f32 %v1358, 0.7978846
        %v1363 = vmul.f32 %v1359, 0.7978846
        %v1364 = vtanh.pop %v1360
        %v1365 = vtanh.pop %v1361
        %v1366 = vtanh.pop %v1362
        %v1367 = vtanh.pop %v1363
        %v1368 = vadd.f32 %v1364, 1.0
        %v1369 = vadd.f32 %v1365, 1.0
        %v1370 = vadd.f32 %v1366, 1.0
        %v1371 = vadd.f32 %v1367, 1.0
        %v1372 = vmul.f32 %v1340, %v1368
        %v1373 = vmul.f32 %v1341, %v1369
        %v1374 = vmul.f32 %v1342, %v1370
        %v1375 = vmul.f32 %v1343, %v1371
        %v1376 = vld [vmem:[#allocation2] sm:$0xff]
        %v1377 = vld [vmem:[#allocation2 + $0x8] sm:$0xff]
        %v1378 = vld [vmem:[#allocation2 + $0x10] sm:$0xff]
        %v1379 = vld [vmem:[#allocation2 + $0x18] sm:$0xff]
        %v1380 = vpack.c.bf16 %v1372, %v1372
        %v1381 = vpack.c.bf16 %v1373, %v1373
        %v1382 = vpack.c.bf16 %v1374, %v1374
        %v1383 = vpack.c.bf16 %v1375, %v1375
        %s1384 = smul.u32 0, 4
        %s1385 = smul.addr %s1384, 4
        %s1386 = scalar_lea.vmem [#allocation9], %s1385
        %v1387 = vld [vmem:[%s1386] sm:$0xff]
        %v1388 = vld [vmem:[%s1386 + $0x8] sm:$0xff]
        %v1389 = vld [vmem:[%s1386 + $0x10] sm:$0xff]
        %v1390 = vld [vmem:[%s1386 + $0x18] sm:$0xff]
        %v1391 = vld [vmem:[%s1386 + $0x20] sm:$0xff]
        %v1392 = vld [vmem:[%s1386 + $0x28] sm:$0xff]
        %v1393 = vld [vmem:[%s1386 + $0x30] sm:$0xff]
        %v1394 = vld [vmem:[%s1386 + $0x38] sm:$0xff]
        %v1395 = vld [vmem:[%s1386 + $0x40] sm:$0xff]
        %v1396 = vld [vmem:[%s1386 + $0x48] sm:$0xff]
        %v1397 = vld [vmem:[%s1386 + $0x50] sm:$0xff]
        %v1398 = vld [vmem:[%s1386 + $0x58] sm:$0xff]
        %v1399 = vld [vmem:[%s1386 + $0x60] sm:$0xff]
        %v1400 = vld [vmem:[%s1386 + $0x68] sm:$0xff]
        %v1401 = vld [vmem:[%s1386 + $0x70] sm:$0xff]
        %v1402 = vld [vmem:[%s1386 + $0x78] sm:$0xff]
        %v1403 = vld [vmem:[%s1386 + $0x80] sm:$0xff]
        %v1404 = vld [vmem:[%s1386 + $0x88] sm:$0xff]
        %v1405 = vld [vmem:[%s1386 + $0x90] sm:$0xff]
        %v1406 = vld [vmem:[%s1386 + $0x98] sm:$0xff]
        %v1407 = vld [vmem:[%s1386 + $0xa0] sm:$0xff]
        %v1408 = vld [vmem:[%s1386 + $0xa8] sm:$0xff]
        %v1409 = vld [vmem:[%s1386 + $0xb0] sm:$0xff]
        %v1410 = vld [vmem:[%s1386 + $0xb8] sm:$0xff]
        %v1411 = vld [vmem:[%s1386 + $0xc0] sm:$0xff]
        %v1412 = vld [vmem:[%s1386 + $0xc8] sm:$0xff]
        %v1413 = vld [vmem:[%s1386 + $0xd0] sm:$0xff]
        %v1414 = vld [vmem:[%s1386 + $0xd8] sm:$0xff]
        %v1415 = vld [vmem:[%s1386 + $0xe0] sm:$0xff]
        %v1416 = vld [vmem:[%s1386 + $0xe8] sm:$0xff]
        %v1417 = vld [vmem:[%s1386 + $0xf0] sm:$0xff]
        %v1418 = vld [vmem:[%s1386 + $0xf8] sm:$0xff]
        %v1419 = vld [vmem:[%s1386 + $0x100] sm:$0xff]
        %v1420 = vld [vmem:[%s1386 + $0x108] sm:$0xff]
        %v1421 = vld [vmem:[%s1386 + $0x110] sm:$0xff]
        %v1422 = vld [vmem:[%s1386 + $0x118] sm:$0xff]
        %v1423 = vld [vmem:[%s1386 + $0x120] sm:$0xff]
        %v1424 = vld [vmem:[%s1386 + $0x128] sm:$0xff]
        %v1425 = vld [vmem:[%s1386 + $0x130] sm:$0xff]
        %v1426 = vld [vmem:[%s1386 + $0x138] sm:$0xff]
        %v1427 = vld [vmem:[%s1386 + $0x140] sm:$0xff]
        %v1428 = vld [vmem:[%s1386 + $0x148] sm:$0xff]
        %v1429 = vld [vmem:[%s1386 + $0x150] sm:$0xff]
        %v1430 = vld [vmem:[%s1386 + $0x158] sm:$0xff]
        %v1431 = vld [vmem:[%s1386 + $0x160] sm:$0xff]
        %v1432 = vld [vmem:[%s1386 + $0x168] sm:$0xff]
        %v1433 = vld [vmem:[%s1386 + $0x170] sm:$0xff]
        %v1434 = vld [vmem:[%s1386 + $0x178] sm:$0xff]
        %v1435 = vld [vmem:[%s1386 + $0x180] sm:$0xff]
        %v1436 = vld [vmem:[%s1386 + $0x188] sm:$0xff]
        %v1437 = vld [vmem:[%s1386 + $0x190] sm:$0xff]
        %v1438 = vld [vmem:[%s1386 + $0x198] sm:$0xff]
        %v1439 = vld [vmem:[%s1386 + $0x1a0] sm:$0xff]
        %v1440 = vld [vmem:[%s1386 + $0x1a8] sm:$0xff]
        %v1441 = vld [vmem:[%s1386 + $0x1b0] sm:$0xff]
        %v1442 = vld [vmem:[%s1386 + $0x1b8] sm:$0xff]
        %v1443 = vld [vmem:[%s1386 + $0x1c0] sm:$0xff]
        %v1444 = vld [vmem:[%s1386 + $0x1c8] sm:$0xff]
        %v1445 = vld [vmem:[%s1386 + $0x1d0] sm:$0xff]
        %v1446 = vld [vmem:[%s1386 + $0x1d8] sm:$0xff]
        %v1447 = vld [vmem:[%s1386 + $0x1e0] sm:$0xff]
        %v1448 = vld [vmem:[%s1386 + $0x1e8] sm:$0xff]
        %v1449 = vld [vmem:[%s1386 + $0x1f0] sm:$0xff]
        %v1450 = vld [vmem:[%s1386 + $0x1f8] sm:$0xff]
        %v1451 = vld [vmem:[%s1386 + $0x200] sm:$0xff]
        %v1452 = vld [vmem:[%s1386 + $0x208] sm:$0xff]
        %v1453 = vld [vmem:[%s1386 + $0x210] sm:$0xff]
        %v1454 = vld [vmem:[%s1386 + $0x218] sm:$0xff]
        %v1455 = vld [vmem:[%s1386 + $0x220] sm:$0xff]
        %v1456 = vld [vmem:[%s1386 + $0x228] sm:$0xff]
        %v1457 = vld [vmem:[%s1386 + $0x230] sm:$0xff]
        %v1458 = vld [vmem:[%s1386 + $0x238] sm:$0xff]
        %v1459 = vld [vmem:[%s1386 + $0x240] sm:$0xff]
        %v1460 = vld [vmem:[%s1386 + $0x248] sm:$0xff]
        %v1461 = vld [vmem:[%s1386 + $0x250] sm:$0xff]
        %v1462 = vld [vmem:[%s1386 + $0x258] sm:$0xff]
        %v1463 = vld [vmem:[%s1386 + $0x260] sm:$0xff]
        %v1464 = vld [vmem:[%s1386 + $0x268] sm:$0xff]
        %v1465 = vld [vmem:[%s1386 + $0x270] sm:$0xff]
        %v1466 = vld [vmem:[%s1386 + $0x278] sm:$0xff]
        %v1467 = vld [vmem:[%s1386 + $0x280] sm:$0xff]
        %v1468 = vld [vmem:[%s1386 + $0x288] sm:$0xff]
        %v1469 = vld [vmem:[%s1386 + $0x290] sm:$0xff]
        %v1470 = vld [vmem:[%s1386 + $0x298] sm:$0xff]
        %v1471 = vld [vmem:[%s1386 + $0x2a0] sm:$0xff]
        %v1472 = vld [vmem:[%s1386 + $0x2a8] sm:$0xff]
        %v1473 = vld [vmem:[%s1386 + $0x2b0] sm:$0xff]
        %v1474 = vld [vmem:[%s1386 + $0x2b8] sm:$0xff]
        %v1475 = vld [vmem:[%s1386 + $0x2c0] sm:$0xff]
        %v1476 = vld [vmem:[%s1386 + $0x2c8] sm:$0xff]
        %v1477 = vld [vmem:[%s1386 + $0x2d0] sm:$0xff]
        %v1478 = vld [vmem:[%s1386 + $0x2d8] sm:$0xff]
        %v1479 = vld [vmem:[%s1386 + $0x2e0] sm:$0xff]
        %v1480 = vld [vmem:[%s1386 + $0x2e8] sm:$0xff]
        %v1481 = vld [vmem:[%s1386 + $0x2f0] sm:$0xff]
        %v1482 = vld [vmem:[%s1386 + $0x2f8] sm:$0xff]
        %v1483 = vld [vmem:[%s1386 + $0x300] sm:$0xff]
        %v1484 = vld [vmem:[%s1386 + $0x308] sm:$0xff]
        %v1485 = vld [vmem:[%s1386 + $0x310] sm:$0xff]
        %v1486 = vld [vmem:[%s1386 + $0x318] sm:$0xff]
        %v1487 = vld [vmem:[%s1386 + $0x320] sm:$0xff]
        %v1488 = vld [vmem:[%s1386 + $0x328] sm:$0xff]
        %v1489 = vld [vmem:[%s1386 + $0x330] sm:$0xff]
        %v1490 = vld [vmem:[%s1386 + $0x338] sm:$0xff]
        %v1491 = vld [vmem:[%s1386 + $0x340] sm:$0xff]
        %v1492 = vld [vmem:[%s1386 + $0x348] sm:$0xff]
        %v1493 = vld [vmem:[%s1386 + $0x350] sm:$0xff]
        %v1494 = vld [vmem:[%s1386 + $0x358] sm:$0xff]
        %v1495 = vld [vmem:[%s1386 + $0x360] sm:$0xff]
        %v1496 = vld [vmem:[%s1386 + $0x368] sm:$0xff]
        %v1497 = vld [vmem:[%s1386 + $0x370] sm:$0xff]
        %v1498 = vld [vmem:[%s1386 + $0x378] sm:$0xff]
        %v1499 = vld [vmem:[%s1386 + $0x380] sm:$0xff]
        %v1500 = vld [vmem:[%s1386 + $0x388] sm:$0xff]
        %v1501 = vld [vmem:[%s1386 + $0x390] sm:$0xff]
        %v1502 = vld [vmem:[%s1386 + $0x398] sm:$0xff]
        %v1503 = vld [vmem:[%s1386 + $0x3a0] sm:$0xff]
        %v1504 = vld [vmem:[%s1386 + $0x3a8] sm:$0xff]
        %v1505 = vld [vmem:[%s1386 + $0x3b0] sm:$0xff]
        %v1506 = vld [vmem:[%s1386 + $0x3b8] sm:$0xff]
        %v1507 = vld [vmem:[%s1386 + $0x3c0] sm:$0xff]
        %v1508 = vld [vmem:[%s1386 + $0x3c8] sm:$0xff]
        %v1509 = vld [vmem:[%s1386 + $0x3d0] sm:$0xff]
        %v1510 = vld [vmem:[%s1386 + $0x3d8] sm:$0xff]
        %v1511 = vld [vmem:[%s1386 + $0x3e0] sm:$0xff]
        %v1512 = vld [vmem:[%s1386 + $0x3e8] sm:$0xff]
        %v1513 = vld [vmem:[%s1386 + $0x3f0] sm:$0xff]
        %v1514 = vld [vmem:[%s1386 + $0x3f8] sm:$0xff]
        %v1643 = vunpack.c.l.b16 %v1387
        %v1644 = vunpack.c.h.b16 %v1387
        %v1645 = vunpack.c.l.b16 %v1388
        %v1646 = vunpack.c.h.b16 %v1388
        %v1647 = vunpack.c.l.b16 %v1389
        %v1648 = vunpack.c.h.b16 %v1389
        %v1649 = vunpack.c.l.b16 %v1390
        %v1650 = vunpack.c.h.b16 %v1390
        %v1651 = vunpack.c.l.b16 %v1391
        %v1652 = vunpack.c.h.b16 %v1391
        %v1653 = vunpack.c.l.b16 %v1392
        %v1654 = vunpack.c.h.b16 %v1392
        %v1655 = vunpack.c.l.b16 %v1393
        %v1656 = vunpack.c.h.b16 %v1393
        %v1657 = vunpack.c.l.b16 %v1394
        %v1658 = vunpack.c.h.b16 %v1394
        %v1659 = vunpack.c.l.b16 %v1395
        %v1660 = vunpack.c.h.b16 %v1395
        %v1661 = vunpack.c.l.b16 %v1396
        %v1662 = vunpack.c.h.b16 %v1396
        %v1663 = vunpack.c.l.b16 %v1397
        %v1664 = vunpack.c.h.b16 %v1397
        %v1665 = vunpack.c.l.b16 %v1398
        %v1666 = vunpack.c.h.b16 %v1398
        %v1667 = vunpack.c.l.b16 %v1399
        %v1668 = vunpack.c.h.b16 %v1399
        %v1669 = vunpack.c.l.b16 %v1400
        %v1670 = vunpack.c.h.b16 %v1400
        %v1671 = vunpack.c.l.b16 %v1401
        %v1672 = vunpack.c.h.b16 %v1401
        %v1673 = vunpack.c.l.b16 %v1402
        %v1674 = vunpack.c.h.b16 %v1402
        %v1675 = vunpack.c.l.b16 %v1403
        %v1676 = vunpack.c.h.b16 %v1403
        %v1677 = vunpack.c.l.b16 %v1404
        %v1678 = vunpack.c.h.b16 %v1404
        %v1679 = vunpack.c.l.b16 %v1405
        %v1680 = vunpack.c.h.b16 %v1405
        %v1681 = vunpack.c.l.b16 %v1406
        %v1682 = vunpack.c.h.b16 %v1406
        %v1683 = vunpack.c.l.b16 %v1407
        %v1684 = vunpack.c.h.b16 %v1407
        %v1685 = vunpack.c.l.b16 %v1408
        %v1686 = vunpack.c.h.b16 %v1408
        %v1687 = vunpack.c.l.b16 %v1409
        %v1688 = vunpack.c.h.b16 %v1409
        %v1689 = vunpack.c.l.b16 %v1410
        %v1690 = vunpack.c.h.b16 %v1410
        %v1691 = vunpack.c.l.b16 %v1411
        %v1692 = vunpack.c.h.b16 %v1411
        %v1693 = vunpack.c.l.b16 %v1412
        %v1694 = vunpack.c.h.b16 %v1412
        %v1695 = vunpack.c.l.b16 %v1413
        %v1696 = vunpack.c.h.b16 %v1413
        %v1697 = vunpack.c.l.b16 %v1414
        %v1698 = vunpack.c.h.b16 %v1414
        %v1699 = vunpack.c.l.b16 %v1415
        %v1700 = vunpack.c.h.b16 %v1415
        %v1701 = vunpack.c.l.b16 %v1416
        %v1702 = vunpack.c.h.b16 %v1416
        %v1703 = vunpack.c.l.b16 %v1417
        %v1704 = vunpack.c.h.b16 %v1417
        %v1705 = vunpack.c.l.b16 %v1418
        %v1706 = vunpack.c.h.b16 %v1418
        %v1707 = vunpack.c.l.b16 %v1419
        %v1708 = vunpack.c.h.b16 %v1419
        %v1709 = vunpack.c.l.b16 %v1420
        %v1710 = vunpack.c.h.b16 %v1420
        %v1711 = vunpack.c.l.b16 %v1421
        %v1712 = vunpack.c.h.b16 %v1421
        %v1713 = vunpack.c.l.b16 %v1422
        %v1714 = vunpack.c.h.b16 %v1422
        %v1715 = vunpack.c.l.b16 %v1423
        %v1716 = vunpack.c.h.b16 %v1423
        %v1717 = vunpack.c.l.b16 %v1424
        %v1718 = vunpack.c.h.b16 %v1424
        %v1719 = vunpack.c.l.b16 %v1425
        %v1720 = vunpack.c.h.b16 %v1425
        %v1721 = vunpack.c.l.b16 %v1426
        %v1722 = vunpack.c.h.b16 %v1426
        %v1723 = vunpack.c.l.b16 %v1427
        %v1724 = vunpack.c.h.b16 %v1427
        %v1725 = vunpack.c.l.b16 %v1428
        %v1726 = vunpack.c.h.b16 %v1428
        %v1727 = vunpack.c.l.b16 %v1429
        %v1728 = vunpack.c.h.b16 %v1429
        %v1729 = vunpack.c.l.b16 %v1430
        %v1730 = vunpack.c.h.b16 %v1430
        %v1731 = vunpack.c.l.b16 %v1431
        %v1732 = vunpack.c.h.b16 %v1431
        %v1733 = vunpack.c.l.b16 %v1432
        %v1734 = vunpack.c.h.b16 %v1432
        %v1735 = vunpack.c.l.b16 %v1433
        %v1736 = vunpack.c.h.b16 %v1433
        %v1737 = vunpack.c.l.b16 %v1434
        %v1738 = vunpack.c.h.b16 %v1434
        %v1739 = vunpack.c.l.b16 %v1435
        %v1740 = vunpack.c.h.b16 %v1435
        %v1741 = vunpack.c.l.b16 %v1436
        %v1742 = vunpack.c.h.b16 %v1436
        %v1743 = vunpack.c.l.b16 %v1437
        %v1744 = vunpack.c.h.b16 %v1437
        %v1745 = vunpack.c.l.b16 %v1438
        %v1746 = vunpack.c.h.b16 %v1438
        %v1747 = vunpack.c.l.b16 %v1439
        %v1748 = vunpack.c.h.b16 %v1439
        %v1749 = vunpack.c.l.b16 %v1440
        %v1750 = vunpack.c.h.b16 %v1440
        %v1751 = vunpack.c.l.b16 %v1441
        %v1752 = vunpack.c.h.b16 %v1441
        %v1753 = vunpack.c.l.b16 %v1442
        %v1754 = vunpack.c.h.b16 %v1442
        %v1755 = vunpack.c.l.b16 %v1443
        %v1756 = vunpack.c.h.b16 %v1443
        %v1757 = vunpack.c.l.b16 %v1444
        %v1758 = vunpack.c.h.b16 %v1444
        %v1759 = vunpack.c.l.b16 %v1445
        %v1760 = vunpack.c.h.b16 %v1445
        %v1761 = vunpack.c.l.b16 %v1446
        %v1762 = vunpack.c.h.b16 %v1446
        %v1763 = vunpack.c.l.b16 %v1447
        %v1764 = vunpack.c.h.b16 %v1447
        %v1765 = vunpack.c.l.b16 %v1448
        %v1766 = vunpack.c.h.b16 %v1448
        %v1767 = vunpack.c.l.b16 %v1449
        %v1768 = vunpack.c.h.b16 %v1449
        %v1769 = vunpack.c.l.b16 %v1450
        %v1770 = vunpack.c.h.b16 %v1450
        %v1771 = vunpack.c.l.b16 %v1451
        %v1772 = vunpack.c.h.b16 %v1451
        %v1773 = vunpack.c.l.b16 %v1452
        %v1774 = vunpack.c.h.b16 %v1452
        %v1775 = vunpack.c.l.b16 %v1453
        %v1776 = vunpack.c.h.b16 %v1453
        %v1777 = vunpack.c.l.b16 %v1454
        %v1778 = vunpack.c.h.b16 %v1454
        %v1779 = vunpack.c.l.b16 %v1455
        %v1780 = vunpack.c.h.b16 %v1455
        %v1781 = vunpack.c.l.b16 %v1456
        %v1782 = vunpack.c.h.b16 %v1456
        %v1783 = vunpack.c.l.b16 %v1457
        %v1784 = vunpack.c.h.b16 %v1457
        %v1785 = vunpack.c.l.b16 %v1458
        %v1786 = vunpack.c.h.b16 %v1458
        %v1787 = vunpack.c.l.b16 %v1459
        %v1788 = vunpack.c.h.b16 %v1459
        %v1789 = vunpack.c.l.b16 %v1460
        %v1790 = vunpack.c.h.b16 %v1460
        %v1791 = vunpack.c.l.b16 %v1461
        %v1792 = vunpack.c.h.b16 %v1461
        %v1793 = vunpack.c.l.b16 %v1462
        %v1794 = vunpack.c.h.b16 %v1462
        %v1795 = vunpack.c.l.b16 %v1463
        %v1796 = vunpack.c.h.b16 %v1463
        %v1797 = vunpack.c.l.b16 %v1464
        %v1798 = vunpack.c.h.b16 %v1464
        %v1799 = vunpack.c.l.b16 %v1465
        %v1800 = vunpack.c.h.b16 %v1465
        %v1801 = vunpack.c.l.b16 %v1466
        %v1802 = vunpack.c.h.b16 %v1466
        %v1803 = vunpack.c.l.b16 %v1467
        %v1804 = vunpack.c.h.b16 %v1467
        %v1805 = vunpack.c.l.b16 %v1468
        %v1806 = vunpack.c.h.b16 %v1468
        %v1807 = vunpack.c.l.b16 %v1469
        %v1808 = vunpack.c.h.b16 %v1469
        %v1809 = vunpack.c.l.b16 %v1470
        %v1810 = vunpack.c.h.b16 %v1470
        %v1811 = vunpack.c.l.b16 %v1471
        %v1812 = vunpack.c.h.b16 %v1471
        %v1813 = vunpack.c.l.b16 %v1472
        %v1814 = vunpack.c.h.b16 %v1472
        %v1815 = vunpack.c.l.b16 %v1473
        %v1816 = vunpack.c.h.b16 %v1473
        %v1817 = vunpack.c.l.b16 %v1474
        %v1818 = vunpack.c.h.b16 %v1474
        %v1819 = vunpack.c.l.b16 %v1475
        %v1820 = vunpack.c.h.b16 %v1475
        %v1821 = vunpack.c.l.b16 %v1476
        %v1822 = vunpack.c.h.b16 %v1476
        %v1823 = vunpack.c.l.b16 %v1477
        %v1824 = vunpack.c.h.b16 %v1477
        %v1825 = vunpack.c.l.b16 %v1478
        %v1826 = vunpack.c.h.b16 %v1478
        %v1827 = vunpack.c.l.b16 %v1479
        %v1828 = vunpack.c.h.b16 %v1479
        %v1829 = vunpack.c.l.b16 %v1480
        %v1830 = vunpack.c.h.b16 %v1480
        %v1831 = vunpack.c.l.b16 %v1481
        %v1832 = vunpack.c.h.b16 %v1481
        %v1833 = vunpack.c.l.b16 %v1482
        %v1834 = vunpack.c.h.b16 %v1482
        %v1835 = vunpack.c.l.b16 %v1483
        %v1836 = vunpack.c.h.b16 %v1483
        %v1837 = vunpack.c.l.b16 %v1484
        %v1838 = vunpack.c.h.b16 %v1484
        %v1839 = vunpack.c.l.b16 %v1485
        %v1840 = vunpack.c.h.b16 %v1485
        %v1841 = vunpack.c.l.b16 %v1486
        %v1842 = vunpack.c.h.b16 %v1486
        %v1843 = vunpack.c.l.b16 %v1487
        %v1844 = vunpack.c.h.b16 %v1487
        %v1845 = vunpack.c.l.b16 %v1488
        %v1846 = vunpack.c.h.b16 %v1488
        %v1847 = vunpack.c.l.b16 %v1489
        %v1848 = vunpack.c.h.b16 %v1489
        %v1849 = vunpack.c.l.b16 %v1490
        %v1850 = vunpack.c.h.b16 %v1490
        %v1851 = vunpack.c.l.b16 %v1491
        %v1852 = vunpack.c.h.b16 %v1491
        %v1853 = vunpack.c.l.b16 %v1492
        %v1854 = vunpack.c.h.b16 %v1492
        %v1855 = vunpack.c.l.b16 %v1493
        %v1856 = vunpack.c.h.b16 %v1493
        %v1857 = vunpack.c.l.b16 %v1494
        %v1858 = vunpack.c.h.b16 %v1494
        %v1859 = vunpack.c.l.b16 %v1495
        %v1860 = vunpack.c.h.b16 %v1495
        %v1861 = vunpack.c.l.b16 %v1496
        %v1862 = vunpack.c.h.b16 %v1496
        %v1863 = vunpack.c.l.b16 %v1497
        %v1864 = vunpack.c.h.b16 %v1497
        %v1865 = vunpack.c.l.b16 %v1498
        %v1866 = vunpack.c.h.b16 %v1498
        %v1867 = vunpack.c.l.b16 %v1499
        %v1868 = vunpack.c.h.b16 %v1499
        %v1869 = vunpack.c.l.b16 %v1500
        %v1870 = vunpack.c.h.b16 %v1500
        %v1871 = vunpack.c.l.b16 %v1501
        %v1872 = vunpack.c.h.b16 %v1501
        %v1873 = vunpack.c.l.b16 %v1502
        %v1874 = vunpack.c.h.b16 %v1502
        %v1875 = vunpack.c.l.b16 %v1503
        %v1876 = vunpack.c.h.b16 %v1503
        %v1877 = vunpack.c.l.b16 %v1504
        %v1878 = vunpack.c.h.b16 %v1504
        %v1879 = vunpack.c.l.b16 %v1505
        %v1880 = vunpack.c.h.b16 %v1505
        %v1881 = vunpack.c.l.b16 %v1506
        %v1882 = vunpack.c.h.b16 %v1506
        %v1883 = vunpack.c.l.b16 %v1507
        %v1884 = vunpack.c.h.b16 %v1507
        %v1885 = vunpack.c.l.b16 %v1508
        %v1886 = vunpack.c.h.b16 %v1508
        %v1887 = vunpack.c.l.b16 %v1509
        %v1888 = vunpack.c.h.b16 %v1509
        %v1889 = vunpack.c.l.b16 %v1510
        %v1890 = vunpack.c.h.b16 %v1510
        %v1891 = vunpack.c.l.b16 %v1511
        %v1892 = vunpack.c.h.b16 %v1511
        %v1893 = vunpack.c.l.b16 %v1512
        %v1894 = vunpack.c.h.b16 %v1512
        %v1895 = vunpack.c.l.b16 %v1513
        %v1896 = vunpack.c.h.b16 %v1513
        %v1897 = vunpack.c.l.b16 %v1514
        %v1898 = vunpack.c.h.b16 %v1514
        %v1899 = vpack.c.b16 %v1647, %v1643
        %v1900 = vpack.c.b16 %v1648, %v1644
        %v1901 = vpack.c.b16 %v1649, %v1645
        %v1902 = vpack.c.b16 %v1650, %v1646
        %v1903 = vpack.c.b16 %v1655, %v1651
        %v1904 = vpack.c.b16 %v1656, %v1652
        %v1905 = vpack.c.b16 %v1657, %v1653
        %v1906 = vpack.c.b16 %v1658, %v1654
        %v1907 = vpack.c.b16 %v1663, %v1659
        %v1908 = vpack.c.b16 %v1664, %v1660
        %v1909 = vpack.c.b16 %v1665, %v1661
        %v1910 = vpack.c.b16 %v1666, %v1662
        %v1911 = vpack.c.b16 %v1671, %v1667
        %v1912 = vpack.c.b16 %v1672, %v1668
        %v1913 = vpack.c.b16 %v1673, %v1669
        %v1914 = vpack.c.b16 %v1674, %v1670
        %v1915 = vpack.c.b16 %v1679, %v1675
        %v1916 = vpack.c.b16 %v1680, %v1676
        %v1917 = vpack.c.b16 %v1681, %v1677
        %v1918 = vpack.c.b16 %v1682, %v1678
        %v1919 = vpack.c.b16 %v1687, %v1683
        %v1920 = vpack.c.b16 %v1688, %v1684
        %v1921 = vpack.c.b16 %v1689, %v1685
        %v1922 = vpack.c.b16 %v1690, %v1686
        %v1923 = vpack.c.b16 %v1695, %v1691
        %v1924 = vpack.c.b16 %v1696, %v1692
        %v1925 = vpack.c.b16 %v1697, %v1693
        %v1926 = vpack.c.b16 %v1698, %v1694
        %v1927 = vpack.c.b16 %v1703, %v1699
        %v1928 = vpack.c.b16 %v1704, %v1700
        %v1929 = vpack.c.b16 %v1705, %v1701
        %v1930 = vpack.c.b16 %v1706, %v1702
        %v1931 = vpack.c.b16 %v1711, %v1707
        %v1932 = vpack.c.b16 %v1712, %v1708
        %v1933 = vpack.c.b16 %v1713, %v1709
        %v1934 = vpack.c.b16 %v1714, %v1710
        %v1935 = vpack.c.b16 %v1719, %v1715
        %v1936 = vpack.c.b16 %v1720, %v1716
        %v1937 = vpack.c.b16 %v1721, %v1717
        %v1938 = vpack.c.b16 %v1722, %v1718
        %v1939 = vpack.c.b16 %v1727, %v1723
        %v1940 = vpack.c.b16 %v1728, %v1724
        %v1941 = vpack.c.b16 %v1729, %v1725
        %v1942 = vpack.c.b16 %v1730, %v1726
        %v1943 = vpack.c.b16 %v1735, %v1731
        %v1944 = vpack.c.b16 %v1736, %v1732
        %v1945 = vpack.c.b16 %v1737, %v1733
        %v1946 = vpack.c.b16 %v1738, %v1734
        %v1947 = vpack.c.b16 %v1743, %v1739
        %v1948 = vpack.c.b16 %v1744, %v1740
        %v1949 = vpack.c.b16 %v1745, %v1741
        %v1950 = vpack.c.b16 %v1746, %v1742
        %v1951 = vpack.c.b16 %v1751, %v1747
        %v1952 = vpack.c.b16 %v1752, %v1748
        %v1953 = vpack.c.b16 %v1753, %v1749
        %v1954 = vpack.c.b16 %v1754, %v1750
        %v1955 = vpack.c.b16 %v1759, %v1755
        %v1956 = vpack.c.b16 %v1760, %v1756
        %v1957 = vpack.c.b16 %v1761, %v1757
        %v1958 = vpack.c.b16 %v1762, %v1758
        %v1959 = vpack.c.b16 %v1767, %v1763
        %v1960 = vpack.c.b16 %v1768, %v1764
        %v1961 = vpack.c.b16 %v1769, %v1765
        %v1962 = vpack.c.b16 %v1770, %v1766
        %v1963 = vpack.c.b16 %v1775, %v1771
        %v1964 = vpack.c.b16 %v1776, %v1772
        %v1965 = vpack.c.b16 %v1777, %v1773
        %v1966 = vpack.c.b16 %v1778, %v1774
        %v1967 = vpack.c.b16 %v1783, %v1779
        %v1968 = vpack.c.b16 %v1784, %v1780
        %v1969 = vpack.c.b16 %v1785, %v1781
        %v1970 = vpack.c.b16 %v1786, %v1782
        %v1971 = vpack.c.b16 %v1791, %v1787
        %v1972 = vpack.c.b16 %v1792, %v1788
        %v1973 = vpack.c.b16 %v1793, %v1789
        %v1974 = vpack.c.b16 %v1794, %v1790
        %v1975 = vpack.c.b16 %v1799, %v1795
        %v1976 = vpack.c.b16 %v1800, %v1796
        %v1977 = vpack.c.b16 %v1801, %v1797
        %v1978 = vpack.c.b16 %v1802, %v1798
        %v1979 = vpack.c.b16 %v1807, %v1803
        %v1980 = vpack.c.b16 %v1808, %v1804
        %v1981 = vpack.c.b16 %v1809, %v1805
        %v1982 = vpack.c.b16 %v1810, %v1806
        %v1983 = vpack.c.b16 %v1815, %v1811
        %v1984 = vpack.c.b16 %v1816, %v1812
        %v1985 = vpack.c.b16 %v1817, %v1813
        %v1986 = vpack.c.b16 %v1818, %v1814
        %v1987 = vpack.c.b16 %v1823, %v1819
        %v1988 = vpack.c.b16 %v1824, %v1820
        %v1989 = vpack.c.b16 %v1825, %v1821
        %v1990 = vpack.c.b16 %v1826, %v1822
        %v1991 = vpack.c.b16 %v1831, %v1827
        %v1992 = vpack.c.b16 %v1832, %v1828
        %v1993 = vpack.c.b16 %v1833, %v1829
        %v1994 = vpack.c.b16 %v1834, %v1830
        %v1995 = vpack.c.b16 %v1839, %v1835
        %v1996 = vpack.c.b16 %v1840, %v1836
        %v1997 = vpack.c.b16 %v1841, %v1837
        %v1998 = vpack.c.b16 %v1842, %v1838
        %v1999 = vpack.c.b16 %v1847, %v1843
        %v2000 = vpack.c.b16 %v1848, %v1844
        %v2001 = vpack.c.b16 %v1849, %v1845
        %v2002 = vpack.c.b16 %v1850, %v1846
        %v2003 = vpack.c.b16 %v1855, %v1851
        %v2004 = vpack.c.b16 %v1856, %v1852
        %v2005 = vpack.c.b16 %v1857, %v1853
        %v2006 = vpack.c.b16 %v1858, %v1854
        %v2007 = vpack.c.b16 %v1863, %v1859
        %v2008 = vpack.c.b16 %v1864, %v1860
        %v2009 = vpack.c.b16 %v1865, %v1861
        %v2010 = vpack.c.b16 %v1866, %v1862
        %v2011 = vpack.c.b16 %v1871, %v1867
        %v2012 = vpack.c.b16 %v1872, %v1868
        %v2013 = vpack.c.b16 %v1873, %v1869
        %v2014 = vpack.c.b16 %v1874, %v1870
        %v2015 = vpack.c.b16 %v1879, %v1875
        %v2016 = vpack.c.b16 %v1880, %v1876
        %v2017 = vpack.c.b16 %v1881, %v1877
        %v2018 = vpack.c.b16 %v1882, %v1878
        %v2019 = vpack.c.b16 %v1887, %v1883
        %v2020 = vpack.c.b16 %v1888, %v1884
        %v2021 = vpack.c.b16 %v1889, %v1885
        %v2022 = vpack.c.b16 %v1890, %v1886
        %v2023 = vpack.c.b16 %v1895, %v1891
        %v2024 = vpack.c.b16 %v1896, %v1892
        %v2025 = vpack.c.b16 %v1897, %v1893
        %v2026 = vpack.c.b16 %v1898, %v1894
        %2155 = vmatprep.subr.bf16.mxu0 %v1900
        %2156 = vmatpush1.bf16.msra.mxu0 %v1899
        %2157 = vmatprep.subr.bf16.mxu0 %v1904
        %2158 = vmatpush1.bf16.msra.mxu0 %v1903
        %2159 = vmatprep.subr.bf16.mxu0 %v1908
        %2160 = vmatpush1.bf16.msra.mxu0 %v1907
        %2161 = vmatprep.subr.bf16.mxu0 %v1912
        %2162 = vmatpush1.bf16.msra.mxu0 %v1911
        %2163 = vmatprep.subr.bf16.mxu0 %v1916
        %2164 = vmatpush1.bf16.msra.mxu0 %v1915
        %2165 = vmatprep.subr.bf16.mxu0 %v1920
        %2166 = vmatpush1.bf16.msra.mxu0 %v1919
        %2167 = vmatprep.subr.bf16.mxu0 %v1924
        %2168 = vmatpush1.bf16.msra.mxu0 %v1923
        %2169 = vmatprep.subr.bf16.mxu0 %v1928
        %2170 = vmatpush1.bf16.msra.mxu0 %v1927
        %2171 = vmatprep.subr.bf16.mxu0 %v1932
        %2172 = vmatpush1.bf16.msra.mxu0 %v1931
        %2173 = vmatprep.subr.bf16.mxu0 %v1936
        %2174 = vmatpush1.bf16.msra.mxu0 %v1935
        %2175 = vmatprep.subr.bf16.mxu0 %v1940
        %2176 = vmatpush1.bf16.msra.mxu0 %v1939
        %2177 = vmatprep.subr.bf16.mxu0 %v1944
        %2178 = vmatpush1.bf16.msra.mxu0 %v1943
        %2179 = vmatprep.subr.bf16.mxu0 %v1948
        %2180 = vmatpush1.bf16.msra.mxu0 %v1947
        %2181 = vmatprep.subr.bf16.mxu0 %v1952
        %2182 = vmatpush1.bf16.msra.mxu0 %v1951
        %2183 = vmatprep.subr.bf16.mxu0 %v1956
        %2184 = vmatpush1.bf16.msra.mxu0 %v1955
        %2185 = vmatprep.subr.bf16.mxu0 %v1960
        %2186 = vmatpush1.bf16.msra.mxu0 %v1959
        %2187 = vmatprep.mubr.bf16.mxu0 %v1381
        %2188 = vmatmul.mubr.bf16.gmra.mrb[0].mxu0 %v1380
        %v2189 = vpop.f32.mrb[0].mxu0
        %v2190 = vadd.f32 0.0, %v2189
        %v2191 = vpop.f32.mrb[0].mxu0
        %v2192 = vadd.f32 0.0, %v2191
        %v2193 = vpop.f32.mrb[0].mxu0
        %v2194 = vpop.f32.mrb[0].mxu0
        %2195 = vdwg.mxu0
        %2196 = vmatprep.subr.bf16.mxu0 %v1964
        %2197 = vmatpush1.bf16.msra.mxu0 %v1963
        %2198 = vmatprep.subr.bf16.mxu0 %v1968
        %2199 = vmatpush1.bf16.msra.mxu0 %v1967
        %2200 = vmatprep.subr.bf16.mxu0 %v1972
        %2201 = vmatpush1.bf16.msra.mxu0 %v1971
        %2202 = vmatprep.subr.bf16.mxu0 %v1976
        %2203 = vmatpush1.bf16.msra.mxu0 %v1975
        %2204 = vmatprep.subr.bf16.mxu0 %v1980
        %2205 = vmatpush1.bf16.msra.mxu0 %v1979
        %2206 = vmatprep.subr.bf16.mxu0 %v1984
        %2207 = vmatpush1.bf16.msra.mxu0 %v1983
        %2208 = vmatprep.subr.bf16.mxu0 %v1988
        %2209 = vmatpush1.bf16.msra.mxu0 %v1987
        %2210 = vmatprep.subr.bf16.mxu0 %v1992
        %2211 = vmatpush1.bf16.msra.mxu0 %v1991
        %2212 = vmatprep.subr.bf16.mxu0 %v1996
        %2213 = vmatpush1.bf16.msra.mxu0 %v1995
        %2214 = vmatprep.subr.bf16.mxu0 %v2000
        %2215 = vmatpush1.bf16.msra.mxu0 %v1999
        %2216 = vmatprep.subr.bf16.mxu0 %v2004
        %2217 = vmatpush1.bf16.msra.mxu0 %v2003
        %2218 = vmatprep.subr.bf16.mxu0 %v2008
        %2219 = vmatpush1.bf16.msra.mxu0 %v2007
        %2220 = vmatprep.subr.bf16.mxu0 %v2012
        %2221 = vmatpush1.bf16.msra.mxu0 %v2011
        %2222 = vmatprep.subr.bf16.mxu0 %v2016
        %2223 = vmatpush1.bf16.msra.mxu0 %v2015
        %2224 = vmatprep.subr.bf16.mxu0 %v2020
        %2225 = vmatpush1.bf16.msra.mxu0 %v2019
        %2226 = vmatprep.subr.bf16.mxu0 %v2024
        %2227 = vmatpush1.bf16.msra.mxu0 %v2023
        %2228 = vmatprep.mubr.bf16.mxu0 %v1383
        %2229 = vmatmul.mubr.bf16.gmra.mrb[0].mxu0 %v1382
        %v2230 = vpop.f32.mrb[0].mxu0
        %v2231 = vadd.f32 %v2190, %v2230
        %v2232 = vpop.f32.mrb[0].mxu0
        %v2233 = vadd.f32 %v2192, %v2232
        %v2234 = vpop.f32.mrb[0].mxu0
        %v2235 = vpop.f32.mrb[0].mxu0
        %2236 = vdwg.mxu0
        %2237 = vmatprep.subr.bf16.mxu0 %v1902
        %2238 = vmatpush1.bf16.msra.mxu0 %v1901
        %2239 = vmatprep.subr.bf16.mxu0 %v1906
        %2240 = vmatpush1.bf16.msra.mxu0 %v1905
        %2241 = vmatprep.subr.bf16.mxu0 %v1910
        %2242 = vmatpush1.bf16.msra.mxu0 %v1909
        %2243 = vmatprep.subr.bf16.mxu0 %v1914
        %2244 = vmatpush1.bf16.msra.mxu0 %v1913
        %2245 = vmatprep.subr.bf16.mxu0 %v1918
        %2246 = vmatpush1.bf16.msra.mxu0 %v1917
        %2247 = vmatprep.subr.bf16.mxu0 %v1922
        %2248 = vmatpush1.bf16.msra.mxu0 %v1921
        %2249 = vmatprep.subr.bf16.mxu0 %v1926
        %2250 = vmatpush1.bf16.msra.mxu0 %v1925
        %2251 = vmatprep.subr.bf16.mxu0 %v1930
        %2252 = vmatpush1.bf16.msra.mxu0 %v1929
        %2253 = vmatprep.subr.bf16.mxu0 %v1934
        %2254 = vmatpush1.bf16.msra.mxu0 %v1933
        %2255 = vmatprep.subr.bf16.mxu0 %v1938
        %2256 = vmatpush1.bf16.msra.mxu0 %v1937
        %2257 = vmatprep.subr.bf16.mxu0 %v1942
        %2258 = vmatpush1.bf16.msra.mxu0 %v1941
        %2259 = vmatprep.subr.bf16.mxu0 %v1946
        %2260 = vmatpush1.bf16.msra.mxu0 %v1945
        %2261 = vmatprep.subr.bf16.mxu0 %v1950
        %2262 = vmatpush1.bf16.msra.mxu0 %v1949
        %2263 = vmatprep.subr.bf16.mxu0 %v1954
        %2264 = vmatpush1.bf16.msra.mxu0 %v1953
        %2265 = vmatprep.subr.bf16.mxu0 %v1958
        %2266 = vmatpush1.bf16.msra.mxu0 %v1957
        %2267 = vmatprep.subr.bf16.mxu0 %v1962
        %2268 = vmatpush1.bf16.msra.mxu0 %v1961
        %2269 = vmatprep.mubr.bf16.mxu0 %v1381
        %2270 = vmatmul.mubr.bf16.gmra.mrb[0].mxu0 %v1380
        %v2271 = vpop.f32.mrb[0].mxu0
        %v2272 = vadd.f32 0.0, %v2271
        %v2273 = vpop.f32.mrb[0].mxu0
        %v2274 = vadd.f32 0.0, %v2273
        %v2275 = vpop.f32.mrb[0].mxu0
        %v2276 = vpop.f32.mrb[0].mxu0
        %2277 = vdwg.mxu0
        %2278 = vmatprep.subr.bf16.mxu0 %v1966
        %2279 = vmatpush1.bf16.msra.mxu0 %v1965
        %2280 = vmatprep.subr.bf16.mxu0 %v1970
        %2281 = vmatpush1.bf16.msra.mxu0 %v1969
        %2282 = vmatprep.subr.bf16.mxu0 %v1974
        %2283 = vmatpush1.bf16.msra.mxu0 %v1973
        %2284 = vmatprep.subr.bf16.mxu0 %v1978
        %2285 = vmatpush1.bf16.msra.mxu0 %v1977
        %2286 = vmatprep.subr.bf16.mxu0 %v1982
        %2287 = vmatpush1.bf16.msra.mxu0 %v1981
        %2288 = vmatprep.subr.bf16.mxu0 %v1986
        %2289 = vmatpush1.bf16.msra.mxu0 %v1985
        %2290 = vmatprep.subr.bf16.mxu0 %v1990
        %2291 = vmatpush1.bf16.msra.mxu0 %v1989
        %2292 = vmatprep.subr.bf16.mxu0 %v1994
        %2293 = vmatpush1.bf16.msra.mxu0 %v1993
        %2294 = vmatprep.subr.bf16.mxu0 %v1998
        %2295 = vmatpush1.bf16.msra.mxu0 %v1997
        %2296 = vmatprep.subr.bf16.mxu0 %v2002
        %2297 = vmatpush1.bf16.msra.mxu0 %v2001
        %2298 = vmatprep.subr.bf16.mxu0 %v2006
        %2299 = vmatpush1.bf16.msra.mxu0 %v2005
        %2300 = vmatprep.subr.bf16.mxu0 %v2010
        %2301 = vmatpush1.bf16.msra.mxu0 %v2009
        %2302 = vmatprep.subr.bf16.mxu0 %v2014
        %2303 = vmatpush1.bf16.msra.mxu0 %v2013
        %2304 = vmatprep.subr.bf16.mxu0 %v2018
        %2305 = vmatpush1.bf16.msra.mxu0 %v2017
        %2306 = vmatprep.subr.bf16.mxu0 %v2022
        %2307 = vmatpush1.bf16.msra.mxu0 %v2021
        %2308 = vmatprep.subr.bf16.mxu0 %v2026
        %2309 = vmatpush1.bf16.msra.mxu0 %v2025
        %2310 = vmatprep.mubr.bf16.mxu0 %v1383
        %2311 = vmatmul.mubr.bf16.gmra.mrb[0].mxu0 %v1382
        %v2312 = vpop.f32.mrb[0].mxu0
        %v2313 = vadd.f32 %v2272, %v2312
        %v2314 = vpop.f32.mrb[0].mxu0
        %v2315 = vadd.f32 %v2274, %v2314
        %v2316 = vpop.f32.mrb[0].mxu0
        %v2317 = vpop.f32.mrb[0].mxu0
        %2318 = vdwg.mxu0
        %v2319 = vadd.f32 %v1376, %v2231
        %v2320 = vadd.f32 %v1377, %v2233
        %v2321 = vadd.f32 %v1378, %v2313
        %v2322 = vadd.f32 %v1379, %v2315
        %2323 = vst [vmem:[#allocation2] sm:$0xff] %v2319
        %2324 = vst [vmem:[#allocation2 + $0x8] sm:$0xff] %v2320
        %2325 = vst [vmem:[#allocation2 + $0x10] sm:$0xff] %v2321
        %2326 = vst [vmem:[#allocation2 + $0x18] sm:$0xff] %v2322
        %s2327 = scalar_lea.vmem [#allocation6], 16
        %v2328 = vld [vmem:[%s2327] sm:$0xff]
        %v2329 = vld [vmem:[%s2327 + $0x8] sm:$0xff]
        %v2330 = vld [vmem:[%s2327 + $0x40] sm:$0xff]
        %v2331 = vld [vmem:[%s2327 + $0x48] sm:$0xff]
        %v2332 = vld [vmem:[%s2327 + $0x80] sm:$0xff]
        %v2333 = vld [vmem:[%s2327 + $0x88] sm:$0xff]
        %v2334 = vld [vmem:[%s2327 + $0xc0] sm:$0xff]
        %v2335 = vld [vmem:[%s2327 + $0xc8] sm:$0xff]
        %v2336 = vld [vmem:[%s2327 + $0x100] sm:$0xff]
        %v2337 = vld [vmem:[%s2327 + $0x108] sm:$0xff]
        %v2338 = vld [vmem:[%s2327 + $0x140] sm:$0xff]
        %v2339 = vld [vmem:[%s2327 + $0x148] sm:$0xff]
        %v2340 = vld [vmem:[%s2327 + $0x180] sm:$0xff]
        %v2341 = vld [vmem:[%s2327 + $0x188] sm:$0xff]
        %v2342 = vld [vmem:[%s2327 + $0x1c0] sm:$0xff]
        %v2343 = vld [vmem:[%s2327 + $0x1c8] sm:$0xff]
        %v2344 = vld [vmem:[%s2327 + $0x200] sm:$0xff]
        %v2345 = vld [vmem:[%s2327 + $0x208] sm:$0xff]
        %v2346 = vld [vmem:[%s2327 + $0x240] sm:$0xff]
        %v2347 = vld [vmem:[%s2327 + $0x248] sm:$0xff]
        %v2348 = vld [vmem:[%s2327 + $0x280] sm:$0xff]
        %v2349 = vld [vmem:[%s2327 + $0x288] sm:$0xff]
        %v2350 = vld [vmem:[%s2327 + $0x2c0] sm:$0xff]
        %v2351 = vld [vmem:[%s2327 + $0x2c8] sm:$0xff]
        %v2352 = vld [vmem:[%s2327 + $0x300] sm:$0xff]
        %v2353 = vld [vmem:[%s2327 + $0x308] sm:$0xff]
        %v2354 = vld [vmem:[%s2327 + $0x340] sm:$0xff]
        %v2355 = vld [vmem:[%s2327 + $0x348] sm:$0xff]
        %v2356 = vld [vmem:[%s2327 + $0x380] sm:$0xff]
        %v2357 = vld [vmem:[%s2327 + $0x388] sm:$0xff]
        %v2358 = vld [vmem:[%s2327 + $0x3c0] sm:$0xff]
        %v2359 = vld [vmem:[%s2327 + $0x3c8] sm:$0xff]
        %v2360 = vld [vmem:[%s2327 + $0x400] sm:$0xff]
        %v2361 = vld [vmem:[%s2327 + $0x408] sm:$0xff]
        %v2362 = vld [vmem:[%s2327 + $0x440] sm:$0xff]
        %v2363 = vld [vmem:[%s2327 + $0x448] sm:$0xff]
        %v2364 = vld [vmem:[%s2327 + $0x480] sm:$0xff]
        %v2365 = vld [vmem:[%s2327 + $0x488] sm:$0xff]
        %v2366 = vld [vmem:[%s2327 + $0x4c0] sm:$0xff]
        %v2367 = vld [vmem:[%s2327 + $0x4c8] sm:$0xff]
        %v2368 = vld [vmem:[%s2327 + $0x500] sm:$0xff]
        %v2369 = vld [vmem:[%s2327 + $0x508] sm:$0xff]
        %v2370 = vld [vmem:[%s2327 + $0x540] sm:$0xff]
        %v2371 = vld [vmem:[%s2327 + $0x548] sm:$0xff]
        %v2372 = vld [vmem:[%s2327 + $0x580] sm:$0xff]
        %v2373 = vld [vmem:[%s2327 + $0x588] sm:$0xff]
        %v2374 = vld [vmem:[%s2327 + $0x5c0] sm:$0xff]
        %v2375 = vld [vmem:[%s2327 + $0x5c8] sm:$0xff]
        %v2376 = vld [vmem:[%s2327 + $0x600] sm:$0xff]
        %v2377 = vld [vmem:[%s2327 + $0x608] sm:$0xff]
        %v2378 = vld [vmem:[%s2327 + $0x640] sm:$0xff]
        %v2379 = vld [vmem:[%s2327 + $0x648] sm:$0xff]
        %v2380 = vld [vmem:[%s2327 + $0x680] sm:$0xff]
        %v2381 = vld [vmem:[%s2327 + $0x688] sm:$0xff]
        %v2382 = vld [vmem:[%s2327 + $0x6c0] sm:$0xff]
        %v2383 = vld [vmem:[%s2327 + $0x6c8] sm:$0xff]
        %v2384 = vld [vmem:[%s2327 + $0x700] sm:$0xff]
        %v2385 = vld [vmem:[%s2327 + $0x708] sm:$0xff]
        %v2386 = vld [vmem:[%s2327 + $0x740] sm:$0xff]
        %v2387 = vld [vmem:[%s2327 + $0x748] sm:$0xff]
        %v2388 = vld [vmem:[%s2327 + $0x780] sm:$0xff]
        %v2389 = vld [vmem:[%s2327 + $0x788] sm:$0xff]
        %v2390 = vld [vmem:[%s2327 + $0x7c0] sm:$0xff]
        %v2391 = vld [vmem:[%s2327 + $0x7c8] sm:$0xff]
        %v2392 = vld [vmem:[%s2327 + $0x800] sm:$0xff]
        %v2393 = vld [vmem:[%s2327 + $0x808] sm:$0xff]
        %v2394 = vld [vmem:[%s2327 + $0x840] sm:$0xff]
        %v2395 = vld [vmem:[%s2327 + $0x848] sm:$0xff]
        %v2396 = vld [vmem:[%s2327 + $0x880] sm:$0xff]
        %v2397 = vld [vmem:[%s2327 + $0x888] sm:$0xff]
        %v2398 = vld [vmem:[%s2327 + $0x8c0] sm:$0xff]
        %v2399 = vld [vmem:[%s2327 + $0x8c8] sm:$0xff]
        %v2400 = vld [vmem:[%s2327 + $0x900] sm:$0xff]
        %v2401 = vld [vmem:[%s2327 + $0x908] sm:$0xff]
        %v2402 = vld [vmem:[%s2327 + $0x940] sm:$0xff]
        %v2403 = vld [vmem:[%s2327 + $0x948] sm:$0xff]
        %v2404 = vld [vmem:[%s2327 + $0x980] sm:$0xff]
        %v2405 = vld [vmem:[%s2327 + $0x988] sm:$0xff]
        %v2406 = vld [vmem:[%s2327 + $0x9c0] sm:$0xff]
        %v2407 = vld [vmem:[%s2327 + $0x9c8] sm:$0xff]
        %v2408 = vld [vmem:[%s2327 + $0xa00] sm:$0xff]
        %v2409 = vld [vmem:[%s2327 + $0xa08] sm:$0xff]
        %v2410 = vld [vmem:[%s2327 + $0xa40] sm:$0xff]
        %v2411 = vld [vmem:[%s2327 + $0xa48] sm:$0xff]
        %v2412 = vld [vmem:[%s2327 + $0xa80] sm:$0xff]
        %v2413 = vld [vmem:[%s2327 + $0xa88] sm:$0xff]
        %v2414 = vld [vmem:[%s2327 + $0xac0] sm:$0xff]
        %v2415 = vld [vmem:[%s2327 + $0xac8] sm:$0xff]
        %v2416 = vld [vmem:[%s2327 + $0xb00] sm:$0xff]
        %v2417 = vld [vmem:[%s2327 + $0xb08] sm:$0xff]
        %v2418 = vld [vmem:[%s2327 + $0xb40] sm:$0xff]
        %v2419 = vld [vmem:[%s2327 + $0xb48] sm:$0xff]
        %v2420 = vld [vmem:[%s2327 + $0xb80] sm:$0xff]
        %v2421 = vld [vmem:[%s2327 + $0xb88] sm:$0xff]
        %v2422 = vld [vmem:[%s2327 + $0xbc0] sm:$0xff]
        %v2423 = vld [vmem:[%s2327 + $0xbc8] sm:$0xff]
        %v2424 = vld [vmem:[%s2327 + $0xc00] sm:$0xff]
        %v2425 = vld [vmem:[%s2327 + $0xc08] sm:$0xff]
        %v2426 = vld [vmem:[%s2327 + $0xc40] sm:$0xff]
        %v2427 = vld [vmem:[%s2327 + $0xc48] sm:$0xff]
        %v2428 = vld [vmem:[%s2327 + $0xc80] sm:$0xff]
        %v2429 = vld [vmem:[%s2327 + $0xc88] sm:$0xff]
        %v2430 = vld [vmem:[%s2327 + $0xcc0] sm:$0xff]
        %v2431 = vld [vmem:[%s2327 + $0xcc8] sm:$0xff]
        %v2432 = vld [vmem:[%s2327 + $0xd00] sm:$0xff]
        %v2433 = vld [vmem:[%s2327 + $0xd08] sm:$0xff]
        %v2434 = vld [vmem:[%s2327 + $0xd40] sm:$0xff]
        %v2435 = vld [vmem:[%s2327 + $0xd48] sm:$0xff]
        %v2436 = vld [vmem:[%s2327 + $0xd80] sm:$0xff]
        %v2437 = vld [vmem:[%s2327 + $0xd88] sm:$0xff]
        %v2438 = vld [vmem:[%s2327 + $0xdc0] sm:$0xff]
        %v2439 = vld [vmem:[%s2327 + $0xdc8] sm:$0xff]
        %v2440 = vld [vmem:[%s2327 + $0xe00] sm:$0xff]
        %v2441 = vld [vmem:[%s2327 + $0xe08] sm:$0xff]
        %v2442 = vld [vmem:[%s2327 + $0xe40] sm:$0xff]
        %v2443 = vld [vmem:[%s2327 + $0xe48] sm:$0xff]
        %v2444 = vld [vmem:[%s2327 + $0xe80] sm:$0xff]
        %v2445 = vld [vmem:[%s2327 + $0xe88] sm:$0xff]
        %v2446 = vld [vmem:[%s2327 + $0xec0] sm:$0xff]
        %v2447 = vld [vmem:[%s2327 + $0xec8] sm:$0xff]
        %v2448 = vld [vmem:[%s2327 + $0xf00] sm:$0xff]
        %v2449 = vld [vmem:[%s2327 + $0xf08] sm:$0xff]
        %v2450 = vld [vmem:[%s2327 + $0xf40] sm:$0xff]
        %v2451 = vld [vmem:[%s2327 + $0xf48] sm:$0xff]
        %v2452 = vld [vmem:[%s2327 + $0xf80] sm:$0xff]
        %v2453 = vld [vmem:[%s2327 + $0xf88] sm:$0xff]
        %v2454 = vld [vmem:[%s2327 + $0xfc0] sm:$0xff]
        %v2455 = vld [vmem:[%s2327 + $0xfc8] sm:$0xff]
        %s2456 = scalar_lea.vmem [#allocation8], 4
        %v2457 = vld [vmem:[%s2456] sm:$0xf]
        %v2459 = vlaneseq
        %v2460 = vshrl.u32 %v2459, 7
        %v2461 = vsub.s32 0, %v2460
        %v2462 = vrot.slane %v2457, %v2461
        %v2463 = vlaneseq
        %v2464 = vshrl.u32 %v2463, 7
        %v2465 = vsub.s32 1, %v2464
        %v2466 = vrot.slane %v2457, %v2465
        %v2467 = vlaneseq
        %v2468 = vshrl.u32 %v2467, 7
        %v2469 = vsub.s32 2, %v2468
        %v2470 = vrot.slane %v2457, %v2469
        %v2471 = vlaneseq
        %v2472 = vshrl.u32 %v2471, 7
        %v2473 = vsub.s32 3, %v2472
        %v2474 = vrot.slane %v2457, %v2473
        %v2607 = vunpack.c.l.b16 %v2328
        %v2608 = vunpack.c.h.b16 %v2328
        %v2609 = vunpack.c.l.b16 %v2329
        %v2610 = vunpack.c.h.b16 %v2329
        %v2611 = vunpack.c.l.b16 %v2330
        %v2612 = vunpack.c.h.b16 %v2330
        %v2613 = vunpack.c.l.b16 %v2331
        %v2614 = vunpack.c.h.b16 %v2331
        %v2615 = vunpack.c.l.b16 %v2332
        %v2616 = vunpack.c.h.b16 %v2332
        %v2617 = vunpack.c.l.b16 %v2333
        %v2618 = vunpack.c.h.b16 %v2333
        %v2619 = vunpack.c.l.b16 %v2334
        %v2620 = vunpack.c.h.b16 %v2334
        %v2621 = vunpack.c.l.b16 %v2335
        %v2622 = vunpack.c.h.b16 %v2335
        %v2623 = vunpack.c.l.b16 %v2336
        %v2624 = vunpack.c.h.b16 %v2336
        %v2625 = vunpack.c.l.b16 %v2337
        %v2626 = vunpack.c.h.b16 %v2337
        %v2627 = vunpack.c.l.b16 %v2338
        %v2628 = vunpack.c.h.b16 %v2338
        %v2629 = vunpack.c.l.b16 %v2339
        %v2630 = vunpack.c.h.b16 %v2339
        %v2631 = vunpack.c.l.b16 %v2340
        %v2632 = vunpack.c.h.b16 %v2340
        %v2633 = vunpack.c.l.b16 %v2341
        %v2634 = vunpack.c.h.b16 %v2341
        %v2635 = vunpack.c.l.b16 %v2342
        %v2636 = vunpack.c.h.b16 %v2342
        %v2637 = vunpack.c.l.b16 %v2343
        %v2638 = vunpack.c.h.b16 %v2343
        %v2639 = vunpack.c.l.b16 %v2344
        %v2640 = vunpack.c.h.b16 %v2344
        %v2641 = vunpack.c.l.b16 %v2345
        %v2642 = vunpack.c.h.b16 %v2345
        %v2643 = vunpack.c.l.b16 %v2346
        %v2644 = vunpack.c.h.b16 %v2346
        %v2645 = vunpack.c.l.b16 %v2347
        %v2646 = vunpack.c.h.b16 %v2347
        %v2647 = vunpack.c.l.b16 %v2348
        %v2648 = vunpack.c.h.b16 %v2348
        %v2649 = vunpack.c.l.b16 %v2349
        %v2650 = vunpack.c.h.b16 %v2349
        %v2651 = vunpack.c.l.b16 %v2350
        %v2652 = vunpack.c.h.b16 %v2350
        %v2653 = vunpack.c.l.b16 %v2351
        %v2654 = vunpack.c.h.b16 %v2351
        %v2655 = vunpack.c.l.b16 %v2352
        %v2656 = vunpack.c.h.b16 %v2352
        %v2657 = vunpack.c.l.b16 %v2353
        %v2658 = vunpack.c.h.b16 %v2353
        %v2659 = vunpack.c.l.b16 %v2354
        %v2660 = vunpack.c.h.b16 %v2354
        %v2661 = vunpack.c.l.b16 %v2355
        %v2662 = vunpack.c.h.b16 %v2355
        %v2663 = vunpack.c.l.b16 %v2356
        %v2664 = vunpack.c.h.b16 %v2356
        %v2665 = vunpack.c.l.b16 %v2357
        %v2666 = vunpack.c.h.b16 %v2357
        %v2667 = vunpack.c.l.b16 %v2358
        %v2668 = vunpack.c.h.b16 %v2358
        %v2669 = vunpack.c.l.b16 %v2359
        %v2670 = vunpack.c.h.b16 %v2359
        %v2671 = vunpack.c.l.b16 %v2360
        %v2672 = vunpack.c.h.b16 %v2360
        %v2673 = vunpack.c.l.b16 %v2361
        %v2674 = vunpack.c.h.b16 %v2361
        %v2675 = vunpack.c.l.b16 %v2362
        %v2676 = vunpack.c.h.b16 %v2362
        %v2677 = vunpack.c.l.b16 %v2363
        %v2678 = vunpack.c.h.b16 %v2363
        %v2679 = vunpack.c.l.b16 %v2364
        %v2680 = vunpack.c.h.b16 %v2364
        %v2681 = vunpack.c.l.b16 %v2365
        %v2682 = vunpack.c.h.b16 %v2365
        %v2683 = vunpack.c.l.b16 %v2366
        %v2684 = vunpack.c.h.b16 %v2366
        %v2685 = vunpack.c.l.b16 %v2367
        %v2686 = vunpack.c.h.b16 %v2367
        %v2687 = vunpack.c.l.b16 %v2368
        %v2688 = vunpack.c.h.b16 %v2368
        %v2689 = vunpack.c.l.b16 %v2369
        %v2690 = vunpack.c.h.b16 %v2369
        %v2691 = vunpack.c.l.b16 %v2370
        %v2692 = vunpack.c.h.b16 %v2370
        %v2693 = vunpack.c.l.b16 %v2371
        %v2694 = vunpack.c.h.b16 %v2371
        %v2695 = vunpack.c.l.b16 %v2372
        %v2696 = vunpack.c.h.b16 %v2372
        %v2697 = vunpack.c.l.b16 %v2373
        %v2698 = vunpack.c.h.b16 %v2373
        %v2699 = vunpack.c.l.b16 %v2374
        %v2700 = vunpack.c.h.b16 %v2374
        %v2701 = vunpack.c.l.b16 %v2375
        %v2702 = vunpack.c.h.b16 %v2375
        %v2703 = vunpack.c.l.b16 %v2376
        %v2704 = vunpack.c.h.b16 %v2376
        %v2705 = vunpack.c.l.b16 %v2377
        %v2706 = vunpack.c.h.b16 %v2377
        %v2707 = vunpack.c.l.b16 %v2378
        %v2708 = vunpack.c.h.b16 %v2378
        %v2709 = vunpack.c.l.b16 %v2379
        %v2710 = vunpack.c.h.b16 %v2379
        %v2711 = vunpack.c.l.b16 %v2380
        %v2712 = vunpack.c.h.b16 %v2380
        %v2713 = vunpack.c.l.b16 %v2381
        %v2714 = vunpack.c.h.b16 %v2381
        %v2715 = vunpack.c.l.b16 %v2382
        %v2716 = vunpack.c.h.b16 %v2382
        %v2717 = vunpack.c.l.b16 %v2383
        %v2718 = vunpack.c.h.b16 %v2383
        %v2719 = vunpack.c.l.b16 %v2384
        %v2720 = vunpack.c.h.b16 %v2384
        %v2721 = vunpack.c.l.b16 %v2385
        %v2722 = vunpack.c.h.b16 %v2385
        %v2723 = vunpack.c.l.b16 %v2386
        %v2724 = vunpack.c.h.b16 %v2386
        %v2725 = vunpack.c.l.b16 %v2387
        %v2726 = vunpack.c.h.b16 %v2387
        %v2727 = vunpack.c.l.b16 %v2388
        %v2728 = vunpack.c.h.b16 %v2388
        %v2729 = vunpack.c.l.b16 %v2389
        %v2730 = vunpack.c.h.b16 %v2389
        %v2731 = vunpack.c.l.b16 %v2390
        %v2732 = vunpack.c.h.b16 %v2390
        %v2733 = vunpack.c.l.b16 %v2391
        %v2734 = vunpack.c.h.b16 %v2391
        %v2735 = vunpack.c.l.b16 %v2392
        %v2736 = vunpack.c.h.b16 %v2392
        %v2737 = vunpack.c.l.b16 %v2393
        %v2738 = vunpack.c.h.b16 %v2393
        %v2739 = vunpack.c.l.b16 %v2394
        %v2740 = vunpack.c.h.b16 %v2394
        %v2741 = vunpack.c.l.b16 %v2395
        %v2742 = vunpack.c.h.b16 %v2395
        %v2743 = vunpack.c.l.b16 %v2396
        %v2744 = vunpack.c.h.b16 %v2396
        %v2745 = vunpack.c.l.b16 %v2397
        %v2746 = vunpack.c.h.b16 %v2397
        %v2747 = vunpack.c.l.b16 %v2398
        %v2748 = vunpack.c.h.b16 %v2398
        %v2749 = vunpack.c.l.b16 %v2399
        %v2750 = vunpack.c.h.b16 %v2399
        %v2751 = vunpack.c.l.b16 %v2400
        %v2752 = vunpack.c.h.b16 %v2400
        %v2753 = vunpack.c.l.b16 %v2401
        %v2754 = vunpack.c.h.b16 %v2401
        %v2755 = vunpack.c.l.b16 %v2402
        %v2756 = vunpack.c.h.b16 %v2402
        %v2757 = vunpack.c.l.b16 %v2403
        %v2758 = vunpack.c.h.b16 %v2403
        %v2759 = vunpack.c.l.b16 %v2404
        %v2760 = vunpack.c.h.b16 %v2404
        %v2761 = vunpack.c.l.b16 %v2405
        %v2762 = vunpack.c.h.b16 %v2405
        %v2763 = vunpack.c.l.b16 %v2406
        %v2764 = vunpack.c.h.b16 %v2406
        %v2765 = vunpack.c.l.b16 %v2407
        %v2766 = vunpack.c.h.b16 %v2407
        %v2767 = vunpack.c.l.b16 %v2408
        %v2768 = vunpack.c.h.b16 %v2408
        %v2769 = vunpack.c.l.b16 %v2409
        %v2770 = vunpack.c.h.b16 %v2409
        %v2771 = vunpack.c.l.b16 %v2410
        %v2772 = vunpack.c.h.b16 %v2410
        %v2773 = vunpack.c.l.b16 %v2411
        %v2774 = vunpack.c.h.b16 %v2411
        %v2775 = vunpack.c.l.b16 %v2412
        %v2776 = vunpack.c.h.b16 %v2412
        %v2777 = vunpack.c.l.b16 %v2413
        %v2778 = vunpack.c.h.b16 %v2413
        %v2779 = vunpack.c.l.b16 %v2414
        %v2780 = vunpack.c.h.b16 %v2414
        %v2781 = vunpack.c.l.b16 %v2415
        %v2782 = vunpack.c.h.b16 %v2415
        %v2783 = vunpack.c.l.b16 %v2416
        %v2784 = vunpack.c.h.b16 %v2416
        %v2785 = vunpack.c.l.b16 %v2417
        %v2786 = vunpack.c.h.b16 %v2417
        %v2787 = vunpack.c.l.b16 %v2418
        %v2788 = vunpack.c.h.b16 %v2418
        %v2789 = vunpack.c.l.b16 %v2419
        %v2790 = vunpack.c.h.b16 %v2419
        %v2791 = vunpack.c.l.b16 %v2420
        %v2792 = vunpack.c.h.b16 %v2420
        %v2793 = vunpack.c.l.b16 %v2421
        %v2794 = vunpack.c.h.b16 %v2421
        %v2795 = vunpack.c.l.b16 %v2422
        %v2796 = vunpack.c.h.b16 %v2422
        %v2797 = vunpack.c.l.b16 %v2423
        %v2798 = vunpack.c.h.b16 %v2423
        %v2799 = vunpack.c.l.b16 %v2424
        %v2800 = vunpack.c.h.b16 %v2424
        %v2801 = vunpack.c.l.b16 %v2425
        %v2802 = vunpack.c.h.b16 %v2425
        %v2803 = vunpack.c.l.b16 %v2426
        %v2804 = vunpack.c.h.b16 %v2426
        %v2805 = vunpack.c.l.b16 %v2427
        %v2806 = vunpack.c.h.b16 %v2427
        %v2807 = vunpack.c.l.b16 %v2428
        %v2808 = vunpack.c.h.b16 %v2428
        %v2809 = vunpack.c.l.b16 %v2429
        %v2810 = vunpack.c.h.b16 %v2429
        %v2811 = vunpack.c.l.b16 %v2430
        %v2812 = vunpack.c.h.b16 %v2430
        %v2813 = vunpack.c.l.b16 %v2431
        %v2814 = vunpack.c.h.b16 %v2431
        %v2815 = vunpack.c.l.b16 %v2432
        %v2816 = vunpack.c.h.b16 %v2432
        %v2817 = vunpack.c.l.b16 %v2433
        %v2818 = vunpack.c.h.b16 %v2433
        %v2819 = vunpack.c.l.b16 %v2434
        %v2820 = vunpack.c.h.b16 %v2434
        %v2821 = vunpack.c.l.b16 %v2435
        %v2822 = vunpack.c.h.b16 %v2435
        %v2823 = vunpack.c.l.b16 %v2436
        %v2824 = vunpack.c.h.b16 %v2436
        %v2825 = vunpack.c.l.b16 %v2437
        %v2826 = vunpack.c.h.b16 %v2437
        %v2827 = vunpack.c.l.b16 %v2438
        %v2828 = vunpack.c.h.b16 %v2438
        %v2829 = vunpack.c.l.b16 %v2439
        %v2830 = vunpack.c.h.b16 %v2439
        %v2831 = vunpack.c.l.b16 %v2440
        %v2832 = vunpack.c.h.b16 %v2440
        %v2833 = vunpack.c.l.b16 %v2441
        %v2834 = vunpack.c.h.b16 %v2441
        %v2835 = vunpack.c.l.b16 %v2442
        %v2836 = vunpack.c.h.b16 %v2442
        %v2837 = vunpack.c.l.b16 %v2443
        %v2838 = vunpack.c.h.b16 %v2443
        %v2839 = vunpack.c.l.b16 %v2444
        %v2840 = vunpack.c.h.b16 %v2444
        %v2841 = vunpack.c.l.b16 %v2445
        %v2842 = vunpack.c.h.b16 %v2445
        %v2843 = vunpack.c.l.b16 %v2446
        %v2844 = vunpack.c.h.b16 %v2446
        %v2845 = vunpack.c.l.b16 %v2447
        %v2846 = vunpack.c.h.b16 %v2447
        %v2847 = vunpack.c.l.b16 %v2448
        %v2848 = vunpack.c.h.b16 %v2448
        %v2849 = vunpack.c.l.b16 %v2449
        %v2850 = vunpack.c.h.b16 %v2449
        %v2851 = vunpack.c.l.b16 %v2450
        %v2852 = vunpack.c.h.b16 %v2450
        %v2853 = vunpack.c.l.b16 %v2451
        %v2854 = vunpack.c.h.b16 %v2451
        %v2855 = vunpack.c.l.b16 %v2452
        %v2856 = vunpack.c.h.b16 %v2452
        %v2857 = vunpack.c.l.b16 %v2453
        %v2858 = vunpack.c.h.b16 %v2453
        %v2859 = vunpack.c.l.b16 %v2454
        %v2860 = vunpack.c.h.b16 %v2454
        %v2861 = vunpack.c.l.b16 %v2455
        %v2862 = vunpack.c.h.b16 %v2455
        %v2863 = vpack.c.b16 %v2611, %v2607
        %v2864 = vpack.c.b16 %v2612, %v2608
        %v2865 = vpack.c.b16 %v2613, %v2609
        %v2866 = vpack.c.b16 %v2614, %v2610
        %v2867 = vpack.c.b16 %v2619, %v2615
        %v2868 = vpack.c.b16 %v2620, %v2616
        %v2869 = vpack.c.b16 %v2621, %v2617
        %v2870 = vpack.c.b16 %v2622, %v2618
        %v2871 = vpack.c.b16 %v2627, %v2623
        %v2872 = vpack.c.b16 %v2628, %v2624
        %v2873 = vpack.c.b16 %v2629, %v2625
        %v2874 = vpack.c.b16 %v2630, %v2626
        %v2875 = vpack.c.b16 %v2635, %v2631
        %v2876 = vpack.c.b16 %v2636, %v2632
        %v2877 = vpack.c.b16 %v2637, %v2633
        %v2878 = vpack.c.b16 %v2638, %v2634
        %v2879 = vpack.c.b16 %v2643, %v2639
        %v2880 = vpack.c.b16 %v2644, %v2640
        %v2881 = vpack.c.b16 %v2645, %v2641
        %v2882 = vpack.c.b16 %v2646, %v2642
        %v2883 = vpack.c.b16 %v2651, %v2647
        %v2884 = vpack.c.b16 %v2652, %v2648
        %v2885 = vpack.c.b16 %v2653, %v2649
        %v2886 = vpack.c.b16 %v2654, %v2650
        %v2887 = vpack.c.b16 %v2659, %v2655
        %v2888 = vpack.c.b16 %v2660, %v2656
        %v2889 = vpack.c.b16 %v2661, %v2657
        %v2890 = vpack.c.b16 %v2662, %v2658
        %v2891 = vpack.c.b16 %v2667, %v2663
        %v2892 = vpack.c.b16 %v2668, %v2664
        %v2893 = vpack.c.b16 %v2669, %v2665
        %v2894 = vpack.c.b16 %v2670, %v2666
        %v2895 = vpack.c.b16 %v2675, %v2671
        %v2896 = vpack.c.b16 %v2676, %v2672
        %v2897 = vpack.c.b16 %v2677, %v2673
        %v2898 = vpack.c.b16 %v2678, %v2674
        %v2899 = vpack.c.b16 %v2683, %v2679
        %v2900 = vpack.c.b16 %v2684, %v2680
        %v2901 = vpack.c.b16 %v2685, %v2681
        %v2902 = vpack.c.b16 %v2686, %v2682
        %v2903 = vpack.c.b16 %v2691, %v2687
        %v2904 = vpack.c.b16 %v2692, %v2688
        %v2905 = vpack.c.b16 %v2693, %v2689
        %v2906 = vpack.c.b16 %v2694, %v2690
        %v2907 = vpack.c.b16 %v2699, %v2695
        %v2908 = vpack.c.b16 %v2700, %v2696
        %v2909 = vpack.c.b16 %v2701, %v2697
        %v2910 = vpack.c.b16 %v2702, %v2698
        %v2911 = vpack.c.b16 %v2707, %v2703
        %v2912 = vpack.c.b16 %v2708, %v2704
        %v2913 = vpack.c.b16 %v2709, %v2705
        %v2914 = vpack.c.b16 %v2710, %v2706
        %v2915 = vpack.c.b16 %v2715, %v2711
        %v2916 = vpack.c.b16 %v2716, %v2712
        %v2917 = vpack.c.b16 %v2717, %v2713
        %v2918 = vpack.c.b16 %v2718, %v2714
        %v2919 = vpack.c.b16 %v2723, %v2719
        %v2920 = vpack.c.b16 %v2724, %v2720
        %v2921 = vpack.c.b16 %v2725, %v2721
        %v2922 = vpack.c.b16 %v2726, %v2722
        %v2923 = vpack.c.b16 %v2731, %v2727
        %v2924 = vpack.c.b16 %v2732, %v2728
        %v2925 = vpack.c.b16 %v2733, %v2729
        %v2926 = vpack.c.b16 %v2734, %v2730
        %v2927 = vpack.c.b16 %v2739, %v2735
        %v2928 = vpack.c.b16 %v2740, %v2736
        %v2929 = vpack.c.b16 %v2741, %v2737
        %v2930 = vpack.c.b16 %v2742, %v2738
        %v2931 = vpack.c.b16 %v2747, %v2743
        %v2932 = vpack.c.b16 %v2748, %v2744
        %v2933 = vpack.c.b16 %v2749, %v2745
        %v2934 = vpack.c.b16 %v2750, %v2746
        %v2935 = vpack.c.b16 %v2755, %v2751
        %v2936 = vpack.c.b16 %v2756, %v2752
        %v2937 = vpack.c.b16 %v2757, %v2753
        %v2938 = vpack.c.b16 %v2758, %v2754
        %v2939 = vpack.c.b16 %v2763, %v2759
        %v2940 = vpack.c.b16 %v2764, %v2760
        %v2941 = vpack.c.b16 %v2765, %v2761
        %v2942 = vpack.c.b16 %v2766, %v2762
        %v2943 = vpack.c.b16 %v2771, %v2767
        %v2944 = vpack.c.b16 %v2772, %v2768
        %v2945 = vpack.c.b16 %v2773, %v2769
        %v2946 = vpack.c.b16 %v2774, %v2770
        %v2947 = vpack.c.b16 %v2779, %v2775
        %v2948 = vpack.c.b16 %v2780, %v2776
        %v2949 = vpack.c.b16 %v2781, %v2777
        %v2950 = vpack.c.b16 %v2782, %v2778
        %v2951 = vpack.c.b16 %v2787, %v2783
        %v2952 = vpack.c.b16 %v2788, %v2784
        %v2953 = vpack.c.b16 %v2789, %v2785
        %v2954 = vpack.c.b16 %v2790, %v2786
        %v2955 = vpack.c.b16 %v2795, %v2791
        %v2956 = vpack.c.b16 %v2796, %v2792
        %v2957 = vpack.c.b16 %v2797, %v2793
        %v2958 = vpack.c.b16 %v2798, %v2794
        %v2959 = vpack.c.b16 %v2803, %v2799
        %v2960 = vpack.c.b16 %v2804, %v2800
        %v2961 = vpack.c.b16 %v2805, %v2801
        %v2962 = vpack.c.b16 %v2806, %v2802
        %v2963 = vpack.c.b16 %v2811, %v2807
        %v2964 = vpack.c.b16 %v2812, %v2808
        %v2965 = vpack.c.b16 %v2813, %v2809
        %v2966 = vpack.c.b16 %v2814, %v2810
        %v2967 = vpack.c.b16 %v2819, %v2815
        %v2968 = vpack.c.b16 %v2820, %v2816
        %v2969 = vpack.c.b16 %v2821, %v2817
        %v2970 = vpack.c.b16 %v2822, %v2818
        %v2971 = vpack.c.b16 %v2827, %v2823
        %v2972 = vpack.c.b16 %v2828, %v2824
        %v2973 = vpack.c.b16 %v2829, %v2825
        %v2974 = vpack.c.b16 %v2830, %v2826
        %v2975 = vpack.c.b16 %v2835, %v2831
        %v2976 = vpack.c.b16 %v2836, %v2832
        %v2977 = vpack.c.b16 %v2837, %v2833
        %v2978 = vpack.c.b16 %v2838, %v2834
        %v2979 = vpack.c.b16 %v2843, %v2839
        %v2980 = vpack.c.b16 %v2844, %v2840
        %v2981 = vpack.c.b16 %v2845, %v2841
        %v2982 = vpack.c.b16 %v2846, %v2842
        %v2983 = vpack.c.b16 %v2851, %v2847
        %v2984 = vpack.c.b16 %v2852, %v2848
        %v2985 = vpack.c.b16 %v2853, %v2849
        %v2986 = vpack.c.b16 %v2854, %v2850
        %v2987 = vpack.c.b16 %v2859, %v2855
        %v2988 = vpack.c.b16 %v2860, %v2856
        %v2989 = vpack.c.b16 %v2861, %v2857
        %v2990 = vpack.c.b16 %v2862, %v2858
        %3119 = vmatprep.subr.bf16.mxu0 %v2864
        %3120 = vmatpush1.bf16.msra.mxu0 %v2863
        %3121 = vmatprep.subr.bf16.mxu0 %v2868
        %3122 = vmatpush1.bf16.msra.mxu0 %v2867
        %3123 = vmatprep.subr.bf16.mxu0 %v2872
        %3124 = vmatpush1.bf16.msra.mxu0 %v2871
        %3125 = vmatprep.subr.bf16.mxu0 %v2876
        %3126 = vmatpush1.bf16.msra.mxu0 %v2875
        %3127 = vmatprep.subr.bf16.mxu0 %v2880
        %3128 = vmatpush1.bf16.msra.mxu0 %v2879
        %3129 = vmatprep.subr.bf16.mxu0 %v2884
        %3130 = vmatpush1.bf16.msra.mxu0 %v2883
        %3131 = vmatprep.subr.bf16.mxu0 %v2888
        %3132 = vmatpush1.bf16.msra.mxu0 %v2887
        %3133 = vmatprep.subr.bf16.mxu0 %v2892
        %3134 = vmatpush1.bf16.msra.mxu0 %v2891
        %3135 = vmatprep.subr.bf16.mxu0 %v2896
        %3136 = vmatpush1.bf16.msra.mxu0 %v2895
        %3137 = vmatprep.subr.bf16.mxu0 %v2900
        %3138 = vmatpush1.bf16.msra.mxu0 %v2899
        %3139 = vmatprep.subr.bf16.mxu0 %v2904
        %3140 = vmatpush1.bf16.msra.mxu0 %v2903
        %3141 = vmatprep.subr.bf16.mxu0 %v2908
        %3142 = vmatpush1.bf16.msra.mxu0 %v2907
        %3143 = vmatprep.subr.bf16.mxu0 %v2912
        %3144 = vmatpush1.bf16.msra.mxu0 %v2911
        %3145 = vmatprep.subr.bf16.mxu0 %v2916
        %3146 = vmatpush1.bf16.msra.mxu0 %v2915
        %3147 = vmatprep.subr.bf16.mxu0 %v2920
        %3148 = vmatpush1.bf16.msra.mxu0 %v2919
        %3149 = vmatprep.subr.bf16.mxu0 %v2924
        %3150 = vmatpush1.bf16.msra.mxu0 %v2923
        %3151 = vmatprep.mubr.bf16.mxu0 %v379
        %3152 = vmatmul.mubr.bf16.gmra.mrb[0].mxu0 %v378
        %v3153 = vpop.f32.mrb[0].mxu0
        %v3154 = vadd.f32 %v2462, %v3153
        %v3155 = vpop.f32.mrb[0].mxu0
        %v3156 = vadd.f32 %v2466, %v3155
        %v3157 = vpop.f32.mrb[0].mxu0
        %v3158 = vpop.f32.mrb[0].mxu0
        %3159 = vdwg.mxu0
        %3160 = vmatprep.subr.bf16.mxu0 %v2928
        %3161 = vmatpush1.bf16.msra.mxu0 %v2927
        %3162 = vmatprep.subr.bf16.mxu0 %v2932
        %3163 = vmatpush1.bf16.msra.mxu0 %v2931
        %3164 = vmatprep.subr.bf16.mxu0 %v2936
        %3165 = vmatpush1.bf16.msra.mxu0 %v2935
        %3166 = vmatprep.subr.bf16.mxu0 %v2940
        %3167 = vmatpush1.bf16.msra.mxu0 %v2939
        %3168 = vmatprep.subr.bf16.mxu0 %v2944
        %3169 = vmatpush1.bf16.msra.mxu0 %v2943
        %3170 = vmatprep.subr.bf16.mxu0 %v2948
        %3171 = vmatpush1.bf16.msra.mxu0 %v2947
        %3172 = vmatprep.subr.bf16.mxu0 %v2952
        %3173 = vmatpush1.bf16.msra.mxu0 %v2951
        %3174 = vmatprep.subr.bf16.mxu0 %v2956
        %3175 = vmatpush1.bf16.msra.mxu0 %v2955
        %3176 = vmatprep.subr.bf16.mxu0 %v2960
        %3177 = vmatpush1.bf16.msra.mxu0 %v2959
        %3178 = vmatprep.subr.bf16.mxu0 %v2964
        %3179 = vmatpush1.bf16.msra.mxu0 %v2963
        %3180 = vmatprep.subr.bf16.mxu0 %v2968
        %3181 = vmatpush1.bf16.msra.mxu0 %v2967
        %3182 = vmatprep.subr.bf16.mxu0 %v2972
        %3183 = vmatpush1.bf16.msra.mxu0 %v2971
        %3184 = vmatprep.subr.bf16.mxu0 %v2976
        %3185 = vmatpush1.bf16.msra.mxu0 %v2975
        %3186 = vmatprep.subr.bf16.mxu0 %v2980
        %3187 = vmatpush1.bf16.msra.mxu0 %v2979
        %3188 = vmatprep.subr.bf16.mxu0 %v2984
        %3189 = vmatpush1.bf16.msra.mxu0 %v2983
        %3190 = vmatprep.subr.bf16.mxu0 %v2988
        %3191 = vmatpush1.bf16.msra.mxu0 %v2987
        %3192 = vmatprep.mubr.bf16.mxu0 %v381
        %3193 = vmatmul.mubr.bf16.gmra.mrb[0].mxu0 %v380
        %v3194 = vpop.f32.mrb[0].mxu0
        %v3195 = vadd.f32 %v3154, %v3194
        %v3196 = vpop.f32.mrb[0].mxu0
        %v3197 = vadd.f32 %v3156, %v3196
        %v3198 = vpop.f32.mrb[0].mxu0
        %v3199 = vpop.f32.mrb[0].mxu0
        %3200 = vdwg.mxu0
        %3201 = vmatprep.subr.bf16.mxu0 %v2866
        %3202 = vmatpush1.bf16.msra.mxu0 %v2865
        %3203 = vmatprep.subr.bf16.mxu0 %v2870
        %3204 = vmatpush1.bf16.msra.mxu0 %v2869
        %3205 = vmatprep.subr.bf16.mxu0 %v2874
        %3206 = vmatpush1.bf16.msra.mxu0 %v2873
        %3207 = vmatprep.subr.bf16.mxu0 %v2878
        %3208 = vmatpush1.bf16.msra.mxu0 %v2877
        %3209 = vmatprep.subr.bf16.mxu0 %v2882
        %3210 = vmatpush1.bf16.msra.mxu0 %v2881
        %3211 = vmatprep.subr.bf16.mxu0 %v2886
        %3212 = vmatpush1.bf16.msra.mxu0 %v2885
        %3213 = vmatprep.subr.bf16.mxu0 %v2890
        %3214 = vmatpush1.bf16.msra.mxu0 %v2889
        %3215 = vmatprep.subr.bf16.mxu0 %v2894
        %3216 = vmatpush1.bf16.msra.mxu0 %v2893
        %3217 = vmatprep.subr.bf16.mxu0 %v2898
        %3218 = vmatpush1.bf16.msra.mxu0 %v2897
        %3219 = vmatprep.subr.bf16.mxu0 %v2902
        %3220 = vmatpush1.bf16.msra.mxu0 %v2901
        %3221 = vmatprep.subr.bf16.mxu0 %v2906
        %3222 = vmatpush1.bf16.msra.mxu0 %v2905
        %3223 = vmatprep.subr.bf16.mxu0 %v2910
        %3224 = vmatpush1.bf16.msra.mxu0 %v2909
        %3225 = vmatprep.subr.bf16.mxu0 %v2914
        %3226 = vmatpush1.bf16.msra.mxu0 %v2913
        %3227 = vmatprep.subr.bf16.mxu0 %v2918
        %3228 = vmatpush1.bf16.msra.mxu0 %v2917
        %3229 = vmatprep.subr.bf16.mxu0 %v2922
        %3230 = vmatpush1.bf16.msra.mxu0 %v2921
        %3231 = vmatprep.subr.bf16.mxu0 %v2926
        %3232 = vmatpush1.bf16.msra.mxu0 %v2925
        %3233 = vmatprep.mubr.bf16.mxu0 %v379
        %3234 = vmatmul.mubr.bf16.gmra.mrb[0].mxu0 %v378
        %v3235 = vpop.f32.mrb[0].mxu0
        %v3236 = vadd.f32 %v2470, %v3235
        %v3237 = vpop.f32.mrb[0].mxu0
        %v3238 = vadd.f32 %v2474, %v3237
        %v3239 = vpop.f32.mrb[0].mxu0
        %v3240 = vpop.f32.mrb[0].mxu0
        %3241 = vdwg.mxu0
        %3242 = vmatprep.subr.bf16.mxu0 %v2930
        %3243 = vmatpush1.bf16.msra.mxu0 %v2929
        %3244 = vmatprep.subr.bf16.mxu0 %v2934
        %3245 = vmatpush1.bf16.msra.mxu0 %v2933
        %3246 = vmatprep.subr.bf16.mxu0 %v2938
        %3247 = vmatpush1.bf16.msra.mxu0 %v2937
        %3248 = vmatprep.subr.bf16.mxu0 %v2942
        %3249 = vmatpush1.bf16.msra.mxu0 %v2941
        %3250 = vmatprep.subr.bf16.mxu0 %v2946
        %3251 = vmatpush1.bf16.msra.mxu0 %v2945
        %3252 = vmatprep.subr.bf16.mxu0 %v2950
        %3253 = vmatpush1.bf16.msra.mxu0 %v2949
        %3254 = vmatprep.subr.bf16.mxu0 %v2954
        %3255 = vmatpush1.bf16.msra.mxu0 %v2953
        %3256 = vmatprep.subr.bf16.mxu0 %v2958
        %3257 = vmatpush1.bf16.msra.mxu0 %v2957
        %3258 = vmatprep.subr.bf16.mxu0 %v2962
        %3259 = vmatpush1.bf16.msra.mxu0 %v2961
        %3260 = vmatprep.subr.bf16.mxu0 %v2966
        %3261 = vmatpush1.bf16.msra.mxu0 %v2965
        %3262 = vmatprep.subr.bf16.mxu0 %v2970
        %3263 = vmatpush1.bf16.msra.mxu0 %v2969
        %3264 = vmatprep.subr.bf16.mxu0 %v2974
        %3265 = vmatpush1.bf16.msra.mxu0 %v2973
        %3266 = vmatprep.subr.bf16.mxu0 %v2978
        %3267 = vmatpush1.bf16.msra.mxu0 %v2977
        %3268 = vmatprep.subr.bf16.mxu0 %v2982
        %3269 = vmatpush1.bf16.msra.mxu0 %v2981
        %3270 = vmatprep.subr.bf16.mxu0 %v2986
        %3271 = vmatpush1.bf16.msra.mxu0 %v2985
        %3272 = vmatprep.subr.bf16.mxu0 %v2990
        %3273 = vmatpush1.bf16.msra.mxu0 %v2989
        %3274 = vmatprep.mubr.bf16.mxu0 %v381
        %3275 = vmatmul.mubr.bf16.gmra.mrb[0].mxu0 %v380
        %v3276 = vpop.f32.mrb[0].mxu0
        %v3277 = vadd.f32 %v3236, %v3276
        %v3278 = vpop.f32.mrb[0].mxu0
        %v3279 = vadd.f32 %v3238, %v3278
        %v3280 = vpop.f32.mrb[0].mxu0
        %v3281 = vpop.f32.mrb[0].mxu0
        %3282 = vdwg.mxu0
        %v3283 = vmul.f32 %v3195, 0.5
        %v3284 = vmul.f32 %v3197, 0.5
        %v3285 = vmul.f32 %v3277, 0.5
        %v3286 = vmul.f32 %v3279, 0.5
        %v3287 = vmul.f32 %v3195, 0.044715
        %v3288 = vmul.f32 %v3197, 0.044715
        %v3289 = vmul.f32 %v3277, 0.044715
        %v3290 = vmul.f32 %v3279, 0.044715
        %v3291 = vmul.f32 %v3287, %v3195
        %v3292 = vmul.f32 %v3288, %v3197
        %v3293 = vmul.f32 %v3289, %v3277
        %v3294 = vmul.f32 %v3290, %v3279
        %v3295 = vmul.f32 %v3291, %v3195
        %v3296 = vmul.f32 %v3292, %v3197
        %v3297 = vmul.f32 %v3293, %v3277
        %v3298 = vmul.f32 %v3294, %v3279
        %v3299 = vadd.f32 %v3195, %v3295
        %v3300 = vadd.f32 %v3197, %v3296
        %v3301 = vadd.f32 %v3277, %v3297
        %v3302 = vadd.f32 %v3279, %v3298
        %v3303 = vmul.f32 %v3299, 0.7978846
        %v3304 = vmul.f32 %v3300, 0.7978846
        %v3305 = vmul.f32 %v3301, 0.7978846
        %v3306 = vmul.f32 %v3302, 0.7978846
        %v3307 = vtanh.pop %v3303
        %v3308 = vtanh.pop %v3304
        %v3309 = vtanh.pop %v3305
        %v3310 = vtanh.pop %v3306
        %v3311 = vadd.f32 %v3307, 1.0
        %v3312 = vadd.f32 %v3308, 1.0
        %v3313 = vadd.f32 %v3309, 1.0
        %v3314 = vadd.f32 %v3310, 1.0
        %v3315 = vmul.f32 %v3283, %v3311
        %v3316 = vmul.f32 %v3284, %v3312
        %v3317 = vmul.f32 %v3285, %v3313
        %v3318 = vmul.f32 %v3286, %v3314
        %v3319 = vld [vmem:[#allocation2] sm:$0xff]
        %v3320 = vld [vmem:[#allocation2 + $0x8] sm:$0xff]
        %v3321 = vld [vmem:[#allocation2 + $0x10] sm:$0xff]
        %v3322 = vld [vmem:[#allocation2 + $0x18] sm:$0xff]
        %v3323 = vpack.c.bf16 %v3315, %v3315
        %v3324 = vpack.c.bf16 %v3316, %v3316
        %v3325 = vpack.c.bf16 %v3317, %v3317
        %v3326 = vpack.c.bf16 %v3318, %v3318
        %s3327 = smul.u32 64, 4
        %s3328 = smul.addr %s3327, 4
        %s3329 = scalar_lea.vmem [#allocation9], %s3328
        %v3330 = vld [vmem:[%s3329] sm:$0xff]
        %v3331 = vld [vmem:[%s3329 + $0x8] sm:$0xff]
        %v3332 = vld [vmem:[%s3329 + $0x10] sm:$0xff]
        %v3333 = vld [vmem:[%s3329 + $0x18] sm:$0xff]
        %v3334 = vld [vmem:[%s3329 + $0x20] sm:$0xff]
        %v3335 = vld [vmem:[%s3329 + $0x28] sm:$0xff]
        %v3336 = vld [vmem:[%s3329 + $0x30] sm:$0xff]
        %v3337 = vld [vmem:[%s3329 + $0x38] sm:$0xff]
        %v3338 = vld [vmem:[%s3329 + $0x40] sm:$0xff]
        %v3339 = vld [vmem:[%s3329 + $0x48] sm:$0xff]
        %v3340 = vld [vmem:[%s3329 + $0x50] sm:$0xff]
        %v3341 = vld [vmem:[%s3329 + $0x58] sm:$0xff]
        %v3342 = vld [vmem:[%s3329 + $0x60] sm:$0xff]
        %v3343 = vld [vmem:[%s3329 + $0x68] sm:$0xff]
        %v3344 = vld [vmem:[%s3329 + $0x70] sm:$0xff]
        %v3345 = vld [vmem:[%s3329 + $0x78] sm:$0xff]
        %v3346 = vld [vmem:[%s3329 + $0x80] sm:$0xff]
        %v3347 = vld [vmem:[%s3329 + $0x88] sm:$0xff]
        %v3348 = vld [vmem:[%s3329 + $0x90] sm:$0xff]
        %v3349 = vld [vmem:[%s3329 + $0x98] sm:$0xff]
        %v3350 = vld [vmem:[%s3329 + $0xa0] sm:$0xff]
        %v3351 = vld [vmem:[%s3329 + $0xa8] sm:$0xff]
        %v3352 = vld [vmem:[%s3329 + $0xb0] sm:$0xff]
        %v3353 = vld [vmem:[%s3329 + $0xb8] sm:$0xff]
        %v3354 = vld [vmem:[%s3329 + $0xc0] sm:$0xff]
        %v3355 = vld [vmem:[%s3329 + $0xc8] sm:$0xff]
        %v3356 = vld [vmem:[%s3329 + $0xd0] sm:$0xff]
        %v3357 = vld [vmem:[%s3329 + $0xd8] sm:$0xff]
        %v3358 = vld [vmem:[%s3329 + $0xe0] sm:$0xff]
        %v3359 = vld [vmem:[%s3329 + $0xe8] sm:$0xff]
        %v3360 = vld [vmem:[%s3329 + $0xf0] sm:$0xff]
        %v3361 = vld [vmem:[%s3329 + $0xf8] sm:$0xff]
        %v3362 = vld [vmem:[%s3329 + $0x100] sm:$0xff]
        %v3363 = vld [vmem:[%s3329 + $0x108] sm:$0xff]
        %v3364 = vld [vmem:[%s3329 + $0x110] sm:$0xff]
        %v3365 = vld [vmem:[%s3329 + $0x118] sm:$0xff]
        %v3366 = vld [vmem:[%s3329 + $0x120] sm:$0xff]
        %v3367 = vld [vmem:[%s3329 + $0x128] sm:$0xff]
        %v3368 = vld [vmem:[%s3329 + $0x130] sm:$0xff]
        %v3369 = vld [vmem:[%s3329 + $0x138] sm:$0xff]
        %v3370 = vld [vmem:[%s3329 + $0x140] sm:$0xff]
        %v3371 = vld [vmem:[%s3329 + $0x148] sm:$0xff]
        %v3372 = vld [vmem:[%s3329 + $0x150] sm:$0xff]
        %v3373 = vld [vmem:[%s3329 + $0x158] sm:$0xff]
        %v3374 = vld [vmem:[%s3329 + $0x160] sm:$0xff]
        %v3375 = vld [vmem:[%s3329 + $0x168] sm:$0xff]
        %v3376 = vld [vmem:[%s3329 + $0x170] sm:$0xff]
        %v3377 = vld [vmem:[%s3329 + $0x178] sm:$0xff]
        %v3378 = vld [vmem:[%s3329 + $0x180] sm:$0xff]
        %v3379 = vld [vmem:[%s3329 + $0x188] sm:$0xff]
        %v3380 = vld [vmem:[%s3329 + $0x190] sm:$0xff]
        %v3381 = vld [vmem:[%s3329 + $0x198] sm:$0xff]
        %v3382 = vld [vmem:[%s3329 + $0x1a0] sm:$0xff]
        %v3383 = vld [vmem:[%s3329 + $0x1a8] sm:$0xff]
        %v3384 = vld [vmem:[%s3329 + $0x1b0] sm:$0xff]
        %v3385 = vld [vmem:[%s3329 + $0x1b8] sm:$0xff]
        %v3386 = vld [vmem:[%s3329 + $0x1c0] sm:$0xff]
        %v3387 = vld [vmem:[%s3329 + $0x1c8] sm:$0xff]
        %v3388 = vld [vmem:[%s3329 + $0x1d0] sm:$0xff]
        %v3389 = vld [vmem:[%s3329 + $0x1d8] sm:$0xff]
        %v3390 = vld [vmem:[%s3329 + $0x1e0] sm:$0xff]
        %v3391 = vld [vmem:[%s3329 + $0x1e8] sm:$0xff]
        %v3392 = vld [vmem:[%s3329 + $0x1f0] sm:$0xff]
        %v3393 = vld [vmem:[%s3329 + $0x1f8] sm:$0xff]
        %v3394 = vld [vmem:[%s3329 + $0x200] sm:$0xff]
        %v3395 = vld [vmem:[%s3329 + $0x208] sm:$0xff]
        %v3396 = vld [vmem:[%s3329 + $0x210] sm:$0xff]
        %v3397 = vld [vmem:[%s3329 + $0x218] sm:$0xff]
        %v3398 = vld [vmem:[%s3329 + $0x220] sm:$0xff]
        %v3399 = vld [vmem:[%s3329 + $0x228] sm:$0xff]
        %v3400 = vld [vmem:[%s3329 + $0x230] sm:$0xff]
        %v3401 = vld [vmem:[%s3329 + $0x238] sm:$0xff]
        %v3402 = vld [vmem:[%s3329 + $0x240] sm:$0xff]
        %v3403 = vld [vmem:[%s3329 + $0x248] sm:$0xff]
        %v3404 = vld [vmem:[%s3329 + $0x250] sm:$0xff]
        %v3405 = vld [vmem:[%s3329 + $0x258] sm:$0xff]
        %v3406 = vld [vmem:[%s3329 + $0x260] sm:$0xff]
        %v3407 = vld [vmem:[%s3329 + $0x268] sm:$0xff]
        %v3408 = vld [vmem:[%s3329 + $0x270] sm:$0xff]
        %v3409 = vld [vmem:[%s3329 + $0x278] sm:$0xff]
        %v3410 = vld [vmem:[%s3329 + $0x280] sm:$0xff]
        %v3411 = vld [vmem:[%s3329 + $0x288] sm:$0xff]
        %v3412 = vld [vmem:[%s3329 + $0x290] sm:$0xff]
        %v3413 = vld [vmem:[%s3329 + $0x298] sm:$0xff]
        %v3414 = vld [vmem:[%s3329 + $0x2a0] sm:$0xff]
        %v3415 = vld [vmem:[%s3329 + $0x2a8] sm:$0xff]
        %v3416 = vld [vmem:[%s3329 + $0x2b0] sm:$0xff]
        %v3417 = vld [vmem:[%s3329 + $0x2b8] sm:$0xff]
        %v3418 = vld [vmem:[%s3329 + $0x2c0] sm:$0xff]
        %v3419 = vld [vmem:[%s3329 + $0x2c8] sm:$0xff]
        %v3420 = vld [vmem:[%s3329 + $0x2d0] sm:$0xff]
        %v3421 = vld [vmem:[%s3329 + $0x2d8] sm:$0xff]
        %v3422 = vld [vmem:[%s3329 + $0x2e0] sm:$0xff]
        %v3423 = vld [vmem:[%s3329 + $0x2e8] sm:$0xff]
        %v3424 = vld [vmem:[%s3329 + $0x2f0] sm:$0xff]
        %v3425 = vld [vmem:[%s3329 + $0x2f8] sm:$0xff]
        %v3426 = vld [vmem:[%s3329 + $0x300] sm:$0xff]
        %v3427 = vld [vmem:[%s3329 + $0x308] sm:$0xff]
        %v3428 = vld [vmem:[%s3329 + $0x310] sm:$0xff]
        %v3429 = vld [vmem:[%s3329 + $0x318] sm:$0xff]
        %v3430 = vld [vmem:[%s3329 + $0x320] sm:$0xff]
        %v3431 = vld [vmem:[%s3329 + $0x328] sm:$0xff]
        %v3432 = vld [vmem:[%s3329 + $0x330] sm:$0xff]
        %v3433 = vld [vmem:[%s3329 + $0x338] sm:$0xff]
        %v3434 = vld [vmem:[%s3329 + $0x340] sm:$0xff]
        %v3435 = vld [vmem:[%s3329 + $0x348] sm:$0xff]
        %v3436 = vld [vmem:[%s3329 + $0x350] sm:$0xff]
        %v3437 = vld [vmem:[%s3329 + $0x358] sm:$0xff]
        %v3438 = vld [vmem:[%s3329 + $0x360] sm:$0xff]
        %v3439 = vld [vmem:[%s3329 + $0x368] sm:$0xff]
        %v3440 = vld [vmem:[%s3329 + $0x370] sm:$0xff]
        %v3441 = vld [vmem:[%s3329 + $0x378] sm:$0xff]
        %v3442 = vld [vmem:[%s3329 + $0x380] sm:$0xff]
        %v3443 = vld [vmem:[%s3329 + $0x388] sm:$0xff]
        %v3444 = vld [vmem:[%s3329 + $0x390] sm:$0xff]
        %v3445 = vld [vmem:[%s3329 + $0x398] sm:$0xff]
        %v3446 = vld [vmem:[%s3329 + $0x3a0] sm:$0xff]
        %v3447 = vld [vmem:[%s3329 + $0x3a8] sm:$0xff]
        %v3448 = vld [vmem:[%s3329 + $0x3b0] sm:$0xff]
        %v3449 = vld [vmem:[%s3329 + $0x3b8] sm:$0xff]
        %v3450 = vld [vmem:[%s3329 + $0x3c0] sm:$0xff]
        %v3451 = vld [vmem:[%s3329 + $0x3c8] sm:$0xff]
        %v3452 = vld [vmem:[%s3329 + $0x3d0] sm:$0xff]
        %v3453 = vld [vmem:[%s3329 + $0x3d8] sm:$0xff]
        %v3454 = vld [vmem:[%s3329 + $0x3e0] sm:$0xff]
        %v3455 = vld [vmem:[%s3329 + $0x3e8] sm:$0xff]
        %v3456 = vld [vmem:[%s3329 + $0x3f0] sm:$0xff]
        %v3457 = vld [vmem:[%s3329 + $0x3f8] sm:$0xff]
        %v3586 = vunpack.c.l.b16 %v3330
        %v3587 = vunpack.c.h.b16 %v3330
        %v3588 = vunpack.c.l.b16 %v3331
        %v3589 = vunpack.c.h.b16 %v3331
        %v3590 = vunpack.c.l.b16 %v3332
        %v3591 = vunpack.c.h.b16 %v3332
        %v3592 = vunpack.c.l.b16 %v3333
        %v3593 = vunpack.c.h.b16 %v3333
        %v3594 = vunpack.c.l.b16 %v3334
        %v3595 = vunpack.c.h.b16 %v3334
        %v3596 = vunpack.c.l.b16 %v3335
        %v3597 = vunpack.c.h.b16 %v3335
        %v3598 = vunpack.c.l.b16 %v3336
        %v3599 = vunpack.c.h.b16 %v3336
        %v3600 = vunpack.c.l.b16 %v3337
        %v3601 = vunpack.c.h.b16 %v3337
        %v3602 = vunpack.c.l.b16 %v3338
        %v3603 = vunpack.c.h.b16 %v3338
        %v3604 = vunpack.c.l.b16 %v3339
        %v3605 = vunpack.c.h.b16 %v3339
        %v3606 = vunpack.c.l.b16 %v3340
        %v3607 = vunpack.c.h.b16 %v3340
        %v3608 = vunpack.c.l.b16 %v3341
        %v3609 = vunpack.c.h.b16 %v3341
        %v3610 = vunpack.c.l.b16 %v3342
        %v3611 = vunpack.c.h.b16 %v3342
        %v3612 = vunpack.c.l.b16 %v3343
        %v3613 = vunpack.c.h.b16 %v3343
        %v3614 = vunpack.c.l.b16 %v3344
        %v3615 = vunpack.c.h.b16 %v3344
        %v3616 = vunpack.c.l.b16 %v3345
        %v3617 = vunpack.c.h.b16 %v3345
        %v3618 = vunpack.c.l.b16 %v3346
        %v3619 = vunpack.c.h.b16 %v3346
        %v3620 = vunpack.c.l.b16 %v3347
        %v3621 = vunpack.c.h.b16 %v3347
        %v3622 = vunpack.c.l.b16 %v3348
        %v3623 = vunpack.c.h.b16 %v3348
        %v3624 = vunpack.c.l.b16 %v3349
        %v3625 = vunpack.c.h.b16 %v3349
        %v3626 = vunpack.c.l.b16 %v3350
        %v3627 = vunpack.c.h.b16 %v3350
        %v3628 = vunpack.c.l.b16 %v3351
        %v3629 = vunpack.c.h.b16 %v3351
        %v3630 = vunpack.c.l.b16 %v3352
        %v3631 = vunpack.c.h.b16 %v3352
        %v3632 = vunpack.c.l.b16 %v3353
        %v3633 = vunpack.c.h.b16 %v3353
        %v3634 = vunpack.c.l.b16 %v3354
        %v3635 = vunpack.c.h.b16 %v3354
        %v3636 = vunpack.c.l.b16 %v3355
        %v3637 = vunpack.c.h.b16 %v3355
        %v3638 = vunpack.c.l.b16 %v3356
        %v3639 = vunpack.c.h.b16 %v3356
        %v3640 = vunpack.c.l.b16 %v3357
        %v3641 = vunpack.c.h.b16 %v3357
        %v3642 = vunpack.c.l.b16 %v3358
        %v3643 = vunpack.c.h.b16 %v3358
        %v3644 = vunpack.c.l.b16 %v3359
        %v3645 = vunpack.c.h.b16 %v3359
        %v3646 = vunpack.c.l.b16 %v3360
        %v3647 = vunpack.c.h.b16 %v3360
        %v3648 = vunpack.c.l.b16 %v3361
        %v3649 = vunpack.c.h.b16 %v3361
        %v3650 = vunpack.c.l.b16 %v3362
        %v3651 = vunpack.c.h.b16 %v3362
        %v3652 = vunpack.c.l.b16 %v3363
        %v3653 = vunpack.c.h.b16 %v3363
        %v3654 = vunpack.c.l.b16 %v3364
        %v3655 = vunpack.c.h.b16 %v3364
        %v3656 = vunpack.c.l.b16 %v3365
        %v3657 = vunpack.c.h.b16 %v3365
        %v3658 = vunpack.c.l.b16 %v3366
        %v3659 = vunpack.c.h.b16 %v3366
        %v3660 = vunpack.c.l.b16 %v3367
        %v3661 = vunpack.c.h.b16 %v3367
        %v3662 = vunpack.c.l.b16 %v3368
        %v3663 = vunpack.c.h.b16 %v3368
        %v3664 = vunpack.c.l.b16 %v3369
        %v3665 = vunpack.c.h.b16 %v3369
        %v3666 = vunpack.c.l.b16 %v3370
        %v3667 = vunpack.c.h.b16 %v3370
        %v3668 = vunpack.c.l.b16 %v3371
        %v3669 = vunpack.c.h.b16 %v3371
        %v3670 = vunpack.c.l.b16 %v3372
        %v3671 = vunpack.c.h.b16 %v3372
        %v3672 = vunpack.c.l.b16 %v3373
        %v3673 = vunpack.c.h.b16 %v3373
        %v3674 = vunpack.c.l.b16 %v3374
        %v3675 = vunpack.c.h.b16 %v3374
        %v3676 = vunpack.c.l.b16 %v3375
        %v3677 = vunpack.c.h.b16 %v3375
        %v3678 = vunpack.c.l.b16 %v3376
        %v3679 = vunpack.c.h.b16 %v3376
        %v3680 = vunpack.c.l.b16 %v3377
        %v3681 = vunpack.c.h.b16 %v3377
        %v3682 = vunpack.c.l.b16 %v3378
        %v3683 = vunpack.c.h.b16 %v3378
        %v3684 = vunpack.c.l.b16 %v3379
        %v3685 = vunpack.c.h.b16 %v3379
        %v3686 = vunpack.c.l.b16 %v3380
        %v3687 = vunpack.c.h.b16 %v3380
        %v3688 = vunpack.c.l.b16 %v3381
        %v3689 = vunpack.c.h.b16 %v3381
        %v3690 = vunpack.c.l.b16 %v3382
        %v3691 = vunpack.c.h.b16 %v3382
        %v3692 = vunpack.c.l.b16 %v3383
        %v3693 = vunpack.c.h.b16 %v3383
        %v3694 = vunpack.c.l.b16 %v3384
        %v3695 = vunpack.c.h.b16 %v3384
        %v3696 = vunpack.c.l.b16 %v3385
        %v3697 = vunpack.c.h.b16 %v3385
        %v3698 = vunpack.c.l.b16 %v3386
        %v3699 = vunpack.c.h.b16 %v3386
        %v3700 = vunpack.c.l.b16 %v3387
        %v3701 = vunpack.c.h.b16 %v3387
        %v3702 = vunpack.c.l.b16 %v3388
        %v3703 = vunpack.c.h.b16 %v3388
        %v3704 = vunpack.c.l.b16 %v3389
        %v3705 = vunpack.c.h.b16 %v3389
        %v3706 = vunpack.c.l.b16 %v3390
        %v3707 = vunpack.c.h.b16 %v3390
        %v3708 = vunpack.c.l.b16 %v3391
        %v3709 = vunpack.c.h.b16 %v3391
        %v3710 = vunpack.c.l.b16 %v3392
        %v3711 = vunpack.c.h.b16 %v3392
        %v3712 = vunpack.c.l.b16 %v3393
        %v3713 = vunpack.c.h.b16 %v3393
        %v3714 = vunpack.c.l.b16 %v3394
        %v3715 = vunpack.c.h.b16 %v3394
        %v3716 = vunpack.c.l.b16 %v3395
        %v3717 = vunpack.c.h.b16 %v3395
        %v3718 = vunpack.c.l.b16 %v3396
        %v3719 = vunpack.c.h.b16 %v3396
        %v3720 = vunpack.c.l.b16 %v3397
        %v3721 = vunpack.c.h.b16 %v3397
        %v3722 = vunpack.c.l.b16 %v3398
        %v3723 = vunpack.c.h.b16 %v3398
        %v3724 = vunpack.c.l.b16 %v3399
        %v3725 = vunpack.c.h.b16 %v3399
        %v3726 = vunpack.c.l.b16 %v3400
        %v3727 = vunpack.c.h.b16 %v3400
        %v3728 = vunpack.c.l.b16 %v3401
        %v3729 = vunpack.c.h.b16 %v3401
        %v3730 = vunpack.c.l.b16 %v3402
        %v3731 = vunpack.c.h.b16 %v3402
        %v3732 = vunpack.c.l.b16 %v3403
        %v3733 = vunpack.c.h.b16 %v3403
        %v3734 = vunpack.c.l.b16 %v3404
        %v3735 = vunpack.c.h.b16 %v3404
        %v3736 = vunpack.c.l.b16 %v3405
        %v3737 = vunpack.c.h.b16 %v3405
        %v3738 = vunpack.c.l.b16 %v3406
        %v3739 = vunpack.c.h.b16 %v3406
        %v3740 = vunpack.c.l.b16 %v3407
        %v3741 = vunpack.c.h.b16 %v3407
        %v3742 = vunpack.c.l.b16 %v3408
        %v3743 = vunpack.c.h.b16 %v3408
        %v3744 = vunpack.c.l.b16 %v3409
        %v3745 = vunpack.c.h.b16 %v3409
        %v3746 = vunpack.c.l.b16 %v3410
        %v3747 = vunpack.c.h.b16 %v3410
        %v3748 = vunpack.c.l.b16 %v3411
        %v3749 = vunpack.c.h.b16 %v3411
        %v3750 = vunpack.c.l.b16 %v3412
        %v3751 = vunpack.c.h.b16 %v3412
        %v3752 = vunpack.c.l.b16 %v3413
        %v3753 = vunpack.c.h.b16 %v3413
        %v3754 = vunpack.c.l.b16 %v3414
        %v3755 = vunpack.c.h.b16 %v3414
        %v3756 = vunpack.c.l.b16 %v3415
        %v3757 = vunpack.c.h.b16 %v3415
        %v3758 = vunpack.c.l.b16 %v3416
        %v3759 = vunpack.c.h.b16 %v3416
        %v3760 = vunpack.c.l.b16 %v3417
        %v3761 = vunpack.c.h.b16 %v3417
        %v3762 = vunpack.c.l.b16 %v3418
        %v3763 = vunpack.c.h.b16 %v3418
        %v3764 = vunpack.c.l.b16 %v3419
        %v3765 = vunpack.c.h.b16 %v3419
        %v3766 = vunpack.c.l.b16 %v3420
        %v3767 = vunpack.c.h.b16 %v3420
        %v3768 = vunpack.c.l.b16 %v3421
        %v3769 = vunpack.c.h.b16 %v3421
        %v3770 = vunpack.c.l.b16 %v3422
        %v3771 = vunpack.c.h.b16 %v3422
        %v3772 = vunpack.c.l.b16 %v3423
        %v3773 = vunpack.c.h.b16 %v3423
        %v3774 = vunpack.c.l.b16 %v3424
        %v3775 = vunpack.c.h.b16 %v3424
        %v3776 = vunpack.c.l.b16 %v3425
        %v3777 = vunpack.c.h.b16 %v3425
        %v3778 = vunpack.c.l.b16 %v3426
        %v3779 = vunpack.c.h.b16 %v3426
        %v3780 = vunpack.c.l.b16 %v3427
        %v3781 = vunpack.c.h.b16 %v3427
        %v3782 = vunpack.c.l.b16 %v3428
        %v3783 = vunpack.c.h.b16 %v3428
        %v3784 = vunpack.c.l.b16 %v3429
        %v3785 = vunpack.c.h.b16 %v3429
        %v3786 = vunpack.c.l.b16 %v3430
        %v3787 = vunpack.c.h.b16 %v3430
        %v3788 = vunpack.c.l.b16 %v3431
        %v3789 = vunpack.c.h.b16 %v3431
        %v3790 = vunpack.c.l.b16 %v3432
        %v3791 = vunpack.c.h.b16 %v3432
        %v3792 = vunpack.c.l.b16 %v3433
        %v3793 = vunpack.c.h.b16 %v3433
        %v3794 = vunpack.c.l.b16 %v3434
        %v3795 = vunpack.c.h.b16 %v3434
        %v3796 = vunpack.c.l.b16 %v3435
        %v3797 = vunpack.c.h.b16 %v3435
        %v3798 = vunpack.c.l.b16 %v3436
        %v3799 = vunpack.c.h.b16 %v3436
        %v3800 = vunpack.c.l.b16 %v3437
        %v3801 = vunpack.c.h.b16 %v3437
        %v3802 = vunpack.c.l.b16 %v3438
        %v3803 = vunpack.c.h.b16 %v3438
        %v3804 = vunpack.c.l.b16 %v3439
        %v3805 = vunpack.c.h.b16 %v3439
        %v3806 = vunpack.c.l.b16 %v3440
        %v3807 = vunpack.c.h.b16 %v3440
        %v3808 = vunpack.c.l.b16 %v3441
        %v3809 = vunpack.c.h.b16 %v3441
        %v3810 = vunpack.c.l.b16 %v3442
        %v3811 = vunpack.c.h.b16 %v3442
        %v3812 = vunpack.c.l.b16 %v3443
        %v3813 = vunpack.c.h.b16 %v3443
        %v3814 = vunpack.c.l.b16 %v3444
        %v3815 = vunpack.c.h.b16 %v3444
        %v3816 = vunpack.c.l.b16 %v3445
        %v3817 = vunpack.c.h.b16 %v3445
        %v3818 = vunpack.c.l.b16 %v3446
        %v3819 = vunpack.c.h.b16 %v3446
        %v3820 = vunpack.c.l.b16 %v3447
        %v3821 = vunpack.c.h.b16 %v3447
        %v3822 = vunpack.c.l.b16 %v3448
        %v3823 = vunpack.c.h.b16 %v3448
        %v3824 = vunpack.c.l.b16 %v3449
        %v3825 = vunpack.c.h.b16 %v3449
        %v3826 = vunpack.c.l.b16 %v3450
        %v3827 = vunpack.c.h.b16 %v3450
        %v3828 = vunpack.c.l.b16 %v3451
        %v3829 = vunpack.c.h.b16 %v3451
        %v3830 = vunpack.c.l.b16 %v3452
        %v3831 = vunpack.c.h.b16 %v3452
        %v3832 = vunpack.c.l.b16 %v3453
        %v3833 = vunpack.c.h.b16 %v3453
        %v3834 = vunpack.c.l.b16 %v3454
        %v3835 = vunpack.c.h.b16 %v3454
        %v3836 = vunpack.c.l.b16 %v3455
        %v3837 = vunpack.c.h.b16 %v3455
        %v3838 = vunpack.c.l.b16 %v3456
        %v3839 = vunpack.c.h.b16 %v3456
        %v3840 = vunpack.c.l.b16 %v3457
        %v3841 = vunpack.c.h.b16 %v3457
        %v3842 = vpack.c.b16 %v3590, %v3586
        %v3843 = vpack.c.b16 %v3591, %v3587
        %v3844 = vpack.c.b16 %v3592, %v3588
        %v3845 = vpack.c.b16 %v3593, %v3589
        %v3846 = vpack.c.b16 %v3598, %v3594
        %v3847 = vpack.c.b16 %v3599, %v3595
        %v3848 = vpack.c.b16 %v3600, %v3596
        %v3849 = vpack.c.b16 %v3601, %v3597
        %v3850 = vpack.c.b16 %v3606, %v3602
        %v3851 = vpack.c.b16 %v3607, %v3603
        %v3852 = vpack.c.b16 %v3608, %v3604
        %v3853 = vpack.c.b16 %v3609, %v3605
        %v3854 = vpack.c.b16 %v3614, %v3610
        %v3855 = vpack.c.b16 %v3615, %v3611
        %v3856 = vpack.c.b16 %v3616, %v3612
        %v3857 = vpack.c.b16 %v3617, %v3613
        %v3858 = vpack.c.b16 %v3622, %v3618
        %v3859 = vpack.c.b16 %v3623, %v3619
        %v3860 = vpack.c.b16 %v3624, %v3620
        %v3861 = vpack.c.b16 %v3625, %v3621
        %v3862 = vpack.c.b16 %v3630, %v3626
        %v3863 = vpack.c.b16 %v3631, %v3627
        %v3864 = vpack.c.b16 %v3632, %v3628
        %v3865 = vpack.c.b16 %v3633, %v3629
        %v3866 = vpack.c.b16 %v3638, %v3634
        %v3867 = vpack.c.b16 %v3639, %v3635
        %v3868 = vpack.c.b16 %v3640, %v3636
        %v3869 = vpack.c.b16 %v3641, %v3637
        %v3870 = vpack.c.b16 %v3646, %v3642
        %v3871 = vpack.c.b16 %v3647, %v3643
        %v3872 = vpack.c.b16 %v3648, %v3644
        %v3873 = vpack.c.b16 %v3649, %v3645
        %v3874 = vpack.c.b16 %v3654, %v3650
        %v3875 = vpack.c.b16 %v3655, %v3651
        %v3876 = vpack.c.b16 %v3656, %v3652
        %v3877 = vpack.c.b16 %v3657, %v3653
        %v3878 = vpack.c.b16 %v3662, %v3658
        %v3879 = vpack.c.b16 %v3663, %v3659
        %v3880 = vpack.c.b16 %v3664, %v3660
        %v3881 = vpack.c.b16 %v3665, %v3661
        %v3882 = vpack.c.b16 %v3670, %v3666
        %v3883 = vpack.c.b16 %v3671, %v3667
        %v3884 = vpack.c.b16 %v3672, %v3668
        %v3885 = vpack.c.b16 %v3673, %v3669
        %v3886 = vpack.c.b16 %v3678, %v3674
        %v3887 = vpack.c.b16 %v3679, %v3675
        %v3888 = vpack.c.b16 %v3680, %v3676
        %v3889 = vpack.c.b16 %v3681, %v3677
        %v3890 = vpack.c.b16 %v3686, %v3682
        %v3891 = vpack.c.b16 %v3687, %v3683
        %v3892 = vpack.c.b16 %v3688, %v3684
        %v3893 = vpack.c.b16 %v3689, %v3685
        %v3894 = vpack.c.b16 %v3694, %v3690
        %v3895 = vpack.c.b16 %v3695, %v3691
        %v3896 = vpack.c.b16 %v3696, %v3692
        %v3897 = vpack.c.b16 %v3697, %v3693
        %v3898 = vpack.c.b16 %v3702, %v3698
        %v3899 = vpack.c.b16 %v3703, %v3699
        %v3900 = vpack.c.b16 %v3704, %v3700
        %v3901 = vpack.c.b16 %v3705, %v3701
        %v3902 = vpack.c.b16 %v3710, %v3706
        %v3903 = vpack.c.b16 %v3711, %v3707
        %v3904 = vpack.c.b16 %v3712, %v3708
        %v3905 = vpack.c.b16 %v3713, %v3709
        %v3906 = vpack.c.b16 %v3718, %v3714
        %v3907 = vpack.c.b16 %v3719, %v3715
        %v3908 = vpack.c.b16 %v3720, %v3716
        %v3909 = vpack.c.b16 %v3721, %v3717
        %v3910 = vpack.c.b16 %v3726, %v3722
        %v3911 = vpack.c.b16 %v3727, %v3723
        %v3912 = vpack.c.b16 %v3728, %v3724
        %v3913 = vpack.c.b16 %v3729, %v3725
        %v3914 = vpack.c.b16 %v3734, %v3730
        %v3915 = vpack.c.b16 %v3735, %v3731
        %v3916 = vpack.c.b16 %v3736, %v3732
        %v3917 = vpack.c.b16 %v3737, %v3733
        %v3918 = vpack.c.b16 %v3742, %v3738
        %v3919 = vpack.c.b16 %v3743, %v3739
        %v3920 = vpack.c.b16 %v3744, %v3740
        %v3921 = vpack.c.b16 %v3745, %v3741
        %v3922 = vpack.c.b16 %v3750, %v3746
        %v3923 = vpack.c.b16 %v3751, %v3747
        %v3924 = vpack.c.b16 %v3752, %v3748
        %v3925 = vpack.c.b16 %v3753, %v3749
        %v3926 = vpack.c.b16 %v3758, %v3754
        %v3927 = vpack.c.b16 %v3759, %v3755
        %v3928 = vpack.c.b16 %v3760, %v3756
        %v3929 = vpack.c.b16 %v3761, %v3757
        %v3930 = vpack.c.b16 %v3766, %v3762
        %v3931 = vpack.c.b16 %v3767, %v3763
        %v3932 = vpack.c.b16 %v3768, %v3764
        %v3933 = vpack.c.b16 %v3769, %v3765
        %v3934 = vpack.c.b16 %v3774, %v3770
        %v3935 = vpack.c.b16 %v3775, %v3771
        %v3936 = vpack.c.b16 %v3776, %v3772
        %v3937 = vpack.c.b16 %v3777, %v3773
        %v3938 = vpack.c.b16 %v3782, %v3778
        %v3939 = vpack.c.b16 %v3783, %v3779
        %v3940 = vpack.c.b16 %v3784, %v3780
        %v3941 = vpack.c.b16 %v3785, %v3781
        %v3942 = vpack.c.b16 %v3790, %v3786
        %v3943 = vpack.c.b16 %v3791, %v3787
        %v3944 = vpack.c.b16 %v3792, %v3788
        %v3945 = vpack.c.b16 %v3793, %v3789
        %v3946 = vpack.c.b16 %v3798, %v3794
        %v3947 = vpack.c.b16 %v3799, %v3795
        %v3948 = vpack.c.b16 %v3800, %v3796
        %v3949 = vpack.c.b16 %v3801, %v3797
        %v3950 = vpack.c.b16 %v3806, %v3802
        %v3951 = vpack.c.b16 %v3807, %v3803
        %v3952 = vpack.c.b16 %v3808, %v3804
        %v3953 = vpack.c.b16 %v3809, %v3805
        %v3954 = vpack.c.b16 %v3814, %v3810
        %v3955 = vpack.c.b16 %v3815, %v3811
        %v3956 = vpack.c.b16 %v3816, %v3812
        %v3957 = vpack.c.b16 %v3817, %v3813
        %v3958 = vpack.c.b16 %v3822, %v3818
        %v3959 = vpack.c.b16 %v3823, %v3819
        %v3960 = vpack.c.b16 %v3824, %v3820
        %v3961 = vpack.c.b16 %v3825, %v3821
        %v3962 = vpack.c.b16 %v3830, %v3826
        %v3963 = vpack.c.b16 %v3831, %v3827
        %v3964 = vpack.c.b16 %v3832, %v3828
        %v3965 = vpack.c.b16 %v3833, %v3829
        %v3966 = vpack.c.b16 %v3838, %v3834
        %v3967 = vpack.c.b16 %v3839, %v3835
        %v3968 = vpack.c.b16 %v3840, %v3836
        %v3969 = vpack.c.b16 %v3841, %v3837
        %4098 = vmatprep.subr.bf16.mxu0 %v3843
        %4099 = vmatpush1.bf16.msra.mxu0 %v3842
        %4100 = vmatprep.subr.bf16.mxu0 %v3847
        %4101 = vmatpush1.bf16.msra.mxu0 %v3846
        %4102 = vmatprep.subr.bf16.mxu0 %v3851
        %4103 = vmatpush1.bf16.msra.mxu0 %v3850
        %4104 = vmatprep.subr.bf16.mxu0 %v3855
        %4105 = vmatpush1.bf16.msra.mxu0 %v3854
        %4106 = vmatprep.subr.bf16.mxu0 %v3859
        %4107 = vmatpush1.bf16.msra.mxu0 %v3858
        %4108 = vmatprep.subr.bf16.mxu0 %v3863
        %4109 = vmatpush1.bf16.msra.mxu0 %v3862
        %4110 = vmatprep.subr.bf16.mxu0 %v3867
        %4111 = vmatpush1.bf16.msra.mxu0 %v3866
        %4112 = vmatprep.subr.bf16.mxu0 %v3871
        %4113 = vmatpush1.bf16.msra.mxu0 %v3870
        %4114 = vmatprep.subr.bf16.mxu0 %v3875
        %4115 = vmatpush1.bf16.msra.mxu0 %v3874
        %4116 = vmatprep.subr.bf16.mxu0 %v3879
        %4117 = vmatpush1.bf16.msra.mxu0 %v3878
        %4118 = vmatprep.subr.bf16.mxu0 %v3883
        %4119 = vmatpush1.bf16.msra.mxu0 %v3882
        %4120 = vmatprep.subr.bf16.mxu0 %v3887
        %4121 = vmatpush1.bf16.msra.mxu0 %v3886
        %4122 = vmatprep.subr.bf16.mxu0 %v3891
        %4123 = vmatpush1.bf16.msra.mxu0 %v3890
        %4124 = vmatprep.subr.bf16.mxu0 %v3895
        %4125 = vmatpush1.bf16.msra.mxu0 %v3894
        %4126 = vmatprep.subr.bf16.mxu0 %v3899
        %4127 = vmatpush1.bf16.msra.mxu0 %v3898
        %4128 = vmatprep.subr.bf16.mxu0 %v3903
        %4129 = vmatpush1.bf16.msra.mxu0 %v3902
        %4130 = vmatprep.mubr.bf16.mxu0 %v3324
        %4131 = vmatmul.mubr.bf16.gmra.mrb[0].mxu0 %v3323
        %v4132 = vpop.f32.mrb[0].mxu0
        %v4133 = vadd.f32 0.0, %v4132
        %v4134 = vpop.f32.mrb[0].mxu0
        %v4135 = vadd.f32 0.0, %v4134
        %v4136 = vpop.f32.mrb[0].mxu0
        %v4137 = vpop.f32.mrb[0].mxu0
        %4138 = vdwg.mxu0
        %4139 = vmatprep.subr.bf16.mxu0 %v3907
        %4140 = vmatpush1.bf16.msra.mxu0 %v3906
        %4141 = vmatprep.subr.bf16.mxu0 %v3911
        %4142 = vmatpush1.bf16.msra.mxu0 %v3910
        %4143 = vmatprep.subr.bf16.mxu0 %v3915
        %4144 = vmatpush1.bf16.msra.mxu0 %v3914
        %4145 = vmatprep.subr.bf16.mxu0 %v3919
        %4146 = vmatpush1.bf16.msra.mxu0 %v3918
        %4147 = vmatprep.subr.bf16.mxu0 %v3923
        %4148 = vmatpush1.bf16.msra.mxu0 %v3922
        %4149 = vmatprep.subr.bf16.mxu0 %v3927
        %4150 = vmatpush1.bf16.msra.mxu0 %v3926
        %4151 = vmatprep.subr.bf16.mxu0 %v3931
        %4152 = vmatpush1.bf16.msra.mxu0 %v3930
        %4153 = vmatprep.subr.bf16.mxu0 %v3935
        %4154 = vmatpush1.bf16.msra.mxu0 %v3934
        %4155 = vmatprep.subr.bf16.mxu0 %v3939
        %4156 = vmatpush1.bf16.msra.mxu0 %v3938
        %4157 = vmatprep.subr.bf16.mxu0 %v3943
        %4158 = vmatpush1.bf16.msra.mxu0 %v3942
        %4159 = vmatprep.subr.bf16.mxu0 %v3947
        %4160 = vmatpush1.bf16.msra.mxu0 %v3946
        %4161 = vmatprep.subr.bf16.mxu0 %v3951
        %4162 = vmatpush1.bf16.msra.mxu0 %v3950
        %4163 = vmatprep.subr.bf16.mxu0 %v3955
        %4164 = vmatpush1.bf16.msra.mxu0 %v3954
        %4165 = vmatprep.subr.bf16.mxu0 %v3959
        %4166 = vmatpush1.bf16.msra.mxu0 %v3958
        %4167 = vmatprep.subr.bf16.mxu0 %v3963
        %4168 = vmatpush1.bf16.msra.mxu0 %v3962
        %4169 = vmatprep.subr.bf16.mxu0 %v3967
        %4170 = vmatpush1.bf16.msra.mxu0 %v3966
        %4171 = vmatprep.mubr.bf16.mxu0 %v3326
        %4172 = vmatmul.mubr.bf16.gmra.mrb[0].mxu0 %v3325
        %v4173 = vpop.f32.mrb[0].mxu0
        %v4174 = vadd.f32 %v4133, %v4173
        %v4175 = vpop.f32.mrb[0].mxu0
        %v4176 = vadd.f32 %v4135, %v4175
        %v4177 = vpop.f32.mrb[0].mxu0
        %v4178 = vpop.f32.mrb[0].mxu0
        %4179 = vdwg.mxu0
        %4180 = vmatprep.subr.bf16.mxu0 %v3845
        %4181 = vmatpush1.bf16.msra.mxu0 %v3844
        %4182 = vmatprep.subr.bf16.mxu0 %v3849
        %4183 = vmatpush1.bf16.msra.mxu0 %v3848
        %4184 = vmatprep.subr.bf16.mxu0 %v3853
        %4185 = vmatpush1.bf16.msra.mxu0 %v3852
        %4186 = vmatprep.subr.bf16.mxu0 %v3857
        %4187 = vmatpush1.bf16.msra.mxu0 %v3856
        %4188 = vmatprep.subr.bf16.mxu0 %v3861
        %4189 = vmatpush1.bf16.msra.mxu0 %v3860
        %4190 = vmatprep.subr.bf16.mxu0 %v3865
        %4191 = vmatpush1.bf16.msra.mxu0 %v3864
        %4192 = vmatprep.subr.bf16.mxu0 %v3869
        %4193 = vmatpush1.bf16.msra.mxu0 %v3868
        %4194 = vmatprep.subr.bf16.mxu0 %v3873
        %4195 = vmatpush1.bf16.msra.mxu0 %v3872
        %4196 = vmatprep.subr.bf16.mxu0 %v3877
        %4197 = vmatpush1.bf16.msra.mxu0 %v3876
        %4198 = vmatprep.subr.bf16.mxu0 %v3881
        %4199 = vmatpush1.bf16.msra.mxu0 %v3880
        %4200 = vmatprep.subr.bf16.mxu0 %v3885
        %4201 = vmatpush1.bf16.msra.mxu0 %v3884
        %4202 = vmatprep.subr.bf16.mxu0 %v3889
        %4203 = vmatpush1.bf16.msra.mxu0 %v3888
        %4204 = vmatprep.subr.bf16.mxu0 %v3893
        %4205 = vmatpush1.bf16.msra.mxu0 %v3892
        %4206 = vmatprep.subr.bf16.mxu0 %v3897
        %4207 = vmatpush1.bf16.msra.mxu0 %v3896
        %4208 = vmatprep.subr.bf16.mxu0 %v3901
        %4209 = vmatpush1.bf16.msra.mxu0 %v3900
        %4210 = vmatprep.subr.bf16.mxu0 %v3905
        %4211 = vmatpush1.bf16.msra.mxu0 %v3904
        %4212 = vmatprep.mubr.bf16.mxu0 %v3324
        %4213 = vmatmul.mubr.bf16.gmra.mrb[0].mxu0 %v3323
        %v4214 = vpop.f32.mrb[0].mxu0
        %v4215 = vadd.f32 0.0, %v4214
        %v4216 = vpop.f32.mrb[0].mxu0
        %v4217 = vadd.f32 0.0, %v4216
        %v4218 = vpop.f32.mrb[0].mxu0
        %v4219 = vpop.f32.mrb[0].mxu0
        %4220 = vdwg.mxu0
        %4221 = vmatprep.subr.bf16.mxu0 %v3909
        %4222 = vmatpush1.bf16.msra.mxu0 %v3908
        %4223 = vmatprep.subr.bf16.mxu0 %v3913
        %4224 = vmatpush1.bf16.msra.mxu0 %v3912
        %4225 = vmatprep.subr.bf16.mxu0 %v3917
        %4226 = vmatpush1.bf16.msra.mxu0 %v3916
        %4227 = vmatprep.subr.bf16.mxu0 %v3921
        %4228 = vmatpush1.bf16.msra.mxu0 %v3920
        %4229 = vmatprep.subr.bf16.mxu0 %v3925
        %4230 = vmatpush1.bf16.msra.mxu0 %v3924
        %4231 = vmatprep.subr.bf16.mxu0 %v3929
        %4232 = vmatpush1.bf16.msra.mxu0 %v3928
        %4233 = vmatprep.subr.bf16.mxu0 %v3933
        %4234 = vmatpush1.bf16.msra.mxu0 %v3932
        %4235 = vmatprep.subr.bf16.mxu0 %v3937
        %4236 = vmatpush1.bf16.msra.mxu0 %v3936
        %4237 = vmatprep.subr.bf16.mxu0 %v3941
        %4238 = vmatpush1.bf16.msra.mxu0 %v3940
        %4239 = vmatprep.subr.bf16.mxu0 %v3945
        %4240 = vmatpush1.bf16.msra.mxu0 %v3944
        %4241 = vmatprep.subr.bf16.mxu0 %v3949
        %4242 = vmatpush1.bf16.msra.mxu0 %v3948
        %4243 = vmatprep.subr.bf16.mxu0 %v3953
        %4244 = vmatpush1.bf16.msra.mxu0 %v3952
        %4245 = vmatprep.subr.bf16.mxu0 %v3957
        %4246 = vmatpush1.bf16.msra.mxu0 %v3956
        %4247 = vmatprep.subr.bf16.mxu0 %v3961
        %4248 = vmatpush1.bf16.msra.mxu0 %v3960
        %4249 = vmatprep.subr.bf16.mxu0 %v3965
        %4250 = vmatpush1.bf16.msra.mxu0 %v3964
        %4251 = vmatprep.subr.bf16.mxu0 %v3969
        %4252 = vmatpush1.bf16.msra.mxu0 %v3968
        %4253 = vmatprep.mubr.bf16.mxu0 %v3326
        %4254 = vmatmul.mubr.bf16.gmra.mrb[0].mxu0 %v3325
        %v4255 = vpop.f32.mrb[0].mxu0
        %v4256 = vadd.f32 %v4215, %v4255
        %v4257 = vpop.f32.mrb[0].mxu0
        %v4258 = vadd.f32 %v4217, %v4257
        %v4259 = vpop.f32.mrb[0].mxu0
        %v4260 = vpop.f32.mrb[0].mxu0
        %4261 = vdwg.mxu0
        %v4262 = vadd.f32 %v3319, %v4174
        %v4263 = vadd.f32 %v3320, %v4176
        %v4264 = vadd.f32 %v3321, %v4256
        %v4265 = vadd.f32 %v3322, %v4258
        %4266 = vst [vmem:[#allocation2] sm:$0xff] %v4262
        %4267 = vst [vmem:[#allocation2 + $0x8] sm:$0xff] %v4263
        %4268 = vst [vmem:[#allocation2 + $0x10] sm:$0xff] %v4264
        %4269 = vst [vmem:[#allocation2 + $0x18] sm:$0xff] %v4265
        %s4270 = scalar_lea.vmem [#allocation6], 32
        %v4271 = vld [vmem:[%s4270] sm:$0xff]
        %v4272 = vld [vmem:[%s4270 + $0x8] sm:$0xff]
        %v4273 = vld [vmem:[%s4270 + $0x40] sm:$0xff]
        %v4274 = vld [vmem:[%s4270 + $0x48] sm:$0xff]
        %v4275 = vld [vmem:[%s4270 + $0x80] sm:$0xff]
        %v4276 = vld [vmem:[%s4270 + $0x88] sm:$0xff]
        %v4277 = vld [vmem:[%s4270 + $0xc0] sm:$0xff]
        %v4278 = vld [vmem:[%s4270 + $0xc8] sm:$0xff]
        %v4279 = vld [vmem:[%s4270 + $0x100] sm:$0xff]
        %v4280 = vld [vmem:[%s4270 + $0x108] sm:$0xff]
        %v4281 = vld [vmem:[%s4270 + $0x140] sm:$0xff]
        %v4282 = vld [vmem:[%s4270 + $0x148] sm:$0xff]
        %v4283 = vld [vmem:[%s4270 + $0x180] sm:$0xff]
        %v4284 = vld [vmem:[%s4270 + $0x188] sm:$0xff]
        %v4285 = vld [vmem:[%s4270 + $0x1c0] sm:$0xff]
        %v4286 = vld [vmem:[%s4270 + $0x1c8] sm:$0xff]
        %v4287 = vld [vmem:[%s4270 + $0x200] sm:$0xff]
        %v4288 = vld [vmem:[%s4270 + $0x208] sm:$0xff]
        %v4289 = vld [vmem:[%s4270 + $0x240] sm:$0xff]
        %v4290 = vld [vmem:[%s4270 + $0x248] sm:$0xff]
        %v4291 = vld [vmem:[%s4270 + $0x280] sm:$0xff]
        %v4292 = vld [vmem:[%s4270 + $0x288] sm:$0xff]
        %v4293 = vld [vmem:[%s4270 + $0x2c0] sm:$0xff]
        %v4294 = vld [vmem:[%s4270 + $0x2c8] sm:$0xff]
        %v4295 = vld [vmem:[%s4270 + $0x300] sm:$0xff]
        %v4296 = vld [vmem:[%s4270 + $0x308] sm:$0xff]
        %v4297 = vld [vmem:[%s4270 + $0x340] sm:$0xff]
        %v4298 = vld [vmem:[%s4270 + $0x348] sm:$0xff]
        %v4299 = vld [vmem:[%s4270 + $0x380] sm:$0xff]
        %v4300 = vld [vmem:[%s4270 + $0x388] sm:$0xff]
        %v4301 = vld [vmem:[%s4270 + $0x3c0] sm:$0xff]
        %v4302 = vld [vmem:[%s4270 + $0x3c8] sm:$0xff]
        %v4303 = vld [vmem:[%s4270 + $0x400] sm:$0xff]
        %v4304 = vld [vmem:[%s4270 + $0x408] sm:$0xff]
        %v4305 = vld [vmem:[%s4270 + $0x440] sm:$0xff]
        %v4306 = vld [vmem:[%s4270 + $0x448] sm:$0xff]
        %v4307 = vld [vmem:[%s4270 + $0x480] sm:$0xff]
        %v4308 = vld [vmem:[%s4270 + $0x488] sm:$0xff]
        %v4309 = vld [vmem:[%s4270 + $0x4c0] sm:$0xff]
        %v4310 = vld [vmem:[%s4270 + $0x4c8] sm:$0xff]
        %v4311 = vld [vmem:[%s4270 + $0x500] sm:$0xff]
        %v4312 = vld [vmem:[%s4270 + $0x508] sm:$0xff]
        %v4313 = vld [vmem:[%s4270 + $0x540] sm:$0xff]
        %v4314 = vld [vmem:[%s4270 + $0x548] sm:$0xff]
        %v4315 = vld [vmem:[%s4270 + $0x580] sm:$0xff]
        %v4316 = vld [vmem:[%s4270 + $0x588] sm:$0xff]
        %v4317 = vld [vmem:[%s4270 + $0x5c0] sm:$0xff]
        %v4318 = vld [vmem:[%s4270 + $0x5c8] sm:$0xff]
        %v4319 = vld [vmem:[%s4270 + $0x600] sm:$0xff]
        %v4320 = vld [vmem:[%s4270 + $0x608] sm:$0xff]
        %v4321 = vld [vmem:[%s4270 + $0x640] sm:$0xff]
        %v4322 = vld [vmem:[%s4270 + $0x648] sm:$0xff]
        %v4323 = vld [vmem:[%s4270 + $0x680] sm:$0xff]
        %v4324 = vld [vmem:[%s4270 + $0x688] sm:$0xff]
        %v4325 = vld [vmem:[%s4270 + $0x6c0] sm:$0xff]
        %v4326 = vld [vmem:[%s4270 + $0x6c8] sm:$0xff]
        %v4327 = vld [vmem:[%s4270 + $0x700] sm:$0xff]
        %v4328 = vld [vmem:[%s4270 + $0x708] sm:$0xff]
        %v4329 = vld [vmem:[%s4270 + $0x740] sm:$0xff]
        %v4330 = vld [vmem:[%s4270 + $0x748] sm:$0xff]
        %v4331 = vld [vmem:[%s4270 + $0x780] sm:$0xff]
        %v4332 = vld [vmem:[%s4270 + $0x788] sm:$0xff]
        %v4333 = vld [vmem:[%s4270 + $0x7c0] sm:$0xff]
        %v4334 = vld [vmem:[%s4270 + $0x7c8] sm:$0xff]
        %v4335 = vld [vmem:[%s4270 + $0x800] sm:$0xff]
        %v4336 = vld [vmem:[%s4270 + $0x808] sm:$0xff]
        %v4337 = vld [vmem:[%s4270 + $0x840] sm:$0xff]
        %v4338 = vld [vmem:[%s4270 + $0x848] sm:$0xff]
        %v4339 = vld [vmem:[%s4270 + $0x880] sm:$0xff]
        %v4340 = vld [vmem:[%s4270 + $0x888] sm:$0xff]
        %v4341 = vld [vmem:[%s4270 + $0x8c0] sm:$0xff]
        %v4342 = vld [vmem:[%s4270 + $0x8c8] sm:$0xff]
        %v4343 = vld [vmem:[%s4270 + $0x900] sm:$0xff]
        %v4344 = vld [vmem:[%s4270 + $0x908] sm:$0xff]
        %v4345 = vld [vmem:[%s4270 + $0x940] sm:$0xff]
        %v4346 = vld [vmem:[%s4270 + $0x948] sm:$0xff]
        %v4347 = vld [vmem:[%s4270 + $0x980] sm:$0xff]
        %v4348 = vld [vmem:[%s4270 + $0x988] sm:$0xff]
        %v4349 = vld [vmem:[%s4270 + $0x9c0] sm:$0xff]
        %v4350 = vld [vmem:[%s4270 + $0x9c8] sm:$0xff]
        %v4351 = vld [vmem:[%s4270 + $0xa00] sm:$0xff]
        %v4352 = vld [vmem:[%s4270 + $0xa08] sm:$0xff]
        %v4353 = vld [vmem:[%s4270 + $0xa40] sm:$0xff]
        %v4354 = vld [vmem:[%s4270 + $0xa48] sm:$0xff]
        %v4355 = vld [vmem:[%s4270 + $0xa80] sm:$0xff]
        %v4356 = vld [vmem:[%s4270 + $0xa88] sm:$0xff]
        %v4357 = vld [vmem:[%s4270 + $0xac0] sm:$0xff]
        %v4358 = vld [vmem:[%s4270 + $0xac8] sm:$0xff]
        %v4359 = vld [vmem:[%s4270 + $0xb00] sm:$0xff]
        %v4360 = vld [vmem:[%s4270 + $0xb08] sm:$0xff]
        %v4361 = vld [vmem:[%s4270 + $0xb40] sm:$0xff]
        %v4362 = vld [vmem:[%s4270 + $0xb48] sm:$0xff]
        %v4363 = vld [vmem:[%s4270 + $0xb80] sm:$0xff]
        %v4364 = vld [vmem:[%s4270 + $0xb88] sm:$0xff]
        %v4365 = vld [vmem:[%s4270 + $0xbc0] sm:$0xff]
        %v4366 = vld [vmem:[%s4270 + $0xbc8] sm:$0xff]
        %v4367 = vld [vmem:[%s4270 + $0xc00] sm:$0xff]
        %v4368 = vld [vmem:[%s4270 + $0xc08] sm:$0xff]
        %v4369 = vld [vmem:[%s4270 + $0xc40] sm:$0xff]
        %v4370 = vld [vmem:[%s4270 + $0xc48] sm:$0xff]
        %v4371 = vld [vmem:[%s4270 + $0xc80] sm:$0xff]
        %v4372 = vld [vmem:[%s4270 + $0xc88] sm:$0xff]
        %v4373 = vld [vmem:[%s4270 + $0xcc0] sm:$0xff]
        %v4374 = vld [vmem:[%s4270 + $0xcc8] sm:$0xff]
        %v4375 = vld [vmem:[%s4270 + $0xd00] sm:$0xff]
        %v4376 = vld [vmem:[%s4270 + $0xd08] sm:$0xff]
        %v4377 = vld [vmem:[%s4270 + $0xd40] sm:$0xff]
        %v4378 = vld [vmem:[%s4270 + $0xd48] sm:$0xff]
        %v4379 = vld [vmem:[%s4270 + $0xd80] sm:$0xff]
        %v4380 = vld [vmem:[%s4270 + $0xd88] sm:$0xff]
        %v4381 = vld [vmem:[%s4270 + $0xdc0] sm:$0xff]
        %v4382 = vld [vmem:[%s4270 + $0xdc8] sm:$0xff]
        %v4383 = vld [vmem:[%s4270 + $0xe00] sm:$0xff]
        %v4384 = vld [vmem:[%s4270 + $0xe08] sm:$0xff]
        %v4385 = vld [vmem:[%s4270 + $0xe40] sm:$0xff]
        %v4386 = vld [vmem:[%s4270 + $0xe48] sm:$0xff]
        %v4387 = vld [vmem:[%s4270 + $0xe80] sm:$0xff]
        %v4388 = vld [vmem:[%s4270 + $0xe88] sm:$0xff]
        %v4389 = vld [vmem:[%s4270 + $0xec0] sm:$0xff]
        %v4390 = vld [vmem:[%s4270 + $0xec8] sm:$0xff]
        %v4391 = vld [vmem:[%s4270 + $0xf00] sm:$0xff]
        %v4392 = vld [vmem:[%s4270 + $0xf08] sm:$0xff]
        %v4393 = vld [vmem:[%s4270 + $0xf40] sm:$0xff]
        %v4394 = vld [vmem:[%s4270 + $0xf48] sm:$0xff]
        %v4395 = vld [vmem:[%s4270 + $0xf80] sm:$0xff]
        %v4396 = vld [vmem:[%s4270 + $0xf88] sm:$0xff]
        %v4397 = vld [vmem:[%s4270 + $0xfc0] sm:$0xff]
        %v4398 = vld [vmem:[%s4270 + $0xfc8] sm:$0xff]
        %s4399 = scalar_lea.vmem [#allocation8], 8
        %v4400 = vld [vmem:[%s4399] sm:$0xf]
        %v4402 = vlaneseq
        %v4403 = vshrl.u32 %v4402, 7
        %v4404 = vsub.s32 0, %v4403
        %v4405 = vrot.slane %v4400, %v4404
        %v4406 = vlaneseq
        %v4407 = vshrl.u32 %v4406, 7
        %v4408 = vsub.s32 1, %v4407
        %v4409 = vrot.slane %v4400, %v4408
        %v4410 = vlaneseq
        %v4411 = vshrl.u32 %v4410, 7
        %v4412 = vsub.s32 2, %v4411
        %v4413 = vrot.slane %v4400, %v4412
        %v4414 = vlaneseq
        %v4415 = vshrl.u32 %v4414, 7
        %v4416 = vsub.s32 3, %v4415
        %v4417 = vrot.slane %v4400, %v4416
        %v4550 = vunpack.c.l.b16 %v4271
        %v4551 = vunpack.c.h.b16 %v4271
        %v4552 = vunpack.c.l.b16 %v4272
        %v4553 = vunpack.c.h.b16 %v4272
        %v4554 = vunpack.c.l.b16 %v4273
        %v4555 = vunpack.c.h.b16 %v4273
        %v4556 = vunpack.c.l.b16 %v4274
        %v4557 = vunpack.c.h.b16 %v4274
        %v4558 = vunpack.c.l.b16 %v4275
        %v4559 = vunpack.c.h.b16 %v4275
        %v4560 = vunpack.c.l.b16 %v4276
        %v4561 = vunpack.c.h.b16 %v4276
        %v4562 = vunpack.c.l.b16 %v4277
        %v4563 = vunpack.c.h.b16 %v4277
        %v4564 = vunpack.c.l.b16 %v4278
        %v4565 = vunpack.c.h.b16 %v4278
        %v4566 = vunpack.c.l.b16 %v4279
        %v4567 = vunpack.c.h.b16 %v4279
        %v4568 = vunpack.c.l.b16 %v4280
        %v4569 = vunpack.c.h.b16 %v4280
        %v4570 = vunpack.c.l.b16 %v4281
        %v4571 = vunpack.c.h.b16 %v4281
        %v4572 = vunpack.c.l.b16 %v4282
        %v4573 = vunpack.c.h.b16 %v4282
        %v4574 = vunpack.c.l.b16 %v4283
        %v4575 = vunpack.c.h.b16 %v4283
        %v4576 = vunpack.c.l.b16 %v4284
        %v4577 = vunpack.c.h.b16 %v4284
        %v4578 = vunpack.c.l.b16 %v4285
        %v4579 = vunpack.c.h.b16 %v4285
        %v4580 = vunpack.c.l.b16 %v4286
        %v4581 = vunpack.c.h.b16 %v4286
        %v4582 = vunpack.c.l.b16 %v4287
        %v4583 = vunpack.c.h.b16 %v4287
        %v4584 = vunpack.c.l.b16 %v4288
        %v4585 = vunpack.c.h.b16 %v4288
        %v4586 = vunpack.c.l.b16 %v4289
        %v4587 = vunpack.c.h.b16 %v4289
        %v4588 = vunpack.c.l.b16 %v4290
        %v4589 = vunpack.c.h.b16 %v4290
        %v4590 = vunpack.c.l.b16 %v4291
        %v4591 = vunpack.c.h.b16 %v4291
        %v4592 = vunpack.c.l.b16 %v4292
        %v4593 = vunpack.c.h.b16 %v4292
        %v4594 = vunpack.c.l.b16 %v4293
        %v4595 = vunpack.c.h.b16 %v4293
        %v4596 = vunpack.c.l.b16 %v4294
        %v4597 = vunpack.c.h.b16 %v4294
        %v4598 = vunpack.c.l.b16 %v4295
        %v4599 = vunpack.c.h.b16 %v4295
        %v4600 = vunpack.c.l.b16 %v4296
        %v4601 = vunpack.c.h.b16 %v4296
        %v4602 = vunpack.c.l.b16 %v4297
        %v4603 = vunpack.c.h.b16 %v4297
        %v4604 = vunpack.c.l.b16 %v4298
        %v4605 = vunpack.c.h.b16 %v4298
        %v4606 = vunpack.c.l.b16 %v4299
        %v4607 = vunpack.c.h.b16 %v4299
        %v4608 = vunpack.c.l.b16 %v4300
        %v4609 = vunpack.c.h.b16 %v4300
        %v4610 = vunpack.c.l.b16 %v4301
        %v4611 = vunpack.c.h.b16 %v4301
        %v4612 = vunpack.c.l.b16 %v4302
        %v4613 = vunpack.c.h.b16 %v4302
        %v4614 = vunpack.c.l.b16 %v4303
        %v4615 = vunpack.c.h.b16 %v4303
        %v4616 = vunpack.c.l.b16 %v4304
        %v4617 = vunpack.c.h.b16 %v4304
        %v4618 = vunpack.c.l.b16 %v4305
        %v4619 = vunpack.c.h.b16 %v4305
        %v4620 = vunpack.c.l.b16 %v4306
        %v4621 = vunpack.c.h.b16 %v4306
        %v4622 = vunpack.c.l.b16 %v4307
        %v4623 = vunpack.c.h.b16 %v4307
        %v4624 = vunpack.c.l.b16 %v4308
        %v4625 = vunpack.c.h.b16 %v4308
        %v4626 = vunpack.c.l.b16 %v4309
        %v4627 = vunpack.c.h.b16 %v4309
        %v4628 = vunpack.c.l.b16 %v4310
        %v4629 = vunpack.c.h.b16 %v4310
        %v4630 = vunpack.c.l.b16 %v4311
        %v4631 = vunpack.c.h.b16 %v4311
        %v4632 = vunpack.c.l.b16 %v4312
        %v4633 = vunpack.c.h.b16 %v4312
        %v4634 = vunpack.c.l.b16 %v4313
        %v4635 = vunpack.c.h.b16 %v4313
        %v4636 = vunpack.c.l.b16 %v4314
        %v4637 = vunpack.c.h.b16 %v4314
        %v4638 = vunpack.c.l.b16 %v4315
        %v4639 = vunpack.c.h.b16 %v4315
        %v4640 = vunpack.c.l.b16 %v4316
        %v4641 = vunpack.c.h.b16 %v4316
        %v4642 = vunpack.c.l.b16 %v4317
        %v4643 = vunpack.c.h.b16 %v4317
        %v4644 = vunpack.c.l.b16 %v4318
        %v4645 = vunpack.c.h.b16 %v4318
        %v4646 = vunpack.c.l.b16 %v4319
        %v4647 = vunpack.c.h.b16 %v4319
        %v4648 = vunpack.c.l.b16 %v4320
        %v4649 = vunpack.c.h.b16 %v4320
        %v4650 = vunpack.c.l.b16 %v4321
        %v4651 = vunpack.c.h.b16 %v4321
        %v4652 = vunpack.c.l.b16 %v4322
        %v4653 = vunpack.c.h.b16 %v4322
        %v4654 = vunpack.c.l.b16 %v4323
        %v4655 = vunpack.c.h.b16 %v4323
        %v4656 = vunpack.c.l.b16 %v4324
        %v4657 = vunpack.c.h.b16 %v4324
        %v4658 = vunpack.c.l.b16 %v4325
        %v4659 = vunpack.c.h.b16 %v4325
        %v4660 = vunpack.c.l.b16 %v4326
        %v4661 = vunpack.c.h.b16 %v4326
        %v4662 = vunpack.c.l.b16 %v4327
        %v4663 = vunpack.c.h.b16 %v4327
        %v4664 = vunpack.c.l.b16 %v4328
        %v4665 = vunpack.c.h.b16 %v4328
        %v4666 = vunpack.c.l.b16 %v4329
        %v4667 = vunpack.c.h.b16 %v4329
        %v4668 = vunpack.c.l.b16 %v4330
        %v4669 = vunpack.c.h.b16 %v4330
        %v4670 = vunpack.c.l.b16 %v4331
        %v4671 = vunpack.c.h.b16 %v4331
        %v4672 = vunpack.c.l.b16 %v4332
        %v4673 = vunpack.c.h.b16 %v4332
        %v4674 = vunpack.c.l.b16 %v4333
        %v4675 = vunpack.c.h.b16 %v4333
        %v4676 = vunpack.c.l.b16 %v4334
        %v4677 = vunpack.c.h.b16 %v4334
        %v4678 = vunpack.c.l.b16 %v4335
        %v4679 = vunpack.c.h.b16 %v4335
        %v4680 = vunpack.c.l.b16 %v4336
        %v4681 = vunpack.c.h.b16 %v4336
        %v4682 = vunpack.c.l.b16 %v4337
        %v4683 = vunpack.c.h.b16 %v4337
        %v4684 = vunpack.c.l.b16 %v4338
        %v4685 = vunpack.c.h.b16 %v4338
        %v4686 = vunpack.c.l.b16 %v4339
        %v4687 = vunpack.c.h.b16 %v4339
        %v4688 = vunpack.c.l.b16 %v4340
        %v4689 = vunpack.c.h.b16 %v4340
        %v4690 = vunpack.c.l.b16 %v4341
        %v4691 = vunpack.c.h.b16 %v4341
        %v4692 = vunpack.c.l.b16 %v4342
        %v4693 = vunpack.c.h.b16 %v4342
        %v4694 = vunpack.c.l.b16 %v4343
        %v4695 = vunpack.c.h.b16 %v4343
        %v4696 = vunpack.c.l.b16 %v4344
        %v4697 = vunpack.c.h.b16 %v4344
        %v4698 = vunpack.c.l.b16 %v4345
        %v4699 = vunpack.c.h.b16 %v4345
        %v4700 = vunpack.c.l.b16 %v4346
        %v4701 = vunpack.c.h.b16 %v4346
        %v4702 = vunpack.c.l.b16 %v4347
        %v4703 = vunpack.c.h.b16 %v4347
        %v4704 = vunpack.c.l.b16 %v4348
        %v4705 = vunpack.c.h.b16 %v4348
        %v4706 = vunpack.c.l.b16 %v4349
        %v4707 = vunpack.c.h.b16 %v4349
        %v4708 = vunpack.c.l.b16 %v4350
        %v4709 = vunpack.c.h.b16 %v4350
        %v4710 = vunpack.c.l.b16 %v4351
        %v4711 = vunpack.c.h.b16 %v4351
        %v4712 = vunpack.c.l.b16 %v4352
        %v4713 = vunpack.c.h.b16 %v4352
        %v4714 = vunpack.c.l.b16 %v4353
        %v4715 = vunpack.c.h.b16 %v4353
        %v4716 = vunpack.c.l.b16 %v4354
        %v4717 = vunpack.c.h.b16 %v4354
        %v4718 = vunpack.c.l.b16 %v4355
        %v4719 = vunpack.c.h.b16 %v4355
        %v4720 = vunpack.c.l.b16 %v4356
        %v4721 = vunpack.c.h.b16 %v4356
        %v4722 = vunpack.c.l.b16 %v4357
        %v4723 = vunpack.c.h.b16 %v4357
        %v4724 = vunpack.c.l.b16 %v4358
        %v4725 = vunpack.c.h.b16 %v4358
        %v4726 = vunpack.c.l.b16 %v4359
        %v4727 = vunpack.c.h.b16 %v4359
        %v4728 = vunpack.c.l.b16 %v4360
        %v4729 = vunpack.c.h.b16 %v4360
        %v4730 = vunpack.c.l.b16 %v4361
        %v4731 = vunpack.c.h.b16 %v4361
        %v4732 = vunpack.c.l.b16 %v4362
        %v4733 = vunpack.c.h.b16 %v4362
        %v4734 = vunpack.c.l.b16 %v4363
        %v4735 = vunpack.c.h.b16 %v4363
        %v4736 = vunpack.c.l.b16 %v4364
        %v4737 = vunpack.c.h.b16 %v4364
        %v4738 = vunpack.c.l.b16 %v4365
        %v4739 = vunpack.c.h.b16 %v4365
        %v4740 = vunpack.c.l.b16 %v4366
        %v4741 = vunpack.c.h.b16 %v4366
        %v4742 = vunpack.c.l.b16 %v4367
        %v4743 = vunpack.c.h.b16 %v4367
        %v4744 = vunpack.c.l.b16 %v4368
        %v4745 = vunpack.c.h.b16 %v4368
        %v4746 = vunpack.c.l.b16 %v4369
        %v4747 = vunpack.c.h.b16 %v4369
        %v4748 = vunpack.c.l.b16 %v4370
        %v4749 = vunpack.c.h.b16 %v4370
        %v4750 = vunpack.c.l.b16 %v4371
        %v4751 = vunpack.c.h.b16 %v4371
        %v4752 = vunpack.c.l.b16 %v4372
        %v4753 = vunpack.c.h.b16 %v4372
        %v4754 = vunpack.c.l.b16 %v4373
        %v4755 = vunpack.c.h.b16 %v4373
        %v4756 = vunpack.c.l.b16 %v4374
        %v4757 = vunpack.c.h.b16 %v4374
        %v4758 = vunpack.c.l.b16 %v4375
        %v4759 = vunpack.c.h.b16 %v4375
        %v4760 = vunpack.c.l.b16 %v4376
        %v4761 = vunpack.c.h.b16 %v4376
        %v4762 = vunpack.c.l.b16 %v4377
        %v4763 = vunpack.c.h.b16 %v4377
        %v4764 = vunpack.c.l.b16 %v4378
        %v4765 = vunpack.c.h.b16 %v4378
        %v4766 = vunpack.c.l.b16 %v4379
        %v4767 = vunpack.c.h.b16 %v4379
        %v4768 = vunpack.c.l.b16 %v4380
        %v4769 = vunpack.c.h.b16 %v4380
        %v4770 = vunpack.c.l.b16 %v4381
        %v4771 = vunpack.c.h.b16 %v4381
        %v4772 = vunpack.c.l.b16 %v4382
        %v4773 = vunpack.c.h.b16 %v4382
        %v4774 = vunpack.c.l.b16 %v4383
        %v4775 = vunpack.c.h.b16 %v4383
        %v4776 = vunpack.c.l.b16 %v4384
        %v4777 = vunpack.c.h.b16 %v4384
        %v4778 = vunpack.c.l.b16 %v4385
        %v4779 = vunpack.c.h.b16 %v4385
        %v4780 = vunpack.c.l.b16 %v4386
        %v4781 = vunpack.c.h.b16 %v4386
        %v4782 = vunpack.c.l.b16 %v4387
        %v4783 = vunpack.c.h.b16 %v4387
        %v4784 = vunpack.c.l.b16 %v4388
        %v4785 = vunpack.c.h.b16 %v4388
        %v4786 = vunpack.c.l.b16 %v4389
        %v4787 = vunpack.c.h.b16 %v4389
        %v4788 = vunpack.c.l.b16 %v4390
        %v4789 = vunpack.c.h.b16 %v4390
        %v4790 = vunpack.c.l.b16 %v4391
        %v4791 = vunpack.c.h.b16 %v4391
        %v4792 = vunpack.c.l.b16 %v4392
        %v4793 = vunpack.c.h.b16 %v4392
        %v4794 = vunpack.c.l.b16 %v4393
        %v4795 = vunpack.c.h.b16 %v4393
        %v4796 = vunpack.c.l.b16 %v4394
        %v4797 = vunpack.c.h.b16 %v4394
        %v4798 = vunpack.c.l.b16 %v4395
        %v4799 = vunpack.c.h.b16 %v4395
        %v4800 = vunpack.c.l.b16 %v4396
        %v4801 = vunpack.c.h.b16 %v4396
        %v4802 = vunpack.c.l.b16 %v4397
        %v4803 = vunpack.c.h.b16 %v4397
        %v4804 = vunpack.c.l.b16 %v4398
        %v4805 = vunpack.c.h.b16 %v4398
        %v4806 = vpack.c.b16 %v4554, %v4550
        %v4807 = vpack.c.b16 %v4555, %v4551
        %v4808 = vpack.c.b16 %v4556, %v4552
        %v4809 = vpack.c.b16 %v4557, %v4553
        %v4810 = vpack.c.b16 %v4562, %v4558
        %v4811 = vpack.c.b16 %v4563, %v4559
        %v4812 = vpack.c.b16 %v4564, %v4560
        %v4813 = vpack.c.b16 %v4565, %v4561
        %v4814 = vpack.c.b16 %v4570, %v4566
        %v4815 = vpack.c.b16 %v4571, %v4567
        %v4816 = vpack.c.b16 %v4572, %v4568
        %v4817 = vpack.c.b16 %v4573, %v4569
        %v4818 = vpack.c.b16 %v4578, %v4574
        %v4819 = vpack.c.b16 %v4579, %v4575
        %v4820 = vpack.c.b16 %v4580, %v4576
        %v4821 = vpack.c.b16 %v4581, %v4577
        %v4822 = vpack.c.b16 %v4586, %v4582
        %v4823 = vpack.c.b16 %v4587, %v4583
        %v4824 = vpack.c.b16 %v4588, %v4584
        %v4825 = vpack.c.b16 %v4589, %v4585
        %v4826 = vpack.c.b16 %v4594, %v4590
        %v4827 = vpack.c.b16 %v4595, %v4591
        %v4828 = vpack.c.b16 %v4596, %v4592
        %v4829 = vpack.c.b16 %v4597, %v4593
        %v4830 = vpack.c.b16 %v4602, %v4598
        %v4831 = vpack.c.b16 %v4603, %v4599
        %v4832 = vpack.c.b16 %v4604, %v4600
        %v4833 = vpack.c.b16 %v4605, %v4601
        %v4834 = vpack.c.b16 %v4610, %v4606
        %v4835 = vpack.c.b16 %v4611, %v4607
        %v4836 = vpack.c.b16 %v4612, %v4608
        %v4837 = vpack.c.b16 %v4613, %v4609
        %v4838 = vpack.c.b16 %v4618, %v4614
        %v4839 = vpack.c.b16 %v4619, %v4615
        %v4840 = vpack.c.b16 %v4620, %v4616
        %v4841 = vpack.c.b16 %v4621, %v4617
        %v4842 = vpack.c.b16 %v4626, %v4622
        %v4843 = vpack.c.b16 %v4627, %v4623
        %v4844 = vpack.c.b16 %v4628, %v4624
        %v4845 = vpack.c.b16 %v4629, %v4625
        %v4846 = vpack.c.b16 %v4634, %v4630
        %v4847 = vpack.c.b16 %v4635, %v4631
        %v4848 = vpack.c.b16 %v4636, %v4632
        %v4849 = vpack.c.b16 %v4637, %v4633
        %v4850 = vpack.c.b16 %v4642, %v4638
        %v4851 = vpack.c.b16 %v4643, %v4639
        %v4852 = vpack.c.b16 %v4644, %v4640
        %v4853 = vpack.c.b16 %v4645, %v4641
        %v4854 = vpack.c.b16 %v4650, %v4646
        %v4855 = vpack.c.b16 %v4651, %v4647
        %v4856 = vpack.c.b16 %v4652, %v4648
        %v4857 = vpack.c.b16 %v4653, %v4649
        %v4858 = vpack.c.b16 %v4658, %v4654
        %v4859 = vpack.c.b16 %v4659, %v4655
        %v4860 = vpack.c.b16 %v4660, %v4656
        %v4861 = vpack.c.b16 %v4661, %v4657
        %v4862 = vpack.c.b16 %v4666, %v4662
        %v4863 = vpack.c.b16 %v4667, %v4663
        %v4864 = vpack.c.b16 %v4668, %v4664
        %v4865 = vpack.c.b16 %v4669, %v4665
        %v4866 = vpack.c.b16 %v4674, %v4670
        %v4867 = vpack.c.b16 %v4675, %v4671
        %v4868 = vpack.c.b16 %v4676, %v4672
        %v4869 = vpack.c.b16 %v4677, %v4673
        %v4870 = vpack.c.b16 %v4682, %v4678
        %v4871 = vpack.c.b16 %v4683, %v4679
        %v4872 = vpack.c.b16 %v4684, %v4680
        %v4873 = vpack.c.b16 %v4685, %v4681
        %v4874 = vpack.c.b16 %v4690, %v4686
        %v4875 = vpack.c.b16 %v4691, %v4687
        %v4876 = vpack.c.b16 %v4692, %v4688
        %v4877 = vpack.c.b16 %v4693, %v4689
        %v4878 = vpack.c.b16 %v4698, %v4694
        %v4879 = vpack.c.b16 %v4699, %v4695
        %v4880 = vpack.c.b16 %v4700, %v4696
        %v4881 = vpack.c.b16 %v4701, %v4697
        %v4882 = vpack.c.b16 %v4706, %v4702
        %v4883 = vpack.c.b16 %v4707, %v4703
        %v4884 = vpack.c.b16 %v4708, %v4704
        %v4885 = vpack.c.b16 %v4709, %v4705
        %v4886 = vpack.c.b16 %v4714, %v4710
        %v4887 = vpack.c.b16 %v4715, %v4711
        %v4888 = vpack.c.b16 %v4716, %v4712
        %v4889 = vpack.c.b16 %v4717, %v4713
        %v4890 = vpack.c.b16 %v4722, %v4718
        %v4891 = vpack.c.b16 %v4723, %v4719
        %v4892 = vpack.c.b16 %v4724, %v4720
        %v4893 = vpack.c.b16 %v4725, %v4721
        %v4894 = vpack.c.b16 %v4730, %v4726
        %v4895 = vpack.c.b16 %v4731, %v4727
        %v4896 = vpack.c.b16 %v4732, %v4728
        %v4897 = vpack.c.b16 %v4733, %v4729
        %v4898 = vpack.c.b16 %v4738, %v4734
        %v4899 = vpack.c.b16 %v4739, %v4735
        %v4900 = vpack.c.b16 %v4740, %v4736
        %v4901 = vpack.c.b16 %v4741, %v4737
        %v4902 = vpack.c.b16 %v4746, %v4742
        %v4903 = vpack.c.b16 %v4747, %v4743
        %v4904 = vpack.c.b16 %v4748, %v4744
        %v4905 = vpack.c.b16 %v4749, %v4745
        %v4906 = vpack.c.b16 %v4754, %v4750
        %v4907 = vpack.c.b16 %v4755, %v4751
        %v4908 = vpack.c.b16 %v4756, %v4752
        %v4909 = vpack.c.b16 %v4757, %v4753
        %v4910 = vpack.c.b16 %v4762, %v4758
        %v4911 = vpack.c.b16 %v4763, %v4759
        %v4912 = vpack.c.b16 %v4764, %v4760
        %v4913 = vpack.c.b16 %v4765, %v4761
        %v4914 = vpack.c.b16 %v4770, %v4766
        %v4915 = vpack.c.b16 %v4771, %v4767
        %v4916 = vpack.c.b16 %v4772, %v4768
        %v4917 = vpack.c.b16 %v4773, %v4769
        %v4918 = vpack.c.b16 %v4778, %v4774
        %v4919 = vpack.c.b16 %v4779, %v4775
        %v4920 = vpack.c.b16 %v4780, %v4776
        %v4921 = vpack.c.b16 %v4781, %v4777
        %v4922 = vpack.c.b16 %v4786, %v4782
        %v4923 = vpack.c.b16 %v4787, %v4783
        %v4924 = vpack.c.b16 %v4788, %v4784
        %v4925 = vpack.c.b16 %v4789, %v4785
        %v4926 = vpack.c.b16 %v4794, %v4790
        %v4927 = vpack.c.b16 %v4795, %v4791
        %v4928 = vpack.c.b16 %v4796, %v4792
        %v4929 = vpack.c.b16 %v4797, %v4793
        %v4930 = vpack.c.b16 %v4802, %v4798
        %v4931 = vpack.c.b16 %v4803, %v4799
        %v4932 = vpack.c.b16 %v4804, %v4800
        %v4933 = vpack.c.b16 %v4805, %v4801
        %5062 = vmatprep.subr.bf16.mxu0 %v4807
        %5063 = vmatpush1.bf16.msra.mxu0 %v4806
        %5064 = vmatprep.subr.bf16.mxu0 %v4811
        %5065 = vmatpush1.bf16.msra.mxu0 %v4810
        %5066 = vmatprep.subr.bf16.mxu0 %v4815
        %5067 = vmatpush1.bf16.msra.mxu0 %v4814
        %5068 = vmatprep.subr.bf16.mxu0 %v4819
        %5069 = vmatpush1.bf16.msra.mxu0 %v4818
        %5070 = vmatprep.subr.bf16.mxu0 %v4823
        %5071 = vmatpush1.bf16.msra.mxu0 %v4822
        %5072 = vmatprep.subr.bf16.mxu0 %v4827
        %5073 = vmatpush1.bf16.msra.mxu0 %v4826
        %5074 = vmatprep.subr.bf16.mxu0 %v4831
        %5075 = vmatpush1.bf16.msra.mxu0 %v4830
        %5076 = vmatprep.subr.bf16.mxu0 %v4835
        %5077 = vmatpush1.bf16.msra.mxu0 %v4834
        %5078 = vmatprep.subr.bf16.mxu0 %v4839
        %5079 = vmatpush1.bf16.msra.mxu0 %v4838
        %5080 = vmatprep.subr.bf16.mxu0 %v4843
        %5081 = vmatpush1.bf16.msra.mxu0 %v4842
        %5082 = vmatprep.subr.bf16.mxu0 %v4847
        %5083 = vmatpush1.bf16.msra.mxu0 %v4846
        %5084 = vmatprep.subr.bf16.mxu0 %v4851
        %5085 = vmatpush1.bf16.msra.mxu0 %v4850
        %5086 = vmatprep.subr.bf16.mxu0 %v4855
        %5087 = vmatpush1.bf16.msra.mxu0 %v4854
        %5088 = vmatprep.subr.bf16.mxu0 %v4859
        %5089 = vmatpush1.bf16.msra.mxu0 %v4858
        %5090 = vmatprep.subr.bf16.mxu0 %v4863
        %5091 = vmatpush1.bf16.msra.mxu0 %v4862
        %5092 = vmatprep.subr.bf16.mxu0 %v4867
        %5093 = vmatpush1.bf16.msra.mxu0 %v4866
        %5094 = vmatprep.mubr.bf16.mxu0 %v379
        %5095 = vmatmul.mubr.bf16.gmra.mrb[0].mxu0 %v378
        %v5096 = vpop.f32.mrb[0].mxu0
        %v5097 = vadd.f32 %v4405, %v5096
        %v5098 = vpop.f32.mrb[0].mxu0
        %v5099 = vadd.f32 %v4409, %v5098
        %v5100 = vpop.f32.mrb[0].mxu0
        %v5101 = vpop.f32.mrb[0].mxu0
        %5102 = vdwg.mxu0
        %5103 = vmatprep.subr.bf16.mxu0 %v4871
        %5104 = vmatpush1.bf16.msra.mxu0 %v4870
        %5105 = vmatprep.subr.bf16.mxu0 %v4875
        %5106 = vmatpush1.bf16.msra.mxu0 %v4874
        %5107 = vmatprep.subr.bf16.mxu0 %v4879
        %5108 = vmatpush1.bf16.msra.mxu0 %v4878
        %5109 = vmatprep.subr.bf16.mxu0 %v4883
        %5110 = vmatpush1.bf16.msra.mxu0 %v4882
        %5111 = vmatprep.subr.bf16.mxu0 %v4887
        %5112 = vmatpush1.bf16.msra.mxu0 %v4886
        %5113 = vmatprep.subr.bf16.mxu0 %v4891
        %5114 = vmatpush1.bf16.msra.mxu0 %v4890
        %5115 = vmatprep.subr.bf16.mxu0 %v4895
        %5116 = vmatpush1.bf16.msra.mxu0 %v4894
        %5117 = vmatprep.subr.bf16.mxu0 %v4899
        %5118 = vmatpush1.bf16.msra.mxu0 %v4898
        %5119 = vmatprep.subr.bf16.mxu0 %v4903
        %5120 = vmatpush1.bf16.msra.mxu0 %v4902
        %5121 = vmatprep.subr.bf16.mxu0 %v4907
        %5122 = vmatpush1.bf16.msra.mxu0 %v4906
        %5123 = vmatprep.subr.bf16.mxu0 %v4911
        %5124 = vmatpush1.bf16.msra.mxu0 %v4910
        %5125 = vmatprep.subr.bf16.mxu0 %v4915
        %5126 = vmatpush1.bf16.msra.mxu0 %v4914
        %5127 = vmatprep.subr.bf16.mxu0 %v4919
        %5128 = vmatpush1.bf16.msra.mxu0 %v4918
        %5129 = vmatprep.subr.bf16.mxu0 %v4923
        %5130 = vmatpush1.bf16.msra.mxu0 %v4922
        %5131 = vmatprep.subr.bf16.mxu0 %v4927
        %5132 = vmatpush1.bf16.msra.mxu0 %v4926
        %5133 = vmatprep.subr.bf16.mxu0 %v4931
        %5134 = vmatpush1.bf16.msra.mxu0 %v4930
        %5135 = vmatprep.mubr.bf16.mxu0 %v381
        %5136 = vmatmul.mubr.bf16.gmra.mrb[0].mxu0 %v380
        %v5137 = vpop.f32.mrb[0].mxu0
        %v5138 = vadd.f32 %v5097, %v5137
        %v5139 = vpop.f32.mrb[0].mxu0
        %v5140 = vadd.f32 %v5099, %v5139
        %v5141 = vpop.f32.mrb[0].mxu0
        %v5142 = vpop.f32.mrb[0].mxu0
        %5143 = vdwg.mxu0
        %5144 = vmatprep.subr.bf16.mxu0 %v4809
        %5145 = vmatpush1.bf16.msra.mxu0 %v4808
        %5146 = vmatprep.subr.bf16.mxu0 %v4813
        %5147 = vmatpush1.bf16.msra.mxu0 %v4812
        %5148 = vmatprep.subr.bf16.mxu0 %v4817
        %5149 = vmatpush1.bf16.msra.mxu0 %v4816
        %5150 = vmatprep.subr.bf16.mxu0 %v4821
        %5151 = vmatpush1.bf16.msra.mxu0 %v4820
        %5152 = vmatprep.subr.bf16.mxu0 %v4825
        %5153 = vmatpush1.bf16.msra.mxu0 %v4824
        %5154 = vmatprep.subr.bf16.mxu0 %v4829
        %5155 = vmatpush1.bf16.msra.mxu0 %v4828
        %5156 = vmatprep.subr.bf16.mxu0 %v4833
        %5157 = vmatpush1.bf16.msra.mxu0 %v4832
        %5158 = vmatprep.subr.bf16.mxu0 %v4837
        %5159 = vmatpush1.bf16.msra.mxu0 %v4836
        %5160 = vmatprep.subr.bf16.mxu0 %v4841
        %5161 = vmatpush1.bf16.msra.mxu0 %v4840
        %5162 = vmatprep.subr.bf16.mxu0 %v4845
        %5163 = vmatpush1.bf16.msra.mxu0 %v4844
        %5164 = vmatprep.subr.bf16.mxu0 %v4849
        %5165 = vmatpush1.bf16.msra.mxu0 %v4848
        %5166 = vmatprep.subr.bf16.mxu0 %v4853
        %5167 = vmatpush1.bf16.msra.mxu0 %v4852
        %5168 = vmatprep.subr.bf16.mxu0 %v4857
        %5169 = vmatpush1.bf16.msra.mxu0 %v4856
        %5170 = vmatprep.subr.bf16.mxu0 %v4861
        %5171 = vmatpush1.bf16.msra.mxu0 %v4860
        %5172 = vmatprep.subr.bf16.mxu0 %v4865
        %5173 = vmatpush1.bf16.msra.mxu0 %v4864
        %5174 = vmatprep.subr.bf16.mxu0 %v4869
        %5175 = vmatpush1.bf16.msra.mxu0 %v4868
        %5176 = vmatprep.mubr.bf16.mxu0 %v379
        %5177 = vmatmul.mubr.bf16.gmra.mrb[0].mxu0 %v378
        %v5178 = vpop.f32.mrb[0].mxu0
        %v5179 = vadd.f32 %v4413, %v5178
        %v5180 = vpop.f32.mrb[0].mxu0
        %v5181 = vadd.f32 %v4417, %v5180
        %v5182 = vpop.f32.mrb[0].mxu0
        %v5183 = vpop.f32.mrb[0].mxu0
        %5184 = vdwg.mxu0
        %5185 = vmatprep.subr.bf16.mxu0 %v4873
        %5186 = vmatpush1.bf16.msra.mxu0 %v4872
        %5187 = vmatprep.subr.bf16.mxu0 %v4877
        %5188 = vmatpush1.bf16.msra.mxu0 %v4876
        %5189 = vmatprep.subr.bf16.mxu0 %v4881
        %5190 = vmatpush1.bf16.msra.mxu0 %v4880
        %5191 = vmatprep.subr.bf16.mxu0 %v4885
        %5192 = vmatpush1.bf16.msra.mxu0 %v4884
        %5193 = vmatprep.subr.bf16.mxu0 %v4889
        %5194 = vmatpush1.bf16.msra.mxu0 %v4888
        %5195 = vmatprep.subr.bf16.mxu0 %v4893
        %5196 = vmatpush1.bf16.msra.mxu0 %v4892
        %5197 = vmatprep.subr.bf16.mxu0 %v4897
        %5198 = vmatpush1.bf16.msra.mxu0 %v4896
        %5199 = vmatprep.subr.bf16.mxu0 %v4901
        %5200 = vmatpush1.bf16.msra.mxu0 %v4900
        %5201 = vmatprep.subr.bf16.mxu0 %v4905
        %5202 = vmatpush1.bf16.msra.mxu0 %v4904
        %5203 = vmatprep.subr.bf16.mxu0 %v4909
        %5204 = vmatpush1.bf16.msra.mxu0 %v4908
        %5205 = vmatprep.subr.bf16.mxu0 %v4913
        %5206 = vmatpush1.bf16.msra.mxu0 %v4912
        %5207 = vmatprep.subr.bf16.mxu0 %v4917
        %5208 = vmatpush1.bf16.msra.mxu0 %v4916
        %5209 = vmatprep.subr.bf16.mxu0 %v4921
        %5210 = vmatpush1.bf16.msra.mxu0 %v4920
        %5211 = vmatprep.subr.bf16.mxu0 %v4925
        %5212 = vmatpush1.bf16.msra.mxu0 %v4924
        %5213 = vmatprep.subr.bf16.mxu0 %v4929
        %5214 = vmatpush1.bf16.msra.mxu0 %v4928
        %5215 = vmatprep.subr.bf16.mxu0 %v4933
        %5216 = vmatpush1.bf16.msra.mxu0 %v4932
        %5217 = vmatprep.mubr.bf16.mxu0 %v381
        %5218 = vmatmul.mubr.bf16.gmra.mrb[0].mxu0 %v380
        %v5219 = vpop.f32.mrb[0].mxu0
        %v5220 = vadd.f32 %v5179, %v5219
        %v5221 = vpop.f32.mrb[0].mxu0
        %v5222 = vadd.f32 %v5181, %v5221
        %v5223 = vpop.f32.mrb[0].mxu0
        %v5224 = vpop.f32.mrb[0].mxu0
        %5225 = vdwg.mxu0
        %v5226 = vmul.f32 %v5138, 0.5
        %v5227 = vmul.f32 %v5140, 0.5
        %v5228 = vmul.f32 %v5220, 0.5
        %v5229 = vmul.f32 %v5222, 0.5
        %v5230 = vmul.f32 %v5138, 0.044715
        %v5231 = vmul.f32 %v5140, 0.044715
        %v5232 = vmul.f32 %v5220, 0.044715
        %v5233 = vmul.f32 %v5222, 0.044715
        %v5234 = vmul.f32 %v5230, %v5138
        %v5235 = vmul.f32 %v5231, %v5140
        %v5236 = vmul.f32 %v5232, %v5220
        %v5237 = vmul.f32 %v5233, %v5222
        %v5238 = vmul.f32 %v5234, %v5138
        %v5239 = vmul.f32 %v5235, %v5140
        %v5240 = vmul.f32 %v5236, %v5220
        %v5241 = vmul.f32 %v5237, %v5222
        %v5242 = vadd.f32 %v5138, %v5238
        %v5243 = vadd.f32 %v5140, %v5239
        %v5244 = vadd.f32 %v5220, %v5240
        %v5245 = vadd.f32 %v5222, %v5241
        %v5246 = vmul.f32 %v5242, 0.7978846
        %v5247 = vmul.f32 %v5243, 0.7978846
        %v5248 = vmul.f32 %v5244, 0.7978846
        %v5249 = vmul.f32 %v5245, 0.7978846
        %v5250 = vtanh.pop %v5246
        %v5251 = vtanh.pop %v5247
        %v5252 = vtanh.pop %v5248
        %v5253 = vtanh.pop %v5249
        %v5254 = vadd.f32 %v5250, 1.0
        %v5255 = vadd.f32 %v5251, 1.0
        %v5256 = vadd.f32 %v5252, 1.0
        %v5257 = vadd.f32 %v5253, 1.0
        %v5258 = vmul.f32 %v5226, %v5254
        %v5259 = vmul.f32 %v5227, %v5255
        %v5260 = vmul.f32 %v5228, %v5256
        %v5261 = vmul.f32 %v5229, %v5257
        %v5262 = vld [vmem:[#allocation2] sm:$0xff]
        %v5263 = vld [vmem:[#allocation2 + $0x8] sm:$0xff]
        %v5264 = vld [vmem:[#allocation2 + $0x10] sm:$0xff]
        %v5265 = vld [vmem:[#allocation2 + $0x18] sm:$0xff]
        %v5266 = vpack.c.bf16 %v5258, %v5258
        %v5267 = vpack.c.bf16 %v5259, %v5259
        %v5268 = vpack.c.bf16 %v5260, %v5260
        %v5269 = vpack.c.bf16 %v5261, %v5261
        %s5270 = smul.u32 128, 4
        %s5271 = smul.addr %s5270, 4
        %s5272 = scalar_lea.vmem [#allocation9], %s5271
        %v5273 = vld [vmem:[%s5272] sm:$0xff]
        %v5274 = vld [vmem:[%s5272 + $0x8] sm:$0xff]
        %v5275 = vld [vmem:[%s5272 + $0x10] sm:$0xff]
        %v5276 = vld [vmem:[%s5272 + $0x18] sm:$0xff]
        %v5277 = vld [vmem:[%s5272 + $0x20] sm:$0xff]
        %v5278 = vld [vmem:[%s5272 + $0x28] sm:$0xff]
        %v5279 = vld [vmem:[%s5272 + $0x30] sm:$0xff]
        %v5280 = vld [vmem:[%s5272 + $0x38] sm:$0xff]
        %v5281 = vld [vmem:[%s5272 + $0x40] sm:$0xff]
        %v5282 = vld [vmem:[%s5272 + $0x48] sm:$0xff]
        %v5283 = vld [vmem:[%s5272 + $0x50] sm:$0xff]
        %v5284 = vld [vmem:[%s5272 + $0x58] sm:$0xff]
        %v5285 = vld [vmem:[%s5272 + $0x60] sm:$0xff]
        %v5286 = vld [vmem:[%s5272 + $0x68] sm:$0xff]
        %v5287 = vld [vmem:[%s5272 + $0x70] sm:$0xff]
        %v5288 = vld [vmem:[%s5272 + $0x78] sm:$0xff]
        %v5289 = vld [vmem:[%s5272 + $0x80] sm:$0xff]
        %v5290 = vld [vmem:[%s5272 + $0x88] sm:$0xff]
        %v5291 = vld [vmem:[%s5272 + $0x90] sm:$0xff]
        %v5292 = vld [vmem:[%s5272 + $0x98] sm:$0xff]
        %v5293 = vld [vmem:[%s5272 + $0xa0] sm:$0xff]
        %v5294 = vld [vmem:[%s5272 + $0xa8] sm:$0xff]
        %v5295 = vld [vmem:[%s5272 + $0xb0] sm:$0xff]
        %v5296 = vld [vmem:[%s5272 + $0xb8] sm:$0xff]
        %v5297 = vld [vmem:[%s5272 + $0xc0] sm:$0xff]
        %v5298 = vld [vmem:[%s5272 + $0xc8] sm:$0xff]
        %v5299 = vld [vmem:[%s5272 + $0xd0] sm:$0xff]
        %v5300 = vld [vmem:[%s5272 + $0xd8] sm:$0xff]
        %v5301 = vld [vmem:[%s5272 + $0xe0] sm:$0xff]
        %v5302 = vld [vmem:[%s5272 + $0xe8] sm:$0xff]
        %v5303 = vld [vmem:[%s5272 + $0xf0] sm:$0xff]
        %v5304 = vld [vmem:[%s5272 + $0xf8] sm:$0xff]
        %v5305 = vld [vmem:[%s5272 + $0x100] sm:$0xff]
        %v5306 = vld [vmem:[%s5272 + $0x108] sm:$0xff]
        %v5307 = vld [vmem:[%s5272 + $0x110] sm:$0xff]
        %v5308 = vld [vmem:[%s5272 + $0x118] sm:$0xff]
        %v5309 = vld [vmem:[%s5272 + $0x120] sm:$0xff]
        %v5310 = vld [vmem:[%s5272 + $0x128] sm:$0xff]
        %v5311 = vld [vmem:[%s5272 + $0x130] sm:$0xff]
        %v5312 = vld [vmem:[%s5272 + $0x138] sm:$0xff]
        %v5313 = vld [vmem:[%s5272 + $0x140] sm:$0xff]
        %v5314 = vld [vmem:[%s5272 + $0x148] sm:$0xff]
        %v5315 = vld [vmem:[%s5272 + $0x150] sm:$0xff]
        %v5316 = vld [vmem:[%s5272 + $0x158] sm:$0xff]
        %v5317 = vld [vmem:[%s5272 + $0x160] sm:$0xff]
        %v5318 = vld [vmem:[%s5272 + $0x168] sm:$0xff]
        %v5319 = vld [vmem:[%s5272 + $0x170] sm:$0xff]
        %v5320 = vld [vmem:[%s5272 + $0x178] sm:$0xff]
        %v5321 = vld [vmem:[%s5272 + $0x180] sm:$0xff]
        %v5322 = vld [vmem:[%s5272 + $0x188] sm:$0xff]
        %v5323 = vld [vmem:[%s5272 + $0x190] sm:$0xff]
        %v5324 = vld [vmem:[%s5272 + $0x198] sm:$0xff]
        %v5325 = vld [vmem:[%s5272 + $0x1a0] sm:$0xff]
        %v5326 = vld [vmem:[%s5272 + $0x1a8] sm:$0xff]
        %v5327 = vld [vmem:[%s5272 + $0x1b0] sm:$0xff]
        %v5328 = vld [vmem:[%s5272 + $0x1b8] sm:$0xff]
        %v5329 = vld [vmem:[%s5272 + $0x1c0] sm:$0xff]
        %v5330 = vld [vmem:[%s5272 + $0x1c8] sm:$0xff]
        %v5331 = vld [vmem:[%s5272 + $0x1d0] sm:$0xff]
        %v5332 = vld [vmem:[%s5272 + $0x1d8] sm:$0xff]
        %v5333 = vld [vmem:[%s5272 + $0x1e0] sm:$0xff]
        %v5334 = vld [vmem:[%s5272 + $0x1e8] sm:$0xff]
        %v5335 = vld [vmem:[%s5272 + $0x1f0] sm:$0xff]
        %v5336 = vld [vmem:[%s5272 + $0x1f8] sm:$0xff]
        %v5337 = vld [vmem:[%s5272 + $0x200] sm:$0xff]
        %v5338 = vld [vmem:[%s5272 + $0x208] sm:$0xff]
        %v5339 = vld [vmem:[%s5272 + $0x210] sm:$0xff]
        %v5340 = vld [vmem:[%s5272 + $0x218] sm:$0xff]
        %v5341 = vld [vmem:[%s5272 + $0x220] sm:$0xff]
        %v5342 = vld [vmem:[%s5272 + $0x228] sm:$0xff]
        %v5343 = vld [vmem:[%s5272 + $0x230] sm:$0xff]
        %v5344 = vld [vmem:[%s5272 + $0x238] sm:$0xff]
        %v5345 = vld [vmem:[%s5272 + $0x240] sm:$0xff]
        %v5346 = vld [vmem:[%s5272 + $0x248] sm:$0xff]
        %v5347 = vld [vmem:[%s5272 + $0x250] sm:$0xff]
        %v5348 = vld [vmem:[%s5272 + $0x258] sm:$0xff]
        %v5349 = vld [vmem:[%s5272 + $0x260] sm:$0xff]
        %v5350 = vld [vmem:[%s5272 + $0x268] sm:$0xff]
        %v5351 = vld [vmem:[%s5272 + $0x270] sm:$0xff]
        %v5352 = vld [vmem:[%s5272 + $0x278] sm:$0xff]
        %v5353 = vld [vmem:[%s5272 + $0x280] sm:$0xff]
        %v5354 = vld [vmem:[%s5272 + $0x288] sm:$0xff]
        %v5355 = vld [vmem:[%s5272 + $0x290] sm:$0xff]
        %v5356 = vld [vmem:[%s5272 + $0x298] sm:$0xff]
        %v5357 = vld [vmem:[%s5272 + $0x2a0] sm:$0xff]
        %v5358 = vld [vmem:[%s5272 + $0x2a8] sm:$0xff]
        %v5359 = vld [vmem:[%s5272 + $0x2b0] sm:$0xff]
        %v5360 = vld [vmem:[%s5272 + $0x2b8] sm:$0xff]
        %v5361 = vld [vmem:[%s5272 + $0x2c0] sm:$0xff]
        %v5362 = vld [vmem:[%s5272 + $0x2c8] sm:$0xff]
        %v5363 = vld [vmem:[%s5272 + $0x2d0] sm:$0xff]
        %v5364 = vld [vmem:[%s5272 + $0x2d8] sm:$0xff]
        %v5365 = vld [vmem:[%s5272 + $0x2e0] sm:$0xff]
        %v5366 = vld [vmem:[%s5272 + $0x2e8] sm:$0xff]
        %v5367 = vld [vmem:[%s5272 + $0x2f0] sm:$0xff]
        %v5368 = vld [vmem:[%s5272 + $0x2f8] sm:$0xff]
        %v5369 = vld [vmem:[%s5272 + $0x300] sm:$0xff]
        %v5370 = vld [vmem:[%s5272 + $0x308] sm:$0xff]
        %v5371 = vld [vmem:[%s5272 + $0x310] sm:$0xff]
        %v5372 = vld [vmem:[%s5272 + $0x318] sm:$0xff]
        %v5373 = vld [vmem:[%s5272 + $0x320] sm:$0xff]
        %v5374 = vld [vmem:[%s5272 + $0x328] sm:$0xff]
        %v5375 = vld [vmem:[%s5272 + $0x330] sm:$0xff]
        %v5376 = vld [vmem:[%s5272 + $0x338] sm:$0xff]
        %v5377 = vld [vmem:[%s5272 + $0x340] sm:$0xff]
        %v5378 = vld [vmem:[%s5272 + $0x348] sm:$0xff]
        %v5379 = vld [vmem:[%s5272 + $0x350] sm:$0xff]
        %v5380 = vld [vmem:[%s5272 + $0x358] sm:$0xff]
        %v5381 = vld [vmem:[%s5272 + $0x360] sm:$0xff]
        %v5382 = vld [vmem:[%s5272 + $0x368] sm:$0xff]
        %v5383 = vld [vmem:[%s5272 + $0x370] sm:$0xff]
        %v5384 = vld [vmem:[%s5272 + $0x378] sm:$0xff]
        %v5385 = vld [vmem:[%s5272 + $0x380] sm:$0xff]
        %v5386 = vld [vmem:[%s5272 + $0x388] sm:$0xff]
        %v5387 = vld [vmem:[%s5272 + $0x390] sm:$0xff]
        %v5388 = vld [vmem:[%s5272 + $0x398] sm:$0xff]
        %v5389 = vld [vmem:[%s5272 + $0x3a0] sm:$0xff]
        %v5390 = vld [vmem:[%s5272 + $0x3a8] sm:$0xff]
        %v5391 = vld [vmem:[%s5272 + $0x3b0] sm:$0xff]
        %v5392 = vld [vmem:[%s5272 + $0x3b8] sm:$0xff]
        %v5393 = vld [vmem:[%s5272 + $0x3c0] sm:$0xff]
        %v5394 = vld [vmem:[%s5272 + $0x3c8] sm:$0xff]
        %v5395 = vld [vmem:[%s5272 + $0x3d0] sm:$0xff]
        %v5396 = vld [vmem:[%s5272 + $0x3d8] sm:$0xff]
        %v5397 = vld [vmem:[%s5272 + $0x3e0] sm:$0xff]
        %v5398 = vld [vmem:[%s5272 + $0x3e8] sm:$0xff]
        %v5399 = vld [vmem:[%s5272 + $0x3f0] sm:$0xff]
        %v5400 = vld [vmem:[%s5272 + $0x3f8] sm:$0xff]
        %v5529 = vunpack.c.l.b16 %v5273
        %v5530 = vunpack.c.h.b16 %v5273
        %v5531 = vunpack.c.l.b16 %v5274
        %v5532 = vunpack.c.h.b16 %v5274
        %v5533 = vunpack.c.l.b16 %v5275
        %v5534 = vunpack.c.h.b16 %v5275
        %v5535 = vunpack.c.l.b16 %v5276
        %v5536 = vunpack.c.h.b16 %v5276
        %v5537 = vunpack.c.l.b16 %v5277
        %v5538 = vunpack.c.h.b16 %v5277
        %v5539 = vunpack.c.l.b16 %v5278
        %v5540 = vunpack.c.h.b16 %v5278
        %v5541 = vunpack.c.l.b16 %v5279
        %v5542 = vunpack.c.h.b16 %v5279
        %v5543 = vunpack.c.l.b16 %v5280
        %v5544 = vunpack.c.h.b16 %v5280
        %v5545 = vunpack.c.l.b16 %v5281
        %v5546 = vunpack.c.h.b16 %v5281
        %v5547 = vunpack.c.l.b16 %v5282
        %v5548 = vunpack.c.h.b16 %v5282
        %v5549 = vunpack.c.l.b16 %v5283
        %v5550 = vunpack.c.h.b16 %v5283
        %v5551 = vunpack.c.l.b16 %v5284
        %v5552 = vunpack.c.h.b16 %v5284
        %v5553 = vunpack.c.l.b16 %v5285
        %v5554 = vunpack.c.h.b16 %v5285
        %v5555 = vunpack.c.l.b16 %v5286
        %v5556 = vunpack.c.h.b16 %v5286
        %v5557 = vunpack.c.l.b16 %v5287
        %v5558 = vunpack.c.h.b16 %v5287
        %v5559 = vunpack.c.l.b16 %v5288
        %v5560 = vunpack.c.h.b16 %v5288
        %v5561 = vunpack.c.l.b16 %v5289
        %v5562 = vunpack.c.h.b16 %v5289
        %v5563 = vunpack.c.l.b16 %v5290
        %v5564 = vunpack.c.h.b16 %v5290
        %v5565 = vunpack.c.l.b16 %v5291
        %v5566 = vunpack.c.h.b16 %v5291
        %v5567 = vunpack.c.l.b16 %v5292
        %v5568 = vunpack.c.h.b16 %v5292
        %v5569 = vunpack.c.l.b16 %v5293
        %v5570 = vunpack.c.h.b16 %v5293
        %v5571 = vunpack.c.l.b16 %v5294
        %v5572 = vunpack.c.h.b16 %v5294
        %v5573 = vunpack.c.l.b16 %v5295
        %v5574 = vunpack.c.h.b16 %v5295
        %v5575 = vunpack.c.l.b16 %v5296
        %v5576 = vunpack.c.h.b16 %v5296
        %v5577 = vunpack.c.l.b16 %v5297
        %v5578 = vunpack.c.h.b16 %v5297
        %v5579 = vunpack.c.l.b16 %v5298
        %v5580 = vunpack.c.h.b16 %v5298
        %v5581 = vunpack.c.l.b16 %v5299
        %v5582 = vunpack.c.h.b16 %v5299
        %v5583 = vunpack.c.l.b16 %v5300
        %v5584 = vunpack.c.h.b16 %v5300
        %v5585 = vunpack.c.l.b16 %v5301
        %v5586 = vunpack.c.h.b16 %v5301
        %v5587 = vunpack.c.l.b16 %v5302
        %v5588 = vunpack.c.h.b16 %v5302
        %v5589 = vunpack.c.l.b16 %v5303
        %v5590 = vunpack.c.h.b16 %v5303
        %v5591 = vunpack.c.l.b16 %v5304
        %v5592 = vunpack.c.h.b16 %v5304
        %v5593 = vunpack.c.l.b16 %v5305
        %v5594 = vunpack.c.h.b16 %v5305
        %v5595 = vunpack.c.l.b16 %v5306
        %v5596 = vunpack.c.h.b16 %v5306
        %v5597 = vunpack.c.l.b16 %v5307
        %v5598 = vunpack.c.h.b16 %v5307
        %v5599 = vunpack.c.l.b16 %v5308
        %v5600 = vunpack.c.h.b16 %v5308
        %v5601 = vunpack.c.l.b16 %v5309
        %v5602 = vunpack.c.h.b16 %v5309
        %v5603 = vunpack.c.l.b16 %v5310
        %v5604 = vunpack.c.h.b16 %v5310
        %v5605 = vunpack.c.l.b16 %v5311
        %v5606 = vunpack.c.h.b16 %v5311
        %v5607 = vunpack.c.l.b16 %v5312
        %v5608 = vunpack.c.h.b16 %v5312
        %v5609 = vunpack.c.l.b16 %v5313
        %v5610 = vunpack.c.h.b16 %v5313
        %v5611 = vunpack.c.l.b16 %v5314
        %v5612 = vunpack.c.h.b16 %v5314
        %v5613 = vunpack.c.l.b16 %v5315
        %v5614 = vunpack.c.h.b16 %v5315
        %v5615 = vunpack.c.l.b16 %v5316
        %v5616 = vunpack.c.h.b16 %v5316
        %v5617 = vunpack.c.l.b16 %v5317
        %v5618 = vunpack.c.h.b16 %v5317
        %v5619 = vunpack.c.l.b16 %v5318
        %v5620 = vunpack.c.h.b16 %v5318
        %v5621 = vunpack.c.l.b16 %v5319
        %v5622 = vunpack.c.h.b16 %v5319
        %v5623 = vunpack.c.l.b16 %v5320
        %v5624 = vunpack.c.h.b16 %v5320
        %v5625 = vunpack.c.l.b16 %v5321
        %v5626 = vunpack.c.h.b16 %v5321
        %v5627 = vunpack.c.l.b16 %v5322
        %v5628 = vunpack.c.h.b16 %v5322
        %v5629 = vunpack.c.l.b16 %v5323
        %v5630 = vunpack.c.h.b16 %v5323
        %v5631 = vunpack.c.l.b16 %v5324
        %v5632 = vunpack.c.h.b16 %v5324
        %v5633 = vunpack.c.l.b16 %v5325
        %v5634 = vunpack.c.h.b16 %v5325
        %v5635 = vunpack.c.l.b16 %v5326
        %v5636 = vunpack.c.h.b16 %v5326
        %v5637 = vunpack.c.l.b16 %v5327
        %v5638 = vunpack.c.h.b16 %v5327
        %v5639 = vunpack.c.l.b16 %v5328
        %v5640 = vunpack.c.h.b16 %v5328
        %v5641 = vunpack.c.l.b16 %v5329
        %v5642 = vunpack.c.h.b16 %v5329
        %v5643 = vunpack.c.l.b16 %v5330
        %v5644 = vunpack.c.h.b16 %v5330
        %v5645 = vunpack.c.l.b16 %v5331
        %v5646 = vunpack.c.h.b16 %v5331
        %v5647 = vunpack.c.l.b16 %v5332
        %v5648 = vunpack.c.h.b16 %v5332
        %v5649 = vunpack.c.l.b16 %v5333
        %v5650 = vunpack.c.h.b16 %v5333
        %v5651 = vunpack.c.l.b16 %v5334
        %v5652 = vunpack.c.h.b16 %v5334
        %v5653 = vunpack.c.l.b16 %v5335
        %v5654 = vunpack.c.h.b16 %v5335
        %v5655 = vunpack.c.l.b16 %v5336
        %v5656 = vunpack.c.h.b16 %v5336
        %v5657 = vunpack.c.l.b16 %v5337
        %v5658 = vunpack.c.h.b16 %v5337
        %v5659 = vunpack.c.l.b16 %v5338
        %v5660 = vunpack.c.h.b16 %v5338
        %v5661 = vunpack.c.l.b16 %v5339
        %v5662 = vunpack.c.h.b16 %v5339
        %v5663 = vunpack.c.l.b16 %v5340
        %v5664 = vunpack.c.h.b16 %v5340
        %v5665 = vunpack.c.l.b16 %v5341
        %v5666 = vunpack.c.h.b16 %v5341
        %v5667 = vunpack.c.l.b16 %v5342
        %v5668 = vunpack.c.h.b16 %v5342
        %v5669 = vunpack.c.l.b16 %v5343
        %v5670 = vunpack.c.h.b16 %v5343
        %v5671 = vunpack.c.l.b16 %v5344
        %v5672 = vunpack.c.h.b16 %v5344
        %v5673 = vunpack.c.l.b16 %v5345
        %v5674 = vunpack.c.h.b16 %v5345
        %v5675 = vunpack.c.l.b16 %v5346
        %v5676 = vunpack.c.h.b16 %v5346
        %v5677 = vunpack.c.l.b16 %v5347
        %v5678 = vunpack.c.h.b16 %v5347
        %v5679 = vunpack.c.l.b16 %v5348
        %v5680 = vunpack.c.h.b16 %v5348
        %v5681 = vunpack.c.l.b16 %v5349
        %v5682 = vunpack.c.h.b16 %v5349
        %v5683 = vunpack.c.l.b16 %v5350
        %v5684 = vunpack.c.h.b16 %v5350
        %v5685 = vunpack.c.l.b16 %v5351
        %v5686 = vunpack.c.h.b16 %v5351
        %v5687 = vunpack.c.l.b16 %v5352
        %v5688 = vunpack.c.h.b16 %v5352
        %v5689 = vunpack.c.l.b16 %v5353
        %v5690 = vunpack.c.h.b16 %v5353
        %v5691 = vunpack.c.l.b16 %v5354
        %v5692 = vunpack.c.h.b16 %v5354
        %v5693 = vunpack.c.l.b16 %v5355
        %v5694 = vunpack.c.h.b16 %v5355
        %v5695 = vunpack.c.l.b16 %v5356
        %v5696 = vunpack.c.h.b16 %v5356
        %v5697 = vunpack.c.l.b16 %v5357
        %v5698 = vunpack.c.h.b16 %v5357
        %v5699 = vunpack.c.l.b16 %v5358
        %v5700 = vunpack.c.h.b16 %v5358
        %v5701 = vunpack.c.l.b16 %v5359
        %v5702 = vunpack.c.h.b16 %v5359
        %v5703 = vunpack.c.l.b16 %v5360
        %v5704 = vunpack.c.h.b16 %v5360
        %v5705 = vunpack.c.l.b16 %v5361
        %v5706 = vunpack.c.h.b16 %v5361
        %v5707 = vunpack.c.l.b16 %v5362
        %v5708 = vunpack.c.h.b16 %v5362
        %v5709 = vunpack.c.l.b16 %v5363
        %v5710 = vunpack.c.h.b16 %v5363
        %v5711 = vunpack.c.l.b16 %v5364
        %v5712 = vunpack.c.h.b16 %v5364
        %v5713 = vunpack.c.l.b16 %v5365
        %v5714 = vunpack.c.h.b16 %v5365
        %v5715 = vunpack.c.l.b16 %v5366
        %v5716 = vunpack.c.h.b16 %v5366
        %v5717 = vunpack.c.l.b16 %v5367
        %v5718 = vunpack.c.h.b16 %v5367
        %v5719 = vunpack.c.l.b16 %v5368
        %v5720 = vunpack.c.h.b16 %v5368
        %v5721 = vunpack.c.l.b16 %v5369
        %v5722 = vunpack.c.h.b16 %v5369
        %v5723 = vunpack.c.l.b16 %v5370
        %v5724 = vunpack.c.h.b16 %v5370
        %v5725 = vunpack.c.l.b16 %v5371
        %v5726 = vunpack.c.h.b16 %v5371
        %v5727 = vunpack.c.l.b16 %v5372
        %v5728 = vunpack.c.h.b16 %v5372
        %v5729 = vunpack.c.l.b16 %v5373
        %v5730 = vunpack.c.h.b16 %v5373
        %v5731 = vunpack.c.l.b16 %v5374
        %v5732 = vunpack.c.h.b16 %v5374
        %v5733 = vunpack.c.l.b16 %v5375
        %v5734 = vunpack.c.h.b16 %v5375
        %v5735 = vunpack.c.l.b16 %v5376
        %v5736 = vunpack.c.h.b16 %v5376
        %v5737 = vunpack.c.l.b16 %v5377
        %v5738 = vunpack.c.h.b16 %v5377
        %v5739 = vunpack.c.l.b16 %v5378
        %v5740 = vunpack.c.h.b16 %v5378
        %v5741 = vunpack.c.l.b16 %v5379
        %v5742 = vunpack.c.h.b16 %v5379
        %v5743 = vunpack.c.l.b16 %v5380
        %v5744 = vunpack.c.h.b16 %v5380
        %v5745 = vunpack.c.l.b16 %v5381
        %v5746 = vunpack.c.h.b16 %v5381
        %v5747 = vunpack.c.l.b16 %v5382
        %v5748 = vunpack.c.h.b16 %v5382
        %v5749 = vunpack.c.l.b16 %v5383
        %v5750 = vunpack.c.h.b16 %v5383
        %v5751 = vunpack.c.l.b16 %v5384
        %v5752 = vunpack.c.h.b16 %v5384
        %v5753 = vunpack.c.l.b16 %v5385
        %v5754 = vunpack.c.h.b16 %v5385
        %v5755 = vunpack.c.l.b16 %v5386
        %v5756 = vunpack.c.h.b16 %v5386
        %v5757 = vunpack.c.l.b16 %v5387
        %v5758 = vunpack.c.h.b16 %v5387
        %v5759 = vunpack.c.l.b16 %v5388
        %v5760 = vunpack.c.h.b16 %v5388
        %v5761 = vunpack.c.l.b16 %v5389
        %v5762 = vunpack.c.h.b16 %v5389
        %v5763 = vunpack.c.l.b16 %v5390
        %v5764 = vunpack.c.h.b16 %v5390
        %v5765 = vunpack.c.l.b16 %v5391
        %v5766 = vunpack.c.h.b16 %v5391
        %v5767 = vunpack.c.l.b16 %v5392
        %v5768 = vunpack.c.h.b16 %v5392
        %v5769 = vunpack.c.l.b16 %v5393
        %v5770 = vunpack.c.h.b16 %v5393
        %v5771 = vunpack.c.l.b16 %v5394
        %v5772 = vunpack.c.h.b16 %v5394
        %v5773 = vunpack.c.l.b16 %v5395
        %v5774 = vunpack.c.h.b16 %v5395
        %v5775 = vunpack.c.l.b16 %v5396
        %v5776 = vunpack.c.h.b16 %v5396
        %v5777 = vunpack.c.l.b16 %v5397
        %v5778 = vunpack.c.h.b16 %v5397
        %v5779 = vunpack.c.l.b16 %v5398
        %v5780 = vunpack.c.h.b16 %v5398
        %v5781 = vunpack.c.l.b16 %v5399
        %v5782 = vunpack.c.h.b16 %v5399
        %v5783 = vunpack.c.l.b16 %v5400
        %v5784 = vunpack.c.h.b16 %v5400
        %v5785 = vpack.c.b16 %v5533, %v5529
        %v5786 = vpack.c.b16 %v5534, %v5530
        %v5787 = vpack.c.b16 %v5535, %v5531
        %v5788 = vpack.c.b16 %v5536, %v5532
        %v5789 = vpack.c.b16 %v5541, %v5537
        %v5790 = vpack.c.b16 %v5542, %v5538
        %v5791 = vpack.c.b16 %v5543, %v5539
        %v5792 = vpack.c.b16 %v5544, %v5540
        %v5793 = vpack.c.b16 %v5549, %v5545
        %v5794 = vpack.c.b16 %v5550, %v5546
        %v5795 = vpack.c.b16 %v5551, %v5547
        %v5796 = vpack.c.b16 %v5552, %v5548
        %v5797 = vpack.c.b16 %v5557, %v5553
        %v5798 = vpack.c.b16 %v5558, %v5554
        %v5799 = vpack.c.b16 %v5559, %v5555
        %v5800 = vpack.c.b16 %v5560, %v5556
        %v5801 = vpack.c.b16 %v5565, %v5561
        %v5802 = vpack.c.b16 %v5566, %v5562
        %v5803 = vpack.c.b16 %v5567, %v5563
        %v5804 = vpack.c.b16 %v5568, %v5564
        %v5805 = vpack.c.b16 %v5573, %v5569
        %v5806 = vpack.c.b16 %v5574, %v5570
        %v5807 = vpack.c.b16 %v5575, %v5571
        %v5808 = vpack.c.b16 %v5576, %v5572
        %v5809 = vpack.c.b16 %v5581, %v5577
        %v5810 = vpack.c.b16 %v5582, %v5578
        %v5811 = vpack.c.b16 %v5583, %v5579
        %v5812 = vpack.c.b16 %v5584, %v5580
        %v5813 = vpack.c.b16 %v5589, %v5585
        %v5814 = vpack.c.b16 %v5590, %v5586
        %v5815 = vpack.c.b16 %v5591, %v5587
        %v5816 = vpack.c.b16 %v5592, %v5588
        %v5817 = vpack.c.b16 %v5597, %v5593
        %v5818 = vpack.c.b16 %v5598, %v5594
        %v5819 = vpack.c.b16 %v5599, %v5595
        %v5820 = vpack.c.b16 %v5600, %v5596
        %v5821 = vpack.c.b16 %v5605, %v5601
        %v5822 = vpack.c.b16 %v5606, %v5602
        %v5823 = vpack.c.b16 %v5607, %v5603
        %v5824 = vpack.c.b16 %v5608, %v5604
        %v5825 = vpack.c.b16 %v5613, %v5609
        %v5826 = vpack.c.b16 %v5614, %v5610
        %v5827 = vpack.c.b16 %v5615, %v5611
        %v5828 = vpack.c.b16 %v5616, %v5612
        %v5829 = vpack.c.b16 %v5621, %v5617
        %v5830 = vpack.c.b16 %v5622, %v5618
        %v5831 = vpack.c.b16 %v5623, %v5619
        %v5832 = vpack.c.b16 %v5624, %v5620
        %v5833 = vpack.c.b16 %v5629, %v5625
        %v5834 = vpack.c.b16 %v5630, %v5626
        %v5835 = vpack.c.b16 %v5631, %v5627
        %v5836 = vpack.c.b16 %v5632, %v5628
        %v5837 = vpack.c.b16 %v5637, %v5633
        %v5838 = vpack.c.b16 %v5638, %v5634
        %v5839 = vpack.c.b16 %v5639, %v5635
        %v5840 = vpack.c.b16 %v5640, %v5636
        %v5841 = vpack.c.b16 %v5645, %v5641
        %v5842 = vpack.c.b16 %v5646, %v5642
        %v5843 = vpack.c.b16 %v5647, %v5643
        %v5844 = vpack.c.b16 %v5648, %v5644
        %v5845 = vpack.c.b16 %v5653, %v5649
        %v5846 = vpack.c.b16 %v5654, %v5650
        %v5847 = vpack.c.b16 %v5655, %v5651
        %v5848 = vpack.c.b16 %v5656, %v5652
        %v5849 = vpack.c.b16 %v5661, %v5657
        %v5850 = vpack.c.b16 %v5662, %v5658
        %v5851 = vpack.c.b16 %v5663, %v5659
        %v5852 = vpack.c.b16 %v5664, %v5660
        %v5853 = vpack.c.b16 %v5669, %v5665
        %v5854 = vpack.c.b16 %v5670, %v5666
        %v5855 = vpack.c.b16 %v5671, %v5667
        %v5856 = vpack.c.b16 %v5672, %v5668
        %v5857 = vpack.c.b16 %v5677, %v5673
        %v5858 = vpack.c.b16 %v5678, %v5674
        %v5859 = vpack.c.b16 %v5679, %v5675
        %v5860 = vpack.c.b16 %v5680, %v5676
        %v5861 = vpack.c.b16 %v5685, %v5681
        %v5862 = vpack.c.b16 %v5686, %v5682
        %v5863 = vpack.c.b16 %v5687, %v5683
        %v5864 = vpack.c.b16 %v5688, %v5684
        %v5865 = vpack.c.b16 %v5693, %v5689
        %v5866 = vpack.c.b16 %v5694, %v5690
        %v5867 = vpack.c.b16 %v5695, %v5691
        %v5868 = vpack.c.b16 %v5696, %v5692
        %v5869 = vpack.c.b16 %v5701, %v5697
        %v5870 = vpack.c.b16 %v5702, %v5698
        %v5871 = vpack.c.b16 %v5703, %v5699
        %v5872 = vpack.c.b16 %v5704, %v5700
        %v5873 = vpack.c.b16 %v5709, %v5705
        %v5874 = vpack.c.b16 %v5710, %v5706
        %v5875 = vpack.c.b16 %v5711, %v5707
        %v5876 = vpack.c.b16 %v5712, %v5708
        %v5877 = vpack.c.b16 %v5717, %v5713
        %v5878 = vpack.c.b16 %v5718, %v5714
        %v5879 = vpack.c.b16 %v5719, %v5715
        %v5880 = vpack.c.b16 %v5720, %v5716
        %v5881 = vpack.c.b16 %v5725, %v5721
        %v5882 = vpack.c.b16 %v5726, %v5722
        %v5883 = vpack.c.b16 %v5727, %v5723
        %v5884 = vpack.c.b16 %v5728, %v5724
        %v5885 = vpack.c.b16 %v5733, %v5729
        %v5886 = vpack.c.b16 %v5734, %v5730
        %v5887 = vpack.c.b16 %v5735, %v5731
        %v5888 = vpack.c.b16 %v5736, %v5732
        %v5889 = vpack.c.b16 %v5741, %v5737
        %v5890 = vpack.c.b16 %v5742, %v5738
        %v5891 = vpack.c.b16 %v5743, %v5739
        %v5892 = vpack.c.b16 %v5744, %v5740
        %v5893 = vpack.c.b16 %v5749, %v5745
        %v5894 = vpack.c.b16 %v5750, %v5746
        %v5895 = vpack.c.b16 %v5751, %v5747
        %v5896 = vpack.c.b16 %v5752, %v5748
        %v5897 = vpack.c.b16 %v5757, %v5753
        %v5898 = vpack.c.b16 %v5758, %v5754
        %v5899 = vpack.c.b16 %v5759, %v5755
        %v5900 = vpack.c.b16 %v5760, %v5756
        %v5901 = vpack.c.b16 %v5765, %v5761
        %v5902 = vpack.c.b16 %v5766, %v5762
        %v5903 = vpack.c.b16 %v5767, %v5763
        %v5904 = vpack.c.b16 %v5768, %v5764
        %v5905 = vpack.c.b16 %v5773, %v5769
        %v5906 = vpack.c.b16 %v5774, %v5770
        %v5907 = vpack.c.b16 %v5775, %v5771
        %v5908 = vpack.c.b16 %v5776, %v5772
        %v5909 = vpack.c.b16 %v5781, %v5777
        %v5910 = vpack.c.b16 %v5782, %v5778
        %v5911 = vpack.c.b16 %v5783, %v5779
        %v5912 = vpack.c.b16 %v5784, %v5780
        %6041 = vmatprep.subr.bf16.mxu0 %v5786
        %6042 = vmatpush1.bf16.msra.mxu0 %v5785
        %6043 = vmatprep.subr.bf16.mxu0 %v5790
        %6044 = vmatpush1.bf16.msra.mxu0 %v5789
        %6045 = vmatprep.subr.bf16.mxu0 %v5794
        %6046 = vmatpush1.bf16.msra.mxu0 %v5793
        %6047 = vmatprep.subr.bf16.mxu0 %v5798
        %6048 = vmatpush1.bf16.msra.mxu0 %v5797
        %6049 = vmatprep.subr.bf16.mxu0 %v5802
        %6050 = vmatpush1.bf16.msra.mxu0 %v5801
        %6051 = vmatprep.subr.bf16.mxu0 %v5806
        %6052 = vmatpush1.bf16.msra.mxu0 %v5805
        %6053 = vmatprep.subr.bf16.mxu0 %v5810
        %6054 = vmatpush1.bf16.msra.mxu0 %v5809
        %6055 = vmatprep.subr.bf16.mxu0 %v5814
        %6056 = vmatpush1.bf16.msra.mxu0 %v5813
        %6057 = vmatprep.subr.bf16.mxu0 %v5818
        %6058 = vmatpush1.bf16.msra.mxu0 %v5817
        %6059 = vmatprep.subr.bf16.mxu0 %v5822
        %6060 = vmatpush1.bf16.msra.mxu0 %v5821
        %6061 = vmatprep.subr.bf16.mxu0 %v5826
        %6062 = vmatpush1.bf16.msra.mxu0 %v5825
        %6063 = vmatprep.subr.bf16.mxu0 %v5830
        %6064 = vmatpush1.bf16.msra.mxu0 %v5829
        %6065 = vmatprep.subr.bf16.mxu0 %v5834
        %6066 = vmatpush1.bf16.msra.mxu0 %v5833
        %6067 = vmatprep.subr.bf16.mxu0 %v5838
        %6068 = vmatpush1.bf16.msra.mxu0 %v5837
        %6069 = vmatprep.subr.bf16.mxu0 %v5842
        %6070 = vmatpush1.bf16.msra.mxu0 %v5841
        %6071 = vmatprep.subr.bf16.mxu0 %v5846
        %6072 = vmatpush1.bf16.msra.mxu0 %v5845
        %6073 = vmatprep.mubr.bf16.mxu0 %v5267
        %6074 = vmatmul.mubr.bf16.gmra.mrb[0].mxu0 %v5266
        %v6075 = vpop.f32.mrb[0].mxu0
        %v6076 = vadd.f32 0.0, %v6075
        %v6077 = vpop.f32.mrb[0].mxu0
        %v6078 = vadd.f32 0.0, %v6077
        %v6079 = vpop.f32.mrb[0].mxu0
        %v6080 = vpop.f32.mrb[0].mxu0
        %6081 = vdwg.mxu0
        %6082 = vmatprep.subr.bf16.mxu0 %v5850
        %6083 = vmatpush1.bf16.msra.mxu0 %v5849
        %6084 = vmatprep.subr.bf16.mxu0 %v5854
        %6085 = vmatpush1.bf16.msra.mxu0 %v5853
        %6086 = vmatprep.subr.bf16.mxu0 %v5858
        %6087 = vmatpush1.bf16.msra.mxu0 %v5857
        %6088 = vmatprep.subr.bf16.mxu0 %v5862
        %6089 = vmatpush1.bf16.msra.mxu0 %v5861
        %6090 = vmatprep.subr.bf16.mxu0 %v5866
        %6091 = vmatpush1.bf16.msra.mxu0 %v5865
        %6092 = vmatprep.subr.bf16.mxu0 %v5870
        %6093 = vmatpush1.bf16.msra.mxu0 %v5869
        %6094 = vmatprep.subr.bf16.mxu0 %v5874
        %6095 = vmatpush1.bf16.msra.mxu0 %v5873
        %6096 = vmatprep.subr.bf16.mxu0 %v5878
        %6097 = vmatpush1.bf16.msra.mxu0 %v5877
        %6098 = vmatprep.subr.bf16.mxu0 %v5882
        %6099 = vmatpush1.bf16.msra.mxu0 %v5881
        %6100 = vmatprep.subr.bf16.mxu0 %v5886
        %6101 = vmatpush1.bf16.msra.mxu0 %v5885
        %6102 = vmatprep.subr.bf16.mxu0 %v5890
        %6103 = vmatpush1.bf16.msra.mxu0 %v5889
        %6104 = vmatprep.subr.bf16.mxu0 %v5894
        %6105 = vmatpush1.bf16.msra.mxu0 %v5893
        %6106 = vmatprep.subr.bf16.mxu0 %v5898
        %6107 = vmatpush1.bf16.msra.mxu0 %v5897
        %6108 = vmatprep.subr.bf16.mxu0 %v5902
        %6109 = vmatpush1.bf16.msra.mxu0 %v5901
        %6110 = vmatprep.subr.bf16.mxu0 %v5906
        %6111 = vmatpush1.bf16.msra.mxu0 %v5905
        %6112 = vmatprep.subr.bf16.mxu0 %v5910
        %6113 = vmatpush1.bf16.msra.mxu0 %v5909
        %6114 = vmatprep.mubr.bf16.mxu0 %v5269
        %6115 = vmatmul.mubr.bf16.gmra.mrb[0].mxu0 %v5268
        %v6116 = vpop.f32.mrb[0].mxu0
        %v6117 = vadd.f32 %v6076, %v6116
        %v6118 = vpop.f32.mrb[0].mxu0
        %v6119 = vadd.f32 %v6078, %v6118
        %v6120 = vpop.f32.mrb[0].mxu0
        %v6121 = vpop.f32.mrb[0].mxu0
        %6122 = vdwg.mxu0
        %6123 = vmatprep.subr.bf16.mxu0 %v5788
        %6124 = vmatpush1.bf16.msra.mxu0 %v5787
        %6125 = vmatprep.subr.bf16.mxu0 %v5792
        %6126 = vmatpush1.bf16.msra.mxu0 %v5791
        %6127 = vmatprep.subr.bf16.mxu0 %v5796
        %6128 = vmatpush1.bf16.msra.mxu0 %v5795
        %6129 = vmatprep.subr.bf16.mxu0 %v5800
        %6130 = vmatpush1.bf16.msra.mxu0 %v5799
        %6131 = vmatprep.subr.bf16.mxu0 %v5804
        %6132 = vmatpush1.bf16.msra.mxu0 %v5803
        %6133 = vmatprep.subr.bf16.mxu0 %v5808
        %6134 = vmatpush1.bf16.msra.mxu0 %v5807
        %6135 = vmatprep.subr.bf16.mxu0 %v5812
        %6136 = vmatpush1.bf16.msra.mxu0 %v5811
        %6137 = vmatprep.subr.bf16.mxu0 %v5816
        %6138 = vmatpush1.bf16.msra.mxu0 %v5815
        %6139 = vmatprep.subr.bf16.mxu0 %v5820
        %6140 = vmatpush1.bf16.msra.mxu0 %v5819
        %6141 = vmatprep.subr.bf16.mxu0 %v5824
        %6142 = vmatpush1.bf16.msra.mxu0 %v5823
        %6143 = vmatprep.subr.bf16.mxu0 %v5828
        %6144 = vmatpush1.bf16.msra.mxu0 %v5827
        %6145 = vmatprep.subr.bf16.mxu0 %v5832
        %6146 = vmatpush1.bf16.msra.mxu0 %v5831
        %6147 = vmatprep.subr.bf16.mxu0 %v5836
        %6148 = vmatpush1.bf16.msra.mxu0 %v5835
        %6149 = vmatprep.subr.bf16.mxu0 %v5840
        %6150 = vmatpush1.bf16.msra.mxu0 %v5839
        %6151 = vmatprep.subr.bf16.mxu0 %v5844
        %6152 = vmatpush1.bf16.msra.mxu0 %v5843
        %6153 = vmatprep.subr.bf16.mxu0 %v5848
        %6154 = vmatpush1.bf16.msra.mxu0 %v5847
        %6155 = vmatprep.mubr.bf16.mxu0 %v5267
        %6156 = vmatmul.mubr.bf16.gmra.mrb[0].mxu0 %v5266
        %v6157 = vpop.f32.mrb[0].mxu0
        %v6158 = vadd.f32 0.0, %v6157
        %v6159 = vpop.f32.mrb[0].mxu0
        %v6160 = vadd.f32 0.0, %v6159
        %v6161 = vpop.f32.mrb[0].mxu0
        %v6162 = vpop.f32.mrb[0].mxu0
        %6163 = vdwg.mxu0
        %6164 = vmatprep.subr.bf16.mxu0 %v5852
        %6165 = vmatpush1.bf16.msra.mxu0 %v5851
        %6166 = vmatprep.subr.bf16.mxu0 %v5856
        %6167 = vmatpush1.bf16.msra.mxu0 %v5855
        %6168 = vmatprep.subr.bf16.mxu0 %v5860
        %6169 = vmatpush1.bf16.msra.mxu0 %v5859
        %6170 = vmatprep.subr.bf16.mxu0 %v5864
        %6171 = vmatpush1.bf16.msra.mxu0 %v5863
        %6172 = vmatprep.subr.bf16.mxu0 %v5868
        %6173 = vmatpush1.bf16.msra.mxu0 %v5867
        %6174 = vmatprep.subr.bf16.mxu0 %v5872
        %6175 = vmatpush1.bf16.msra.mxu0 %v5871
        %6176 = vmatprep.subr.bf16.mxu0 %v5876
        %6177 = vmatpush1.bf16.msra.mxu0 %v5875
        %6178 = vmatprep.subr.bf16.mxu0 %v5880
        %6179 = vmatpush1.bf16.msra.mxu0 %v5879
        %6180 = vmatprep.subr.bf16.mxu0 %v5884
        %6181 = vmatpush1.bf16.msra.mxu0 %v5883
        %6182 = vmatprep.subr.bf16.mxu0 %v5888
        %6183 = vmatpush1.bf16.msra.mxu0 %v5887
        %6184 = vmatprep.subr.bf16.mxu0 %v5892
        %6185 = vmatpush1.bf16.msra.mxu0 %v5891
        %6186 = vmatprep.subr.bf16.mxu0 %v5896
        %6187 = vmatpush1.bf16.msra.mxu0 %v5895
        %6188 = vmatprep.subr.bf16.mxu0 %v5900
        %6189 = vmatpush1.bf16.msra.mxu0 %v5899
        %6190 = vmatprep.subr.bf16.mxu0 %v5904
        %6191 = vmatpush1.bf16.msra.mxu0 %v5903
        %6192 = vmatprep.subr.bf16.mxu0 %v5908
        %6193 = vmatpush1.bf16.msra.mxu0 %v5907
        %6194 = vmatprep.subr.bf16.mxu0 %v5912
        %6195 = vmatpush1.bf16.msra.mxu0 %v5911
        %6196 = vmatprep.mubr.bf16.mxu0 %v5269
        %6197 = vmatmul.mubr.bf16.gmra.mrb[0].mxu0 %v5268
        %v6198 = vpop.f32.mrb[0].mxu0
        %v6199 = vadd.f32 %v6158, %v6198
        %v6200 = vpop.f32.mrb[0].mxu0
        %v6201 = vadd.f32 %v6160, %v6200
        %v6202 = vpop.f32.mrb[0].mxu0
        %v6203 = vpop.f32.mrb[0].mxu0
        %6204 = vdwg.mxu0
        %v6205 = vadd.f32 %v5262, %v6117
        %v6206 = vadd.f32 %v5263, %v6119
        %v6207 = vadd.f32 %v5264, %v6199
        %v6208 = vadd.f32 %v5265, %v6201
        %6209 = vst [vmem:[#allocation2] sm:$0xff] %v6205
        %6210 = vst [vmem:[#allocation2 + $0x8] sm:$0xff] %v6206
        %6211 = vst [vmem:[#allocation2 + $0x10] sm:$0xff] %v6207
        %6212 = vst [vmem:[#allocation2 + $0x18] sm:$0xff] %v6208
        %s6213 = scalar_lea.vmem [#allocation6], 48
        %v6214 = vld [vmem:[%s6213] sm:$0xff]
        %v6215 = vld [vmem:[%s6213 + $0x8] sm:$0xff]
        %v6216 = vld [vmem:[%s6213 + $0x40] sm:$0xff]
        %v6217 = vld [vmem:[%s6213 + $0x48] sm:$0xff]
        %v6218 = vld [vmem:[%s6213 + $0x80] sm:$0xff]
        %v6219 = vld [vmem:[%s6213 + $0x88] sm:$0xff]
        %v6220 = vld [vmem:[%s6213 + $0xc0] sm:$0xff]
        %v6221 = vld [vmem:[%s6213 + $0xc8] sm:$0xff]
        %v6222 = vld [vmem:[%s6213 + $0x100] sm:$0xff]
        %v6223 = vld [vmem:[%s6213 + $0x108] sm:$0xff]
        %v6224 = vld [vmem:[%s6213 + $0x140] sm:$0xff]
        %v6225 = vld [vmem:[%s6213 + $0x148] sm:$0xff]
        %v6226 = vld [vmem:[%s6213 + $0x180] sm:$0xff]
        %v6227 = vld [vmem:[%s6213 + $0x188] sm:$0xff]
        %v6228 = vld [vmem:[%s6213 + $0x1c0] sm:$0xff]
        %v6229 = vld [vmem:[%s6213 + $0x1c8] sm:$0xff]
        %v6230 = vld [vmem:[%s6213 + $0x200] sm:$0xff]
        %v6231 = vld [vmem:[%s6213 + $0x208] sm:$0xff]
        %v6232 = vld [vmem:[%s6213 + $0x240] sm:$0xff]
        %v6233 = vld [vmem:[%s6213 + $0x248] sm:$0xff]
        %v6234 = vld [vmem:[%s6213 + $0x280] sm:$0xff]
        %v6235 = vld [vmem:[%s6213 + $0x288] sm:$0xff]
        %v6236 = vld [vmem:[%s6213 + $0x2c0] sm:$0xff]
        %v6237 = vld [vmem:[%s6213 + $0x2c8] sm:$0xff]
        %v6238 = vld [vmem:[%s6213 + $0x300] sm:$0xff]
        %v6239 = vld [vmem:[%s6213 + $0x308] sm:$0xff]
        %v6240 = vld [vmem:[%s6213 + $0x340] sm:$0xff]
        %v6241 = vld [vmem:[%s6213 + $0x348] sm:$0xff]
        %v6242 = vld [vmem:[%s6213 + $0x380] sm:$0xff]
        %v6243 = vld [vmem:[%s6213 + $0x388] sm:$0xff]
        %v6244 = vld [vmem:[%s6213 + $0x3c0] sm:$0xff]
        %v6245 = vld [vmem:[%s6213 + $0x3c8] sm:$0xff]
        %v6246 = vld [vmem:[%s6213 + $0x400] sm:$0xff]
        %v6247 = vld [vmem:[%s6213 + $0x408] sm:$0xff]
        %v6248 = vld [vmem:[%s6213 + $0x440] sm:$0xff]
        %v6249 = vld [vmem:[%s6213 + $0x448] sm:$0xff]
        %v6250 = vld [vmem:[%s6213 + $0x480] sm:$0xff]
        %v6251 = vld [vmem:[%s6213 + $0x488] sm:$0xff]
        %v6252 = vld [vmem:[%s6213 + $0x4c0] sm:$0xff]
        %v6253 = vld [vmem:[%s6213 + $0x4c8] sm:$0xff]
        %v6254 = vld [vmem:[%s6213 + $0x500] sm:$0xff]
        %v6255 = vld [vmem:[%s6213 + $0x508] sm:$0xff]
        %v6256 = vld [vmem:[%s6213 + $0x540] sm:$0xff]
        %v6257 = vld [vmem:[%s6213 + $0x548] sm:$0xff]
        %v6258 = vld [vmem:[%s6213 + $0x580] sm:$0xff]
        %v6259 = vld [vmem:[%s6213 + $0x588] sm:$0xff]
        %v6260 = vld [vmem:[%s6213 + $0x5c0] sm:$0xff]
        %v6261 = vld [vmem:[%s6213 + $0x5c8] sm:$0xff]
        %v6262 = vld [vmem:[%s6213 + $0x600] sm:$0xff]
        %v6263 = vld [vmem:[%s6213 + $0x608] sm:$0xff]
        %v6264 = vld [vmem:[%s6213 + $0x640] sm:$0xff]
        %v6265 = vld [vmem:[%s6213 + $0x648] sm:$0xff]
        %v6266 = vld [vmem:[%s6213 + $0x680] sm:$0xff]
        %v6267 = vld [vmem:[%s6213 + $0x688] sm:$0xff]
        %v6268 = vld [vmem:[%s6213 + $0x6c0] sm:$0xff]
        %v6269 = vld [vmem:[%s6213 + $0x6c8] sm:$0xff]
        %v6270 = vld [vmem:[%s6213 + $0x700] sm:$0xff]
        %v6271 = vld [vmem:[%s6213 + $0x708] sm:$0xff]
        %v6272 = vld [vmem:[%s6213 + $0x740] sm:$0xff]
        %v6273 = vld [vmem:[%s6213 + $0x748] sm:$0xff]
        %v6274 = vld [vmem:[%s6213 + $0x780] sm:$0xff]
        %v6275 = vld [vmem:[%s6213 + $0x788] sm:$0xff]
        %v6276 = vld [vmem:[%s6213 + $0x7c0] sm:$0xff]
        %v6277 = vld [vmem:[%s6213 + $0x7c8] sm:$0xff]
        %v6278 = vld [vmem:[%s6213 + $0x800] sm:$0xff]
        %v6279 = vld [vmem:[%s6213 + $0x808] sm:$0xff]
        %v6280 = vld [vmem:[%s6213 + $0x840] sm:$0xff]
        %v6281 = vld [vmem:[%s6213 + $0x848] sm:$0xff]
        %v6282 = vld [vmem:[%s6213 + $0x880] sm:$0xff]
        %v6283 = vld [vmem:[%s6213 + $0x888] sm:$0xff]
        %v6284 = vld [vmem:[%s6213 + $0x8c0] sm:$0xff]
        %v6285 = vld [vmem:[%s6213 + $0x8c8] sm:$0xff]
        %v6286 = vld [vmem:[%s6213 + $0x900] sm:$0xff]
        %v6287 = vld [vmem:[%s6213 + $0x908] sm:$0xff]
        %v6288 = vld [vmem:[%s6213 + $0x940] sm:$0xff]
        %v6289 = vld [vmem:[%s6213 + $0x948] sm:$0xff]
        %v6290 = vld [vmem:[%s6213 + $0x980] sm:$0xff]
        %v6291 = vld [vmem:[%s6213 + $0x988] sm:$0xff]
        %v6292 = vld [vmem:[%s6213 + $0x9c0] sm:$0xff]
        %v6293 = vld [vmem:[%s6213 + $0x9c8] sm:$0xff]
        %v6294 = vld [vmem:[%s6213 + $0xa00] sm:$0xff]
        %v6295 = vld [vmem:[%s6213 + $0xa08] sm:$0xff]
        %v6296 = vld [vmem:[%s6213 + $0xa40] sm:$0xff]
        %v6297 = vld [vmem:[%s6213 + $0xa48] sm:$0xff]
        %v6298 = vld [vmem:[%s6213 + $0xa80] sm:$0xff]
        %v6299 = vld [vmem:[%s6213 + $0xa88] sm:$0xff]
        %v6300 = vld [vmem:[%s6213 + $0xac0] sm:$0xff]
        %v6301 = vld [vmem:[%s6213 + $0xac8] sm:$0xff]
        %v6302 = vld [vmem:[%s6213 + $0xb00] sm:$0xff]
        %v6303 = vld [vmem:[%s6213 + $0xb08] sm:$0xff]
        %v6304 = vld [vmem:[%s6213 + $0xb40] sm:$0xff]
        %v6305 = vld [vmem:[%s6213 + $0xb48] sm:$0xff]
        %v6306 = vld [vmem:[%s6213 + $0xb80] sm:$0xff]
        %v6307 = vld [vmem:[%s6213 + $0xb88] sm:$0xff]
        %v6308 = vld [vmem:[%s6213 + $0xbc0] sm:$0xff]
        %v6309 = vld [vmem:[%s6213 + $0xbc8] sm:$0xff]
        %v6310 = vld [vmem:[%s6213 + $0xc00] sm:$0xff]
        %v6311 = vld [vmem:[%s6213 + $0xc08] sm:$0xff]
        %v6312 = vld [vmem:[%s6213 + $0xc40] sm:$0xff]
        %v6313 = vld [vmem:[%s6213 + $0xc48] sm:$0xff]
        %v6314 = vld [vmem:[%s6213 + $0xc80] sm:$0xff]
        %v6315 = vld [vmem:[%s6213 + $0xc88] sm:$0xff]
        %v6316 = vld [vmem:[%s6213 + $0xcc0] sm:$0xff]
        %v6317 = vld [vmem:[%s6213 + $0xcc8] sm:$0xff]
        %v6318 = vld [vmem:[%s6213 + $0xd00] sm:$0xff]
        %v6319 = vld [vmem:[%s6213 + $0xd08] sm:$0xff]
        %v6320 = vld [vmem:[%s6213 + $0xd40] sm:$0xff]
        %v6321 = vld [vmem:[%s6213 + $0xd48] sm:$0xff]
        %v6322 = vld [vmem:[%s6213 + $0xd80] sm:$0xff]
        %v6323 = vld [vmem:[%s6213 + $0xd88] sm:$0xff]
        %v6324 = vld [vmem:[%s6213 + $0xdc0] sm:$0xff]
        %v6325 = vld [vmem:[%s6213 + $0xdc8] sm:$0xff]
        %v6326 = vld [vmem:[%s6213 + $0xe00] sm:$0xff]
        %v6327 = vld [vmem:[%s6213 + $0xe08] sm:$0xff]
        %v6328 = vld [vmem:[%s6213 + $0xe40] sm:$0xff]
        %v6329 = vld [vmem:[%s6213 + $0xe48] sm:$0xff]
        %v6330 = vld [vmem:[%s6213 + $0xe80] sm:$0xff]
        %v6331 = vld [vmem:[%s6213 + $0xe88] sm:$0xff]
        %v6332 = vld [vmem:[%s6213 + $0xec0] sm:$0xff]
        %v6333 = vld [vmem:[%s6213 + $0xec8] sm:$0xff]
        %v6334 = vld [vmem:[%s6213 + $0xf00] sm:$0xff]
        %v6335 = vld [vmem:[%s6213 + $0xf08] sm:$0xff]
        %v6336 = vld [vmem:[%s6213 + $0xf40] sm:$0xff]
        %v6337 = vld [vmem:[%s6213 + $0xf48] sm:$0xff]
        %v6338 = vld [vmem:[%s6213 + $0xf80] sm:$0xff]
        %v6339 = vld [vmem:[%s6213 + $0xf88] sm:$0xff]
        %v6340 = vld [vmem:[%s6213 + $0xfc0] sm:$0xff]
        %v6341 = vld [vmem:[%s6213 + $0xfc8] sm:$0xff]
        %s6342 = scalar_lea.vmem [#allocation8], 12
        %v6343 = vld [vmem:[%s6342] sm:$0xf]
        %v6345 = vlaneseq
        %v6346 = vshrl.u32 %v6345, 7
        %v6347 = vsub.s32 0, %v6346
        %v6348 = vrot.slane %v6343, %v6347
        %v6349 = vlaneseq
        %v6350 = vshrl.u32 %v6349, 7
        %v6351 = vsub.s32 1, %v6350
        %v6352 = vrot.slane %v6343, %v6351
        %v6353 = vlaneseq
        %v6354 = vshrl.u32 %v6353, 7
        %v6355 = vsub.s32 2, %v6354
        %v6356 = vrot.slane %v6343, %v6355
        %v6357 = vlaneseq
        %v6358 = vshrl.u32 %v6357, 7
        %v6359 = vsub.s32 3, %v6358
        %v6360 = vrot.slane %v6343, %v6359
        %v6493 = vunpack.c.l.b16 %v6214
        %v6494 = vunpack.c.h.b16 %v6214
        %v6495 = vunpack.c.l.b16 %v6215
        %v6496 = vunpack.c.h.b16 %v6215
        %v6497 = vunpack.c.l.b16 %v6216
        %v6498 = vunpack.c.h.b16 %v6216
        %v6499 = vunpack.c.l.b16 %v6217
        %v6500 = vunpack.c.h.b16 %v6217
        %v6501 = vunpack.c.l.b16 %v6218
        %v6502 = vunpack.c.h.b16 %v6218
        %v6503 = vunpack.c.l.b16 %v6219
        %v6504 = vunpack.c.h.b16 %v6219
        %v6505 = vunpack.c.l.b16 %v6220
        %v6506 = vunpack.c.h.b16 %v6220
        %v6507 = vunpack.c.l.b16 %v6221
        %v6508 = vunpack.c.h.b16 %v6221
        %v6509 = vunpack.c.l.b16 %v6222
        %v6510 = vunpack.c.h.b16 %v6222
        %v6511 = vunpack.c.l.b16 %v6223
        %v6512 = vunpack.c.h.b16 %v6223
        %v6513 = vunpack.c.l.b16 %v6224
        %v6514 = vunpack.c.h.b16 %v6224
        %v6515 = vunpack.c.l.b16 %v6225
        %v6516 = vunpack.c.h.b16 %v6225
        %v6517 = vunpack.c.l.b16 %v6226
        %v6518 = vunpack.c.h.b16 %v6226
        %v6519 = vunpack.c.l.b16 %v6227
        %v6520 = vunpack.c.h.b16 %v6227
        %v6521 = vunpack.c.l.b16 %v6228
        %v6522 = vunpack.c.h.b16 %v6228
        %v6523 = vunpack.c.l.b16 %v6229
        %v6524 = vunpack.c.h.b16 %v6229
        %v6525 = vunpack.c.l.b16 %v6230
        %v6526 = vunpack.c.h.b16 %v6230
        %v6527 = vunpack.c.l.b16 %v6231
        %v6528 = vunpack.c.h.b16 %v6231
        %v6529 = vunpack.c.l.b16 %v6232
        %v6530 = vunpack.c.h.b16 %v6232
        %v6531 = vunpack.c.l.b16 %v6233
        %v6532 = vunpack.c.h.b16 %v6233
        %v6533 = vunpack.c.l.b16 %v6234
        %v6534 = vunpack.c.h.b16 %v6234
        %v6535 = vunpack.c.l.b16 %v6235
        %v6536 = vunpack.c.h.b16 %v6235
        %v6537 = vunpack.c.l.b16 %v6236
        %v6538 = vunpack.c.h.b16 %v6236
        %v6539 = vunpack.c.l.b16 %v6237
        %v6540 = vunpack.c.h.b16 %v6237
        %v6541 = vunpack.c.l.b16 %v6238
        %v6542 = vunpack.c.h.b16 %v6238
        %v6543 = vunpack.c.l.b16 %v6239
        %v6544 = vunpack.c.h.b16 %v6239
        %v6545 = vunpack.c.l.b16 %v6240
        %v6546 = vunpack.c.h.b16 %v6240
        %v6547 = vunpack.c.l.b16 %v6241
        %v6548 = vunpack.c.h.b16 %v6241
        %v6549 = vunpack.c.l.b16 %v6242
        %v6550 = vunpack.c.h.b16 %v6242
        %v6551 = vunpack.c.l.b16 %v6243
        %v6552 = vunpack.c.h.b16 %v6243
        %v6553 = vunpack.c.l.b16 %v6244
        %v6554 = vunpack.c.h.b16 %v6244
        %v6555 = vunpack.c.l.b16 %v6245
        %v6556 = vunpack.c.h.b16 %v6245
        %v6557 = vunpack.c.l.b16 %v6246
        %v6558 = vunpack.c.h.b16 %v6246
        %v6559 = vunpack.c.l.b16 %v6247
        %v6560 = vunpack.c.h.b16 %v6247
        %v6561 = vunpack.c.l.b16 %v6248
        %v6562 = vunpack.c.h.b16 %v6248
        %v6563 = vunpack.c.l.b16 %v6249
        %v6564 = vunpack.c.h.b16 %v6249
        %v6565 = vunpack.c.l.b16 %v6250
        %v6566 = vunpack.c.h.b16 %v6250
        %v6567 = vunpack.c.l.b16 %v6251
        %v6568 = vunpack.c.h.b16 %v6251
        %v6569 = vunpack.c.l.b16 %v6252
        %v6570 = vunpack.c.h.b16 %v6252
        %v6571 = vunpack.c.l.b16 %v6253
        %v6572 = vunpack.c.h.b16 %v6253
        %v6573 = vunpack.c.l.b16 %v6254
        %v6574 = vunpack.c.h.b16 %v6254
        %v6575 = vunpack.c.l.b16 %v6255
        %v6576 = vunpack.c.h.b16 %v6255
        %v6577 = vunpack.c.l.b16 %v6256
        %v6578 = vunpack.c.h.b16 %v6256
        %v6579 = vunpack.c.l.b16 %v6257
        %v6580 = vunpack.c.h.b16 %v6257
        %v6581 = vunpack.c.l.b16 %v6258
        %v6582 = vunpack.c.h.b16 %v6258
        %v6583 = vunpack.c.l.b16 %v6259
        %v6584 = vunpack.c.h.b16 %v6259
        %v6585 = vunpack.c.l.b16 %v6260
        %v6586 = vunpack.c.h.b16 %v6260
        %v6587 = vunpack.c.l.b16 %v6261
        %v6588 = vunpack.c.h.b16 %v6261
        %v6589 = vunpack.c.l.b16 %v6262
        %v6590 = vunpack.c.h.b16 %v6262
        %v6591 = vunpack.c.l.b16 %v6263
        %v6592 = vunpack.c.h.b16 %v6263
        %v6593 = vunpack.c.l.b16 %v6264
        %v6594 = vunpack.c.h.b16 %v6264
        %v6595 = vunpack.c.l.b16 %v6265
        %v6596 = vunpack.c.h.b16 %v6265
        %v6597 = vunpack.c.l.b16 %v6266
        %v6598 = vunpack.c.h.b16 %v6266
        %v6599 = vunpack.c.l.b16 %v6267
        %v6600 = vunpack.c.h.b16 %v6267
        %v6601 = vunpack.c.l.b16 %v6268
        %v6602 = vunpack.c.h.b16 %v6268
        %v6603 = vunpack.c.l.b16 %v6269
        %v6604 = vunpack.c.h.b16 %v6269
        %v6605 = vunpack.c.l.b16 %v6270
        %v6606 = vunpack.c.h.b16 %v6270
        %v6607 = vunpack.c.l.b16 %v6271
        %v6608 = vunpack.c.h.b16 %v6271
        %v6609 = vunpack.c.l.b16 %v6272
        %v6610 = vunpack.c.h.b16 %v6272
        %v6611 = vunpack.c.l.b16 %v6273
        %v6612 = vunpack.c.h.b16 %v6273
        %v6613 = vunpack.c.l.b16 %v6274
        %v6614 = vunpack.c.h.b16 %v6274
        %v6615 = vunpack.c.l.b16 %v6275
        %v6616 = vunpack.c.h.b16 %v6275
        %v6617 = vunpack.c.l.b16 %v6276
        %v6618 = vunpack.c.h.b16 %v6276
        %v6619 = vunpack.c.l.b16 %v6277
        %v6620 = vunpack.c.h.b16 %v6277
        %v6621 = vunpack.c.l.b16 %v6278
        %v6622 = vunpack.c.h.b16 %v6278
        %v6623 = vunpack.c.l.b16 %v6279
        %v6624 = vunpack.c.h.b16 %v6279
        %v6625 = vunpack.c.l.b16 %v6280
        %v6626 = vunpack.c.h.b16 %v6280
        %v6627 = vunpack.c.l.b16 %v6281
        %v6628 = vunpack.c.h.b16 %v6281
        %v6629 = vunpack.c.l.b16 %v6282
        %v6630 = vunpack.c.h.b16 %v6282
        %v6631 = vunpack.c.l.b16 %v6283
        %v6632 = vunpack.c.h.b16 %v6283
        %v6633 = vunpack.c.l.b16 %v6284
        %v6634 = vunpack.c.h.b16 %v6284
        %v6635 = vunpack.c.l.b16 %v6285
        %v6636 = vunpack.c.h.b16 %v6285
        %v6637 = vunpack.c.l.b16 %v6286
        %v6638 = vunpack.c.h.b16 %v6286
        %v6639 = vunpack.c.l.b16 %v6287
        %v6640 = vunpack.c.h.b16 %v6287
        %v6641 = vunpack.c.l.b16 %v6288
        %v6642 = vunpack.c.h.b16 %v6288
        %v6643 = vunpack.c.l.b16 %v6289
        %v6644 = vunpack.c.h.b16 %v6289
        %v6645 = vunpack.c.l.b16 %v6290
        %v6646 = vunpack.c.h.b16 %v6290
        %v6647 = vunpack.c.l.b16 %v6291
        %v6648 = vunpack.c.h.b16 %v6291
        %v6649 = vunpack.c.l.b16 %v6292
        %v6650 = vunpack.c.h.b16 %v6292
        %v6651 = vunpack.c.l.b16 %v6293
        %v6652 = vunpack.c.h.b16 %v6293
        %v6653 = vunpack.c.l.b16 %v6294
        %v6654 = vunpack.c.h.b16 %v6294
        %v6655 = vunpack.c.l.b16 %v6295
        %v6656 = vunpack.c.h.b16 %v6295
        %v6657 = vunpack.c.l.b16 %v6296
        %v6658 = vunpack.c.h.b16 %v6296
        %v6659 = vunpack.c.l.b16 %v6297
        %v6660 = vunpack.c.h.b16 %v6297
        %v6661 = vunpack.c.l.b16 %v6298
        %v6662 = vunpack.c.h.b16 %v6298
        %v6663 = vunpack.c.l.b16 %v6299
        %v6664 = vunpack.c.h.b16 %v6299
        %v6665 = vunpack.c.l.b16 %v6300
        %v6666 = vunpack.c.h.b16 %v6300
        %v6667 = vunpack.c.l.b16 %v6301
        %v6668 = vunpack.c.h.b16 %v6301
        %v6669 = vunpack.c.l.b16 %v6302
        %v6670 = vunpack.c.h.b16 %v6302
        %v6671 = vunpack.c.l.b16 %v6303
        %v6672 = vunpack.c.h.b16 %v6303
        %v6673 = vunpack.c.l.b16 %v6304
        %v6674 = vunpack.c.h.b16 %v6304
        %v6675 = vunpack.c.l.b16 %v6305
        %v6676 = vunpack.c.h.b16 %v6305
        %v6677 = vunpack.c.l.b16 %v6306
        %v6678 = vunpack.c.h.b16 %v6306
        %v6679 = vunpack.c.l.b16 %v6307
        %v6680 = vunpack.c.h.b16 %v6307
        %v6681 = vunpack.c.l.b16 %v6308
        %v6682 = vunpack.c.h.b16 %v6308
        %v6683 = vunpack.c.l.b16 %v6309
        %v6684 = vunpack.c.h.b16 %v6309
        %v6685 = vunpack.c.l.b16 %v6310
        %v6686 = vunpack.c.h.b16 %v6310
        %v6687 = vunpack.c.l.b16 %v6311
        %v6688 = vunpack.c.h.b16 %v6311
        %v6689 = vunpack.c.l.b16 %v6312
        %v6690 = vunpack.c.h.b16 %v6312
        %v6691 = vunpack.c.l.b16 %v6313
        %v6692 = vunpack.c.h.b16 %v6313
        %v6693 = vunpack.c.l.b16 %v6314
        %v6694 = vunpack.c.h.b16 %v6314
        %v6695 = vunpack.c.l.b16 %v6315
        %v6696 = vunpack.c.h.b16 %v6315
        %v6697 = vunpack.c.l.b16 %v6316
        %v6698 = vunpack.c.h.b16 %v6316
        %v6699 = vunpack.c.l.b16 %v6317
        %v6700 = vunpack.c.h.b16 %v6317
        %v6701 = vunpack.c.l.b16 %v6318
        %v6702 = vunpack.c.h.b16 %v6318
        %v6703 = vunpack.c.l.b16 %v6319
        %v6704 = vunpack.c.h.b16 %v6319
        %v6705 = vunpack.c.l.b16 %v6320
        %v6706 = vunpack.c.h.b16 %v6320
        %v6707 = vunpack.c.l.b16 %v6321
        %v6708 = vunpack.c.h.b16 %v6321
        %v6709 = vunpack.c.l.b16 %v6322
        %v6710 = vunpack.c.h.b16 %v6322
        %v6711 = vunpack.c.l.b16 %v6323
        %v6712 = vunpack.c.h.b16 %v6323
        %v6713 = vunpack.c.l.b16 %v6324
        %v6714 = vunpack.c.h.b16 %v6324
        %v6715 = vunpack.c.l.b16 %v6325
        %v6716 = vunpack.c.h.b16 %v6325
        %v6717 = vunpack.c.l.b16 %v6326
        %v6718 = vunpack.c.h.b16 %v6326
        %v6719 = vunpack.c.l.b16 %v6327
        %v6720 = vunpack.c.h.b16 %v6327
        %v6721 = vunpack.c.l.b16 %v6328
        %v6722 = vunpack.c.h.b16 %v6328
        %v6723 = vunpack.c.l.b16 %v6329
        %v6724 = vunpack.c.h.b16 %v6329
        %v6725 = vunpack.c.l.b16 %v6330
        %v6726 = vunpack.c.h.b16 %v6330
        %v6727 = vunpack.c.l.b16 %v6331
        %v6728 = vunpack.c.h.b16 %v6331
        %v6729 = vunpack.c.l.b16 %v6332
        %v6730 = vunpack.c.h.b16 %v6332
        %v6731 = vunpack.c.l.b16 %v6333
        %v6732 = vunpack.c.h.b16 %v6333
        %v6733 = vunpack.c.l.b16 %v6334
        %v6734 = vunpack.c.h.b16 %v6334
        %v6735 = vunpack.c.l.b16 %v6335
        %v6736 = vunpack.c.h.b16 %v6335
        %v6737 = vunpack.c.l.b16 %v6336
        %v6738 = vunpack.c.h.b16 %v6336
        %v6739 = vunpack.c.l.b16 %v6337
        %v6740 = vunpack.c.h.b16 %v6337
        %v6741 = vunpack.c.l.b16 %v6338
        %v6742 = vunpack.c.h.b16 %v6338
        %v6743 = vunpack.c.l.b16 %v6339
        %v6744 = vunpack.c.h.b16 %v6339
        %v6745 = vunpack.c.l.b16 %v6340
        %v6746 = vunpack.c.h.b16 %v6340
        %v6747 = vunpack.c.l.b16 %v6341
        %v6748 = vunpack.c.h.b16 %v6341
        %v6749 = vpack.c.b16 %v6497, %v6493
        %v6750 = vpack.c.b16 %v6498, %v6494
        %v6751 = vpack.c.b16 %v6499, %v6495
        %v6752 = vpack.c.b16 %v6500, %v6496
        %v6753 = vpack.c.b16 %v6505, %v6501
        %v6754 = vpack.c.b16 %v6506, %v6502
        %v6755 = vpack.c.b16 %v6507, %v6503
        %v6756 = vpack.c.b16 %v6508, %v6504
        %v6757 = vpack.c.b16 %v6513, %v6509
        %v6758 = vpack.c.b16 %v6514, %v6510
        %v6759 = vpack.c.b16 %v6515, %v6511
        %v6760 = vpack.c.b16 %v6516, %v6512
        %v6761 = vpack.c.b16 %v6521, %v6517
        %v6762 = vpack.c.b16 %v6522, %v6518
        %v6763 = vpack.c.b16 %v6523, %v6519
        %v6764 = vpack.c.b16 %v6524, %v6520
        %v6765 = vpack.c.b16 %v6529, %v6525
        %v6766 = vpack.c.b16 %v6530, %v6526
        %v6767 = vpack.c.b16 %v6531, %v6527
        %v6768 = vpack.c.b16 %v6532, %v6528
        %v6769 = vpack.c.b16 %v6537, %v6533
        %v6770 = vpack.c.b16 %v6538, %v6534
        %v6771 = vpack.c.b16 %v6539, %v6535
        %v6772 = vpack.c.b16 %v6540, %v6536
        %v6773 = vpack.c.b16 %v6545, %v6541
        %v6774 = vpack.c.b16 %v6546, %v6542
        %v6775 = vpack.c.b16 %v6547, %v6543
        %v6776 = vpack.c.b16 %v6548, %v6544
        %v6777 = vpack.c.b16 %v6553, %v6549
        %v6778 = vpack.c.b16 %v6554, %v6550
        %v6779 = vpack.c.b16 %v6555, %v6551
        %v6780 = vpack.c.b16 %v6556, %v6552
        %v6781 = vpack.c.b16 %v6561, %v6557
        %v6782 = vpack.c.b16 %v6562, %v6558
        %v6783 = vpack.c.b16 %v6563, %v6559
        %v6784 = vpack.c.b16 %v6564, %v6560
        %v6785 = vpack.c.b16 %v6569, %v6565
        %v6786 = vpack.c.b16 %v6570, %v6566
        %v6787 = vpack.c.b16 %v6571, %v6567
        %v6788 = vpack.c.b16 %v6572, %v6568
        %v6789 = vpack.c.b16 %v6577, %v6573
        %v6790 = vpack.c.b16 %v6578, %v6574
        %v6791 = vpack.c.b16 %v6579, %v6575
        %v6792 = vpack.c.b16 %v6580, %v6576
        %v6793 = vpack.c.b16 %v6585, %v6581
        %v6794 = vpack.c.b16 %v6586, %v6582
        %v6795 = vpack.c.b16 %v6587, %v6583
        %v6796 = vpack.c.b16 %v6588, %v6584
        %v6797 = vpack.c.b16 %v6593, %v6589
        %v6798 = vpack.c.b16 %v6594, %v6590
        %v6799 = vpack.c.b16 %v6595, %v6591
        %v6800 = vpack.c.b16 %v6596, %v6592
        %v6801 = vpack.c.b16 %v6601, %v6597
        %v6802 = vpack.c.b16 %v6602, %v6598
        %v6803 = vpack.c.b16 %v6603, %v6599
        %v6804 = vpack.c.b16 %v6604, %v6600
        %v6805 = vpack.c.b16 %v6609, %v6605
        %v6806 = vpack.c.b16 %v6610, %v6606
        %v6807 = vpack.c.b16 %v6611, %v6607
        %v6808 = vpack.c.b16 %v6612, %v6608
        %v6809 = vpack.c.b16 %v6617, %v6613
        %v6810 = vpack.c.b16 %v6618, %v6614
        %v6811 = vpack.c.b16 %v6619, %v6615
        %v6812 = vpack.c.b16 %v6620, %v6616
        %v6813 = vpack.c.b16 %v6625, %v6621
        %v6814 = vpack.c.b16 %v6626, %v6622
        %v6815 = vpack.c.b16 %v6627, %v6623
        %v6816 = vpack.c.b16 %v6628, %v6624
        %v6817 = vpack.c.b16 %v6633, %v6629
        %v6818 = vpack.c.b16 %v6634, %v6630
        %v6819 = vpack.c.b16 %v6635, %v6631
        %v6820 = vpack.c.b16 %v6636, %v6632
        %v6821 = vpack.c.b16 %v6641, %v6637
        %v6822 = vpack.c.b16 %v6642, %v6638
        %v6823 = vpack.c.b16 %v6643, %v6639
        %v6824 = vpack.c.b16 %v6644, %v6640
        %v6825 = vpack.c.b16 %v6649, %v6645
        %v6826 = vpack.c.b16 %v6650, %v6646
        %v6827 = vpack.c.b16 %v6651, %v6647
        %v6828 = vpack.c.b16 %v6652, %v6648
        %v6829 = vpack.c.b16 %v6657, %v6653
        %v6830 = vpack.c.b16 %v6658, %v6654
        %v6831 = vpack.c.b16 %v6659, %v6655
        %v6832 = vpack.c.b16 %v6660, %v6656
        %v6833 = vpack.c.b16 %v6665, %v6661
        %v6834 = vpack.c.b16 %v6666, %v6662
        %v6835 = vpack.c.b16 %v6667, %v6663
        %v6836 = vpack.c.b16 %v6668, %v6664
        %v6837 = vpack.c.b16 %v6673, %v6669
        %v6838 = vpack.c.b16 %v6674, %v6670
        %v6839 = vpack.c.b16 %v6675, %v6671
        %v6840 = vpack.c.b16 %v6676, %v6672
        %v6841 = vpack.c.b16 %v6681, %v6677
        %v6842 = vpack.c.b16 %v6682, %v6678
        %v6843 = vpack.c.b16 %v6683, %v6679
        %v6844 = vpack.c.b16 %v6684, %v6680
        %v6845 = vpack.c.b16 %v6689, %v6685
        %v6846 = vpack.c.b16 %v6690, %v6686
        %v6847 = vpack.c.b16 %v6691, %v6687
        %v6848 = vpack.c.b16 %v6692, %v6688
        %v6849 = vpack.c.b16 %v6697, %v6693
        %v6850 = vpack.c.b16 %v6698, %v6694
        %v6851 = vpack.c.b16 %v6699, %v6695
        %v6852 = vpack.c.b16 %v6700, %v6696
        %v6853 = vpack.c.b16 %v6705, %v6701
        %v6854 = vpack.c.b16 %v6706, %v6702
        %v6855 = vpack.c.b16 %v6707, %v6703
        %v6856 = vpack.c.b16 %v6708, %v6704
        %v6857 = vpack.c.b16 %v6713, %v6709
        %v6858 = vpack.c.b16 %v6714, %v6710
        %v6859 = vpack.c.b16 %v6715, %v6711
        %v6860 = vpack.c.b16 %v6716, %v6712
        %v6861 = vpack.c.b16 %v6721, %v6717
        %v6862 = vpack.c.b16 %v6722, %v6718
        %v6863 = vpack.c.b16 %v6723, %v6719
        %v6864 = vpack.c.b16 %v6724, %v6720
        %v6865 = vpack.c.b16 %v6729, %v6725
        %v6866 = vpack.c.b16 %v6730, %v6726
        %v6867 = vpack.c.b16 %v6731, %v6727
        %v6868 = vpack.c.b16 %v6732, %v6728
        %v6869 = vpack.c.b16 %v6737, %v6733
        %v6870 = vpack.c.b16 %v6738, %v6734
        %v6871 = vpack.c.b16 %v6739, %v6735
        %v6872 = vpack.c.b16 %v6740, %v6736
        %v6873 = vpack.c.b16 %v6745, %v6741
        %v6874 = vpack.c.b16 %v6746, %v6742
        %v6875 = vpack.c.b16 %v6747, %v6743
        %v6876 = vpack.c.b16 %v6748, %v6744
        %7005 = vmatprep.subr.bf16.mxu0 %v6750
        %7006 = vmatpush1.bf16.msra.mxu0 %v6749
        %7007 = vmatprep.subr.bf16.mxu0 %v6754
        %7008 = vmatpush1.bf16.msra.mxu0 %v6753
        %7009 = vmatprep.subr.bf16.mxu0 %v6758
        %7010 = vmatpush1.bf16.msra.mxu0 %v6757
        %7011 = vmatprep.subr.bf16.mxu0 %v6762
        %7012 = vmatpush1.bf16.msra.mxu0 %v6761
        %7013 = vmatprep.subr.bf16.mxu0 %v6766
        %7014 = vmatpush1.bf16.msra.mxu0 %v6765
        %7015 = vmatprep.subr.bf16.mxu0 %v6770
        %7016 = vmatpush1.bf16.msra.mxu0 %v6769
        %7017 = vmatprep.subr.bf16.mxu0 %v6774
        %7018 = vmatpush1.bf16.msra.mxu0 %v6773
        %7019 = vmatprep.subr.bf16.mxu0 %v6778
        %7020 = vmatpush1.bf16.msra.mxu0 %v6777
        %7021 = vmatprep.subr.bf16.mxu0 %v6782
        %7022 = vmatpush1.bf16.msra.mxu0 %v6781
        %7023 = vmatprep.subr.bf16.mxu0 %v6786
        %7024 = vmatpush1.bf16.msra.mxu0 %v6785
        %7025 = vmatprep.subr.bf16.mxu0 %v6790
        %7026 = vmatpush1.bf16.msra.mxu0 %v6789
        %7027 = vmatprep.subr.bf16.mxu0 %v6794
        %7028 = vmatpush1.bf16.msra.mxu0 %v6793
        %7029 = vmatprep.subr.bf16.mxu0 %v6798
        %7030 = vmatpush1.bf16.msra.mxu0 %v6797
        %7031 = vmatprep.subr.bf16.mxu0 %v6802
        %7032 = vmatpush1.bf16.msra.mxu0 %v6801
        %7033 = vmatprep.subr.bf16.mxu0 %v6806
        %7034 = vmatpush1.bf16.msra.mxu0 %v6805
        %7035 = vmatprep.subr.bf16.mxu0 %v6810
        %7036 = vmatpush1.bf16.msra.mxu0 %v6809
        %7037 = vmatprep.mubr.bf16.mxu0 %v379
        %7038 = vmatmul.mubr.bf16.gmra.mrb[0].mxu0 %v378
        %v7039 = vpop.f32.mrb[0].mxu0
        %v7040 = vadd.f32 %v6348, %v7039
        %v7041 = vpop.f32.mrb[0].mxu0
        %v7042 = vadd.f32 %v6352, %v7041
        %v7043 = vpop.f32.mrb[0].mxu0
        %v7044 = vpop.f32.mrb[0].mxu0
        %7045 = vdwg.mxu0
        %7046 = vmatprep.subr.bf16.mxu0 %v6814
        %7047 = vmatpush1.bf16.msra.mxu0 %v6813
        %7048 = vmatprep.subr.bf16.mxu0 %v6818
        %7049 = vmatpush1.bf16.msra.mxu0 %v6817
        %7050 = vmatprep.subr.bf16.mxu0 %v6822
        %7051 = vmatpush1.bf16.msra.mxu0 %v6821
        %7052 = vmatprep.subr.bf16.mxu0 %v6826
        %7053 = vmatpush1.bf16.msra.mxu0 %v6825
        %7054 = vmatprep.subr.bf16.mxu0 %v6830
        %7055 = vmatpush1.bf16.msra.mxu0 %v6829
        %7056 = vmatprep.subr.bf16.mxu0 %v6834
        %7057 = vmatpush1.bf16.msra.mxu0 %v6833
        %7058 = vmatprep.subr.bf16.mxu0 %v6838
        %7059 = vmatpush1.bf16.msra.mxu0 %v6837
        %7060 = vmatprep.subr.bf16.mxu0 %v6842
        %7061 = vmatpush1.bf16.msra.mxu0 %v6841
        %7062 = vmatprep.subr.bf16.mxu0 %v6846
        %7063 = vmatpush1.bf16.msra.mxu0 %v6845
        %7064 = vmatprep.subr.bf16.mxu0 %v6850
        %7065 = vmatpush1.bf16.msra.mxu0 %v6849
        %7066 = vmatprep.subr.bf16.mxu0 %v6854
        %7067 = vmatpush1.bf16.msra.mxu0 %v6853
        %7068 = vmatprep.subr.bf16.mxu0 %v6858
        %7069 = vmatpush1.bf16.msra.mxu0 %v6857
        %7070 = vmatprep.subr.bf16.mxu0 %v6862
        %7071 = vmatpush1.bf16.msra.mxu0 %v6861
        %7072 = vmatprep.subr.bf16.mxu0 %v6866
        %7073 = vmatpush1.bf16.msra.mxu0 %v6865
        %7074 = vmatprep.subr.bf16.mxu0 %v6870
        %7075 = vmatpush1.bf16.msra.mxu0 %v6869
        %7076 = vmatprep.subr.bf16.mxu0 %v6874
        %7077 = vmatpush1.bf16.msra.mxu0 %v6873
        %7078 = vmatprep.mubr.bf16.mxu0 %v381
        %7079 = vmatmul.mubr.bf16.gmra.mrb[0].mxu0 %v380
        %v7080 = vpop.f32.mrb[0].mxu0
        %v7081 = vadd.f32 %v7040, %v7080
        %v7082 = vpop.f32.mrb[0].mxu0
        %v7083 = vadd.f32 %v7042, %v7082
        %v7084 = vpop.f32.mrb[0].mxu0
        %v7085 = vpop.f32.mrb[0].mxu0
        %7086 = vdwg.mxu0
        %7087 = vmatprep.subr.bf16.mxu0 %v6752
        %7088 = vmatpush1.bf16.msra.mxu0 %v6751
        %7089 = vmatprep.subr.bf16.mxu0 %v6756
        %7090 = vmatpush1.bf16.msra.mxu0 %v6755
        %7091 = vmatprep.subr.bf16.mxu0 %v6760
        %7092 = vmatpush1.bf16.msra.mxu0 %v6759
        %7093 = vmatprep.subr.bf16.mxu0 %v6764
        %7094 = vmatpush1.bf16.msra.mxu0 %v6763
        %7095 = vmatprep.subr.bf16.mxu0 %v6768
        %7096 = vmatpush1.bf16.msra.mxu0 %v6767
        %7097 = vmatprep.subr.bf16.mxu0 %v6772
        %7098 = vmatpush1.bf16.msra.mxu0 %v6771
        %7099 = vmatprep.subr.bf16.mxu0 %v6776
        %7100 = vmatpush1.bf16.msra.mxu0 %v6775
        %7101 = vmatprep.subr.bf16.mxu0 %v6780
        %7102 = vmatpush1.bf16.msra.mxu0 %v6779
        %7103 = vmatprep.subr.bf16.mxu0 %v6784
        %7104 = vmatpush1.bf16.msra.mxu0 %v6783
        %7105 = vmatprep.subr.bf16.mxu0 %v6788
        %7106 = vmatpush1.bf16.msra.mxu0 %v6787
        %7107 = vmatprep.subr.bf16.mxu0 %v6792
        %7108 = vmatpush1.bf16.msra.mxu0 %v6791
        %7109 = vmatprep.subr.bf16.mxu0 %v6796
        %7110 = vmatpush1.bf16.msra.mxu0 %v6795
        %7111 = vmatprep.subr.bf16.mxu0 %v6800
        %7112 = vmatpush1.bf16.msra.mxu0 %v6799
        %7113 = vmatprep.subr.bf16.mxu0 %v6804
        %7114 = vmatpush1.bf16.msra.mxu0 %v6803
        %7115 = vmatprep.subr.bf16.mxu0 %v6808
        %7116 = vmatpush1.bf16.msra.mxu0 %v6807
        %7117 = vmatprep.subr.bf16.mxu0 %v6812
        %7118 = vmatpush1.bf16.msra.mxu0 %v6811
        %7119 = vmatprep.mubr.bf16.mxu0 %v379
        %7120 = vmatmul.mubr.bf16.gmra.mrb[0].mxu0 %v378
        %v7121 = vpop.f32.mrb[0].mxu0
        %v7122 = vadd.f32 %v6356, %v7121
        %v7123 = vpop.f32.mrb[0].mxu0
        %v7124 = vadd.f32 %v6360, %v7123
        %v7125 = vpop.f32.mrb[0].mxu0
        %v7126 = vpop.f32.mrb[0].mxu0
        %7127 = vdwg.mxu0
        %7128 = vmatprep.subr.bf16.mxu0 %v6816
        %7129 = vmatpush1.bf16.msra.mxu0 %v6815
        %7130 = vmatprep.subr.bf16.mxu0 %v6820
        %7131 = vmatpush1.bf16.msra.mxu0 %v6819
        %7132 = vmatprep.subr.bf16.mxu0 %v6824
        %7133 = vmatpush1.bf16.msra.mxu0 %v6823
        %7134 = vmatprep.subr.bf16.mxu0 %v6828
        %7135 = vmatpush1.bf16.msra.mxu0 %v6827
        %7136 = vmatprep.subr.bf16.mxu0 %v6832
        %7137 = vmatpush1.bf16.msra.mxu0 %v6831
        %7138 = vmatprep.subr.bf16.mxu0 %v6836
        %7139 = vmatpush1.bf16.msra.mxu0 %v6835
        %7140 = vmatprep.subr.bf16.mxu0 %v6840
        %7141 = vmatpush1.bf16.msra.mxu0 %v6839
        %7142 = vmatprep.subr.bf16.mxu0 %v6844
        %7143 = vmatpush1.bf16.msra.mxu0 %v6843
        %7144 = vmatprep.subr.bf16.mxu0 %v6848
        %7145 = vmatpush1.bf16.msra.mxu0 %v6847
        %7146 = vmatprep.subr.bf16.mxu0 %v6852
        %7147 = vmatpush1.bf16.msra.mxu0 %v6851
        %7148 = vmatprep.subr.bf16.mxu0 %v6856
        %7149 = vmatpush1.bf16.msra.mxu0 %v6855
        %7150 = vmatprep.subr.bf16.mxu0 %v6860
        %7151 = vmatpush1.bf16.msra.mxu0 %v6859
        %7152 = vmatprep.subr.bf16.mxu0 %v6864
        %7153 = vmatpush1.bf16.msra.mxu0 %v6863
        %7154 = vmatprep.subr.bf16.mxu0 %v6868
        %7155 = vmatpush1.bf16.msra.mxu0 %v6867
        %7156 = vmatprep.subr.bf16.mxu0 %v6872
        %7157 = vmatpush1.bf16.msra.mxu0 %v6871
        %7158 = vmatprep.subr.bf16.mxu0 %v6876
        %7159 = vmatpush1.bf16.msra.mxu0 %v6875
        %7160 = vmatprep.mubr.bf16.mxu0 %v381
        %7161 = vmatmul.mubr.bf16.gmra.mrb[0].mxu0 %v380
        %v7162 = vpop.f32.mrb[0].mxu0
        %v7163 = vadd.f32 %v7122, %v7162
        %v7164 = vpop.f32.mrb[0].mxu0
        %v7165 = vadd.f32 %v7124, %v7164
        %v7166 = vpop.f32.mrb[0].mxu0
        %v7167 = vpop.f32.mrb[0].mxu0
        %7168 = vdwg.mxu0
        %v7169 = vmul.f32 %v7081, 0.5
        %v7170 = vmul.f32 %v7083, 0.5
        %v7171 = vmul.f32 %v7163, 0.5
        %v7172 = vmul.f32 %v7165, 0.5
        %v7173 = vmul.f32 %v7081, 0.044715
        %v7174 = vmul.f32 %v7083, 0.044715
        %v7175 = vmul.f32 %v7163, 0.044715
        %v7176 = vmul.f32 %v7165, 0.044715
        %v7177 = vmul.f32 %v7173, %v7081
        %v7178 = vmul.f32 %v7174, %v7083
        %v7179 = vmul.f32 %v7175, %v7163
        %v7180 = vmul.f32 %v7176, %v7165
        %v7181 = vmul.f32 %v7177, %v7081
        %v7182 = vmul.f32 %v7178, %v7083
        %v7183 = vmul.f32 %v7179, %v7163
        %v7184 = vmul.f32 %v7180, %v7165
        %v7185 = vadd.f32 %v7081, %v7181
        %v7186 = vadd.f32 %v7083, %v7182
        %v7187 = vadd.f32 %v7163, %v7183
        %v7188 = vadd.f32 %v7165, %v7184
        %v7189 = vmul.f32 %v7185, 0.7978846
        %v7190 = vmul.f32 %v7186, 0.7978846
        %v7191 = vmul.f32 %v7187, 0.7978846
        %v7192 = vmul.f32 %v7188, 0.7978846
        %v7193 = vtanh.pop %v7189
        %v7194 = vtanh.pop %v7190
        %v7195 = vtanh.pop %v7191
        %v7196 = vtanh.pop %v7192
        %v7197 = vadd.f32 %v7193, 1.0
        %v7198 = vadd.f32 %v7194, 1.0
        %v7199 = vadd.f32 %v7195, 1.0
        %v7200 = vadd.f32 %v7196, 1.0
        %v7201 = vmul.f32 %v7169, %v7197
        %v7202 = vmul.f32 %v7170, %v7198
        %v7203 = vmul.f32 %v7171, %v7199
        %v7204 = vmul.f32 %v7172, %v7200
        %v7205 = vld [vmem:[#allocation2] sm:$0xff]
        %v7206 = vld [vmem:[#allocation2 + $0x8] sm:$0xff]
        %v7207 = vld [vmem:[#allocation2 + $0x10] sm:$0xff]
        %v7208 = vld [vmem:[#allocation2 + $0x18] sm:$0xff]
        %v7209 = vpack.c.bf16 %v7201, %v7201
        %v7210 = vpack.c.bf16 %v7202, %v7202
        %v7211 = vpack.c.bf16 %v7203, %v7203
        %v7212 = vpack.c.bf16 %v7204, %v7204
        %s7213 = smul.u32 192, 4
        %s7214 = smul.addr %s7213, 4
        %s7215 = scalar_lea.vmem [#allocation9], %s7214
        %v7216 = vld [vmem:[%s7215] sm:$0xff]
        %v7217 = vld [vmem:[%s7215 + $0x8] sm:$0xff]
        %v7218 = vld [vmem:[%s7215 + $0x10] sm:$0xff]
        %v7219 = vld [vmem:[%s7215 + $0x18] sm:$0xff]
        %v7220 = vld [vmem:[%s7215 + $0x20] sm:$0xff]
        %v7221 = vld [vmem:[%s7215 + $0x28] sm:$0xff]
        %v7222 = vld [vmem:[%s7215 + $0x30] sm:$0xff]
        %v7223 = vld [vmem:[%s7215 + $0x38] sm:$0xff]
        %v7224 = vld [vmem:[%s7215 + $0x40] sm:$0xff]
        %v7225 = vld [vmem:[%s7215 + $0x48] sm:$0xff]
        %v7226 = vld [vmem:[%s7215 + $0x50] sm:$0xff]
        %v7227 = vld [vmem:[%s7215 + $0x58] sm:$0xff]
        %v7228 = vld [vmem:[%s7215 + $0x60] sm:$0xff]
        %v7229 = vld [vmem:[%s7215 + $0x68] sm:$0xff]
        %v7230 = vld [vmem:[%s7215 + $0x70] sm:$0xff]
        %v7231 = vld [vmem:[%s7215 + $0x78] sm:$0xff]
        %v7232 = vld [vmem:[%s7215 + $0x80] sm:$0xff]
        %v7233 = vld [vmem:[%s7215 + $0x88] sm:$0xff]
        %v7234 = vld [vmem:[%s7215 + $0x90] sm:$0xff]
        %v7235 = vld [vmem:[%s7215 + $0x98] sm:$0xff]
        %v7236 = vld [vmem:[%s7215 + $0xa0] sm:$0xff]
        %v7237 = vld [vmem:[%s7215 + $0xa8] sm:$0xff]
        %v7238 = vld [vmem:[%s7215 + $0xb0] sm:$0xff]
        %v7239 = vld [vmem:[%s7215 + $0xb8] sm:$0xff]
        %v7240 = vld [vmem:[%s7215 + $0xc0] sm:$0xff]
        %v7241 = vld [vmem:[%s7215 + $0xc8] sm:$0xff]
        %v7242 = vld [vmem:[%s7215 + $0xd0] sm:$0xff]
        %v7243 = vld [vmem:[%s7215 + $0xd8] sm:$0xff]
        %v7244 = vld [vmem:[%s7215 + $0xe0] sm:$0xff]
        %v7245 = vld [vmem:[%s7215 + $0xe8] sm:$0xff]
        %v7246 = vld [vmem:[%s7215 + $0xf0] sm:$0xff]
        %v7247 = vld [vmem:[%s7215 + $0xf8] sm:$0xff]
        %v7248 = vld [vmem:[%s7215 + $0x100] sm:$0xff]
        %v7249 = vld [vmem:[%s7215 + $0x108] sm:$0xff]
        %v7250 = vld [vmem:[%s7215 + $0x110] sm:$0xff]
        %v7251 = vld [vmem:[%s7215 + $0x118] sm:$0xff]
        %v7252 = vld [vmem:[%s7215 + $0x120] sm:$0xff]
        %v7253 = vld [vmem:[%s7215 + $0x128] sm:$0xff]
        %v7254 = vld [vmem:[%s7215 + $0x130] sm:$0xff]
        %v7255 = vld [vmem:[%s7215 + $0x138] sm:$0xff]
        %v7256 = vld [vmem:[%s7215 + $0x140] sm:$0xff]
        %v7257 = vld [vmem:[%s7215 + $0x148] sm:$0xff]
        %v7258 = vld [vmem:[%s7215 + $0x150] sm:$0xff]
        %v7259 = vld [vmem:[%s7215 + $0x158] sm:$0xff]
        %v7260 = vld [vmem:[%s7215 + $0x160] sm:$0xff]
        %v7261 = vld [vmem:[%s7215 + $0x168] sm:$0xff]
        %v7262 = vld [vmem:[%s7215 + $0x170] sm:$0xff]
        %v7263 = vld [vmem:[%s7215 + $0x178] sm:$0xff]
        %v7264 = vld [vmem:[%s7215 + $0x180] sm:$0xff]
        %v7265 = vld [vmem:[%s7215 + $0x188] sm:$0xff]
        %v7266 = vld [vmem:[%s7215 + $0x190] sm:$0xff]
        %v7267 = vld [vmem:[%s7215 + $0x198] sm:$0xff]
        %v7268 = vld [vmem:[%s7215 + $0x1a0] sm:$0xff]
        %v7269 = vld [vmem:[%s7215 + $0x1a8] sm:$0xff]
        %v7270 = vld [vmem:[%s7215 + $0x1b0] sm:$0xff]
        %v7271 = vld [vmem:[%s7215 + $0x1b8] sm:$0xff]
        %v7272 = vld [vmem:[%s7215 + $0x1c0] sm:$0xff]
        %v7273 = vld [vmem:[%s7215 + $0x1c8] sm:$0xff]
        %v7274 = vld [vmem:[%s7215 + $0x1d0] sm:$0xff]
        %v7275 = vld [vmem:[%s7215 + $0x1d8] sm:$0xff]
        %v7276 = vld [vmem:[%s7215 + $0x1e0] sm:$0xff]
        %v7277 = vld [vmem:[%s7215 + $0x1e8] sm:$0xff]
        %v7278 = vld [vmem:[%s7215 + $0x1f0] sm:$0xff]
        %v7279 = vld [vmem:[%s7215 + $0x1f8] sm:$0xff]
        %v7280 = vld [vmem:[%s7215 + $0x200] sm:$0xff]
        %v7281 = vld [vmem:[%s7215 + $0x208] sm:$0xff]
        %v7282 = vld [vmem:[%s7215 + $0x210] sm:$0xff]
        %v7283 = vld [vmem:[%s7215 + $0x218] sm:$0xff]
        %v7284 = vld [vmem:[%s7215 + $0x220] sm:$0xff]
        %v7285 = vld [vmem:[%s7215 + $0x228] sm:$0xff]
        %v7286 = vld [vmem:[%s7215 + $0x230] sm:$0xff]
        %v7287 = vld [vmem:[%s7215 + $0x238] sm:$0xff]
        %v7288 = vld [vmem:[%s7215 + $0x240] sm:$0xff]
        %v7289 = vld [vmem:[%s7215 + $0x248] sm:$0xff]
        %v7290 = vld [vmem:[%s7215 + $0x250] sm:$0xff]
        %v7291 = vld [vmem:[%s7215 + $0x258] sm:$0xff]
        %v7292 = vld [vmem:[%s7215 + $0x260] sm:$0xff]
        %v7293 = vld [vmem:[%s7215 + $0x268] sm:$0xff]
        %v7294 = vld [vmem:[%s7215 + $0x270] sm:$0xff]
        %v7295 = vld [vmem:[%s7215 + $0x278] sm:$0xff]
        %v7296 = vld [vmem:[%s7215 + $0x280] sm:$0xff]
        %v7297 = vld [vmem:[%s7215 + $0x288] sm:$0xff]
        %v7298 = vld [vmem:[%s7215 + $0x290] sm:$0xff]
        %v7299 = vld [vmem:[%s7215 + $0x298] sm:$0xff]
        %v7300 = vld [vmem:[%s7215 + $0x2a0] sm:$0xff]
        %v7301 = vld [vmem:[%s7215 + $0x2a8] sm:$0xff]
        %v7302 = vld [vmem:[%s7215 + $0x2b0] sm:$0xff]
        %v7303 = vld [vmem:[%s7215 + $0x2b8] sm:$0xff]
        %v7304 = vld [vmem:[%s7215 + $0x2c0] sm:$0xff]
        %v7305 = vld [vmem:[%s7215 + $0x2c8] sm:$0xff]
        %v7306 = vld [vmem:[%s7215 + $0x2d0] sm:$0xff]
        %v7307 = vld [vmem:[%s7215 + $0x2d8] sm:$0xff]
        %v7308 = vld [vmem:[%s7215 + $0x2e0] sm:$0xff]
        %v7309 = vld [vmem:[%s7215 + $0x2e8] sm:$0xff]
        %v7310 = vld [vmem:[%s7215 + $0x2f0] sm:$0xff]
        %v7311 = vld [vmem:[%s7215 + $0x2f8] sm:$0xff]
        %v7312 = vld [vmem:[%s7215 + $0x300] sm:$0xff]
        %v7313 = vld [vmem:[%s7215 + $0x308] sm:$0xff]
        %v7314 = vld [vmem:[%s7215 + $0x310] sm:$0xff]
        %v7315 = vld [vmem:[%s7215 + $0x318] sm:$0xff]
        %v7316 = vld [vmem:[%s7215 + $0x320] sm:$0xff]
        %v7317 = vld [vmem:[%s7215 + $0x328] sm:$0xff]
        %v7318 = vld [vmem:[%s7215 + $0x330] sm:$0xff]
        %v7319 = vld [vmem:[%s7215 + $0x338] sm:$0xff]
        %v7320 = vld [vmem:[%s7215 + $0x340] sm:$0xff]
        %v7321 = vld [vmem:[%s7215 + $0x348] sm:$0xff]
        %v7322 = vld [vmem:[%s7215 + $0x350] sm:$0xff]
        %v7323 = vld [vmem:[%s7215 + $0x358] sm:$0xff]
        %v7324 = vld [vmem:[%s7215 + $0x360] sm:$0xff]
        %v7325 = vld [vmem:[%s7215 + $0x368] sm:$0xff]
        %v7326 = vld [vmem:[%s7215 + $0x370] sm:$0xff]
        %v7327 = vld [vmem:[%s7215 + $0x378] sm:$0xff]
        %v7328 = vld [vmem:[%s7215 + $0x380] sm:$0xff]
        %v7329 = vld [vmem:[%s7215 + $0x388] sm:$0xff]
        %v7330 = vld [vmem:[%s7215 + $0x390] sm:$0xff]
        %v7331 = vld [vmem:[%s7215 + $0x398] sm:$0xff]
        %v7332 = vld [vmem:[%s7215 + $0x3a0] sm:$0xff]
        %v7333 = vld [vmem:[%s7215 + $0x3a8] sm:$0xff]
        %v7334 = vld [vmem:[%s7215 + $0x3b0] sm:$0xff]
        %v7335 = vld [vmem:[%s7215 + $0x3b8] sm:$0xff]
        %v7336 = vld [vmem:[%s7215 + $0x3c0] sm:$0xff]
        %v7337 = vld [vmem:[%s7215 + $0x3c8] sm:$0xff]
        %v7338 = vld [vmem:[%s7215 + $0x3d0] sm:$0xff]
        %v7339 = vld [vmem:[%s7215 + $0x3d8] sm:$0xff]
        %v7340 = vld [vmem:[%s7215 + $0x3e0] sm:$0xff]
        %v7341 = vld [vmem:[%s7215 + $0x3e8] sm:$0xff]
        %v7342 = vld [vmem:[%s7215 + $0x3f0] sm:$0xff]
        %v7343 = vld [vmem:[%s7215 + $0x3f8] sm:$0xff]
        %v7472 = vunpack.c.l.b16 %v7216
        %v7473 = vunpack.c.h.b16 %v7216
        %v7474 = vunpack.c.l.b16 %v7217
        %v7475 = vunpack.c.h.b16 %v7217
        %v7476 = vunpack.c.l.b16 %v7218
        %v7477 = vunpack.c.h.b16 %v7218
        %v7478 = vunpack.c.l.b16 %v7219
        %v7479 = vunpack.c.h.b16 %v7219
        %v7480 = vunpack.c.l.b16 %v7220
        %v7481 = vunpack.c.h.b16 %v7220
        %v7482 = vunpack.c.l.b16 %v7221
        %v7483 = vunpack.c.h.b16 %v7221
        %v7484 = vunpack.c.l.b16 %v7222
        %v7485 = vunpack.c.h.b16 %v7222
        %v7486 = vunpack.c.l.b16 %v7223
        %v7487 = vunpack.c.h.b16 %v7223
        %v7488 = vunpack.c.l.b16 %v7224
        %v7489 = vunpack.c.h.b16 %v7224
        %v7490 = vunpack.c.l.b16 %v7225
        %v7491 = vunpack.c.h.b16 %v7225
        %v7492 = vunpack.c.l.b16 %v7226
        %v7493 = vunpack.c.h.b16 %v7226
        %v7494 = vunpack.c.l.b16 %v7227
        %v7495 = vunpack.c.h.b16 %v7227
        %v7496 = vunpack.c.l.b16 %v7228
        %v7497 = vunpack.c.h.b16 %v7228
        %v7498 = vunpack.c.l.b16 %v7229
        %v7499 = vunpack.c.h.b16 %v7229
        %v7500 = vunpack.c.l.b16 %v7230
        %v7501 = vunpack.c.h.b16 %v7230
        %v7502 = vunpack.c.l.b16 %v7231
        %v7503 = vunpack.c.h.b16 %v7231
        %v7504 = vunpack.c.l.b16 %v7232
        %v7505 = vunpack.c.h.b16 %v7232
        %v7506 = vunpack.c.l.b16 %v7233
        %v7507 = vunpack.c.h.b16 %v7233
        %v7508 = vunpack.c.l.b16 %v7234
        %v7509 = vunpack.c.h.b16 %v7234
        %v7510 = vunpack.c.l.b16 %v7235
        %v7511 = vunpack.c.h.b16 %v7235
        %v7512 = vunpack.c.l.b16 %v7236
        %v7513 = vunpack.c.h.b16 %v7236
        %v7514 = vunpack.c.l.b16 %v7237
        %v7515 = vunpack.c.h.b16 %v7237
        %v7516 = vunpack.c.l.b16 %v7238
        %v7517 = vunpack.c.h.b16 %v7238
        %v7518 = vunpack.c.l.b16 %v7239
        %v7519 = vunpack.c.h.b16 %v7239
        %v7520 = vunpack.c.l.b16 %v7240
        %v7521 = vunpack.c.h.b16 %v7240
        %v7522 = vunpack.c.l.b16 %v7241
        %v7523 = vunpack.c.h.b16 %v7241
        %v7524 = vunpack.c.l.b16 %v7242
        %v7525 = vunpack.c.h.b16 %v7242
        %v7526 = vunpack.c.l.b16 %v7243
        %v7527 = vunpack.c.h.b16 %v7243
        %v7528 = vunpack.c.l.b16 %v7244
        %v7529 = vunpack.c.h.b16 %v7244
        %v7530 = vunpack.c.l.b16 %v7245
        %v7531 = vunpack.c.h.b16 %v7245
        %v7532 = vunpack.c.l.b16 %v7246
        %v7533 = vunpack.c.h.b16 %v7246
        %v7534 = vunpack.c.l.b16 %v7247
        %v7535 = vunpack.c.h.b16 %v7247
        %v7536 = vunpack.c.l.b16 %v7248
        %v7537 = vunpack.c.h.b16 %v7248
        %v7538 = vunpack.c.l.b16 %v7249
        %v7539 = vunpack.c.h.b16 %v7249
        %v7540 = vunpack.c.l.b16 %v7250
        %v7541 = vunpack.c.h.b16 %v7250
        %v7542 = vunpack.c.l.b16 %v7251
        %v7543 = vunpack.c.h.b16 %v7251
        %v7544 = vunpack.c.l.b16 %v7252
        %v7545 = vunpack.c.h.b16 %v7252
        %v7546 = vunpack.c.l.b16 %v7253
        %v7547 = vunpack.c.h.b16 %v7253
        %v7548 = vunpack.c.l.b16 %v7254
        %v7549 = vunpack.c.h.b16 %v7254
        %v7550 = vunpack.c.l.b16 %v7255
        %v7551 = vunpack.c.h.b16 %v7255
        %v7552 = vunpack.c.l.b16 %v7256
        %v7553 = vunpack.c.h.b16 %v7256
        %v7554 = vunpack.c.l.b16 %v7257
        %v7555 = vunpack.c.h.b16 %v7257
        %v7556 = vunpack.c.l.b16 %v7258
        %v7557 = vunpack.c.h.b16 %v7258
        %v7558 = vunpack.c.l.b16 %v7259
        %v7559 = vunpack.c.h.b16 %v7259
        %v7560 = vunpack.c.l.b16 %v7260
        %v7561 = vunpack.c.h.b16 %v7260
        %v7562 = vunpack.c.l.b16 %v7261
        %v7563 = vunpack.c.h.b16 %v7261
        %v7564 = vunpack.c.l.b16 %v7262
        %v7565 = vunpack.c.h.b16 %v7262
        %v7566 = vunpack.c.l.b16 %v7263
        %v7567 = vunpack.c.h.b16 %v7263
        %v7568 = vunpack.c.l.b16 %v7264
        %v7569 = vunpack.c.h.b16 %v7264
        %v7570 = vunpack.c.l.b16 %v7265
        %v7571 = vunpack.c.h.b16 %v7265
        %v7572 = vunpack.c.l.b16 %v7266
        %v7573 = vunpack.c.h.b16 %v7266
        %v7574 = vunpack.c.l.b16 %v7267
        %v7575 = vunpack.c.h.b16 %v7267
        %v7576 = vunpack.c.l.b16 %v7268
        %v7577 = vunpack.c.h.b16 %v7268
        %v7578 = vunpack.c.l.b16 %v7269
        %v7579 = vunpack.c.h.b16 %v7269
        %v7580 = vunpack.c.l.b16 %v7270
        %v7581 = vunpack.c.h.b16 %v7270
        %v7582 = vunpack.c.l.b16 %v7271
        %v7583 = vunpack.c.h.b16 %v7271
        %v7584 = vunpack.c.l.b16 %v7272
        %v7585 = vunpack.c.h.b16 %v7272
        %v7586 = vunpack.c.l.b16 %v7273
        %v7587 = vunpack.c.h.b16 %v7273
        %v7588 = vunpack.c.l.b16 %v7274
        %v7589 = vunpack.c.h.b16 %v7274
        %v7590 = vunpack.c.l.b16 %v7275
        %v7591 = vunpack.c.h.b16 %v7275
        %v7592 = vunpack.c.l.b16 %v7276
        %v7593 = vunpack.c.h.b16 %v7276
        %v7594 = vunpack.c.l.b16 %v7277
        %v7595 = vunpack.c.h.b16 %v7277
        %v7596 = vunpack.c.l.b16 %v7278
        %v7597 = vunpack.c.h.b16 %v7278
        %v7598 = vunpack.c.l.b16 %v7279
        %v7599 = vunpack.c.h.b16 %v7279
        %v7600 = vunpack.c.l.b16 %v7280
        %v7601 = vunpack.c.h.b16 %v7280
        %v7602 = vunpack.c.l.b16 %v7281
        %v7603 = vunpack.c.h.b16 %v7281
        %v7604 = vunpack.c.l.b16 %v7282
        %v7605 = vunpack.c.h.b16 %v7282
        %v7606 = vunpack.c.l.b16 %v7283
        %v7607 = vunpack.c.h.b16 %v7283
        %v7608 = vunpack.c.l.b16 %v7284
        %v7609 = vunpack.c.h.b16 %v7284
        %v7610 = vunpack.c.l.b16 %v7285
        %v7611 = vunpack.c.h.b16 %v7285
        %v7612 = vunpack.c.l.b16 %v7286
        %v7613 = vunpack.c.h.b16 %v7286
        %v7614 = vunpack.c.l.b16 %v7287
        %v7615 = vunpack.c.h.b16 %v7287
        %v7616 = vunpack.c.l.b16 %v7288
        %v7617 = vunpack.c.h.b16 %v7288
        %v7618 = vunpack.c.l.b16 %v7289
        %v7619 = vunpack.c.h.b16 %v7289
        %v7620 = vunpack.c.l.b16 %v7290
        %v7621 = vunpack.c.h.b16 %v7290
        %v7622 = vunpack.c.l.b16 %v7291
        %v7623 = vunpack.c.h.b16 %v7291
        %v7624 = vunpack.c.l.b16 %v7292
        %v7625 = vunpack.c.h.b16 %v7292
        %v7626 = vunpack.c.l.b16 %v7293
        %v7627 = vunpack.c.h.b16 %v7293
        %v7628 = vunpack.c.l.b16 %v7294
        %v7629 = vunpack.c.h.b16 %v7294
        %v7630 = vunpack.c.l.b16 %v7295
        %v7631 = vunpack.c.h.b16 %v7295
        %v7632 = vunpack.c.l.b16 %v7296
        %v7633 = vunpack.c.h.b16 %v7296
        %v7634 = vunpack.c.l.b16 %v7297
        %v7635 = vunpack.c.h.b16 %v7297
        %v7636 = vunpack.c.l.b16 %v7298
        %v7637 = vunpack.c.h.b16 %v7298
        %v7638 = vunpack.c.l.b16 %v7299
        %v7639 = vunpack.c.h.b16 %v7299
        %v7640 = vunpack.c.l.b16 %v7300
        %v7641 = vunpack.c.h.b16 %v7300
        %v7642 = vunpack.c.l.b16 %v7301
        %v7643 = vunpack.c.h.b16 %v7301
        %v7644 = vunpack.c.l.b16 %v7302
        %v7645 = vunpack.c.h.b16 %v7302
        %v7646 = vunpack.c.l.b16 %v7303
        %v7647 = vunpack.c.h.b16 %v7303
        %v7648 = vunpack.c.l.b16 %v7304
        %v7649 = vunpack.c.h.b16 %v7304
        %v7650 = vunpack.c.l.b16 %v7305
        %v7651 = vunpack.c.h.b16 %v7305
        %v7652 = vunpack.c.l.b16 %v7306
        %v7653 = vunpack.c.h.b16 %v7306
        %v7654 = vunpack.c.l.b16 %v7307
        %v7655 = vunpack.c.h.b16 %v7307
        %v7656 = vunpack.c.l.b16 %v7308
        %v7657 = vunpack.c.h.b16 %v7308
        %v7658 = vunpack.c.l.b16 %v7309
        %v7659 = vunpack.c.h.b16 %v7309
        %v7660 = vunpack.c.l.b16 %v7310
        %v7661 = vunpack.c.h.b16 %v7310
        %v7662 = vunpack.c.l.b16 %v7311
        %v7663 = vunpack.c.h.b16 %v7311
        %v7664 = vunpack.c.l.b16 %v7312
        %v7665 = vunpack.c.h.b16 %v7312
        %v7666 = vunpack.c.l.b16 %v7313
        %v7667 = vunpack.c.h.b16 %v7313
        %v7668 = vunpack.c.l.b16 %v7314
        %v7669 = vunpack.c.h.b16 %v7314
        %v7670 = vunpack.c.l.b16 %v7315
        %v7671 = vunpack.c.h.b16 %v7315
        %v7672 = vunpack.c.l.b16 %v7316
        %v7673 = vunpack.c.h.b16 %v7316
        %v7674 = vunpack.c.l.b16 %v7317
        %v7675 = vunpack.c.h.b16 %v7317
        %v7676 = vunpack.c.l.b16 %v7318
        %v7677 = vunpack.c.h.b16 %v7318
        %v7678 = vunpack.c.l.b16 %v7319
        %v7679 = vunpack.c.h.b16 %v7319
        %v7680 = vunpack.c.l.b16 %v7320
        %v7681 = vunpack.c.h.b16 %v7320
        %v7682 = vunpack.c.l.b16 %v7321
        %v7683 = vunpack.c.h.b16 %v7321
        %v7684 = vunpack.c.l.b16 %v7322
        %v7685 = vunpack.c.h.b16 %v7322
        %v7686 = vunpack.c.l.b16 %v7323
        %v7687 = vunpack.c.h.b16 %v7323
        %v7688 = vunpack.c.l.b16 %v7324
        %v7689 = vunpack.c.h.b16 %v7324
        %v7690 = vunpack.c.l.b16 %v7325
        %v7691 = vunpack.c.h.b16 %v7325
        %v7692 = vunpack.c.l.b16 %v7326
        %v7693 = vunpack.c.h.b16 %v7326
        %v7694 = vunpack.c.l.b16 %v7327
        %v7695 = vunpack.c.h.b16 %v7327
        %v7696 = vunpack.c.l.b16 %v7328
        %v7697 = vunpack.c.h.b16 %v7328
        %v7698 = vunpack.c.l.b16 %v7329
        %v7699 = vunpack.c.h.b16 %v7329
        %v7700 = vunpack.c.l.b16 %v7330
        %v7701 = vunpack.c.h.b16 %v7330
        %v7702 = vunpack.c.l.b16 %v7331
        %v7703 = vunpack.c.h.b16 %v7331
        %v7704 = vunpack.c.l.b16 %v7332
        %v7705 = vunpack.c.h.b16 %v7332
        %v7706 = vunpack.c.l.b16 %v7333
        %v7707 = vunpack.c.h.b16 %v7333
        %v7708 = vunpack.c.l.b16 %v7334
        %v7709 = vunpack.c.h.b16 %v7334
        %v7710 = vunpack.c.l.b16 %v7335
        %v7711 = vunpack.c.h.b16 %v7335
        %v7712 = vunpack.c.l.b16 %v7336
        %v7713 = vunpack.c.h.b16 %v7336
        %v7714 = vunpack.c.l.b16 %v7337
        %v7715 = vunpack.c.h.b16 %v7337
        %v7716 = vunpack.c.l.b16 %v7338
        %v7717 = vunpack.c.h.b16 %v7338
        %v7718 = vunpack.c.l.b16 %v7339
        %v7719 = vunpack.c.h.b16 %v7339
        %v7720 = vunpack.c.l.b16 %v7340
        %v7721 = vunpack.c.h.b16 %v7340
        %v7722 = vunpack.c.l.b16 %v7341
        %v7723 = vunpack.c.h.b16 %v7341
        %v7724 = vunpack.c.l.b16 %v7342
        %v7725 = vunpack.c.h.b16 %v7342
        %v7726 = vunpack.c.l.b16 %v7343
        %v7727 = vunpack.c.h.b16 %v7343
        %v7728 = vpack.c.b16 %v7476, %v7472
        %v7729 = vpack.c.b16 %v7477, %v7473
        %v7730 = vpack.c.b16 %v7478, %v7474
        %v7731 = vpack.c.b16 %v7479, %v7475
        %v7732 = vpack.c.b16 %v7484, %v7480
        %v7733 = vpack.c.b16 %v7485, %v7481
        %v7734 = vpack.c.b16 %v7486, %v7482
        %v7735 = vpack.c.b16 %v7487, %v7483
        %v7736 = vpack.c.b16 %v7492, %v7488
        %v7737 = vpack.c.b16 %v7493, %v7489
        %v7738 = vpack.c.b16 %v7494, %v7490
        %v7739 = vpack.c.b16 %v7495, %v7491
        %v7740 = vpack.c.b16 %v7500, %v7496
        %v7741 = vpack.c.b16 %v7501, %v7497
        %v7742 = vpack.c.b16 %v7502, %v7498
        %v7743 = vpack.c.b16 %v7503, %v7499
        %v7744 = vpack.c.b16 %v7508, %v7504
        %v7745 = vpack.c.b16 %v7509, %v7505
        %v7746 = vpack.c.b16 %v7510, %v7506
        %v7747 = vpack.c.b16 %v7511, %v7507
        %v7748 = vpack.c.b16 %v7516, %v7512
        %v7749 = vpack.c.b16 %v7517, %v7513
        %v7750 = vpack.c.b16 %v7518, %v7514
        %v7751 = vpack.c.b16 %v7519, %v7515
        %v7752 = vpack.c.b16 %v7524, %v7520
        %v7753 = vpack.c.b16 %v7525, %v7521
        %v7754 = vpack.c.b16 %v7526, %v7522
        %v7755 = vpack.c.b16 %v7527, %v7523
        %v7756 = vpack.c.b16 %v7532, %v7528
        %v7757 = vpack.c.b16 %v7533, %v7529
        %v7758 = vpack.c.b16 %v7534, %v7530
        %v7759 = vpack.c.b16 %v7535, %v7531
        %v7760 = vpack.c.b16 %v7540, %v7536
        %v7761 = vpack.c.b16 %v7541, %v7537
        %v7762 = vpack.c.b16 %v7542, %v7538
        %v7763 = vpack.c.b16 %v7543, %v7539
        %v7764 = vpack.c.b16 %v7548, %v7544
        %v7765 = vpack.c.b16 %v7549, %v7545
        %v7766 = vpack.c.b16 %v7550, %v7546
        %v7767 = vpack.c.b16 %v7551, %v7547
        %v7768 = vpack.c.b16 %v7556, %v7552
        %v7769 = vpack.c.b16 %v7557, %v7553
        %v7770 = vpack.c.b16 %v7558, %v7554
        %v7771 = vpack.c.b16 %v7559, %v7555
        %v7772 = vpack.c.b16 %v7564, %v7560
        %v7773 = vpack.c.b16 %v7565, %v7561
        %v7774 = vpack.c.b16 %v7566, %v7562
        %v7775 = vpack.c.b16 %v7567, %v7563
        %v7776 = vpack.c.b16 %v7572, %v7568
        %v7777 = vpack.c.b16 %v7573, %v7569
        %v7778 = vpack.c.b16 %v7574, %v7570
        %v7779 = vpack.c.b16 %v7575, %v7571
        %v7780 = vpack.c.b16 %v7580, %v7576
        %v7781 = vpack.c.b16 %v7581, %v7577
        %v7782 = vpack.c.b16 %v7582, %v7578
        %v7783 = vpack.c.b16 %v7583, %v7579
        %v7784 = vpack.c.b16 %v7588, %v7584
        %v7785 = vpack.c.b16 %v7589, %v7585
        %v7786 = vpack.c.b16 %v7590, %v7586
        %v7787 = vpack.c.b16 %v7591, %v7587
        %v7788 = vpack.c.b16 %v7596, %v7592
        %v7789 = vpack.c.b16 %v7597, %v7593
        %v7790 = vpack.c.b16 %v7598, %v7594
        %v7791 = vpack.c.b16 %v7599, %v7595
        %v7792 = vpack.c.b16 %v7604, %v7600
        %v7793 = vpack.c.b16 %v7605, %v7601
        %v7794 = vpack.c.b16 %v7606, %v7602
        %v7795 = vpack.c.b16 %v7607, %v7603
        %v7796 = vpack.c.b16 %v7612, %v7608
        %v7797 = vpack.c.b16 %v7613, %v7609
        %v7798 = vpack.c.b16 %v7614, %v7610
        %v7799 = vpack.c.b16 %v7615, %v7611
        %v7800 = vpack.c.b16 %v7620, %v7616
        %v7801 = vpack.c.b16 %v7621, %v7617
        %v7802 = vpack.c.b16 %v7622, %v7618
        %v7803 = vpack.c.b16 %v7623, %v7619
        %v7804 = vpack.c.b16 %v7628, %v7624
        %v7805 = vpack.c.b16 %v7629, %v7625
        %v7806 = vpack.c.b16 %v7630, %v7626
        %v7807 = vpack.c.b16 %v7631, %v7627
        %v7808 = vpack.c.b16 %v7636, %v7632
        %v7809 = vpack.c.b16 %v7637, %v7633
        %v7810 = vpack.c.b16 %v7638, %v7634
        %v7811 = vpack.c.b16 %v7639, %v7635
        %v7812 = vpack.c.b16 %v7644, %v7640
        %v7813 = vpack.c.b16 %v7645, %v7641
        %v7814 = vpack.c.b16 %v7646, %v7642
        %v7815 = vpack.c.b16 %v7647, %v7643
        %v7816 = vpack.c.b16 %v7652, %v7648
        %v7817 = vpack.c.b16 %v7653, %v7649
        %v7818 = vpack.c.b16 %v7654, %v7650
        %v7819 = vpack.c.b16 %v7655, %v7651
        %v7820 = vpack.c.b16 %v7660, %v7656
        %v7821 = vpack.c.b16 %v7661, %v7657
        %v7822 = vpack.c.b16 %v7662, %v7658
        %v7823 = vpack.c.b16 %v7663, %v7659
        %v7824 = vpack.c.b16 %v7668, %v7664
        %v7825 = vpack.c.b16 %v7669, %v7665
        %v7826 = vpack.c.b16 %v7670, %v7666
        %v7827 = vpack.c.b16 %v7671, %v7667
        %v7828 = vpack.c.b16 %v7676, %v7672
        %v7829 = vpack.c.b16 %v7677, %v7673
        %v7830 = vpack.c.b16 %v7678, %v7674
        %v7831 = vpack.c.b16 %v7679, %v7675
        %v7832 = vpack.c.b16 %v7684, %v7680
        %v7833 = vpack.c.b16 %v7685, %v7681
        %v7834 = vpack.c.b16 %v7686, %v7682
        %v7835 = vpack.c.b16 %v7687, %v7683
        %v7836 = vpack.c.b16 %v7692, %v7688
        %v7837 = vpack.c.b16 %v7693, %v7689
        %v7838 = vpack.c.b16 %v7694, %v7690
        %v7839 = vpack.c.b16 %v7695, %v7691
        %v7840 = vpack.c.b16 %v7700, %v7696
        %v7841 = vpack.c.b16 %v7701, %v7697
        %v7842 = vpack.c.b16 %v7702, %v7698
        %v7843 = vpack.c.b16 %v7703, %v7699
        %v7844 = vpack.c.b16 %v7708, %v7704
        %v7845 = vpack.c.b16 %v7709, %v7705
        %v7846 = vpack.c.b16 %v7710, %v7706
        %v7847 = vpack.c.b16 %v7711, %v7707
        %v7848 = vpack.c.b16 %v7716, %v7712
        %v7849 = vpack.c.b16 %v7717, %v7713
        %v7850 = vpack.c.b16 %v7718, %v7714
        %v7851 = vpack.c.b16 %v7719, %v7715
        %v7852 = vpack.c.b16 %v7724, %v7720
        %v7853 = vpack.c.b16 %v7725, %v7721
        %v7854 = vpack.c.b16 %v7726, %v7722
        %v7855 = vpack.c.b16 %v7727, %v7723
        %7984 = vmatprep.subr.bf16.mxu0 %v7729
        %7985 = vmatpush1.bf16.msra.mxu0 %v7728
        %7986 = vmatprep.subr.bf16.mxu0 %v7733
        %7987 = vmatpush1.bf16.msra.mxu0 %v7732
        %7988 = vmatprep.subr.bf16.mxu0 %v7737
        %7989 = vmatpush1.bf16.msra.mxu0 %v7736
        %7990 = vmatprep.subr.bf16.mxu0 %v7741
        %7991 = vmatpush1.bf16.msra.mxu0 %v7740
        %7992 = vmatprep.subr.bf16.mxu0 %v7745
        %7993 = vmatpush1.bf16.msra.mxu0 %v7744
        %7994 = vmatprep.subr.bf16.mxu0 %v7749
        %7995 = vmatpush1.bf16.msra.mxu0 %v7748
        %7996 = vmatprep.subr.bf16.mxu0 %v7753
        %7997 = vmatpush1.bf16.msra.mxu0 %v7752
        %7998 = vmatprep.subr.bf16.mxu0 %v7757
        %7999 = vmatpush1.bf16.msra.mxu0 %v7756
        %8000 = vmatprep.subr.bf16.mxu0 %v7761
        %8001 = vmatpush1.bf16.msra.mxu0 %v7760
        %8002 = vmatprep.subr.bf16.mxu0 %v7765
        %8003 = vmatpush1.bf16.msra.mxu0 %v7764
        %8004 = vmatprep.subr.bf16.mxu0 %v7769
        %8005 = vmatpush1.bf16.msra.mxu0 %v7768
        %8006 = vmatprep.subr.bf16.mxu0 %v7773
        %8007 = vmatpush1.bf16.msra.mxu0 %v7772
        %8008 = vmatprep.subr.bf16.mxu0 %v7777
        %8009 = vmatpush1.bf16.msra.mxu0 %v7776
        %8010 = vmatprep.subr.bf16.mxu0 %v7781
        %8011 = vmatpush1.bf16.msra.mxu0 %v7780
        %8012 = vmatprep.subr.bf16.mxu0 %v7785
        %8013 = vmatpush1.bf16.msra.mxu0 %v7784
        %8014 = vmatprep.subr.bf16.mxu0 %v7789
        %8015 = vmatpush1.bf16.msra.mxu0 %v7788
        %8016 = vmatprep.mubr.bf16.mxu0 %v7210
        %8017 = vmatmul.mubr.bf16.gmra.mrb[0].mxu0 %v7209
        %v8018 = vpop.f32.mrb[0].mxu0
        %v8019 = vadd.f32 0.0, %v8018
        %v8020 = vpop.f32.mrb[0].mxu0
        %v8021 = vadd.f32 0.0, %v8020
        %v8022 = vpop.f32.mrb[0].mxu0
        %v8023 = vpop.f32.mrb[0].mxu0
        %8024 = vdwg.mxu0
        %8025 = vmatprep.subr.bf16.mxu0 %v7793
        %8026 = vmatpush1.bf16.msra.mxu0 %v7792
        %8027 = vmatprep.subr.bf16.mxu0 %v7797
        %8028 = vmatpush1.bf16.msra.mxu0 %v7796
        %8029 = vmatprep.subr.bf16.mxu0 %v7801
        %8030 = vmatpush1.bf16.msra.mxu0 %v7800
        %8031 = vmatprep.subr.bf16.mxu0 %v7805
        %8032 = vmatpush1.bf16.msra.mxu0 %v7804
        %8033 = vmatprep.subr.bf16.mxu0 %v7809
        %8034 = vmatpush1.bf16.msra.mxu0 %v7808
        %8035 = vmatprep.subr.bf16.mxu0 %v7813
        %8036 = vmatpush1.bf16.msra.mxu0 %v7812
        %8037 = vmatprep.subr.bf16.mxu0 %v7817
        %8038 = vmatpush1.bf16.msra.mxu0 %v7816
        %8039 = vmatprep.subr.bf16.mxu0 %v7821
        %8040 = vmatpush1.bf16.msra.mxu0 %v7820
        %8041 = vmatprep.subr.bf16.mxu0 %v7825
        %8042 = vmatpush1.bf16.msra.mxu0 %v7824
        %8043 = vmatprep.subr.bf16.mxu0 %v7829
        %8044 = vmatpush1.bf16.msra.mxu0 %v7828
        %8045 = vmatprep.subr.bf16.mxu0 %v7833
        %8046 = vmatpush1.bf16.msra.mxu0 %v7832
        %8047 = vmatprep.subr.bf16.mxu0 %v7837
        %8048 = vmatpush1.bf16.msra.mxu0 %v7836
        %8049 = vmatprep.subr.bf16.mxu0 %v7841
        %8050 = vmatpush1.bf16.msra.mxu0 %v7840
        %8051 = vmatprep.subr.bf16.mxu0 %v7845
        %8052 = vmatpush1.bf16.msra.mxu0 %v7844
        %8053 = vmatprep.subr.bf16.mxu0 %v7849
        %8054 = vmatpush1.bf16.msra.mxu0 %v7848
        %8055 = vmatprep.subr.bf16.mxu0 %v7853
        %8056 = vmatpush1.bf16.msra.mxu0 %v7852
        %8057 = vmatprep.mubr.bf16.mxu0 %v7212
        %8058 = vmatmul.mubr.bf16.gmra.mrb[0].mxu0 %v7211
        %v8059 = vpop.f32.mrb[0].mxu0
        %v8060 = vadd.f32 %v8019, %v8059
        %v8061 = vpop.f32.mrb[0].mxu0
        %v8062 = vadd.f32 %v8021, %v8061
        %v8063 = vpop.f32.mrb[0].mxu0
        %v8064 = vpop.f32.mrb[0].mxu0
        %8065 = vdwg.mxu0
        %8066 = vmatprep.subr.bf16.mxu0 %v7731
        %8067 = vmatpush1.bf16.msra.mxu0 %v7730
        %8068 = vmatprep.subr.bf16.mxu0 %v7735
        %8069 = vmatpush1.bf16.msra.mxu0 %v7734
        %8070 = vmatprep.subr.bf16.mxu0 %v7739
        %8071 = vmatpush1.bf16.msra.mxu0 %v7738
        %8072 = vmatprep.subr.bf16.mxu0 %v7743
        %8073 = vmatpush1.bf16.msra.mxu0 %v7742
        %8074 = vmatprep.subr.bf16.mxu0 %v7747
        %8075 = vmatpush1.bf16.msra.mxu0 %v7746
        %8076 = vmatprep.subr.bf16.mxu0 %v7751
        %8077 = vmatpush1.bf16.msra.mxu0 %v7750
        %8078 = vmatprep.subr.bf16.mxu0 %v7755
        %8079 = vmatpush1.bf16.msra.mxu0 %v7754
        %8080 = vmatprep.subr.bf16.mxu0 %v7759
        %8081 = vmatpush1.bf16.msra.mxu0 %v7758
        %8082 = vmatprep.subr.bf16.mxu0 %v7763
        %8083 = vmatpush1.bf16.msra.mxu0 %v7762
        %8084 = vmatprep.subr.bf16.mxu0 %v7767
        %8085 = vmatpush1.bf16.msra.mxu0 %v7766
        %8086 = vmatprep.subr.bf16.mxu0 %v7771
        %8087 = vmatpush1.bf16.msra.mxu0 %v7770
        %8088 = vmatprep.subr.bf16.mxu0 %v7775
        %8089 = vmatpush1.bf16.msra.mxu0 %v7774
        %8090 = vmatprep.subr.bf16.mxu0 %v7779
        %8091 = vmatpush1.bf16.msra.mxu0 %v7778
        %8092 = vmatprep.subr.bf16.mxu0 %v7783
        %8093 = vmatpush1.bf16.msra.mxu0 %v7782
        %8094 = vmatprep.subr.bf16.mxu0 %v7787
        %8095 = vmatpush1.bf16.msra.mxu0 %v7786
        %8096 = vmatprep.subr.bf16.mxu0 %v7791
        %8097 = vmatpush1.bf16.msra.mxu0 %v7790
        %8098 = vmatprep.mubr.bf16.mxu0 %v7210
        %8099 = vmatmul.mubr.bf16.gmra.mrb[0].mxu0 %v7209
        %v8100 = vpop.f32.mrb[0].mxu0
        %v8101 = vadd.f32 0.0, %v8100
        %v8102 = vpop.f32.mrb[0].mxu0
        %v8103 = vadd.f32 0.0, %v8102
        %v8104 = vpop.f32.mrb[0].mxu0
        %v8105 = vpop.f32.mrb[0].mxu0
        %8106 = vdwg.mxu0
        %8107 = vmatprep.subr.bf16.mxu0 %v7795
        %8108 = vmatpush1.bf16.msra.mxu0 %v7794
        %8109 = vmatprep.subr.bf16.mxu0 %v7799
        %8110 = vmatpush1.bf16.msra.mxu0 %v7798
        %8111 = vmatprep.subr.bf16.mxu0 %v7803
        %8112 = vmatpush1.bf16.msra.mxu0 %v7802
        %8113 = vmatprep.subr.bf16.mxu0 %v7807
        %8114 = vmatpush1.bf16.msra.mxu0 %v7806
        %8115 = vmatprep.subr.bf16.mxu0 %v7811
        %8116 = vmatpush1.bf16.msra.mxu0 %v7810
        %8117 = vmatprep.subr.bf16.mxu0 %v7815
        %8118 = vmatpush1.bf16.msra.mxu0 %v7814
        %8119 = vmatprep.subr.bf16.mxu0 %v7819
        %8120 = vmatpush1.bf16.msra.mxu0 %v7818
        %8121 = vmatprep.subr.bf16.mxu0 %v7823
        %8122 = vmatpush1.bf16.msra.mxu0 %v7822
        %8123 = vmatprep.subr.bf16.mxu0 %v7827
        %8124 = vmatpush1.bf16.msra.mxu0 %v7826
        %8125 = vmatprep.subr.bf16.mxu0 %v7831
        %8126 = vmatpush1.bf16.msra.mxu0 %v7830
        %8127 = vmatprep.subr.bf16.mxu0 %v7835
        %8128 = vmatpush1.bf16.msra.mxu0 %v7834
        %8129 = vmatprep.subr.bf16.mxu0 %v7839
        %8130 = vmatpush1.bf16.msra.mxu0 %v7838
        %8131 = vmatprep.subr.bf16.mxu0 %v7843
        %8132 = vmatpush1.bf16.msra.mxu0 %v7842
        %8133 = vmatprep.subr.bf16.mxu0 %v7847
        %8134 = vmatpush1.bf16.msra.mxu0 %v7846
        %8135 = vmatprep.subr.bf16.mxu0 %v7851
        %8136 = vmatpush1.bf16.msra.mxu0 %v7850
        %8137 = vmatprep.subr.bf16.mxu0 %v7855
        %8138 = vmatpush1.bf16.msra.mxu0 %v7854
        %8139 = vmatprep.mubr.bf16.mxu0 %v7212
        %8140 = vmatmul.mubr.bf16.gmra.mrb[0].mxu0 %v7211
        %v8141 = vpop.f32.mrb[0].mxu0
        %v8142 = vadd.f32 %v8101, %v8141
        %v8143 = vpop.f32.mrb[0].mxu0
        %v8144 = vadd.f32 %v8103, %v8143
        %v8145 = vpop.f32.mrb[0].mxu0
        %v8146 = vpop.f32.mrb[0].mxu0
        %8147 = vdwg.mxu0
        %v8148 = vadd.f32 %v7205, %v8060
        %v8149 = vadd.f32 %v7206, %v8062
        %v8150 = vadd.f32 %v7207, %v8142
        %v8151 = vadd.f32 %v7208, %v8144
        %8152 = vst [vmem:[#allocation2] sm:$0xff] %v8148
        %8153 = vst [vmem:[#allocation2 + $0x8] sm:$0xff] %v8149
        %8154 = vst [vmem:[#allocation2 + $0x10] sm:$0xff] %v8150
        %8155 = vst [vmem:[#allocation2 + $0x18] sm:$0xff] %v8151
        %v8156 = vld [vmem:[#allocation2] sm:$0xff]
        %v8157 = vld [vmem:[#allocation2 + $0x8] sm:$0xff]
        %v8158 = vld [vmem:[#allocation2 + $0x10] sm:$0xff]
        %v8159 = vld [vmem:[#allocation2 + $0x18] sm:$0xff]
        %v8160 = vld [vmem:[#allocation11] sm:$0xf]
        %v8162 = vlaneseq
        %v8163 = vshrl.u32 %v8162, 7
        %v8164 = vsub.s32 0, %v8163
        %v8165 = vrot.slane %v8160, %v8164
        %v8166 = vlaneseq
        %v8167 = vshrl.u32 %v8166, 7
        %v8168 = vsub.s32 1, %v8167
        %v8169 = vrot.slane %v8160, %v8168
        %v8170 = vlaneseq
        %v8171 = vshrl.u32 %v8170, 7
        %v8172 = vsub.s32 2, %v8171
        %v8173 = vrot.slane %v8160, %v8172
        %v8174 = vlaneseq
        %v8175 = vshrl.u32 %v8174, 7
        %v8176 = vsub.s32 3, %v8175
        %v8177 = vrot.slane %v8160, %v8176
        %v8182 = vadd.f32 %v8156, %v8165
        %v8183 = vadd.f32 %v8157, %v8169
        %v8184 = vadd.f32 %v8158, %v8173
        %v8185 = vadd.f32 %v8159, %v8177
        %v8186 = vadd.f32 %v8182, %v374
        %v8187 = vadd.f32 %v8183, %v375
        %v8188 = vadd.f32 %v8184, %v376
        %v8189 = vadd.f32 %v8185, %v377
        %v8190 = vadd.f32 %v8186, %v8187
        %v8191 = vadd.f32 %v8190, %v8188
        %v8192 = vadd.f32 %v8191, %v8189
        %8193 = vadd.xlane.f32.xlu0 %v8192
        %v8194 = vpop.xlane.xlu0 %8193
        %v8195 = vmul.f32 %v8194, 0.001953125
        %v8196 = vmul.f32 %v8186, %v8186
        %v8197 = vmul.f32 %v8187, %v8187
        %v8198 = vmul.f32 %v8188, %v8188
        %v8199 = vmul.f32 %v8189, %v8189
        %v8200 = vadd.f32 %v8196, %v8197
        %v8201 = vadd.f32 %v8200, %v8198
        %v8202 = vadd.f32 %v8201, %v8199
        %8203 = vadd.xlane.f32.xlu0 %v8202
        %v8204 = vpop.xlane.xlu0 %8203
        %v8205 = vmul.f32 %v8204, 0.001953125
        %v8206 = vmul.f32 %v8195, %v8195
        %v8207 = vsub.f32 %v8205, %v8206
        %v8208 = vadd.f32 %v8207, 1e-05
        %v8209 = vrsqrt.pop %v8208
        %v8210 = vsub.f32 %v8186, %v8195
        %v8211 = vsub.f32 %v8187, %v8195
        %v8212 = vsub.f32 %v8188, %v8195
        %v8213 = vsub.f32 %v8189, %v8195
        %v8214 = vmul.f32 %v8210, %v8209
        %v8215 = vmul.f32 %v8211, %v8209
        %v8216 = vmul.f32 %v8212, %v8209
        %v8217 = vmul.f32 %v8213, %v8209
        %v8218 = vld [vmem:[#allocation12] sm:$0xf]
        %v8220 = vlaneseq
        %v8221 = vshrl.u32 %v8220, 7
        %v8222 = vsub.s32 0, %v8221
        %v8223 = vrot.slane %v8218, %v8222
        %v8224 = vlaneseq
        %v8225 = vshrl.u32 %v8224, 7
        %v8226 = vsub.s32 1, %v8225
        %v8227 = vrot.slane %v8218, %v8226
        %v8228 = vlaneseq
        %v8229 = vshrl.u32 %v8228, 7
        %v8230 = vsub.s32 2, %v8229
        %v8231 = vrot.slane %v8218, %v8230
        %v8232 = vlaneseq
        %v8233 = vshrl.u32 %v8232, 7
        %v8234 = vsub.s32 3, %v8233
        %v8235 = vrot.slane %v8218, %v8234
        %v8240 = vmul.f32 %v8214, %v8223
        %v8241 = vmul.f32 %v8215, %v8227
        %v8242 = vmul.f32 %v8216, %v8231
        %v8243 = vmul.f32 %v8217, %v8235
        %v8244 = vld [vmem:[#allocation14] sm:$0xf]
        %v8246 = vlaneseq
        %v8247 = vshrl.u32 %v8246, 7
        %v8248 = vsub.s32 0, %v8247
        %v8249 = vrot.slane %v8244, %v8248
        %v8250 = vlaneseq
        %v8251 = vshrl.u32 %v8250, 7
        %v8252 = vsub.s32 1, %v8251
        %v8253 = vrot.slane %v8244, %v8252
        %v8254 = vlaneseq
        %v8255 = vshrl.u32 %v8254, 7
        %v8256 = vsub.s32 2, %v8255
        %v8257 = vrot.slane %v8244, %v8256
        %v8258 = vlaneseq
        %v8259 = vshrl.u32 %v8258, 7
        %v8260 = vsub.s32 3, %v8259
        %v8261 = vrot.slane %v8244, %v8260
        %v8266 = vadd.f32 %v8240, %v8249
        %v8267 = vadd.f32 %v8241, %v8253
        %v8268 = vadd.f32 %v8242, %v8257
        %v8269 = vadd.f32 %v8243, %v8261
        %8270 = vst [vmem:[%s373] sm:$0xff] %v8266
        %8271 = vst [vmem:[%s373 + $0x8] sm:$0xff] %v8267
        %8272 = vst [vmem:[%s373 + $0x10] sm:$0xff] %v8268
        %8273 = vst [vmem:[%s373 + $0x18] sm:$0xff] %v8269
        %s8274 = sand.u32 %s187, 1
        %s8275 = scalar_lea.sflag [#allocation5], %s8274
        %s8276 = sand.u32 %s187, 1
        %s8277 = smul.addr %s8276, 32
        %s8278 = scalar_lea.vmem [#allocation15], %s8277
        // Predicated region
        $region77: #{tpu_custom_call.1} parent=47 // pred_check
          %p8279 = pneg %p197
        $region78: #{tpu_custom_call.1} parent=47 // pred_check_branch
          %8281 = sbr.rel (%p8279) target = $region80
        $region79: #{tpu_custom_call.1} parent=47 // pred_region
          %s8283 = ssub.s32 512, 512
          %8284 = vsyncadd %s8275, %s8283
          %s8285 = smul.addr %s27, 4
          %s8286 = smul.addr %s8285, 128
          %s8287 = scalar_lea.hbm %s7, %s8286
          %s8289 = sshll.u32 %s8278, 4
          %s8290 = int_to_ptr.vmem [resolvable:$true] %s8289
          %8292 = dma.vmem_to_hbm [thread:$0]  %s8290, 512, %s8287, %s8275
        $region80: #{tpu_custom_call.1} parent=47 // pred_fallthru
          _
      $region48: #{tpu_custom_call.1} parent=5 // pred_fallthru
        _
      %p8293 = scmp.le.s32.totalorder 2, %s22
      // Predicated region
      $region81: #{tpu_custom_call.1} parent=5 // pred_check
        %p8294 = pneg %p8293
      $region82: #{tpu_custom_call.1} parent=5 // pred_check_branch
        %8296 = sbr.rel (%p8294) target = $region84
      $region83: #{tpu_custom_call.1} parent=5 // pred_region
        %s8297 = ssub.s32 %s22, 2
        // Predicated region
        $region85: #{tpu_custom_call.1} parent=83 // pred_check
          %p8298 = pneg %p203
        $region86: #{tpu_custom_call.1} parent=83 // pred_check_branch
          %8300 = sbr.rel (%p8298) target = $region88
        $region87: #{tpu_custom_call.1} parent=83 // pred_region
          %s8301 = sand.u32 %s188, 1
          %s8302 = scalar_lea.sflag [#allocation5], %s8301
          %s8303 = sand.u32 %s188, 1
          %s8304 = smul.addr %s8303, 32
          %s8305 = scalar_lea.vmem [#allocation15], %s8304
          %8306 = dma.done %s8302, 512
        $region88: #{tpu_custom_call.1} parent=83 // pred_fallthru
          _
      $region84: #{tpu_custom_call.1} parent=5 // pred_fallthru
        _
    $region6: #{tpu_custom_call.1} parent=1 // loop_footer
      %s26 = sadd.s32 1, %s22
    $region7: #{tpu_custom_call.1} parent=1 // loop_footer_branch
      %21 = sbr.rel target = $region3
    $region8: #{tpu_custom_call.1} parent=1 // loop_exit
      _
    %8307 = vsyncpa [#allocation4], 1
    %s8308 = scalar_lea.sflag [#allocation4], 1
    %8309 = vsyncpa %s8308, 1
    %8310 = vsyncpa [#allocation7], 1
    %8311 = vsyncpa [#allocation10], 1
    %8312 = vsyncpa [#allocation13], 1
    %8313 = vsyncpa [#allocation5], 1
    %s8314 = scalar_lea.sflag [#allocation5], 1
    %8315 = vsyncpa %s8314, 1

</llo_original>
